<compile_context>
chip_gen: v6e
topology: v6e:2x2x1
jax: 0.10.0
libtpu: 0.0.40
codegen_flags: <defaults>
</compile_context>

<pallas_src>
import jax
import jax.numpy as jnp
from jax.experimental import pallas as pl
from jax.experimental.pallas import tpu as pltpu

LANE = 128


def _round_up(x, m):
    return (x + m - 1) // m * m


def double_conv_kernel(x_ref, w1_ref, s1_ref, b1_ref, w2_ref, s2_ref, b2_ref,
                       o_ref, y1p_ref):
    """Fused (conv3x3 + eval-BN + ReLU) x 2 for one (batch, row-tile) block.

    x_ref:   (1, H+4, Wp, C0)  bf16 spatially pre-padded input (whole image):
                               2 zero rows top/bottom, 1 zero col left,
                               Wp - W - 1 zero cols right, channels padded.
    w1_ref:  (9, C0, C1)       bf16 conv1 weights, tap-major (ky*3+kx)
    s1_ref/b1_ref: (1, C1)     f32 folded BN1 scale / shift (conv bias folded)
    w2_ref:  (9, C1, C2)       bf16 conv2 weights
    s2_ref/b2_ref: (1, C2)     f32 folded BN2 scale / shift
    o_ref:   (1, TH, W, C2)    bf16 output row tile (lane-dense)
    y1p_ref: (TH+2, Wp, C1)    bf16 scratch: stage-1 rows r0-1..r0+TH with a
                               1-px zero column border and zero halo rows at
                               the image top/bottom.
    """
    TH = o_ref.shape[1]
    W = o_ref.shape[2]
    C0 = x_ref.shape[3]
    C1 = y1p_ref.shape[2]

    t = pl.program_id(1)
    r0 = pl.multiple_of(t * TH, TH)          # first output row of this tile

    def conv3x3(read_window, w_ref, rows, cin, scale, shift):
        # 9 shift-and-accumulate tap matmuls (K = cin), f32 accumulation,
        # folded eval-BN + ReLU epilogue in f32.
        acc = None
        for dy in range(3):
            for dx in range(3):
                win = read_window(dy, dx).reshape(rows * W, cin)
                part = jnp.dot(win, w_ref[dy * 3 + dx],
                               preferred_element_type=jnp.float32)
                acc = part if acc is None else acc + part
        return jnp.maximum(acc * scale + shift, 0.0)

    # ---- stage 1: TH+2 rows (1-row halo each side) of conv1 + BN + ReLU ----
    def x_window(dy, dx):
        return x_ref[0, pl.ds(r0 + dy, TH + 2), pl.ds(dx, W), :]

    y1 = conv3x3(x_window, w1_ref, TH + 2, C0, s1_ref[...], b1_ref[...])
    y1p_ref[:, pl.ds(1, W), :] = (
        y1.reshape(TH + 2, W, C1).astype(y1p_ref.dtype))

    # Thin 1-px zero column strips (left col 0, right col W+1); cols >= W+2
    # are never read, so they are left untouched.
    zcol = jnp.zeros((TH + 2, 1, C1), y1p_ref.dtype)
    y1p_ref[:, pl.ds(0, 1), :] = zcol
    y1p_ref[:, pl.ds(W + 1, 1), :] = zcol

    # Halo rows that fall outside the image are conv padding for stage 2 and
    # must be exactly zero (done per grid step; scratch is not zero on entry).
    zrow = jnp.zeros((1, y1p_ref.shape[1], C1), y1p_ref.dtype)

    @pl.when(t == 0)
    def _():
        y1p_ref[pl.ds(0, 1), :, :] = zrow

    @pl.when(t == pl.num_programs(1) - 1)
    def _():
        y1p_ref[pl.ds(TH + 1, 1), :, :] = zrow

    # ---- stage 2: conv2 + BN + ReLU over the VMEM-resident stage-1 tile ----
    def y_window(dy, dx):
        return y1p_ref[pl.ds(dy, TH), pl.ds(dx, W), :]

    y2 = conv3x3(y_window, w2_ref, TH, C1, s2_ref[...], b2_ref[...])
    o_ref[...] = y2.reshape(1, TH, W, o_ref.shape[3]).astype(o_ref.dtype)


def _flatten_conv_weight(w, cin_pad, cout_pad):
    """PyTorch (Cout, Cin, 3, 3) -> (9, cin_pad, cout_pad) bf16, tap-major
    (ky*3+kx). Padded rows/cols are zero."""
    cout, cin = w.shape[0], w.shape[1]
    w = jnp.transpose(w, (2, 3, 1, 0))                       # (3, 3, Cin, Cout)
    w = jnp.pad(w, ((0, 0), (0, 0), (0, cin_pad - cin), (0, cout_pad - cout)))
    return w.reshape(9, cin_pad, cout_pad).astype(jnp.bfloat16)


def _fold_bn(p, cout_pad, eps=1e-5):
    """Eval-mode BN folded into per-channel (scale, shift); conv bias folded.
    Padded lanes are zero so padded output channels stay exactly zero."""
    scale = p["gamma"] / jnp.sqrt(p["var"] + eps)
    shift = (p["b"] - p["mean"]) * scale + p["beta"]
    cout = scale.shape[0]
    scale = jnp.pad(scale, (0, cout_pad - cout))
    shift = jnp.pad(shift, (0, cout_pad - cout))
    return (scale[None, :].astype(jnp.float32),
            shift[None, :].astype(jnp.float32))


def make_params(key, in_ch, out_ch):
    """Deterministic params for one (Conv2d(3x3, pad=1) + BN) block."""
    k_w, k_b, k_g, k_be, k_m, k_v = jax.random.split(key, 6)
    w = jax.random.normal(k_w, (out_ch, in_ch, 3, 3), jnp.float32) * 0.1
    b = jax.random.normal(k_b, (out_ch,), jnp.float32) * 0.1
    gamma = 1.0 + 0.1 * jax.random.normal(k_g, (out_ch,), jnp.float32)
    beta = 0.1 * jax.random.normal(k_be, (out_ch,), jnp.float32)
    mean = 0.1 * jax.random.normal(k_m, (out_ch,), jnp.float32)
    var = jnp.abs(jax.random.normal(k_v, (out_ch,), jnp.float32)) + 0.5
    return {"w": w, "b": b, "gamma": gamma, "beta": beta, "mean": mean,
            "var": var}


def double_conv(x_nchw, p1, p2, *, tile_h=8):
    """DoubleConv forward. Input NCHW (PyTorch convention), output NCHW f32."""
    N, Cin, H, W = x_nchw.shape
    Cmid = p1["w"].shape[0]
    Cout = p2["w"].shape[0]
    C0 = _round_up(Cin, LANE)
    C1 = _round_up(Cmid, LANE)
    C2 = _round_up(Cout, LANE)

    TH = tile_h if (H % tile_h == 0 and H > tile_h) else H
    T = H // TH
    Wp = _round_up(W + 2, 8)      # sublane-aligned padded width
    Hp = H + 4                    # 2 zero rows top/bottom (stage-1 halo)

    # NCHW -> NHWC, spatial pre-pad (2 rows / 1 col of zeros), channel pad to
    # a lane multiple, bf16 MXU operands.
    # TODO(synk): keep the surrounding model NHWC/bf16 end-to-end so this
    # transpose/pad glue disappears at UNet scale.
    x = jnp.transpose(x_nchw, (0, 2, 3, 1))
    x = jnp.pad(x, ((0, 0), (2, 2), (1, Wp - W - 1), (0, C0 - Cin)))
    x = x.astype(jnp.bfloat16)

    w1 = _flatten_conv_weight(p1["w"], C0, C1)
    w2 = _flatten_conv_weight(p2["w"], C1, C2)
    s1, b1 = _fold_bn(p1, C1)
    s2, b2 = _fold_bn(p2, C2)

    flops = 2 * N * H * W * 9 * (Cin * Cmid + Cmid * Cout)
    bytes_accessed = (x.size * 2 + w1.size * 2 + w2.size * 2
                      + (s1.size + b1.size + s2.size + b2.size) * 4
                      + N * H * W * C2 * 2)

    out = pl.pallas_call(
        double_conv_kernel,
        out_shape=jax.ShapeDtypeStruct((N, H, W, C2), jnp.bfloat16),
        grid_spec=pltpu.PrefetchScalarGridSpec(
            num_scalar_prefetch=0,
            grid=(N, T),
            in_specs=[
                pl.BlockSpec((1, Hp, Wp, C0), lambda n, t: (n, 0, 0, 0)),
                pl.BlockSpec((9, C0, C1), lambda n, t: (0, 0, 0)),
                pl.BlockSpec((1, C1), lambda n, t: (0, 0)),
                pl.BlockSpec((1, C1), lambda n, t: (0, 0)),
                pl.BlockSpec((9, C1, C2), lambda n, t: (0, 0, 0)),
                pl.BlockSpec((1, C2), lambda n, t: (0, 0)),
                pl.BlockSpec((1, C2), lambda n, t: (0, 0)),
            ],
            out_specs=pl.BlockSpec((1, TH, W, C2), lambda n, t: (n, t, 0, 0)),
            scratch_shapes=[
                pltpu.VMEM((TH + 2, Wp, C1), jnp.bfloat16),
            ],
        ),
        compiler_params=pltpu.CompilerParams(
            dimension_semantics=("parallel", "parallel"),
            vmem_limit_bytes=32 * 1024 * 1024),
        cost_estimate=pl.CostEstimate(
            flops=flops, transcendentals=0, bytes_accessed=bytes_accessed),
    )(x, w1, s1, b1, w2, s2, b2)

    # Drop lane padding; cast back to f32 to match the PyTorch module's dtype
    # (inside a fused UNet the next layer would consume the bf16 directly).
    out = out[:, :, :, :Cout].astype(jnp.float32)
    return jnp.transpose(out, (0, 3, 1, 2))         # NHWC -> NCHW


def _ref_conv_bn_relu(x_nhwc, p, eps=1e-5):
    """Pure-JAX f32 reference (eval-mode BN) for verification."""
    w_hwio = jnp.transpose(p["w"], (2, 3, 1, 0))
    y = jax.lax.conv_general_dilated(
        x_nhwc, w_hwio, window_strides=(1, 1), padding="SAME",
        dimension_numbers=("NHWC", "HWIO", "NHWC"))
    y = y + p["b"]
    y = (y - p["mean"]) / jnp.sqrt(p["var"] + eps) * p["gamma"] + p["beta"]
    return jnp.maximum(y, 0.0)


if __name__ == "__main__":
    key = jax.random.PRNGKey(0)
    k_x, k_p1, k_p2 = jax.random.split(key, 3)

    N, Cin, Cout, H, W = 2, 4, 8, 16, 16
    x = jax.random.normal(k_x, (N, Cin, H, W), jnp.float32)  # NCHW like PyTorch

    p1 = make_params(k_p1, Cin, Cout)
    p2 = make_params(k_p2, Cout, Cout)

    out = double_conv(x, p1, p2)
    out = jax.block_until_ready(out)

    # sanity check against pure-JAX f32 reference (eval-mode BatchNorm);
    # tolerance accounts for bf16 MXU operands, bf16 intermediate and output.
    x_nhwc = jnp.transpose(x, (0, 2, 3, 1))
    ref = _ref_conv_bn_relu(_ref_conv_bn_relu(x_nhwc, p1), p2)
    ref = jnp.transpose(ref, (0, 3, 1, 2))
    assert out.shape == (N, Cout, H, W)
    assert jnp.allclose(out, ref, atol=5e-2, rtol=5e-2), (
        float(jnp.max(jnp.abs(out - ref))))

    print("KERNEL_OK")
</pallas_src>

<mosaic_0001>
module attributes {stable_mosaic.version = 11 : i64} {
  func.func @double_conv_kernel(%arg0: i32, %arg1: i32, %arg2: memref<1x20x24x128xbf16, #tpu.memory_space<vmem>>, %arg3: memref<9x128x128xbf16, #tpu.memory_space<vmem>>, %arg4: memref<1x128xf32, #tpu.memory_space<vmem>>, %arg5: memref<1x128xf32, #tpu.memory_space<vmem>>, %arg6: memref<9x128x128xbf16, #tpu.memory_space<vmem>>, %arg7: memref<1x128xf32, #tpu.memory_space<vmem>>, %arg8: memref<1x128xf32, #tpu.memory_space<vmem>>, %arg9: memref<1x8x16x128xbf16, #tpu.memory_space<vmem>>, %arg10: memref<10x24x128xbf16, #tpu.memory_space<vmem>>) attributes {dimension_semantics = [#tpu.dimension_semantics<parallel>, #tpu.dimension_semantics<parallel>], iteration_bounds = array<i64: 2, 2>, scalar_prefetch = 0 : i64, scratch_operands = 1 : i64, tpu.core_type = #tpu.core_type<tc>, window_params = [{transform_indices = @transform_0, window_bounds = array<i64: 1, 20, 24, 128>}, {pipeline_mode = #tpu.pipeline_mode<synchronous>, transform_indices = @transform_1, window_bounds = array<i64: 9, 128, 128>}, {pipeline_mode = #tpu.pipeline_mode<synchronous>, transform_indices = @transform_2, window_bounds = array<i64: 1, 128>}, {pipeline_mode = #tpu.pipeline_mode<synchronous>, transform_indices = @transform_3, window_bounds = array<i64: 1, 128>}, {pipeline_mode = #tpu.pipeline_mode<synchronous>, transform_indices = @transform_4, window_bounds = array<i64: 9, 128, 128>}, {pipeline_mode = #tpu.pipeline_mode<synchronous>, transform_indices = @transform_5, window_bounds = array<i64: 1, 128>}, {pipeline_mode = #tpu.pipeline_mode<synchronous>, transform_indices = @transform_6, window_bounds = array<i64: 1, 128>}, {transform_indices = @transform_7, window_bounds = array<i64: 1, 8, 16, 128>}]} {
    %c8_i32 = arith.constant 8 : i32
    %0 = arith.muli %arg1, %c8_i32 : i32
    %1 = tpu.assume_multiple %0, 8 : i32
    %c0 = arith.constant 0 : index
    %c0_0 = arith.constant 0 : index
    %2 = vector.load %arg4[%c0, %c0_0] : memref<1x128xf32, #tpu.memory_space<vmem>>, vector<1x128xf32>
    %c0_1 = arith.constant 0 : index
    %c0_2 = arith.constant 0 : index
    %3 = vector.load %arg5[%c0_1, %c0_2] : memref<1x128xf32, #tpu.memory_space<vmem>>, vector<1x128xf32>
    %c0_i32 = arith.constant 0 : i32
    %4 = arith.addi %1, %c0_i32 : i32
    %c0_3 = arith.constant 0 : index
    %5 = arith.index_cast %4 : i32 to index
    %c0_4 = arith.constant 0 : index
    %c0_5 = arith.constant 0 : index
    %6 = vector.load %arg2[%c0_3, %5, %c0_4, %c0_5] : memref<1x20x24x128xbf16, #tpu.memory_space<vmem>>, vector<1x10x16x128xbf16>
    %7 = vector.shape_cast %6 : vector<1x10x16x128xbf16> to vector<10x16x128xbf16>
    %8 = vector.shape_cast %7 : vector<10x16x128xbf16> to vector<160x128xbf16>
    %c0_6 = arith.constant 0 : index
    %c0_7 = arith.constant 0 : index
    %c0_8 = arith.constant 0 : index
    %9 = vector.load %arg3[%c0_6, %c0_7, %c0_8] : memref<9x128x128xbf16, #tpu.memory_space<vmem>>, vector<1x128x128xbf16>
    %10 = vector.shape_cast %9 : vector<1x128x128xbf16> to vector<128x128xbf16>
    %cst = arith.constant dense<0.000000e+00> : vector<160x128xf32>
    %11 = tpu.matmul %8, %10, %cst {dimension_numbers = #tpu.dot_dimension_numbers<[1], [0], [0], [1], [0, 0, 1, 1], [], []>} : vector<160x128xbf16>, vector<128x128xbf16>, vector<160x128xf32> -> vector<160x128xf32>
    %c0_i32_9 = arith.constant 0 : i32
    %12 = arith.addi %1, %c0_i32_9 : i32
    %c0_10 = arith.constant 0 : index
    %13 = arith.index_cast %12 : i32 to index
    %c1 = arith.constant 1 : index
    %c0_11 = arith.constant 0 : index
    %14 = vector.load %arg2[%c0_10, %13, %c1, %c0_11] : memref<1x20x24x128xbf16, #tpu.memory_space<vmem>>, vector<1x10x16x128xbf16>
    %15 = vector.shape_cast %14 : vector<1x10x16x128xbf16> to vector<10x16x128xbf16>
    %16 = vector.shape_cast %15 : vector<10x16x128xbf16> to vector<160x128xbf16>
    %c1_12 = arith.constant 1 : index
    %c0_13 = arith.constant 0 : index
    %c0_14 = arith.constant 0 : index
    %17 = vector.load %arg3[%c1_12, %c0_13, %c0_14] : memref<9x128x128xbf16, #tpu.memory_space<vmem>>, vector<1x128x128xbf16>
    %18 = vector.shape_cast %17 : vector<1x128x128xbf16> to vector<128x128xbf16>
    %cst_15 = arith.constant dense<0.000000e+00> : vector<160x128xf32>
    %19 = tpu.matmul %16, %18, %cst_15 {dimension_numbers = #tpu.dot_dimension_numbers<[1], [0], [0], [1], [0, 0, 1, 1], [], []>} : vector<160x128xbf16>, vector<128x128xbf16>, vector<160x128xf32> -> vector<160x128xf32>
    %20 = arith.addf %11, %19 : vector<160x128xf32>
    %c0_i32_16 = arith.constant 0 : i32
    %21 = arith.addi %1, %c0_i32_16 : i32
    %c0_17 = arith.constant 0 : index
    %22 = arith.index_cast %21 : i32 to index
    %c2 = arith.constant 2 : index
    %c0_18 = arith.constant 0 : index
    %23 = vector.load %arg2[%c0_17, %22, %c2, %c0_18] : memref<1x20x24x128xbf16, #tpu.memory_space<vmem>>, vector<1x10x16x128xbf16>
    %24 = vector.shape_cast %23 : vector<1x10x16x128xbf16> to vector<10x16x128xbf16>
    %25 = vector.shape_cast %24 : vector<10x16x128xbf16> to vector<160x128xbf16>
    %c2_19 = arith.constant 2 : index
    %c0_20 = arith.constant 0 : index
    %c0_21 = arith.constant 0 : index
    %26 = vector.load %arg3[%c2_19, %c0_20, %c0_21] : memref<9x128x128xbf16, #tpu.memory_space<vmem>>, vector<1x128x128xbf16>
    %27 = vector.shape_cast %26 : vector<1x128x128xbf16> to vector<128x128xbf16>
    %cst_22 = arith.constant dense<0.000000e+00> : vector<160x128xf32>
    %28 = tpu.matmul %25, %27, %cst_22 {dimension_numbers = #tpu.dot_dimension_numbers<[1], [0], [0], [1], [0, 0, 1, 1], [], []>} : vector<160x128xbf16>, vector<128x128xbf16>, vector<160x128xf32> -> vector<160x128xf32>
    %29 = arith.addf %20, %28 : vector<160x128xf32>
    %c1_i32 = arith.constant 1 : i32
    %30 = arith.addi %1, %c1_i32 : i32
    %c0_23 = arith.constant 0 : index
    %31 = arith.index_cast %30 : i32 to index
    %c0_24 = arith.constant 0 : index
    %c0_25 = arith.constant 0 : index
    %32 = vector.load %arg2[%c0_23, %31, %c0_24, %c0_25] : memref<1x20x24x128xbf16, #tpu.memory_space<vmem>>, vector<1x10x16x128xbf16>
    %33 = vector.shape_cast %32 : vector<1x10x16x128xbf16> to vector<10x16x128xbf16>
    %34 = vector.shape_cast %33 : vector<10x16x128xbf16> to vector<160x128xbf16>
    %c3 = arith.constant 3 : index
    %c0_26 = arith.constant 0 : index
    %c0_27 = arith.constant 0 : index
    %35 = vector.load %arg3[%c3, %c0_26, %c0_27] : memref<9x128x128xbf16, #tpu.memory_space<vmem>>, vector<1x128x128xbf16>
    %36 = vector.shape_cast %35 : vector<1x128x128xbf16> to vector<128x128xbf16>
    %cst_28 = arith.constant dense<0.000000e+00> : vector<160x128xf32>
    %37 = tpu.matmul %34, %36, %cst_28 {dimension_numbers = #tpu.dot_dimension_numbers<[1], [0], [0], [1], [0, 0, 1, 1], [], []>} : vector<160x128xbf16>, vector<128x128xbf16>, vector<160x128xf32> -> vector<160x128xf32>
    %38 = arith.addf %29, %37 : vector<160x128xf32>
    %c1_i32_29 = arith.constant 1 : i32
    %39 = arith.addi %1, %c1_i32_29 : i32
    %c0_30 = arith.constant 0 : index
    %40 = arith.index_cast %39 : i32 to index
    %c1_31 = arith.constant 1 : index
    %c0_32 = arith.constant 0 : index
    %41 = vector.load %arg2[%c0_30, %40, %c1_31, %c0_32] : memref<1x20x24x128xbf16, #tpu.memory_space<vmem>>, vector<1x10x16x128xbf16>
    %42 = vector.shape_cast %41 : vector<1x10x16x128xbf16> to vector<10x16x128xbf16>
    %43 = vector.shape_cast %42 : vector<10x16x128xbf16> to vector<160x128xbf16>
    %c4 = arith.constant 4 : index
    %c0_33 = arith.constant 0 : index
    %c0_34 = arith.constant 0 : index
    %44 = vector.load %arg3[%c4, %c0_33, %c0_34] : memref<9x128x128xbf16, #tpu.memory_space<vmem>>, vector<1x128x128xbf16>
    %45 = vector.shape_cast %44 : vector<1x128x128xbf16> to vector<128x128xbf16>
    %cst_35 = arith.constant dense<0.000000e+00> : vector<160x128xf32>
    %46 = tpu.matmul %43, %45, %cst_35 {dimension_numbers = #tpu.dot_dimension_numbers<[1], [0], [0], [1], [0, 0, 1, 1], [], []>} : vector<160x128xbf16>, vector<128x128xbf16>, vector<160x128xf32> -> vector<160x128xf32>
    %47 = arith.addf %38, %46 : vector<160x128xf32>
    %c1_i32_36 = arith.constant 1 : i32
    %48 = arith.addi %1, %c1_i32_36 : i32
    %c0_37 = arith.constant 0 : index
    %49 = arith.index_cast %48 : i32 to index
    %c2_38 = arith.constant 2 : index
    %c0_39 = arith.constant 0 : index
    %50 = vector.load %arg2[%c0_37, %49, %c2_38, %c0_39] : memref<1x20x24x128xbf16, #tpu.memory_space<vmem>>, vector<1x10x16x128xbf16>
    %51 = vector.shape_cast %50 : vector<1x10x16x128xbf16> to vector<10x16x128xbf16>
    %52 = vector.shape_cast %51 : vector<10x16x128xbf16> to vector<160x128xbf16>
    %c5 = arith.constant 5 : index
    %c0_40 = arith.constant 0 : index
    %c0_41 = arith.constant 0 : index
    %53 = vector.load %arg3[%c5, %c0_40, %c0_41] : memref<9x128x128xbf16, #tpu.memory_space<vmem>>, vector<1x128x128xbf16>
    %54 = vector.shape_cast %53 : vector<1x128x128xbf16> to vector<128x128xbf16>
    %cst_42 = arith.constant dense<0.000000e+00> : vector<160x128xf32>
    %55 = tpu.matmul %52, %54, %cst_42 {dimension_numbers = #tpu.dot_dimension_numbers<[1], [0], [0], [1], [0, 0, 1, 1], [], []>} : vector<160x128xbf16>, vector<128x128xbf16>, vector<160x128xf32> -> vector<160x128xf32>
    %56 = arith.addf %47, %55 : vector<160x128xf32>
    %c2_i32 = arith.constant 2 : i32
    %57 = arith.addi %1, %c2_i32 : i32
    %c0_43 = arith.constant 0 : index
    %58 = arith.index_cast %57 : i32 to index
    %c0_44 = arith.constant 0 : index
    %c0_45 = arith.constant 0 : index
    %59 = vector.load %arg2[%c0_43, %58, %c0_44, %c0_45] : memref<1x20x24x128xbf16, #tpu.memory_space<vmem>>, vector<1x10x16x128xbf16>
    %60 = vector.shape_cast %59 : vector<1x10x16x128xbf16> to vector<10x16x128xbf16>
    %61 = vector.shape_cast %60 : vector<10x16x128xbf16> to vector<160x128xbf16>
    %c6 = arith.constant 6 : index
    %c0_46 = arith.constant 0 : index
    %c0_47 = arith.constant 0 : index
    %62 = vector.load %arg3[%c6, %c0_46, %c0_47] : memref<9x128x128xbf16, #tpu.memory_space<vmem>>, vector<1x128x128xbf16>
    %63 = vector.shape_cast %62 : vector<1x128x128xbf16> to vector<128x128xbf16>
    %cst_48 = arith.constant dense<0.000000e+00> : vector<160x128xf32>
    %64 = tpu.matmul %61, %63, %cst_48 {dimension_numbers = #tpu.dot_dimension_numbers<[1], [0], [0], [1], [0, 0, 1, 1], [], []>} : vector<160x128xbf16>, vector<128x128xbf16>, vector<160x128xf32> -> vector<160x128xf32>
    %65 = arith.addf %56, %64 : vector<160x128xf32>
    %c2_i32_49 = arith.constant 2 : i32
    %66 = arith.addi %1, %c2_i32_49 : i32
    %c0_50 = arith.constant 0 : index
    %67 = arith.index_cast %66 : i32 to index
    %c1_51 = arith.constant 1 : index
    %c0_52 = arith.constant 0 : index
    %68 = vector.load %arg2[%c0_50, %67, %c1_51, %c0_52] : memref<1x20x24x128xbf16, #tpu.memory_space<vmem>>, vector<1x10x16x128xbf16>
    %69 = vector.shape_cast %68 : vector<1x10x16x128xbf16> to vector<10x16x128xbf16>
    %70 = vector.shape_cast %69 : vector<10x16x128xbf16> to vector<160x128xbf16>
    %c7 = arith.constant 7 : index
    %c0_53 = arith.constant 0 : index
    %c0_54 = arith.constant 0 : index
    %71 = vector.load %arg3[%c7, %c0_53, %c0_54] : memref<9x128x128xbf16, #tpu.memory_space<vmem>>, vector<1x128x128xbf16>
    %72 = vector.shape_cast %71 : vector<1x128x128xbf16> to vector<128x128xbf16>
    %cst_55 = arith.constant dense<0.000000e+00> : vector<160x128xf32>
    %73 = tpu.matmul %70, %72, %cst_55 {dimension_numbers = #tpu.dot_dimension_numbers<[1], [0], [0], [1], [0, 0, 1, 1], [], []>} : vector<160x128xbf16>, vector<128x128xbf16>, vector<160x128xf32> -> vector<160x128xf32>
    %74 = arith.addf %65, %73 : vector<160x128xf32>
    %c2_i32_56 = arith.constant 2 : i32
    %75 = arith.addi %1, %c2_i32_56 : i32
    %c0_57 = arith.constant 0 : index
    %76 = arith.index_cast %75 : i32 to index
    %c2_58 = arith.constant 2 : index
    %c0_59 = arith.constant 0 : index
    %77 = vector.load %arg2[%c0_57, %76, %c2_58, %c0_59] : memref<1x20x24x128xbf16, #tpu.memory_space<vmem>>, vector<1x10x16x128xbf16>
    %78 = vector.shape_cast %77 : vector<1x10x16x128xbf16> to vector<10x16x128xbf16>
    %79 = vector.shape_cast %78 : vector<10x16x128xbf16> to vector<160x128xbf16>
    %c8 = arith.constant 8 : index
    %c0_60 = arith.constant 0 : index
    %c0_61 = arith.constant 0 : index
    %80 = vector.load %arg3[%c8, %c0_60, %c0_61] : memref<9x128x128xbf16, #tpu.memory_space<vmem>>, vector<1x128x128xbf16>
    %81 = vector.shape_cast %80 : vector<1x128x128xbf16> to vector<128x128xbf16>
    %cst_62 = arith.constant dense<0.000000e+00> : vector<160x128xf32>
    %82 = tpu.matmul %79, %81, %cst_62 {dimension_numbers = #tpu.dot_dimension_numbers<[1], [0], [0], [1], [0, 0, 1, 1], [], []>} : vector<160x128xbf16>, vector<128x128xbf16>, vector<160x128xf32> -> vector<160x128xf32>
    %83 = arith.addf %74, %82 : vector<160x128xf32>
    %84 = vector.broadcast %2 : vector<1x128xf32> to vector<160x128xf32>
    %85 = arith.mulf %83, %84 : vector<160x128xf32>
    %86 = vector.broadcast %3 : vector<1x128xf32> to vector<160x128xf32>
    %87 = arith.addf %85, %86 : vector<160x128xf32>
    %cst_63 = arith.constant 0.000000e+00 : f32
    %88 = vector.broadcast %cst_63 : f32 to vector<160x128xf32>
    %89 = arith.maximumf %87, %88 : vector<160x128xf32>
    %90 = vector.shape_cast %89 : vector<160x128xf32> to vector<10x16x128xf32>
    %91 = arith.truncf %90 : vector<10x16x128xf32> to vector<10x16x128xbf16>
    %c0_64 = arith.constant 0 : index
    %c1_65 = arith.constant 1 : index
    %c0_66 = arith.constant 0 : index
    %92 = vector.load %arg10[%c0_64, %c1_65, %c0_66] : memref<10x24x128xbf16, #tpu.memory_space<vmem>>, vector<10x16x128xbf16>
    tpu.vector_store %arg10[%c0_64, %c1_65, %c0_66], %91 {strides = array<i32>} : memref<10x24x128xbf16, #tpu.memory_space<vmem>>, vector<10x16x128xbf16>,
    %cst_67 = arith.constant 0.000000e+00 : bf16
    %93 = vector.broadcast %cst_67 : bf16 to vector<10x1x128xbf16>
    %c0_68 = arith.constant 0 : index
    %c0_69 = arith.constant 0 : index
    %c0_70 = arith.constant 0 : index
    %94 = vector.load %arg10[%c0_68, %c0_69, %c0_70] : memref<10x24x128xbf16, #tpu.memory_space<vmem>>, vector<10x1x128xbf16>
    tpu.vector_store %arg10[%c0_68, %c0_69, %c0_70], %93 {strides = array<i32>} : memref<10x24x128xbf16, #tpu.memory_space<vmem>>, vector<10x1x128xbf16>,
    %c0_71 = arith.constant 0 : index
    %c17 = arith.constant 17 : index
    %c0_72 = arith.constant 0 : index
    %95 = vector.load %arg10[%c0_71, %c17, %c0_72] : memref<10x24x128xbf16, #tpu.memory_space<vmem>>, vector<10x1x128xbf16>
    tpu.vector_store %arg10[%c0_71, %c17, %c0_72], %93 {strides = array<i32>} : memref<10x24x128xbf16, #tpu.memory_space<vmem>>, vector<10x1x128xbf16>,
    %cst_73 = arith.constant 0.000000e+00 : bf16
    %96 = vector.broadcast %cst_73 : bf16 to vector<1x24x128xbf16>
    %c0_i32_74 = arith.constant 0 : i32
    %97 = arith.cmpi eq, %arg1, %c0_i32_74 : i32
    %98 = arith.extui %97 : i1 to i32
    %c0_i32_75 = arith.constant 0 : i32
    %99 = arith.cmpi ne, %98, %c0_i32_75 : i32
    scf.if %99 {
      %c0_150 = arith.constant 0 : index
      %c0_151 = arith.constant 0 : index
      %c0_152 = arith.constant 0 : index
      %167 = vector.load %arg10[%c0_150, %c0_151, %c0_152] : memref<10x24x128xbf16, #tpu.memory_space<vmem>>, vector<1x24x128xbf16>
      tpu.vector_store %arg10[%c0_150, %c0_151, %c0_152], %96 {strides = array<i32>} : memref<10x24x128xbf16, #tpu.memory_space<vmem>>, vector<1x24x128xbf16>,
    } else {
    }
    %c1_i32_76 = arith.constant 1 : i32
    %100 = arith.cmpi eq, %arg1, %c1_i32_76 : i32
    %101 = arith.extui %100 : i1 to i32
    %c0_i32_77 = arith.constant 0 : i32
    %102 = arith.cmpi ne, %101, %c0_i32_77 : i32
    scf.if %102 {
      %c9 = arith.constant 9 : index
      %c0_150 = arith.constant 0 : index
      %c0_151 = arith.constant 0 : index
      %167 = vector.load %arg10[%c9, %c0_150, %c0_151] : memref<10x24x128xbf16, #tpu.memory_space<vmem>>, vector<1x24x128xbf16>
      tpu.vector_store %arg10[%c9, %c0_150, %c0_151], %96 {strides = array<i32>} : memref<10x24x128xbf16, #tpu.memory_space<vmem>>, vector<1x24x128xbf16>,
    } else {
    }
    %c0_78 = arith.constant 0 : index
    %c0_79 = arith.constant 0 : index
    %103 = vector.load %arg7[%c0_78, %c0_79] : memref<1x128xf32, #tpu.memory_space<vmem>>, vector<1x128xf32>
    %c0_80 = arith.constant 0 : index
    %c0_81 = arith.constant 0 : index
    %104 = vector.load %arg8[%c0_80, %c0_81] : memref<1x128xf32, #tpu.memory_space<vmem>>, vector<1x128xf32>
    %c0_82 = arith.constant 0 : index
    %c0_83 = arith.constant 0 : index
    %c0_84 = arith.constant 0 : index
    %105 = vector.load %arg10[%c0_82, %c0_83, %c0_84] : memref<10x24x128xbf16, #tpu.memory_space<vmem>>, vector<8x16x128xbf16>
    %106 = vector.shape_cast %105 : vector<8x16x128xbf16> to vector<128x128xbf16>
    %c0_85 = arith.constant 0 : index
    %c0_86 = arith.constant 0 : index
    %c0_87 = arith.constant 0 : index
    %107 = vector.load %arg6[%c0_85, %c0_86, %c0_87] : memref<9x128x128xbf16, #tpu.memory_space<vmem>>, vector<1x128x128xbf16>
    %108 = vector.shape_cast %107 : vector<1x128x128xbf16> to vector<128x128xbf16>
    %cst_88 = arith.constant dense<0.000000e+00> : vector<128x128xf32>
    %109 = tpu.matmul %106, %108, %cst_88 {dimension_numbers = #tpu.dot_dimension_numbers<[1], [0], [0], [1], [0, 0, 1, 1], [], []>} : vector<128x128xbf16>, vector<128x128xbf16>, vector<128x128xf32> -> vector<128x128xf32>
    %c0_89 = arith.constant 0 : index
    %c1_90 = arith.constant 1 : index
    %c0_91 = arith.constant 0 : index
    %110 = vector.load %arg10[%c0_89, %c1_90, %c0_91] : memref<10x24x128xbf16, #tpu.memory_space<vmem>>, vector<8x16x128xbf16>
    %111 = vector.shape_cast %110 : vector<8x16x128xbf16> to vector<128x128xbf16>
    %c1_92 = arith.constant 1 : index
    %c0_93 = arith.constant 0 : index
    %c0_94 = arith.constant 0 : index
    %112 = vector.load %arg6[%c1_92, %c0_93, %c0_94] : memref<9x128x128xbf16, #tpu.memory_space<vmem>>, vector<1x128x128xbf16>
    %113 = vector.shape_cast %112 : vector<1x128x128xbf16> to vector<128x128xbf16>
    %cst_95 = arith.constant dense<0.000000e+00> : vector<128x128xf32>
    %114 = tpu.matmul %111, %113, %cst_95 {dimension_numbers = #tpu.dot_dimension_numbers<[1], [0], [0], [1], [0, 0, 1, 1], [], []>} : vector<128x128xbf16>, vector<128x128xbf16>, vector<128x128xf32> -> vector<128x128xf32>
    %115 = arith.addf %109, %114 : vector<128x128xf32>
    %c0_96 = arith.constant 0 : index
    %c2_97 = arith.constant 2 : index
    %c0_98 = arith.constant 0 : index
    %116 = vector.load %arg10[%c0_96, %c2_97, %c0_98] : memref<10x24x128xbf16, #tpu.memory_space<vmem>>, vector<8x16x128xbf16>
    %117 = vector.shape_cast %116 : vector<8x16x128xbf16> to vector<128x128xbf16>
    %c2_99 = arith.constant 2 : index
    %c0_100 = arith.constant 0 : index
    %c0_101 = arith.constant 0 : index
    %118 = vector.load %arg6[%c2_99, %c0_100, %c0_101] : memref<9x128x128xbf16, #tpu.memory_space<vmem>>, vector<1x128x128xbf16>
    %119 = vector.shape_cast %118 : vector<1x128x128xbf16> to vector<128x128xbf16>
    %cst_102 = arith.constant dense<0.000000e+00> : vector<128x128xf32>
    %120 = tpu.matmul %117, %119, %cst_102 {dimension_numbers = #tpu.dot_dimension_numbers<[1], [0], [0], [1], [0, 0, 1, 1], [], []>} : vector<128x128xbf16>, vector<128x128xbf16>, vector<128x128xf32> -> vector<128x128xf32>
    %121 = arith.addf %115, %120 : vector<128x128xf32>
    %c1_103 = arith.constant 1 : index
    %c0_104 = arith.constant 0 : index
    %c0_105 = arith.constant 0 : index
    %122 = vector.load %arg10[%c1_103, %c0_104, %c0_105] : memref<10x24x128xbf16, #tpu.memory_space<vmem>>, vector<8x16x128xbf16>
    %123 = vector.shape_cast %122 : vector<8x16x128xbf16> to vector<128x128xbf16>
    %c3_106 = arith.constant 3 : index
    %c0_107 = arith.constant 0 : index
    %c0_108 = arith.constant 0 : index
    %124 = vector.load %arg6[%c3_106, %c0_107, %c0_108] : memref<9x128x128xbf16, #tpu.memory_space<vmem>>, vector<1x128x128xbf16>
    %125 = vector.shape_cast %124 : vector<1x128x128xbf16> to vector<128x128xbf16>
    %cst_109 = arith.constant dense<0.000000e+00> : vector<128x128xf32>
    %126 = tpu.matmul %123, %125, %cst_109 {dimension_numbers = #tpu.dot_dimension_numbers<[1], [0], [0], [1], [0, 0, 1, 1], [], []>} : vector<128x128xbf16>, vector<128x128xbf16>, vector<128x128xf32> -> vector<128x128xf32>
    %127 = arith.addf %121, %126 : vector<128x128xf32>
    %c1_110 = arith.constant 1 : index
    %c1_111 = arith.constant 1 : index
    %c0_112 = arith.constant 0 : index
    %128 = vector.load %arg10[%c1_110, %c1_111, %c0_112] : memref<10x24x128xbf16, #tpu.memory_space<vmem>>, vector<8x16x128xbf16>
    %129 = vector.shape_cast %128 : vector<8x16x128xbf16> to vector<128x128xbf16>
    %c4_113 = arith.constant 4 : index
    %c0_114 = arith.constant 0 : index
    %c0_115 = arith.constant 0 : index
    %130 = vector.load %arg6[%c4_113, %c0_114, %c0_115] : memref<9x128x128xbf16, #tpu.memory_space<vmem>>, vector<1x128x128xbf16>
    %131 = vector.shape_cast %130 : vector<1x128x128xbf16> to vector<128x128xbf16>
    %cst_116 = arith.constant dense<0.000000e+00> : vector<128x128xf32>
    %132 = tpu.matmul %129, %131, %cst_116 {dimension_numbers = #tpu.dot_dimension_numbers<[1], [0], [0], [1], [0, 0, 1, 1], [], []>} : vector<128x128xbf16>, vector<128x128xbf16>, vector<128x128xf32> -> vector<128x128xf32>
    %133 = arith.addf %127, %132 : vector<128x128xf32>
    %c1_117 = arith.constant 1 : index
    %c2_118 = arith.constant 2 : index
    %c0_119 = arith.constant 0 : index
    %134 = vector.load %arg10[%c1_117, %c2_118, %c0_119] : memref<10x24x128xbf16, #tpu.memory_space<vmem>>, vector<8x16x128xbf16>
    %135 = vector.shape_cast %134 : vector<8x16x128xbf16> to vector<128x128xbf16>
    %c5_120 = arith.constant 5 : index
    %c0_121 = arith.constant 0 : index
    %c0_122 = arith.constant 0 : index
    %136 = vector.load %arg6[%c5_120, %c0_121, %c0_122] : memref<9x128x128xbf16, #tpu.memory_space<vmem>>, vector<1x128x128xbf16>
    %137 = vector.shape_cast %136 : vector<1x128x128xbf16> to vector<128x128xbf16>
    %cst_123 = arith.constant dense<0.000000e+00> : vector<128x128xf32>
    %138 = tpu.matmul %135, %137, %cst_123 {dimension_numbers = #tpu.dot_dimension_numbers<[1], [0], [0], [1], [0, 0, 1, 1], [], []>} : vector<128x128xbf16>, vector<128x128xbf16>, vector<128x128xf32> -> vector<128x128xf32>
    %139 = arith.addf %133, %138 : vector<128x128xf32>
    %c2_124 = arith.constant 2 : index
    %c0_125 = arith.constant 0 : index
    %c0_126 = arith.constant 0 : index
    %140 = vector.load %arg10[%c2_124, %c0_125, %c0_126] : memref<10x24x128xbf16, #tpu.memory_space<vmem>>, vector<8x16x128xbf16>
    %141 = vector.shape_cast %140 : vector<8x16x128xbf16> to vector<128x128xbf16>
    %c6_127 = arith.constant 6 : index
    %c0_128 = arith.constant 0 : index
    %c0_129 = arith.constant 0 : index
    %142 = vector.load %arg6[%c6_127, %c0_128, %c0_129] : memref<9x128x128xbf16, #tpu.memory_space<vmem>>, vector<1x128x128xbf16>
    %143 = vector.shape_cast %142 : vector<1x128x128xbf16> to vector<128x128xbf16>
    %cst_130 = arith.constant dense<0.000000e+00> : vector<128x128xf32>
    %144 = tpu.matmul %141, %143, %cst_130 {dimension_numbers = #tpu.dot_dimension_numbers<[1], [0], [0], [1], [0, 0, 1, 1], [], []>} : vector<128x128xbf16>, vector<128x128xbf16>, vector<128x128xf32> -> vector<128x128xf32>
    %145 = arith.addf %139, %144 : vector<128x128xf32>
    %c2_131 = arith.constant 2 : index
    %c1_132 = arith.constant 1 : index
    %c0_133 = arith.constant 0 : index
    %146 = vector.load %arg10[%c2_131, %c1_132, %c0_133] : memref<10x24x128xbf16, #tpu.memory_space<vmem>>, vector<8x16x128xbf16>
    %147 = vector.shape_cast %146 : vector<8x16x128xbf16> to vector<128x128xbf16>
    %c7_134 = arith.constant 7 : index
    %c0_135 = arith.constant 0 : index
    %c0_136 = arith.constant 0 : index
    %148 = vector.load %arg6[%c7_134, %c0_135, %c0_136] : memref<9x128x128xbf16, #tpu.memory_space<vmem>>, vector<1x128x128xbf16>
    %149 = vector.shape_cast %148 : vector<1x128x128xbf16> to vector<128x128xbf16>
    %cst_137 = arith.constant dense<0.000000e+00> : vector<128x128xf32>
    %150 = tpu.matmul %147, %149, %cst_137 {dimension_numbers = #tpu.dot_dimension_numbers<[1], [0], [0], [1], [0, 0, 1, 1], [], []>} : vector<128x128xbf16>, vector<128x128xbf16>, vector<128x128xf32> -> vector<128x128xf32>
    %151 = arith.addf %145, %150 : vector<128x128xf32>
    %c2_138 = arith.constant 2 : index
    %c2_139 = arith.constant 2 : index
    %c0_140 = arith.constant 0 : index
    %152 = vector.load %arg10[%c2_138, %c2_139, %c0_140] : memref<10x24x128xbf16, #tpu.memory_space<vmem>>, vector<8x16x128xbf16>
    %153 = vector.shape_cast %152 : vector<8x16x128xbf16> to vector<128x128xbf16>
    %c8_141 = arith.constant 8 : index
    %c0_142 = arith.constant 0 : index
    %c0_143 = arith.constant 0 : index
    %154 = vector.load %arg6[%c8_141, %c0_142, %c0_143] : memref<9x128x128xbf16, #tpu.memory_space<vmem>>, vector<1x128x128xbf16>
    %155 = vector.shape_cast %154 : vector<1x128x128xbf16> to vector<128x128xbf16>
    %cst_144 = arith.constant dense<0.000000e+00> : vector<128x128xf32>
    %156 = tpu.matmul %153, %155, %cst_144 {dimension_numbers = #tpu.dot_dimension_numbers<[1], [0], [0], [1], [0, 0, 1, 1], [], []>} : vector<128x128xbf16>, vector<128x128xbf16>, vector<128x128xf32> -> vector<128x128xf32>
    %157 = arith.addf %151, %156 : vector<128x128xf32>
    %158 = vector.broadcast %103 : vector<1x128xf32> to vector<128x128xf32>
    %159 = arith.mulf %157, %158 : vector<128x128xf32>
    %160 = vector.broadcast %104 : vector<1x128xf32> to vector<128x128xf32>
    %161 = arith.addf %159, %160 : vector<128x128xf32>
    %cst_145 = arith.constant 0.000000e+00 : f32
    %162 = vector.broadcast %cst_145 : f32 to vector<128x128xf32>
    %163 = arith.maximumf %161, %162 : vector<128x128xf32>
    %164 = vector.shape_cast %163 : vector<128x128xf32> to vector<1x8x16x128xf32>
    %165 = arith.truncf %164 : vector<1x8x16x128xf32> to vector<1x8x16x128xbf16>
    %c0_146 = arith.constant 0 : index
    %c0_147 = arith.constant 0 : index
    %c0_148 = arith.constant 0 : index
    %c0_149 = arith.constant 0 : index
    %166 = vector.load %arg9[%c0_146, %c0_147, %c0_148, %c0_149] : memref<1x8x16x128xbf16, #tpu.memory_space<vmem>>, vector<1x8x16x128xbf16>
    tpu.vector_store %arg9[%c0_146, %c0_147, %c0_148, %c0_149], %165 {strides = array<i32>} : memref<1x8x16x128xbf16, #tpu.memory_space<vmem>>, vector<1x8x16x128xbf16>,
    return
  }
  func.func @transform_0(%arg0: i32, %arg1: i32) -> (i32, i32, i32, i32) {
    %c0_i32 = arith.constant 0 : i32
    %c0_i32_0 = arith.constant 0 : i32
    %c0_i32_1 = arith.constant 0 : i32
    %c0_i32_2 = arith.constant 0 : i32
    return %arg0, %c0_i32, %c0_i32_0, %c0_i32_1 : i32, i32, i32, i32
  }
  func.func @transform_1(%arg0: i32, %arg1: i32) -> (i32, i32, i32) {
    %c0_i32 = arith.constant 0 : i32
    %c0_i32_0 = arith.constant 0 : i32
    %c0_i32_1 = arith.constant 0 : i32
    %c0_i32_2 = arith.constant 0 : i32
    return %c0_i32, %c0_i32_0, %c0_i32_1 : i32, i32, i32
  }
  func.func @transform_2(%arg0: i32, %arg1: i32) -> (i32, i32) {
    %c0_i32 = arith.constant 0 : i32
    %c0_i32_0 = arith.constant 0 : i32
    %c0_i32_1 = arith.constant 0 : i32
    return %c0_i32, %c0_i32_0 : i32, i32
  }
  func.func @transform_3(%arg0: i32, %arg1: i32) -> (i32, i32) {
    %c0_i32 = arith.constant 0 : i32
    %c0_i32_0 = arith.constant 0 : i32
    %c0_i32_1 = arith.constant 0 : i32
    return %c0_i32, %c0_i32_0 : i32, i32
  }
  func.func @transform_4(%arg0: i32, %arg1: i32) -> (i32, i32, i32) {
    %c0_i32 = arith.constant 0 : i32
    %c0_i32_0 = arith.constant 0 : i32
    %c0_i32_1 = arith.constant 0 : i32
    %c0_i32_2 = arith.constant 0 : i32
    return %c0_i32, %c0_i32_0, %c0_i32_1 : i32, i32, i32
  }
  func.func @transform_5(%arg0: i32, %arg1: i32) -> (i32, i32) {
    %c0_i32 = arith.constant 0 : i32
    %c0_i32_0 = arith.constant 0 : i32
    %c0_i32_1 = arith.constant 0 : i32
    return %c0_i32, %c0_i32_0 : i32, i32
  }
  func.func @transform_6(%arg0: i32, %arg1: i32) -> (i32, i32) {
    %c0_i32 = arith.constant 0 : i32
    %c0_i32_0 = arith.constant 0 : i32
    %c0_i32_1 = arith.constant 0 : i32
    return %c0_i32, %c0_i32_0 : i32, i32
  }
  func.func @transform_7(%arg0: i32, %arg1: i32) -> (i32, i32, i32, i32) {
    %c0_i32 = arith.constant 0 : i32
    %c0_i32_0 = arith.constant 0 : i32
    %c0_i32_1 = arith.constant 0 : i32
    return %arg0, %arg1, %c0_i32, %c0_i32_0 : i32, i32, i32, i32
  }
}

</mosaic_0001>

<llo_original>
// kernel: tpu_custom_call.1
$region0: #{tpu_custom_call.1}
  #allocation0 [shape = 'u32[]', space=smem, size = 0x4, offset = 0x4, fixed_abs, tag = 'smem constant byte address 0x4 - core index']
  #allocation1 [shape = 'u32[144,128]{1,0:T(1,128)}', space=vmem, size = 0x12000, scoped, tag = 'internal scratch']
  #allocation2 [shape = 'bf16[10,24,128]{2,1,0:T(8,128)(2,1)}', space=vmem, size = 0xf000, scoped, tag = 'scratch operand']
  %s0 = inlined_call_operand.hbm [shape: bf16[2,20,24,128], index: 0, kind: input, shape index: {}]
  %s1 = inlined_call_operand.hbm [shape: bf16[9,128,128], index: 1, kind: input, shape index: {}]
  %s2 = inlined_call_operand.vmem [shape: f32[1,128], index: 2, kind: input, shape index: {}]
  %s3 = inlined_call_operand.vmem [shape: f32[1,128], index: 3, kind: input, shape index: {}]
  %s4 = inlined_call_operand.hbm [shape: bf16[9,128,128], index: 4, kind: input, shape index: {}]
  %s5 = inlined_call_operand.vmem [shape: f32[1,128], index: 5, kind: input, shape index: {}]
  %s6 = inlined_call_operand.vmem [shape: f32[1,128], index: 6, kind: input, shape index: {}]
  %s7 = inlined_call_operand.hbm [shape: bf16[2,16,16,128], index: 7, kind: output, shape index: {}]
  %s8 = sld [smem:[#allocation0]]
  $region81: #{tpu_custom_call.1} parent=0
    _
  %s10 = ssub.s32 1, %s8
  %s11 = scalar_select 0, %s10, %s8
  $region1: #{tpu_custom_call.1} parent=0
    #allocation3 [shape = 'u8[245760]{0}', space=vmem, size = 0x3c000, scoped, tag = 'input window, operand 0']
    #allocation4 [shape = 's32[2]{0}', space=sflag, size = 0x8, scoped, tag = 'scoped memory for tpu_custom_call.1']
    #allocation5 [shape = 's32[2]{0}', space=sflag, size = 0x8, scoped, tag = 'scoped memory for tpu_custom_call.1']
    #allocation6 [shape = 'u8[294912]{0}', space=vmem, size = 0x48000, scoped, tag = 'input window, operand 1, single buffered']
    #allocation7 [shape = 's32[1]{0}', space=sflag, size = 0x4, scoped, tag = 'scoped memory for tpu_custom_call.1']
    #allocation8 [shape = 'u8[294912]{0}', space=vmem, size = 0x48000, scoped, tag = 'input window, operand 4, single buffered']
    #allocation9 [shape = 'u8[65536]{0}', space=vmem, size = 0x10000, scoped, tag = 'output window, operand 0']
    %12 = vsyncpa [#allocation4], 0
    %s13 = scalar_lea.sflag [#allocation4], 1
    %14 = vsyncpa %s13, 0
    %15 = vsyncpa [#allocation7], 0
    %16 = vsyncpa [#allocation5], 0
    %s17 = scalar_lea.sflag [#allocation5], 1
    %18 = vsyncpa %s17, 0
    loop: start=0, step=1, limit=6
    $region2: #{tpu_custom_call.1} parent=1 // loop_pre_header
      _
    $region3: #{tpu_custom_call.1} parent=1 // loop_header
      %s20 = sphi 0, %s24
      %p21 = scmp.ge.s32.totalorder %s20, 6
      %s27 = sphi 0, %s39
      %s28 = sphi 0, %s35
      %s29 = sphi 0, %s27
      %s30 = sphi 0, %s28
      %s31 = sphi 0, %s29
      %s32 = sphi 0, %s30
      %s42 = sphi 0, %s44
      %s45 = sphi 0, %s42
      %s46 = sphi 0, %s45
      %s62 = sphi 0, %s46
      %s66 = sphi 0, %s66
      %s68 = sphi 0, %s66
      %s69 = sphi 0, %s68
      %s83 = sphi 0, %s69
      %s87 = sphi 0, %s87
      %s89 = sphi 0, %s87
      %s90 = sphi 0, %s89
      %s104 = sphi 0, %s90
      %s108 = sphi 0, %s108
      %s110 = sphi 0, %s108
      %s111 = sphi 0, %s110
      %s125 = sphi 0, %s111
      %s129 = sphi 0, %s129
      %s131 = sphi 0, %s129
      %s132 = sphi 0, %s131
      %s146 = sphi 0, %s132
      %s150 = sphi 0, %s150
      %s152 = sphi 0, %s150
      %s153 = sphi 0, %s152
      %s167 = sphi 0, %s153
      %s171 = sphi 0, %s171
      %s173 = sphi 0, %s171
      %s174 = sphi 0, %s173
      %s188 = sphi 0, %s174
      %s196 = sphi 0, %s198
      %s199 = sphi 0, %s196
      %s200 = sphi 0, %s199
      %s216 = sphi 0, %s200
    $region4: #{tpu_custom_call.1} parent=1 // loop_header_branch
      %23 = sbr.rel (%p21) target = $region8
    $region5: #{tpu_custom_call.1} parent=1 // loop_body
      %s25 = ssub.s32 %s20, 1
      %s26 = ssub.s32 %s20, 2
      %s33 = sadd.s32 1, %s28
      %p34 = scmp.ge.s32.totalorder %s33, 2
      %s35 = scalar_select %p34, 0, %s33
      %s36 = sadd.s32 1, %s27
      %s37 = scalar_select %p34, %s36, %s27
      %p38 = scmp.ge.s32.totalorder %s37, 2
      %s39 = scalar_select %p38, 0, %s37
      %s40 = ssub.s32 %s27, %s39
      %p41 = scmp.eq.s32.totalorder %s40, 0
      %s43 = sadd.s32 %s42, 1
      %s44 = scalar_select %p41, %s42, %s43
      %p47 = pneg %p41
      %p48 = scmp.eq.s32.totalorder %s20, 3
      %p49 = por %p47, %p48
      %p50 = scmp.ne.s32.totalorder %s42, %s45
      %p51 = scmp.eq.s32.totalorder %s20, 0
      %p52 = por %p50, %p51
      %p53 = scmp.ne.s32.totalorder %s42, %s45
      %p54 = scmp.eq.s32.totalorder %s25, 3
      %p55 = por %p53, %p54
      %p56 = scmp.ne.s32.totalorder %s45, %s46
      %p57 = scmp.eq.s32.totalorder %s25, 0
      %p58 = por %p56, %p57
      %p59 = scmp.ne.s32.totalorder %s45, %s46
      %p60 = scmp.eq.s32.totalorder %s26, 3
      %p61 = por %p59, %p60
      %p63 = scmp.ne.s32.totalorder %s46, %s62
      %p64 = scmp.eq.s32.totalorder %s26, 0
      %p65 = por %p63, %p64
      %s67 = sadd.s32 %s66, 1
      %p70 = scmp.eq.s32.totalorder %s20, 3
      %p71 = scmp.ne.s32.totalorder %s66, %s68
      %p72 = scmp.eq.s32.totalorder %s20, 0
      %p73 = por %p71, %p72
      %p74 = scmp.ne.s32.totalorder %s66, %s68
      %p75 = scmp.eq.s32.totalorder %s25, 3
      %p76 = por %p74, %p75
      %p77 = scmp.ne.s32.totalorder %s68, %s69
      %p78 = scmp.eq.s32.totalorder %s25, 0
      %p79 = por %p77, %p78
      %p80 = scmp.ne.s32.totalorder %s68, %s69
      %p81 = scmp.eq.s32.totalorder %s26, 3
      %p82 = por %p80, %p81
      %p84 = scmp.ne.s32.totalorder %s69, %s83
      %p85 = scmp.eq.s32.totalorder %s26, 0
      %p86 = por %p84, %p85
      %s88 = sadd.s32 %s87, 1
      %p91 = scmp.eq.s32.totalorder %s20, 3
      %p92 = scmp.ne.s32.totalorder %s87, %s89
      %p93 = scmp.eq.s32.totalorder %s20, 0
      %p94 = por %p92, %p93
      %p95 = scmp.ne.s32.totalorder %s87, %s89
      %p96 = scmp.eq.s32.totalorder %s25, 3
      %p97 = por %p95, %p96
      %p98 = scmp.ne.s32.totalorder %s89, %s90
      %p99 = scmp.eq.s32.totalorder %s25, 0
      %p100 = por %p98, %p99
      %p101 = scmp.ne.s32.totalorder %s89, %s90
      %p102 = scmp.eq.s32.totalorder %s26, 3
      %p103 = por %p101, %p102
      %p105 = scmp.ne.s32.totalorder %s90, %s104
      %p106 = scmp.eq.s32.totalorder %s26, 0
      %p107 = por %p105, %p106
      %s109 = sadd.s32 %s108, 1
      %p112 = scmp.eq.s32.totalorder %s20, 3
      %p113 = scmp.ne.s32.totalorder %s108, %s110
      %p114 = scmp.eq.s32.totalorder %s20, 0
      %p115 = por %p113, %p114
      %p116 = scmp.ne.s32.totalorder %s108, %s110
      %p117 = scmp.eq.s32.totalorder %s25, 3
      %p118 = por %p116, %p117
      %p119 = scmp.ne.s32.totalorder %s110, %s111
      %p120 = scmp.eq.s32.totalorder %s25, 0
      %p121 = por %p119, %p120
      %p122 = scmp.ne.s32.totalorder %s110, %s111
      %p123 = scmp.eq.s32.totalorder %s26, 3
      %p124 = por %p122, %p123
      %p126 = scmp.ne.s32.totalorder %s111, %s125
      %p127 = scmp.eq.s32.totalorder %s26, 0
      %p128 = por %p126, %p127
      %s130 = sadd.s32 %s129, 1
      %p133 = scmp.eq.s32.totalorder %s20, 3
      %p134 = scmp.ne.s32.totalorder %s129, %s131
      %p135 = scmp.eq.s32.totalorder %s20, 0
      %p136 = por %p134, %p135
      %p137 = scmp.ne.s32.totalorder %s129, %s131
      %p138 = scmp.eq.s32.totalorder %s25, 3
      %p139 = por %p137, %p138
      %p140 = scmp.ne.s32.totalorder %s131, %s132
      %p141 = scmp.eq.s32.totalorder %s25, 0
      %p142 = por %p140, %p141
      %p143 = scmp.ne.s32.totalorder %s131, %s132
      %p144 = scmp.eq.s32.totalorder %s26, 3
      %p145 = por %p143, %p144
      %p147 = scmp.ne.s32.totalorder %s132, %s146
      %p148 = scmp.eq.s32.totalorder %s26, 0
      %p149 = por %p147, %p148
      %s151 = sadd.s32 %s150, 1
      %p154 = scmp.eq.s32.totalorder %s20, 3
      %p155 = scmp.ne.s32.totalorder %s150, %s152
      %p156 = scmp.eq.s32.totalorder %s20, 0
      %p157 = por %p155, %p156
      %p158 = scmp.ne.s32.totalorder %s150, %s152
      %p159 = scmp.eq.s32.totalorder %s25, 3
      %p160 = por %p158, %p159
      %p161 = scmp.ne.s32.totalorder %s152, %s153
      %p162 = scmp.eq.s32.totalorder %s25, 0
      %p163 = por %p161, %p162
      %p164 = scmp.ne.s32.totalorder %s152, %s153
      %p165 = scmp.eq.s32.totalorder %s26, 3
      %p166 = por %p164, %p165
      %p168 = scmp.ne.s32.totalorder %s153, %s167
      %p169 = scmp.eq.s32.totalorder %s26, 0
      %p170 = por %p168, %p169
      %s172 = sadd.s32 %s171, 1
      %p175 = scmp.eq.s32.totalorder %s20, 3
      %p176 = scmp.ne.s32.totalorder %s171, %s173
      %p177 = scmp.eq.s32.totalorder %s20, 0
      %p178 = por %p176, %p177
      %p179 = scmp.ne.s32.totalorder %s171, %s173
      %p180 = scmp.eq.s32.totalorder %s25, 3
      %p181 = por %p179, %p180
      %p182 = scmp.ne.s32.totalorder %s173, %s174
      %p183 = scmp.eq.s32.totalorder %s25, 0
      %p184 = por %p182, %p183
      %p185 = scmp.ne.s32.totalorder %s173, %s174
      %p186 = scmp.eq.s32.totalorder %s26, 3
      %p187 = por %p185, %p186
      %p189 = scmp.ne.s32.totalorder %s174, %s188
      %p190 = scmp.eq.s32.totalorder %s26, 0
      %p191 = por %p189, %p190
      %s192 = ssub.s32 %s27, %s39
      %s193 = ssub.s32 %s28, %s35
      %s194 = sor.u32 %s192, %s193
      %p195 = scmp.eq.s32.totalorder %s194, 0
      %s197 = sadd.s32 %s196, 1
      %s198 = scalar_select %p195, %s196, %s197
      %p201 = pneg %p195
      %p202 = scmp.eq.s32.totalorder %s20, 3
      %p203 = por %p201, %p202
      %p204 = scmp.ne.s32.totalorder %s196, %s199
      %p205 = scmp.eq.s32.totalorder %s20, 0
      %p206 = por %p204, %p205
      %p207 = scmp.ne.s32.totalorder %s196, %s199
      %p208 = scmp.eq.s32.totalorder %s25, 3
      %p209 = por %p207, %p208
      %p210 = scmp.ne.s32.totalorder %s199, %s200
      %p211 = scmp.eq.s32.totalorder %s25, 0
      %p212 = por %p210, %p211
      %p213 = scmp.ne.s32.totalorder %s199, %s200
      %p214 = scmp.eq.s32.totalorder %s26, 3
      %p215 = por %p213, %p214
      %p217 = scmp.ne.s32.totalorder %s200, %s216
      %p218 = scmp.eq.s32.totalorder %s26, 0
      %p219 = por %p217, %p218
      %p220 = scmp.le.s32.totalorder 1, %s20
      %p221 = scmp.lt.s32.totalorder %s20, 5
      %p222 = pnand %p220, %p221
      %p223 = pneg %p222
      // Predicated region
      $region9: #{tpu_custom_call.1} parent=5 // pred_check
        _
      $region10: #{tpu_custom_call.1} parent=5 // pred_check_branch
        %225 = sbr.rel (%p222) target = $region12
      $region11: #{tpu_custom_call.1} parent=5 // pred_region
        %s226 = ssub.s32 %s20, 1
        // Predicated region
        $region13: #{tpu_custom_call.1} parent=11 // pred_check
          %p227 = pneg %p79
        $region14: #{tpu_custom_call.1} parent=11 // pred_check_branch
          %229 = sbr.rel (%p227) target = $region16
        $region15: #{tpu_custom_call.1} parent=11 // pred_region
          %s231 = ssub.s32 9216, 9216
          %232 = vsyncadd [#allocation7], %s231
          %s233 = sshll.u32 [#allocation6], 4
          %s234 = int_to_ptr.vmem [resolvable:$true] %s233
          %239 = dma.hbm_to_vmem [thread:$0]  %s1, 9216, %s234, [#allocation7], 64, 64, 4
        $region16: #{tpu_custom_call.1} parent=11 // pred_fallthru
          _
        // Predicated region
        $region17: #{tpu_custom_call.1} parent=11 // pred_check
          %p240 = pneg %p100
        $region18: #{tpu_custom_call.1} parent=11 // pred_check_branch
          %242 = sbr.rel (%p240) target = $region20
        $region19: #{tpu_custom_call.1} parent=11 // pred_region
          _
        $region20: #{tpu_custom_call.1} parent=11 // pred_fallthru
          _
        // Predicated region
        $region21: #{tpu_custom_call.1} parent=11 // pred_check
          %p243 = pneg %p121
        $region22: #{tpu_custom_call.1} parent=11 // pred_check_branch
          %245 = sbr.rel (%p243) target = $region24
        $region23: #{tpu_custom_call.1} parent=11 // pred_region
          _
        $region24: #{tpu_custom_call.1} parent=11 // pred_fallthru
          _
        // Predicated region
        $region25: #{tpu_custom_call.1} parent=11 // pred_check
          %p246 = pneg %p142
        $region26: #{tpu_custom_call.1} parent=11 // pred_check_branch
          %248 = sbr.rel (%p246) target = $region28
        $region27: #{tpu_custom_call.1} parent=11 // pred_region
          %s250 = ssub.s32 9216, 9216
          %251 = vsyncadd [#allocation7], %s250
          %s252 = sshll.u32 [#allocation8], 4
          %s253 = int_to_ptr.vmem [resolvable:$true] %s252
          %258 = dma.hbm_to_vmem [thread:$0]  %s4, 9216, %s253, [#allocation7], 64, 64, 4
        $region28: #{tpu_custom_call.1} parent=11 // pred_fallthru
          _
        // Predicated region
        $region29: #{tpu_custom_call.1} parent=11 // pred_check
          %p259 = pneg %p163
        $region30: #{tpu_custom_call.1} parent=11 // pred_check_branch
          %261 = sbr.rel (%p259) target = $region32
        $region31: #{tpu_custom_call.1} parent=11 // pred_region
          _
        $region32: #{tpu_custom_call.1} parent=11 // pred_fallthru
          _
        // Predicated region
        $region33: #{tpu_custom_call.1} parent=11 // pred_check
          %p262 = pneg %p184
        $region34: #{tpu_custom_call.1} parent=11 // pred_check_branch
          %264 = sbr.rel (%p262) target = $region36
        $region35: #{tpu_custom_call.1} parent=11 // pred_region
          _
        $region36: #{tpu_custom_call.1} parent=11 // pred_fallthru
          _
      $region12: #{tpu_custom_call.1} parent=5 // pred_fallthru
        _
      %p265 = scmp.lt.s32.totalorder %s20, 4
      // Predicated region
      $region37: #{tpu_custom_call.1} parent=5 // pred_check
        %p266 = pneg %p265
      $region38: #{tpu_custom_call.1} parent=5 // pred_check_branch
        %268 = sbr.rel (%p266) target = $region40
      $region39: #{tpu_custom_call.1} parent=5 // pred_region
        // Predicated region
        $region41: #{tpu_custom_call.1} parent=39 // pred_check
          %p269 = pneg %p52
        $region42: #{tpu_custom_call.1} parent=39 // pred_check_branch
          %271 = sbr.rel (%p269) target = $region44
        $region43: #{tpu_custom_call.1} parent=39 // pred_region
          %s272 = sand.u32 %s42, 1
          %s273 = scalar_lea.sflag [#allocation4], %s272
          %s274 = sand.u32 %s42, 1
          %s275 = smul.addr %s274, 240
          %s276 = scalar_lea.vmem [#allocation3], %s275
          %s278 = ssub.s32 3840, 3840
          %279 = vsyncadd %s273, %s278
          %s280 = smul.addr %s27, 60
          %s281 = smul.addr %s280, 64
          %s282 = scalar_lea.hbm %s0, %s281
          %s283 = sshll.u32 %s276, 4
          %s284 = int_to_ptr.vmem [resolvable:$true] %s283
          %289 = dma.hbm_to_vmem [thread:$0]  %s282, 3840, %s284, %s273, 64, 64, 4
        $region44: #{tpu_custom_call.1} parent=39 // pred_fallthru
          _
      $region40: #{tpu_custom_call.1} parent=5 // pred_fallthru
        _
      %p290 = scmp.le.s32.totalorder 1, %s20
      %p291 = scmp.lt.s32.totalorder %s20, 5
      %p292 = pnand %p290, %p291
      %p293 = pneg %p292
      // Predicated region
      $region45: #{tpu_custom_call.1} parent=5 // pred_check
        _
      $region46: #{tpu_custom_call.1} parent=5 // pred_check_branch
        %295 = sbr.rel (%p292) target = $region48
      $region47: #{tpu_custom_call.1} parent=5 // pred_region
        %s296 = ssub.s32 %s20, 1
        %s297 = sand.u32 %s45, 1
        %s298 = scalar_lea.sflag [#allocation4], %s297
        %s299 = sand.u32 %s45, 1
        %s300 = smul.addr %s299, 240
        %s301 = scalar_lea.vmem [#allocation3], %s300
        // Predicated region
        $region49: #{tpu_custom_call.1} parent=47 // pred_check
          %p302 = pneg %p58
        $region50: #{tpu_custom_call.1} parent=47 // pred_check_branch
          %304 = sbr.rel (%p302) target = $region52
        $region51: #{tpu_custom_call.1} parent=47 // pred_region
          %305 = dma.done %s298, 3840
        $region52: #{tpu_custom_call.1} parent=47 // pred_fallthru
          _
        // Predicated region
        $region53: #{tpu_custom_call.1} parent=47 // pred_check
          %p306 = pneg %p79
        $region54: #{tpu_custom_call.1} parent=47 // pred_check_branch
          %308 = sbr.rel (%p306) target = $region56
        $region55: #{tpu_custom_call.1} parent=47 // pred_region
          %309 = dma.done [#allocation7], 9216
        $region56: #{tpu_custom_call.1} parent=47 // pred_fallthru
          _
        // Predicated region
        $region57: #{tpu_custom_call.1} parent=47 // pred_check
          %p310 = pneg %p142
        $region58: #{tpu_custom_call.1} parent=47 // pred_check_branch
          %312 = sbr.rel (%p310) target = $region60
        $region59: #{tpu_custom_call.1} parent=47 // pred_region
          %313 = dma.done [#allocation7], 9216
        $region60: #{tpu_custom_call.1} parent=47 // pred_fallthru
          _
        %s314 = sand.u32 %s45, 1
        %s315 = scalar_lea.sflag [#allocation4], %s314
        %s316 = sand.u32 %s45, 1
        %s317 = smul.addr %s316, 240
        %s318 = scalar_lea.vmem [#allocation3], %s317
        %p319 = pneg %p58
        %p320 = pneg %p55
        %p321 = pneg %p79
        %p322 = pneg %p76
        %p323 = pneg %p100
        %p324 = pneg %p97
        %p325 = pneg %p121
        %p326 = pneg %p118
        %p327 = pneg %p142
        %p328 = pneg %p139
        %p329 = pneg %p163
        %p330 = pneg %p160
        %p331 = pneg %p184
        %p332 = pneg %p181
        %p333 = pneg %p212
        %p334 = pneg %p209
        %s335 = sand.u32 %s199, 1
        %s336 = scalar_lea.sflag [#allocation5], %s335
        %s337 = sand.u32 %s199, 1
        %s338 = smul.addr %s337, 64
        %s339 = scalar_lea.vmem [#allocation9], %s338
        %s340 = smul.u32 8, %s30
        %s342 = smul.u32 %s30, 8
        %v343 = vld [vmem:[%s2] sm:$0x1]
        %v344 = vld [vmem:[%s3] sm:$0x1]
        %s345 = smul.u32 %s342, 3
        %s346 = smul.addr %s345, 4
        %s347 = scalar_lea.vmem %s301, %s346 [#allocation3]
        %v348 = vld [vmem:[%s347] sm:$0xf]
        %v349 = vld [vmem:[%s347 + $0x4] sm:$0xf]
        %v350 = vld [vmem:[%s347 + $0xc] sm:$0xf]
        %v351 = vld [vmem:[%s347 + $0x10] sm:$0xf]
        %v352 = vld [vmem:[%s347 + $0x18] sm:$0xf]
        %v353 = vld [vmem:[%s347 + $0x1c] sm:$0xf]
        %v354 = vld [vmem:[%s347 + $0x24] sm:$0xf]
        %v355 = vld [vmem:[%s347 + $0x28] sm:$0xf]
        %v356 = vld [vmem:[%s347 + $0x30] sm:$0xf]
        %v357 = vld [vmem:[%s347 + $0x34] sm:$0xf]
        %v358 = vld [vmem:[%s347 + $0x3c] sm:$0xf]
        %v359 = vld [vmem:[%s347 + $0x40] sm:$0xf]
        %v360 = vld [vmem:[%s347 + $0x48] sm:$0xf]
        %v361 = vld [vmem:[%s347 + $0x4c] sm:$0xf]
        %v362 = vld [vmem:[%s347 + $0x54] sm:$0xf]
        %v363 = vld [vmem:[%s347 + $0x58] sm:$0xf]
        %v364 = vld [vmem:[%s347 + $0x60] sm:$0xf]
        %v365 = vld [vmem:[%s347 + $0x64] sm:$0xf]
        %v366 = vld [vmem:[%s347 + $0x6c] sm:$0xf]
        %v367 = vld [vmem:[%s347 + $0x70] sm:$0xf]
        %v368 = vld [vmem:[#allocation6] sm:$0xf]
        %v369 = vld [vmem:[#allocation6 + $0x4] sm:$0xf]
        %v370 = vld [vmem:[#allocation6 + $0x8] sm:$0xf]
        %v371 = vld [vmem:[#allocation6 + $0xc] sm:$0xf]
        %v372 = vld [vmem:[#allocation6 + $0x10] sm:$0xf]
        %v373 = vld [vmem:[#allocation6 + $0x14] sm:$0xf]
        %v374 = vld [vmem:[#allocation6 + $0x18] sm:$0xf]
        %v375 = vld [vmem:[#allocation6 + $0x1c] sm:$0xf]
        %v376 = vld [vmem:[#allocation6 + $0x20] sm:$0xf]
        %v377 = vld [vmem:[#allocation6 + $0x24] sm:$0xf]
        %v378 = vld [vmem:[#allocation6 + $0x28] sm:$0xf]
        %v379 = vld [vmem:[#allocation6 + $0x2c] sm:$0xf]
        %v380 = vld [vmem:[#allocation6 + $0x30] sm:$0xf]
        %v381 = vld [vmem:[#allocation6 + $0x34] sm:$0xf]
        %v382 = vld [vmem:[#allocation6 + $0x38] sm:$0xf]
        %v383 = vld [vmem:[#allocation6 + $0x3c] sm:$0xf]
        %v384 = vld [vmem:[%s347 + $0x8] sm:$0x1]
        %v385 = vld [vmem:[%s347 + $0x14] sm:$0x1]
        %v386 = vld [vmem:[%s347 + $0x20] sm:$0x1]
        %v387 = vld [vmem:[%s347 + $0x2c] sm:$0x1]
        %v388 = vld [vmem:[%s347 + $0x38] sm:$0x1]
        %v389 = vld [vmem:[%s347 + $0x44] sm:$0x1]
        %v390 = vld [vmem:[%s347 + $0x50] sm:$0x1]
        %v391 = vld [vmem:[%s347 + $0x5c] sm:$0x1]
        %v392 = vld [vmem:[%s347 + $0x68] sm:$0x1]
        %v393 = vld [vmem:[%s347 + $0x74] sm:$0x1]
        %vm394 = vsmask.f32 3328
        %vm395 = vsmask.f32 7440
        %vm396 = vmor %vm394, %vm395
        %v398 = vshrl.u32 %v348, 16
        %v400 = vrot.slane %v398, 4
        %v401 = vshll.u32 %v348, 16
        %v403 = vrot.slane %v401, 5
        %v404 = vor.u32 %v400, %v403
        %v405 = vrot.slane %v404, 4
        %v407 = vshll.u32 %v349, 16
        %v409 = vrot.slane %v407, 5
        %v410 = vsel %vm396, %v405, %v409
        %v411 = vshrl.u32 %v349, 16
        %v413 = vrot.slane %v411, 4
        %v414 = vor.u32 %v413, %v409
        %v415 = vrot.slane %v414, 4
        %v417 = vshll.u32 %v384, 16
        %v419 = vrot.slane %v417, 5
        %v420 = vsel %vm396, %v415, %v419
        %v422 = vshrl.u32 %v350, 16
        %v424 = vrot.slane %v422, 4
        %v425 = vshll.u32 %v350, 16
        %v427 = vrot.slane %v425, 5
        %v428 = vor.u32 %v424, %v427
        %v429 = vrot.slane %v428, 4
        %v431 = vshll.u32 %v351, 16
        %v433 = vrot.slane %v431, 5
        %v434 = vsel %vm396, %v429, %v433
        %v435 = vshrl.u32 %v351, 16
        %v437 = vrot.slane %v435, 4
        %v438 = vor.u32 %v437, %v433
        %v439 = vrot.slane %v438, 4
        %v441 = vshll.u32 %v385, 16
        %v443 = vrot.slane %v441, 5
        %v444 = vsel %vm396, %v439, %v443
        %v446 = vshrl.u32 %v352, 16
        %v448 = vrot.slane %v446, 4
        %v449 = vshll.u32 %v352, 16
        %v451 = vrot.slane %v449, 5
        %v452 = vor.u32 %v448, %v451
        %v453 = vrot.slane %v452, 4
        %v455 = vshll.u32 %v353, 16
        %v457 = vrot.slane %v455, 5
        %v458 = vsel %vm396, %v453, %v457
        %v459 = vshrl.u32 %v353, 16
        %v461 = vrot.slane %v459, 4
        %v462 = vor.u32 %v461, %v457
        %v463 = vrot.slane %v462, 4
        %v465 = vshll.u32 %v386, 16
        %v467 = vrot.slane %v465, 5
        %v468 = vsel %vm396, %v463, %v467
        %v470 = vshrl.u32 %v354, 16
        %v472 = vrot.slane %v470, 4
        %v473 = vshll.u32 %v354, 16
        %v475 = vrot.slane %v473, 5
        %v476 = vor.u32 %v472, %v475
        %v477 = vrot.slane %v476, 4
        %v479 = vshll.u32 %v355, 16
        %v481 = vrot.slane %v479, 5
        %v482 = vsel %vm396, %v477, %v481
        %v483 = vshrl.u32 %v355, 16
        %v485 = vrot.slane %v483, 4
        %v486 = vor.u32 %v485, %v481
        %v487 = vrot.slane %v486, 4
        %v489 = vshll.u32 %v387, 16
        %v491 = vrot.slane %v489, 5
        %v492 = vsel %vm396, %v487, %v491
        %v494 = vshrl.u32 %v356, 16
        %v496 = vrot.slane %v494, 4
        %v497 = vshll.u32 %v356, 16
        %v499 = vrot.slane %v497, 5
        %v500 = vor.u32 %v496, %v499
        %v501 = vrot.slane %v500, 4
        %v503 = vshll.u32 %v357, 16
        %v505 = vrot.slane %v503, 5
        %v506 = vsel %vm396, %v501, %v505
        %v507 = vshrl.u32 %v357, 16
        %v509 = vrot.slane %v507, 4
        %v510 = vor.u32 %v509, %v505
        %v511 = vrot.slane %v510, 4
        %v513 = vshll.u32 %v388, 16
        %v515 = vrot.slane %v513, 5
        %v516 = vsel %vm396, %v511, %v515
        %v518 = vshrl.u32 %v358, 16
        %v520 = vrot.slane %v518, 4
        %v521 = vshll.u32 %v358, 16
        %v523 = vrot.slane %v521, 5
        %v524 = vor.u32 %v520, %v523
        %v525 = vrot.slane %v524, 4
        %v527 = vshll.u32 %v359, 16
        %v529 = vrot.slane %v527, 5
        %v530 = vsel %vm396, %v525, %v529
        %v531 = vshrl.u32 %v359, 16
        %v533 = vrot.slane %v531, 4
        %v534 = vor.u32 %v533, %v529
        %v535 = vrot.slane %v534, 4
        %v537 = vshll.u32 %v389, 16
        %v539 = vrot.slane %v537, 5
        %v540 = vsel %vm396, %v535, %v539
        %v542 = vshrl.u32 %v360, 16
        %v544 = vrot.slane %v542, 4
        %v545 = vshll.u32 %v360, 16
        %v547 = vrot.slane %v545, 5
        %v548 = vor.u32 %v544, %v547
        %v549 = vrot.slane %v548, 4
        %v551 = vshll.u32 %v361, 16
        %v553 = vrot.slane %v551, 5
        %v554 = vsel %vm396, %v549, %v553
        %v555 = vshrl.u32 %v361, 16
        %v557 = vrot.slane %v555, 4
        %v558 = vor.u32 %v557, %v553
        %v559 = vrot.slane %v558, 4
        %v561 = vshll.u32 %v390, 16
        %v563 = vrot.slane %v561, 5
        %v564 = vsel %vm396, %v559, %v563
        %v566 = vshrl.u32 %v362, 16
        %v568 = vrot.slane %v566, 4
        %v569 = vshll.u32 %v362, 16
        %v571 = vrot.slane %v569, 5
        %v572 = vor.u32 %v568, %v571
        %v573 = vrot.slane %v572, 4
        %v575 = vshll.u32 %v363, 16
        %v577 = vrot.slane %v575, 5
        %v578 = vsel %vm396, %v573, %v577
        %v579 = vshrl.u32 %v363, 16
        %v581 = vrot.slane %v579, 4
        %v582 = vor.u32 %v581, %v577
        %v583 = vrot.slane %v582, 4
        %v585 = vshll.u32 %v391, 16
        %v587 = vrot.slane %v585, 5
        %v588 = vsel %vm396, %v583, %v587
        %v590 = vshrl.u32 %v364, 16
        %v592 = vrot.slane %v590, 4
        %v593 = vshll.u32 %v364, 16
        %v595 = vrot.slane %v593, 5
        %v596 = vor.u32 %v592, %v595
        %v597 = vrot.slane %v596, 4
        %v599 = vshll.u32 %v365, 16
        %v601 = vrot.slane %v599, 5
        %v602 = vsel %vm396, %v597, %v601
        %v603 = vshrl.u32 %v365, 16
        %v605 = vrot.slane %v603, 4
        %v606 = vor.u32 %v605, %v601
        %v607 = vrot.slane %v606, 4
        %v609 = vshll.u32 %v392, 16
        %v611 = vrot.slane %v609, 5
        %v612 = vsel %vm396, %v607, %v611
        %v614 = vshrl.u32 %v366, 16
        %v616 = vrot.slane %v614, 4
        %v617 = vshll.u32 %v366, 16
        %v619 = vrot.slane %v617, 5
        %v620 = vor.u32 %v616, %v619
        %v621 = vrot.slane %v620, 4
        %v623 = vshll.u32 %v367, 16
        %v625 = vrot.slane %v623, 5
        %v626 = vsel %vm396, %v621, %v625
        %v627 = vshrl.u32 %v367, 16
        %v629 = vrot.slane %v627, 4
        %v630 = vor.u32 %v629, %v625
        %v631 = vrot.slane %v630, 4
        %v633 = vshll.u32 %v393, 16
        %v635 = vrot.slane %v633, 5
        %v636 = vsel %vm396, %v631, %v635
        %s637 = scalar_lea.vmem [#allocation6], 64
        %v638 = vld [vmem:[%s637] sm:$0xf]
        %v639 = vld [vmem:[%s637 + $0x4] sm:$0xf]
        %v640 = vld [vmem:[%s637 + $0x8] sm:$0xf]
        %v641 = vld [vmem:[%s637 + $0xc] sm:$0xf]
        %v642 = vld [vmem:[%s637 + $0x10] sm:$0xf]
        %v643 = vld [vmem:[%s637 + $0x14] sm:$0xf]
        %v644 = vld [vmem:[%s637 + $0x18] sm:$0xf]
        %v645 = vld [vmem:[%s637 + $0x1c] sm:$0xf]
        %v646 = vld [vmem:[%s637 + $0x20] sm:$0xf]
        %v647 = vld [vmem:[%s637 + $0x24] sm:$0xf]
        %v648 = vld [vmem:[%s637 + $0x28] sm:$0xf]
        %v649 = vld [vmem:[%s637 + $0x2c] sm:$0xf]
        %v650 = vld [vmem:[%s637 + $0x30] sm:$0xf]
        %v651 = vld [vmem:[%s637 + $0x34] sm:$0xf]
        %v652 = vld [vmem:[%s637 + $0x38] sm:$0xf]
        %v653 = vld [vmem:[%s637 + $0x3c] sm:$0xf]
        %v654 = vunpack.c.l.b16 %v410
        %v655 = vunpack.c.l.b16 %v420
        %v656 = vunpack.c.l.b16 %v434
        %v657 = vunpack.c.l.b16 %v444
        %v658 = vunpack.c.l.b16 %v458
        %v659 = vunpack.c.l.b16 %v468
        %v660 = vunpack.c.l.b16 %v482
        %v661 = vunpack.c.l.b16 %v492
        %v662 = vunpack.c.l.b16 %v506
        %v663 = vunpack.c.l.b16 %v516
        %v664 = vunpack.c.l.b16 %v530
        %v665 = vunpack.c.l.b16 %v540
        %v666 = vunpack.c.l.b16 %v554
        %v667 = vunpack.c.l.b16 %v564
        %v668 = vunpack.c.l.b16 %v578
        %v669 = vunpack.c.l.b16 %v588
        %v670 = vunpack.c.l.b16 %v602
        %v671 = vunpack.c.l.b16 %v612
        %v672 = vunpack.c.l.b16 %v626
        %v673 = vunpack.c.l.b16 %v636
        %v674 = vpack.c.b16 %v655, %v654
        %v675 = vpack.c.b16 %v657, %v656
        %v676 = vpack.c.b16 %v659, %v658
        %v677 = vpack.c.b16 %v661, %v660
        %v678 = vpack.c.b16 %v663, %v662
        %v679 = vpack.c.b16 %v665, %v664
        %v680 = vpack.c.b16 %v667, %v666
        %v681 = vpack.c.b16 %v669, %v668
        %v682 = vpack.c.b16 %v671, %v670
        %v683 = vpack.c.b16 %v673, %v672
        %v710 = vunpack.c.l.b16 %v638
        %v711 = vunpack.c.l.b16 %v639
        %v712 = vunpack.c.l.b16 %v640
        %v713 = vunpack.c.l.b16 %v641
        %v714 = vunpack.c.l.b16 %v642
        %v715 = vunpack.c.l.b16 %v643
        %v716 = vunpack.c.l.b16 %v644
        %v717 = vunpack.c.l.b16 %v645
        %v718 = vunpack.c.l.b16 %v646
        %v719 = vunpack.c.l.b16 %v647
        %v720 = vunpack.c.l.b16 %v648
        %v721 = vunpack.c.l.b16 %v649
        %v722 = vunpack.c.l.b16 %v650
        %v723 = vunpack.c.l.b16 %v651
        %v724 = vunpack.c.l.b16 %v652
        %v725 = vunpack.c.l.b16 %v653
        %v726 = vpack.c.b16 %v711, %v710
        %v727 = vpack.c.b16 %v713, %v712
        %v728 = vpack.c.b16 %v715, %v714
        %v729 = vpack.c.b16 %v717, %v716
        %v730 = vpack.c.b16 %v719, %v718
        %v731 = vpack.c.b16 %v721, %v720
        %v732 = vpack.c.b16 %v723, %v722
        %v733 = vpack.c.b16 %v725, %v724
        %742 = vmatprep.subr.bf16.mxu0 0
        %743 = vmatpush1.bf16.msra.mxu0 %v733
        %744 = vmatprep.subr.bf16.mxu0 0
        %745 = vmatpush1.bf16.msra.mxu0 %v732
        %746 = vmatprep.subr.bf16.mxu0 0
        %747 = vmatpush1.bf16.msra.mxu0 %v731
        %748 = vmatprep.subr.bf16.mxu0 0
        %749 = vmatpush1.bf16.msra.mxu0 %v730
        %750 = vmatprep.subr.bf16.mxu0 0
        %751 = vmatpush1.bf16.msra.mxu0 %v729
        %752 = vmatprep.subr.bf16.mxu0 0
        %753 = vmatpush1.bf16.msra.mxu0 %v728
        %754 = vmatprep.subr.bf16.mxu0 0
        %755 = vmatpush1.bf16.msra.mxu0 %v727
        %756 = vmatprep.subr.bf16.mxu0 0
        %757 = vmatpush1.bf16.msra.mxu0 %v726
        %758 = vmatprep.subr.bf16.mxu0 0
        %759 = vmatpush2.bf16.msra.mxu0 0
        %760 = vmatprep.subr.bf16.mxu0 0
        %761 = vmatpush2.bf16.msra.mxu0 0
        %762 = vmatprep.subr.bf16.mxu0 0
        %763 = vmatpush2.bf16.msra.mxu0 0
        %764 = vmatprep.subr.bf16.mxu0 0
        %765 = vmatpush2.bf16.msra.mxu0 0
        %766 = vmatprep.subr.bf16.mxu0 0
        %767 = vmatpush2.bf16.msra.mxu0 0
        %768 = vmatprep.subr.bf16.mxu0 0
        %769 = vmatpush2.bf16.msra.mxu0 0
        %770 = vmatprep.subr.bf16.mxu0 0
        %771 = vmatpush2.bf16.msra.mxu0 0
        %772 = vmatprep.subr.bf16.mxu0 0
        %773 = vmatpush2.bf16.msra.mxu0 0
        %774 = vmatprep.mubr.bf16.mxu0 0
        %775 = vmatmul.mubr.bf16.gmra.mxu0 %v674
        %v776 = vpop.f32.mrf.mxu0
        %v777 = vadd.f32 0.0, %v776
        %v778 = vpop.f32.mrf.mxu0
        %v779 = vpop.f32.mrf.mxu0
        %v780 = vadd.f32 0.0, %v779
        %v781 = vpop.f32.mrf.mxu0
        %782 = vmatprep.mubr.bf16.mxu0 0
        %783 = vmatmul.mubr.bf16.gmra.mxu0 %v675
        %v784 = vpop.f32.mrf.mxu0
        %v785 = vadd.f32 0.0, %v784
        %v786 = vpop.f32.mrf.mxu0
        %v787 = vpop.f32.mrf.mxu0
        %v788 = vadd.f32 0.0, %v787
        %v789 = vpop.f32.mrf.mxu0
        %790 = vmatprep.mubr.bf16.mxu0 0
        %791 = vmatmul.mubr.bf16.gmra.mxu0 %v676
        %v792 = vpop.f32.mrf.mxu0
        %v793 = vadd.f32 0.0, %v792
        %v794 = vpop.f32.mrf.mxu0
        %v795 = vpop.f32.mrf.mxu0
        %v796 = vadd.f32 0.0, %v795
        %v797 = vpop.f32.mrf.mxu0
        %798 = vmatprep.mubr.bf16.mxu0 0
        %799 = vmatmul.mubr.bf16.gmra.mxu0 %v677
        %v800 = vpop.f32.mrf.mxu0
        %v801 = vadd.f32 0.0, %v800
        %v802 = vpop.f32.mrf.mxu0
        %v803 = vpop.f32.mrf.mxu0
        %v804 = vadd.f32 0.0, %v803
        %v805 = vpop.f32.mrf.mxu0
        %806 = vmatprep.mubr.bf16.mxu0 0
        %807 = vmatmul.mubr.bf16.gmra.mxu0 %v678
        %v808 = vpop.f32.mrf.mxu0
        %v809 = vadd.f32 0.0, %v808
        %v810 = vpop.f32.mrf.mxu0
        %v811 = vpop.f32.mrf.mxu0
        %v812 = vadd.f32 0.0, %v811
        %v813 = vpop.f32.mrf.mxu0
        %814 = vmatprep.mubr.bf16.mxu0 0
        %815 = vmatmul.mubr.bf16.gmra.mxu0 %v679
        %v816 = vpop.f32.mrf.mxu0
        %v817 = vadd.f32 0.0, %v816
        %v818 = vpop.f32.mrf.mxu0
        %v819 = vpop.f32.mrf.mxu0
        %v820 = vadd.f32 0.0, %v819
        %v821 = vpop.f32.mrf.mxu0
        %822 = vmatprep.mubr.bf16.mxu0 0
        %823 = vmatmul.mubr.bf16.gmra.mxu0 %v680
        %v824 = vpop.f32.mrf.mxu0
        %v825 = vadd.f32 0.0, %v824
        %v826 = vpop.f32.mrf.mxu0
        %v827 = vpop.f32.mrf.mxu0
        %v828 = vadd.f32 0.0, %v827
        %v829 = vpop.f32.mrf.mxu0
        %830 = vmatprep.mubr.bf16.mxu0 0
        %831 = vmatmul.mubr.bf16.gmra.mxu0 %v681
        %v832 = vpop.f32.mrf.mxu0
        %v833 = vadd.f32 0.0, %v832
        %v834 = vpop.f32.mrf.mxu0
        %v835 = vpop.f32.mrf.mxu0
        %v836 = vadd.f32 0.0, %v835
        %v837 = vpop.f32.mrf.mxu0
        %838 = vmatprep.mubr.bf16.mxu0 0
        %839 = vmatmul.mubr.bf16.gmra.mxu0 %v682
        %v840 = vpop.f32.mrf.mxu0
        %v841 = vadd.f32 0.0, %v840
        %v842 = vpop.f32.mrf.mxu0
        %v843 = vpop.f32.mrf.mxu0
        %v844 = vadd.f32 0.0, %v843
        %v845 = vpop.f32.mrf.mxu0
        %846 = vmatprep.mubr.bf16.mxu0 0
        %847 = vmatmul.mubr.bf16.gmra.mxu0 %v683
        %v848 = vpop.f32.mrf.mxu0
        %v849 = vadd.f32 0.0, %v848
        %v850 = vpop.f32.mrf.mxu0
        %v851 = vpop.f32.mrf.mxu0
        %v852 = vadd.f32 0.0, %v851
        %v853 = vpop.f32.mrf.mxu0
        %854 = vdwg.mxu0
        %v875 = vunpack.c.l.b16 %v348
        %v876 = vunpack.c.l.b16 %v349
        %v877 = vunpack.c.l.b16 %v350
        %v878 = vunpack.c.l.b16 %v351
        %v879 = vunpack.c.l.b16 %v352
        %v880 = vunpack.c.l.b16 %v353
        %v881 = vunpack.c.l.b16 %v354
        %v882 = vunpack.c.l.b16 %v355
        %v883 = vunpack.c.l.b16 %v356
        %v884 = vunpack.c.l.b16 %v357
        %v885 = vunpack.c.l.b16 %v358
        %v886 = vunpack.c.l.b16 %v359
        %v887 = vunpack.c.l.b16 %v360
        %v888 = vunpack.c.l.b16 %v361
        %v889 = vunpack.c.l.b16 %v362
        %v890 = vunpack.c.l.b16 %v363
        %v891 = vunpack.c.l.b16 %v364
        %v892 = vunpack.c.l.b16 %v365
        %v893 = vunpack.c.l.b16 %v366
        %v894 = vunpack.c.l.b16 %v367
        %v895 = vpack.c.b16 %v876, %v875
        %v896 = vpack.c.b16 %v878, %v877
        %v897 = vpack.c.b16 %v880, %v879
        %v898 = vpack.c.b16 %v882, %v881
        %v899 = vpack.c.b16 %v884, %v883
        %v900 = vpack.c.b16 %v886, %v885
        %v901 = vpack.c.b16 %v888, %v887
        %v902 = vpack.c.b16 %v890, %v889
        %v903 = vpack.c.b16 %v892, %v891
        %v904 = vpack.c.b16 %v894, %v893
        %v931 = vunpack.c.l.b16 %v368
        %v932 = vunpack.c.l.b16 %v369
        %v933 = vunpack.c.l.b16 %v370
        %v934 = vunpack.c.l.b16 %v371
        %v935 = vunpack.c.l.b16 %v372
        %v936 = vunpack.c.l.b16 %v373
        %v937 = vunpack.c.l.b16 %v374
        %v938 = vunpack.c.l.b16 %v375
        %v939 = vunpack.c.l.b16 %v376
        %v940 = vunpack.c.l.b16 %v377
        %v941 = vunpack.c.l.b16 %v378
        %v942 = vunpack.c.l.b16 %v379
        %v943 = vunpack.c.l.b16 %v380
        %v944 = vunpack.c.l.b16 %v381
        %v945 = vunpack.c.l.b16 %v382
        %v946 = vunpack.c.l.b16 %v383
        %v947 = vpack.c.b16 %v932, %v931
        %v948 = vpack.c.b16 %v934, %v933
        %v949 = vpack.c.b16 %v936, %v935
        %v950 = vpack.c.b16 %v938, %v937
        %v951 = vpack.c.b16 %v940, %v939
        %v952 = vpack.c.b16 %v942, %v941
        %v953 = vpack.c.b16 %v944, %v943
        %v954 = vpack.c.b16 %v946, %v945
        %963 = vmatprep.subr.bf16.mxu0 0
        %964 = vmatpush1.bf16.msra.mxu0 %v954
        %965 = vmatprep.subr.bf16.mxu0 0
        %966 = vmatpush1.bf16.msra.mxu0 %v953
        %967 = vmatprep.subr.bf16.mxu0 0
        %968 = vmatpush1.bf16.msra.mxu0 %v952
        %969 = vmatprep.subr.bf16.mxu0 0
        %970 = vmatpush1.bf16.msra.mxu0 %v951
        %971 = vmatprep.subr.bf16.mxu0 0
        %972 = vmatpush1.bf16.msra.mxu0 %v950
        %973 = vmatprep.subr.bf16.mxu0 0
        %974 = vmatpush1.bf16.msra.mxu0 %v949
        %975 = vmatprep.subr.bf16.mxu0 0
        %976 = vmatpush1.bf16.msra.mxu0 %v948
        %977 = vmatprep.subr.bf16.mxu0 0
        %978 = vmatpush1.bf16.msra.mxu0 %v947
        %979 = vmatprep.subr.bf16.mxu0 0
        %980 = vmatpush2.bf16.msra.mxu0 0
        %981 = vmatprep.subr.bf16.mxu0 0
        %982 = vmatpush2.bf16.msra.mxu0 0
        %983 = vmatprep.subr.bf16.mxu0 0
        %984 = vmatpush2.bf16.msra.mxu0 0
        %985 = vmatprep.subr.bf16.mxu0 0
        %986 = vmatpush2.bf16.msra.mxu0 0
        %987 = vmatprep.subr.bf16.mxu0 0
        %988 = vmatpush2.bf16.msra.mxu0 0
        %989 = vmatprep.subr.bf16.mxu0 0
        %990 = vmatpush2.bf16.msra.mxu0 0
        %991 = vmatprep.subr.bf16.mxu0 0
        %992 = vmatpush2.bf16.msra.mxu0 0
        %993 = vmatprep.subr.bf16.mxu0 0
        %994 = vmatpush2.bf16.msra.mxu0 0
        %995 = vmatprep.mubr.bf16.mxu0 0
        %996 = vmatmul.mubr.bf16.gmra.mxu0 %v895
        %v997 = vpop.f32.mrf.mxu0
        %v998 = vadd.f32 %v777, %v997
        %v999 = vpop.f32.mrf.mxu0
        %v1000 = vpop.f32.mrf.mxu0
        %v1001 = vadd.f32 %v780, %v1000
        %v1002 = vpop.f32.mrf.mxu0
        %1003 = vmatprep.mubr.bf16.mxu0 0
        %1004 = vmatmul.mubr.bf16.gmra.mxu0 %v896
        %v1005 = vpop.f32.mrf.mxu0
        %v1006 = vadd.f32 %v785, %v1005
        %v1007 = vpop.f32.mrf.mxu0
        %v1008 = vpop.f32.mrf.mxu0
        %v1009 = vadd.f32 %v788, %v1008
        %v1010 = vpop.f32.mrf.mxu0
        %1011 = vmatprep.mubr.bf16.mxu0 0
        %1012 = vmatmul.mubr.bf16.gmra.mxu0 %v897
        %v1013 = vpop.f32.mrf.mxu0
        %v1014 = vadd.f32 %v793, %v1013
        %v1015 = vpop.f32.mrf.mxu0
        %v1016 = vpop.f32.mrf.mxu0
        %v1017 = vadd.f32 %v796, %v1016
        %v1018 = vpop.f32.mrf.mxu0
        %1019 = vmatprep.mubr.bf16.mxu0 0
        %1020 = vmatmul.mubr.bf16.gmra.mxu0 %v898
        %v1021 = vpop.f32.mrf.mxu0
        %v1022 = vadd.f32 %v801, %v1021
        %v1023 = vpop.f32.mrf.mxu0
        %v1024 = vpop.f32.mrf.mxu0
        %v1025 = vadd.f32 %v804, %v1024
        %v1026 = vpop.f32.mrf.mxu0
        %1027 = vmatprep.mubr.bf16.mxu0 0
        %1028 = vmatmul.mubr.bf16.gmra.mxu0 %v899
        %v1029 = vpop.f32.mrf.mxu0
        %v1030 = vadd.f32 %v809, %v1029
        %v1031 = vpop.f32.mrf.mxu0
        %v1032 = vpop.f32.mrf.mxu0
        %v1033 = vadd.f32 %v812, %v1032
        %v1034 = vpop.f32.mrf.mxu0
        %1035 = vmatprep.mubr.bf16.mxu0 0
        %1036 = vmatmul.mubr.bf16.gmra.mxu0 %v900
        %v1037 = vpop.f32.mrf.mxu0
        %v1038 = vadd.f32 %v817, %v1037
        %v1039 = vpop.f32.mrf.mxu0
        %v1040 = vpop.f32.mrf.mxu0
        %v1041 = vadd.f32 %v820, %v1040
        %v1042 = vpop.f32.mrf.mxu0
        %1043 = vmatprep.mubr.bf16.mxu0 0
        %1044 = vmatmul.mubr.bf16.gmra.mxu0 %v901
        %v1045 = vpop.f32.mrf.mxu0
        %v1046 = vadd.f32 %v825, %v1045
        %v1047 = vpop.f32.mrf.mxu0
        %v1048 = vpop.f32.mrf.mxu0
        %v1049 = vadd.f32 %v828, %v1048
        %v1050 = vpop.f32.mrf.mxu0
        %1051 = vmatprep.mubr.bf16.mxu0 0
        %1052 = vmatmul.mubr.bf16.gmra.mxu0 %v902
        %v1053 = vpop.f32.mrf.mxu0
        %v1054 = vadd.f32 %v833, %v1053
        %v1055 = vpop.f32.mrf.mxu0
        %v1056 = vpop.f32.mrf.mxu0
        %v1057 = vadd.f32 %v836, %v1056
        %v1058 = vpop.f32.mrf.mxu0
        %1059 = vmatprep.mubr.bf16.mxu0 0
        %1060 = vmatmul.mubr.bf16.gmra.mxu0 %v903
        %v1061 = vpop.f32.mrf.mxu0
        %v1062 = vadd.f32 %v841, %v1061
        %v1063 = vpop.f32.mrf.mxu0
        %v1064 = vpop.f32.mrf.mxu0
        %v1065 = vadd.f32 %v844, %v1064
        %v1066 = vpop.f32.mrf.mxu0
        %1067 = vmatprep.mubr.bf16.mxu0 0
        %1068 = vmatmul.mubr.bf16.gmra.mxu0 %v904
        %v1069 = vpop.f32.mrf.mxu0
        %v1070 = vadd.f32 %v849, %v1069
        %v1071 = vpop.f32.mrf.mxu0
        %v1072 = vpop.f32.mrf.mxu0
        %v1073 = vadd.f32 %v852, %v1072
        %v1074 = vpop.f32.mrf.mxu0
        %1075 = vdwg.mxu0
        %v1076 = vld [vmem:[%s347] sm:$0xe]
        %v1077 = vld [vmem:[%s347 + $0xc] sm:$0xe]
        %v1078 = vld [vmem:[%s347 + $0x18] sm:$0xe]
        %v1079 = vld [vmem:[%s347 + $0x24] sm:$0xe]
        %v1080 = vld [vmem:[%s347 + $0x30] sm:$0xe]
        %v1081 = vld [vmem:[%s347 + $0x3c] sm:$0xe]
        %v1082 = vld [vmem:[%s347 + $0x48] sm:$0xe]
        %v1083 = vld [vmem:[%s347 + $0x54] sm:$0xe]
        %v1084 = vld [vmem:[%s347 + $0x60] sm:$0xe]
        %v1085 = vld [vmem:[%s347 + $0x6c] sm:$0xe]
        %vm1106 = vcmask 1042432
        %vm1107 = vcmask 1046532
        %vm1108 = vmor %vm1106, %vm1107
        %v1109 = vrot.slane %v1076, 5
        %v1110 = vrot.slane %v1109, 4
        %v1111 = vrot.slane %v349, 5
        %v1112 = vsel %vm1108, %v1110, %v1111
        %v1113 = vrot.slane %v1111, 4
        %v1114 = vrot.slane %v384, 5
        %v1115 = vsel %vm1108, %v1113, %v1114
        %v1116 = vrot.slane %v1077, 5
        %v1117 = vrot.slane %v1116, 4
        %v1118 = vrot.slane %v351, 5
        %v1119 = vsel %vm1108, %v1117, %v1118
        %v1120 = vrot.slane %v1118, 4
        %v1121 = vrot.slane %v385, 5
        %v1122 = vsel %vm1108, %v1120, %v1121
        %v1123 = vrot.slane %v1078, 5
        %v1124 = vrot.slane %v1123, 4
        %v1125 = vrot.slane %v353, 5
        %v1126 = vsel %vm1108, %v1124, %v1125
        %v1127 = vrot.slane %v1125, 4
        %v1128 = vrot.slane %v386, 5
        %v1129 = vsel %vm1108, %v1127, %v1128
        %v1130 = vrot.slane %v1079, 5
        %v1131 = vrot.slane %v1130, 4
        %v1132 = vrot.slane %v355, 5
        %v1133 = vsel %vm1108, %v1131, %v1132
        %v1134 = vrot.slane %v1132, 4
        %v1135 = vrot.slane %v387, 5
        %v1136 = vsel %vm1108, %v1134, %v1135
        %v1137 = vrot.slane %v1080, 5
        %v1138 = vrot.slane %v1137, 4
        %v1139 = vrot.slane %v357, 5
        %v1140 = vsel %vm1108, %v1138, %v1139
        %v1141 = vrot.slane %v1139, 4
        %v1142 = vrot.slane %v388, 5
        %v1143 = vsel %vm1108, %v1141, %v1142
        %v1144 = vrot.slane %v1081, 5
        %v1145 = vrot.slane %v1144, 4
        %v1146 = vrot.slane %v359, 5
        %v1147 = vsel %vm1108, %v1145, %v1146
        %v1148 = vrot.slane %v1146, 4
        %v1149 = vrot.slane %v389, 5
        %v1150 = vsel %vm1108, %v1148, %v1149
        %v1151 = vrot.slane %v1082, 5
        %v1152 = vrot.slane %v1151, 4
        %v1153 = vrot.slane %v361, 5
        %v1154 = vsel %vm1108, %v1152, %v1153
        %v1155 = vrot.slane %v1153, 4
        %v1156 = vrot.slane %v390, 5
        %v1157 = vsel %vm1108, %v1155, %v1156
        %v1158 = vrot.slane %v1083, 5
        %v1159 = vrot.slane %v1158, 4
        %v1160 = vrot.slane %v363, 5
        %v1161 = vsel %vm1108, %v1159, %v1160
        %v1162 = vrot.slane %v1160, 4
        %v1163 = vrot.slane %v391, 5
        %v1164 = vsel %vm1108, %v1162, %v1163
        %v1165 = vrot.slane %v1084, 5
        %v1166 = vrot.slane %v1165, 4
        %v1167 = vrot.slane %v365, 5
        %v1168 = vsel %vm1108, %v1166, %v1167
        %v1169 = vrot.slane %v1167, 4
        %v1170 = vrot.slane %v392, 5
        %v1171 = vsel %vm1108, %v1169, %v1170
        %v1172 = vrot.slane %v1085, 5
        %v1173 = vrot.slane %v1172, 4
        %v1174 = vrot.slane %v367, 5
        %v1175 = vsel %vm1108, %v1173, %v1174
        %v1176 = vrot.slane %v1174, 4
        %v1177 = vrot.slane %v393, 5
        %v1178 = vsel %vm1108, %v1176, %v1177
        %s1179 = scalar_lea.vmem [#allocation6], 128
        %v1180 = vld [vmem:[%s1179] sm:$0xf]
        %v1181 = vld [vmem:[%s1179 + $0x4] sm:$0xf]
        %v1182 = vld [vmem:[%s1179 + $0x8] sm:$0xf]
        %v1183 = vld [vmem:[%s1179 + $0xc] sm:$0xf]
        %v1184 = vld [vmem:[%s1179 + $0x10] sm:$0xf]
        %v1185 = vld [vmem:[%s1179 + $0x14] sm:$0xf]
        %v1186 = vld [vmem:[%s1179 + $0x18] sm:$0xf]
        %v1187 = vld [vmem:[%s1179 + $0x1c] sm:$0xf]
        %v1188 = vld [vmem:[%s1179 + $0x20] sm:$0xf]
        %v1189 = vld [vmem:[%s1179 + $0x24] sm:$0xf]
        %v1190 = vld [vmem:[%s1179 + $0x28] sm:$0xf]
        %v1191 = vld [vmem:[%s1179 + $0x2c] sm:$0xf]
        %v1192 = vld [vmem:[%s1179 + $0x30] sm:$0xf]
        %v1193 = vld [vmem:[%s1179 + $0x34] sm:$0xf]
        %v1194 = vld [vmem:[%s1179 + $0x38] sm:$0xf]
        %v1195 = vld [vmem:[%s1179 + $0x3c] sm:$0xf]
        %v1196 = vunpack.c.l.b16 %v1112
        %v1197 = vunpack.c.l.b16 %v1115
        %v1198 = vunpack.c.l.b16 %v1119
        %v1199 = vunpack.c.l.b16 %v1122
        %v1200 = vunpack.c.l.b16 %v1126
        %v1201 = vunpack.c.l.b16 %v1129
        %v1202 = vunpack.c.l.b16 %v1133
        %v1203 = vunpack.c.l.b16 %v1136
        %v1204 = vunpack.c.l.b16 %v1140
        %v1205 = vunpack.c.l.b16 %v1143
        %v1206 = vunpack.c.l.b16 %v1147
        %v1207 = vunpack.c.l.b16 %v1150
        %v1208 = vunpack.c.l.b16 %v1154
        %v1209 = vunpack.c.l.b16 %v1157
        %v1210 = vunpack.c.l.b16 %v1161
        %v1211 = vunpack.c.l.b16 %v1164
        %v1212 = vunpack.c.l.b16 %v1168
        %v1213 = vunpack.c.l.b16 %v1171
        %v1214 = vunpack.c.l.b16 %v1175
        %v1215 = vunpack.c.l.b16 %v1178
        %v1216 = vpack.c.b16 %v1197, %v1196
        %v1217 = vpack.c.b16 %v1199, %v1198
        %v1218 = vpack.c.b16 %v1201, %v1200
        %v1219 = vpack.c.b16 %v1203, %v1202
        %v1220 = vpack.c.b16 %v1205, %v1204
        %v1221 = vpack.c.b16 %v1207, %v1206
        %v1222 = vpack.c.b16 %v1209, %v1208
        %v1223 = vpack.c.b16 %v1211, %v1210
        %v1224 = vpack.c.b16 %v1213, %v1212
        %v1225 = vpack.c.b16 %v1215, %v1214
        %v1252 = vunpack.c.l.b16 %v1180
        %v1253 = vunpack.c.l.b16 %v1181
        %v1254 = vunpack.c.l.b16 %v1182
        %v1255 = vunpack.c.l.b16 %v1183
        %v1256 = vunpack.c.l.b16 %v1184
        %v1257 = vunpack.c.l.b16 %v1185
        %v1258 = vunpack.c.l.b16 %v1186
        %v1259 = vunpack.c.l.b16 %v1187
        %v1260 = vunpack.c.l.b16 %v1188
        %v1261 = vunpack.c.l.b16 %v1189
        %v1262 = vunpack.c.l.b16 %v1190
        %v1263 = vunpack.c.l.b16 %v1191
        %v1264 = vunpack.c.l.b16 %v1192
        %v1265 = vunpack.c.l.b16 %v1193
        %v1266 = vunpack.c.l.b16 %v1194
        %v1267 = vunpack.c.l.b16 %v1195
        %v1268 = vpack.c.b16 %v1253, %v1252
        %v1269 = vpack.c.b16 %v1255, %v1254
        %v1270 = vpack.c.b16 %v1257, %v1256
        %v1271 = vpack.c.b16 %v1259, %v1258
        %v1272 = vpack.c.b16 %v1261, %v1260
        %v1273 = vpack.c.b16 %v1263, %v1262
        %v1274 = vpack.c.b16 %v1265, %v1264
        %v1275 = vpack.c.b16 %v1267, %v1266
        %1284 = vmatprep.subr.bf16.mxu0 0
        %1285 = vmatpush1.bf16.msra.mxu0 %v1275
        %1286 = vmatprep.subr.bf16.mxu0 0
        %1287 = vmatpush1.bf16.msra.mxu0 %v1274
        %1288 = vmatprep.subr.bf16.mxu0 0
        %1289 = vmatpush1.bf16.msra.mxu0 %v1273
        %1290 = vmatprep.subr.bf16.mxu0 0
        %1291 = vmatpush1.bf16.msra.mxu0 %v1272
        %1292 = vmatprep.subr.bf16.mxu0 0
        %1293 = vmatpush1.bf16.msra.mxu0 %v1271
        %1294 = vmatprep.subr.bf16.mxu0 0
        %1295 = vmatpush1.bf16.msra.mxu0 %v1270
        %1296 = vmatprep.subr.bf16.mxu0 0
        %1297 = vmatpush1.bf16.msra.mxu0 %v1269
        %1298 = vmatprep.subr.bf16.mxu0 0
        %1299 = vmatpush1.bf16.msra.mxu0 %v1268
        %1300 = vmatprep.subr.bf16.mxu0 0
        %1301 = vmatpush2.bf16.msra.mxu0 0
        %1302 = vmatprep.subr.bf16.mxu0 0
        %1303 = vmatpush2.bf16.msra.mxu0 0
        %1304 = vmatprep.subr.bf16.mxu0 0
        %1305 = vmatpush2.bf16.msra.mxu0 0
        %1306 = vmatprep.subr.bf16.mxu0 0
        %1307 = vmatpush2.bf16.msra.mxu0 0
        %1308 = vmatprep.subr.bf16.mxu0 0
        %1309 = vmatpush2.bf16.msra.mxu0 0
        %1310 = vmatprep.subr.bf16.mxu0 0
        %1311 = vmatpush2.bf16.msra.mxu0 0
        %1312 = vmatprep.subr.bf16.mxu0 0
        %1313 = vmatpush2.bf16.msra.mxu0 0
        %1314 = vmatprep.subr.bf16.mxu0 0
        %1315 = vmatpush2.bf16.msra.mxu0 0
        %1316 = vmatprep.mubr.bf16.mxu0 0
        %1317 = vmatmul.mubr.bf16.gmra.mxu0 %v1216
        %v1318 = vpop.f32.mrf.mxu0
        %v1319 = vadd.f32 0.0, %v1318
        %v1320 = vpop.f32.mrf.mxu0
        %v1321 = vpop.f32.mrf.mxu0
        %v1322 = vadd.f32 0.0, %v1321
        %v1323 = vpop.f32.mrf.mxu0
        %1324 = vmatprep.mubr.bf16.mxu0 0
        %1325 = vmatmul.mubr.bf16.gmra.mxu0 %v1217
        %v1326 = vpop.f32.mrf.mxu0
        %v1327 = vadd.f32 0.0, %v1326
        %v1328 = vpop.f32.mrf.mxu0
        %v1329 = vpop.f32.mrf.mxu0
        %v1330 = vadd.f32 0.0, %v1329
        %v1331 = vpop.f32.mrf.mxu0
        %1332 = vmatprep.mubr.bf16.mxu0 0
        %1333 = vmatmul.mubr.bf16.gmra.mxu0 %v1218
        %v1334 = vpop.f32.mrf.mxu0
        %v1335 = vadd.f32 0.0, %v1334
        %v1336 = vpop.f32.mrf.mxu0
        %v1337 = vpop.f32.mrf.mxu0
        %v1338 = vadd.f32 0.0, %v1337
        %v1339 = vpop.f32.mrf.mxu0
        %1340 = vmatprep.mubr.bf16.mxu0 0
        %1341 = vmatmul.mubr.bf16.gmra.mxu0 %v1219
        %v1342 = vpop.f32.mrf.mxu0
        %v1343 = vadd.f32 0.0, %v1342
        %v1344 = vpop.f32.mrf.mxu0
        %v1345 = vpop.f32.mrf.mxu0
        %v1346 = vadd.f32 0.0, %v1345
        %v1347 = vpop.f32.mrf.mxu0
        %1348 = vmatprep.mubr.bf16.mxu0 0
        %1349 = vmatmul.mubr.bf16.gmra.mxu0 %v1220
        %v1350 = vpop.f32.mrf.mxu0
        %v1351 = vadd.f32 0.0, %v1350
        %v1352 = vpop.f32.mrf.mxu0
        %v1353 = vpop.f32.mrf.mxu0
        %v1354 = vadd.f32 0.0, %v1353
        %v1355 = vpop.f32.mrf.mxu0
        %1356 = vmatprep.mubr.bf16.mxu0 0
        %1357 = vmatmul.mubr.bf16.gmra.mxu0 %v1221
        %v1358 = vpop.f32.mrf.mxu0
        %v1359 = vadd.f32 0.0, %v1358
        %v1360 = vpop.f32.mrf.mxu0
        %v1361 = vpop.f32.mrf.mxu0
        %v1362 = vadd.f32 0.0, %v1361
        %v1363 = vpop.f32.mrf.mxu0
        %1364 = vmatprep.mubr.bf16.mxu0 0
        %1365 = vmatmul.mubr.bf16.gmra.mxu0 %v1222
        %v1366 = vpop.f32.mrf.mxu0
        %v1367 = vadd.f32 0.0, %v1366
        %v1368 = vpop.f32.mrf.mxu0
        %v1369 = vpop.f32.mrf.mxu0
        %v1370 = vadd.f32 0.0, %v1369
        %v1371 = vpop.f32.mrf.mxu0
        %1372 = vmatprep.mubr.bf16.mxu0 0
        %1373 = vmatmul.mubr.bf16.gmra.mxu0 %v1223
        %v1374 = vpop.f32.mrf.mxu0
        %v1375 = vadd.f32 0.0, %v1374
        %v1376 = vpop.f32.mrf.mxu0
        %v1377 = vpop.f32.mrf.mxu0
        %v1378 = vadd.f32 0.0, %v1377
        %v1379 = vpop.f32.mrf.mxu0
        %1380 = vmatprep.mubr.bf16.mxu0 0
        %1381 = vmatmul.mubr.bf16.gmra.mxu0 %v1224
        %v1382 = vpop.f32.mrf.mxu0
        %v1383 = vadd.f32 0.0, %v1382
        %v1384 = vpop.f32.mrf.mxu0
        %v1385 = vpop.f32.mrf.mxu0
        %v1386 = vadd.f32 0.0, %v1385
        %v1387 = vpop.f32.mrf.mxu0
        %1388 = vmatprep.mubr.bf16.mxu0 0
        %1389 = vmatmul.mubr.bf16.gmra.mxu0 %v1225
        %v1390 = vpop.f32.mrf.mxu0
        %v1391 = vadd.f32 0.0, %v1390
        %v1392 = vpop.f32.mrf.mxu0
        %v1393 = vpop.f32.mrf.mxu0
        %v1394 = vadd.f32 0.0, %v1393
        %v1395 = vpop.f32.mrf.mxu0
        %1396 = vdwg.mxu0
        %v1397 = vadd.f32 %v998, %v1319
        %v1398 = vadd.f32 %v1001, %v1322
        %v1399 = vadd.f32 %v1006, %v1327
        %v1400 = vadd.f32 %v1009, %v1330
        %v1401 = vadd.f32 %v1014, %v1335
        %v1402 = vadd.f32 %v1017, %v1338
        %v1403 = vadd.f32 %v1022, %v1343
        %v1404 = vadd.f32 %v1025, %v1346
        %v1405 = vadd.f32 %v1030, %v1351
        %v1406 = vadd.f32 %v1033, %v1354
        %v1407 = vadd.f32 %v1038, %v1359
        %v1408 = vadd.f32 %v1041, %v1362
        %v1409 = vadd.f32 %v1046, %v1367
        %v1410 = vadd.f32 %v1049, %v1370
        %v1411 = vadd.f32 %v1054, %v1375
        %v1412 = vadd.f32 %v1057, %v1378
        %v1413 = vadd.f32 %v1062, %v1383
        %v1414 = vadd.f32 %v1065, %v1386
        %v1415 = vadd.f32 %v1070, %v1391
        %v1416 = vadd.f32 %v1073, %v1394
        %s1417 = sadd.s32 %s342, 1
        %s1418 = smul.u32 %s1417, 3
        %s1419 = smul.addr %s1418, 4
        %s1420 = scalar_lea.vmem %s301, %s1419 [#allocation3]
        %v1421 = vld [vmem:[%s1420] sm:$0xf]
        %v1422 = vld [vmem:[%s1420 + $0x4] sm:$0xf]
        %v1423 = vld [vmem:[%s1420 + $0xc] sm:$0xf]
        %v1424 = vld [vmem:[%s1420 + $0x10] sm:$0xf]
        %v1425 = vld [vmem:[%s1420 + $0x18] sm:$0xf]
        %v1426 = vld [vmem:[%s1420 + $0x1c] sm:$0xf]
        %v1427 = vld [vmem:[%s1420 + $0x24] sm:$0xf]
        %v1428 = vld [vmem:[%s1420 + $0x28] sm:$0xf]
        %v1429 = vld [vmem:[%s1420 + $0x30] sm:$0xf]
        %v1430 = vld [vmem:[%s1420 + $0x34] sm:$0xf]
        %v1431 = vld [vmem:[%s1420 + $0x3c] sm:$0xf]
        %v1432 = vld [vmem:[%s1420 + $0x40] sm:$0xf]
        %v1433 = vld [vmem:[%s1420 + $0x48] sm:$0xf]
        %v1434 = vld [vmem:[%s1420 + $0x4c] sm:$0xf]
        %v1435 = vld [vmem:[%s1420 + $0x54] sm:$0xf]
        %v1436 = vld [vmem:[%s1420 + $0x58] sm:$0xf]
        %v1437 = vld [vmem:[%s1420 + $0x60] sm:$0xf]
        %v1438 = vld [vmem:[%s1420 + $0x64] sm:$0xf]
        %v1439 = vld [vmem:[%s1420 + $0x6c] sm:$0xf]
        %v1440 = vld [vmem:[%s1420 + $0x70] sm:$0xf]
        %s1441 = scalar_lea.vmem [#allocation6], 192
        %v1442 = vld [vmem:[%s1441] sm:$0xf]
        %v1443 = vld [vmem:[%s1441 + $0x4] sm:$0xf]
        %v1444 = vld [vmem:[%s1441 + $0x8] sm:$0xf]
        %v1445 = vld [vmem:[%s1441 + $0xc] sm:$0xf]
        %v1446 = vld [vmem:[%s1441 + $0x10] sm:$0xf]
        %v1447 = vld [vmem:[%s1441 + $0x14] sm:$0xf]
        %v1448 = vld [vmem:[%s1441 + $0x18] sm:$0xf]
        %v1449 = vld [vmem:[%s1441 + $0x1c] sm:$0xf]
        %v1450 = vld [vmem:[%s1441 + $0x20] sm:$0xf]
        %v1451 = vld [vmem:[%s1441 + $0x24] sm:$0xf]
        %v1452 = vld [vmem:[%s1441 + $0x28] sm:$0xf]
        %v1453 = vld [vmem:[%s1441 + $0x2c] sm:$0xf]
        %v1454 = vld [vmem:[%s1441 + $0x30] sm:$0xf]
        %v1455 = vld [vmem:[%s1441 + $0x34] sm:$0xf]
        %v1456 = vld [vmem:[%s1441 + $0x38] sm:$0xf]
        %v1457 = vld [vmem:[%s1441 + $0x3c] sm:$0xf]
        %v1478 = vunpack.c.l.b16 %v1421
        %v1479 = vunpack.c.l.b16 %v1422
        %v1480 = vunpack.c.l.b16 %v1423
        %v1481 = vunpack.c.l.b16 %v1424
        %v1482 = vunpack.c.l.b16 %v1425
        %v1483 = vunpack.c.l.b16 %v1426
        %v1484 = vunpack.c.l.b16 %v1427
        %v1485 = vunpack.c.l.b16 %v1428
        %v1486 = vunpack.c.l.b16 %v1429
        %v1487 = vunpack.c.l.b16 %v1430
        %v1488 = vunpack.c.l.b16 %v1431
        %v1489 = vunpack.c.l.b16 %v1432
        %v1490 = vunpack.c.l.b16 %v1433
        %v1491 = vunpack.c.l.b16 %v1434
        %v1492 = vunpack.c.l.b16 %v1435
        %v1493 = vunpack.c.l.b16 %v1436
        %v1494 = vunpack.c.l.b16 %v1437
        %v1495 = vunpack.c.l.b16 %v1438
        %v1496 = vunpack.c.l.b16 %v1439
        %v1497 = vunpack.c.l.b16 %v1440
        %v1498 = vpack.c.b16 %v1479, %v1478
        %v1499 = vpack.c.b16 %v1481, %v1480
        %v1500 = vpack.c.b16 %v1483, %v1482
        %v1501 = vpack.c.b16 %v1485, %v1484
        %v1502 = vpack.c.b16 %v1487, %v1486
        %v1503 = vpack.c.b16 %v1489, %v1488
        %v1504 = vpack.c.b16 %v1491, %v1490
        %v1505 = vpack.c.b16 %v1493, %v1492
        %v1506 = vpack.c.b16 %v1495, %v1494
        %v1507 = vpack.c.b16 %v1497, %v1496
        %v1534 = vunpack.c.l.b16 %v1442
        %v1535 = vunpack.c.l.b16 %v1443
        %v1536 = vunpack.c.l.b16 %v1444
        %v1537 = vunpack.c.l.b16 %v1445
        %v1538 = vunpack.c.l.b16 %v1446
        %v1539 = vunpack.c.l.b16 %v1447
        %v1540 = vunpack.c.l.b16 %v1448
        %v1541 = vunpack.c.l.b16 %v1449
        %v1542 = vunpack.c.l.b16 %v1450
        %v1543 = vunpack.c.l.b16 %v1451
        %v1544 = vunpack.c.l.b16 %v1452
        %v1545 = vunpack.c.l.b16 %v1453
        %v1546 = vunpack.c.l.b16 %v1454
        %v1547 = vunpack.c.l.b16 %v1455
        %v1548 = vunpack.c.l.b16 %v1456
        %v1549 = vunpack.c.l.b16 %v1457
        %v1550 = vpack.c.b16 %v1535, %v1534
        %v1551 = vpack.c.b16 %v1537, %v1536
        %v1552 = vpack.c.b16 %v1539, %v1538
        %v1553 = vpack.c.b16 %v1541, %v1540
        %v1554 = vpack.c.b16 %v1543, %v1542
        %v1555 = vpack.c.b16 %v1545, %v1544
        %v1556 = vpack.c.b16 %v1547, %v1546
        %v1557 = vpack.c.b16 %v1549, %v1548
        %1566 = vmatprep.subr.bf16.mxu0 0
        %1567 = vmatpush1.bf16.msra.mxu0 %v1557
        %1568 = vmatprep.subr.bf16.mxu0 0
        %1569 = vmatpush1.bf16.msra.mxu0 %v1556
        %1570 = vmatprep.subr.bf16.mxu0 0
        %1571 = vmatpush1.bf16.msra.mxu0 %v1555
        %1572 = vmatprep.subr.bf16.mxu0 0
        %1573 = vmatpush1.bf16.msra.mxu0 %v1554
        %1574 = vmatprep.subr.bf16.mxu0 0
        %1575 = vmatpush1.bf16.msra.mxu0 %v1553
        %1576 = vmatprep.subr.bf16.mxu0 0
        %1577 = vmatpush1.bf16.msra.mxu0 %v1552
        %1578 = vmatprep.subr.bf16.mxu0 0
        %1579 = vmatpush1.bf16.msra.mxu0 %v1551
        %1580 = vmatprep.subr.bf16.mxu0 0
        %1581 = vmatpush1.bf16.msra.mxu0 %v1550
        %1582 = vmatprep.subr.bf16.mxu0 0
        %1583 = vmatpush2.bf16.msra.mxu0 0
        %1584 = vmatprep.subr.bf16.mxu0 0
        %1585 = vmatpush2.bf16.msra.mxu0 0
        %1586 = vmatprep.subr.bf16.mxu0 0
        %1587 = vmatpush2.bf16.msra.mxu0 0
        %1588 = vmatprep.subr.bf16.mxu0 0
        %1589 = vmatpush2.bf16.msra.mxu0 0
        %1590 = vmatprep.subr.bf16.mxu0 0
        %1591 = vmatpush2.bf16.msra.mxu0 0
        %1592 = vmatprep.subr.bf16.mxu0 0
        %1593 = vmatpush2.bf16.msra.mxu0 0
        %1594 = vmatprep.subr.bf16.mxu0 0
        %1595 = vmatpush2.bf16.msra.mxu0 0
        %1596 = vmatprep.subr.bf16.mxu0 0
        %1597 = vmatpush2.bf16.msra.mxu0 0
        %1598 = vmatprep.mubr.bf16.mxu0 0
        %1599 = vmatmul.mubr.bf16.gmra.mxu0 %v1498
        %v1600 = vpop.f32.mrf.mxu0
        %v1601 = vadd.f32 0.0, %v1600
        %v1602 = vpop.f32.mrf.mxu0
        %v1603 = vpop.f32.mrf.mxu0
        %v1604 = vadd.f32 0.0, %v1603
        %v1605 = vpop.f32.mrf.mxu0
        %1606 = vmatprep.mubr.bf16.mxu0 0
        %1607 = vmatmul.mubr.bf16.gmra.mxu0 %v1499
        %v1608 = vpop.f32.mrf.mxu0
        %v1609 = vadd.f32 0.0, %v1608
        %v1610 = vpop.f32.mrf.mxu0
        %v1611 = vpop.f32.mrf.mxu0
        %v1612 = vadd.f32 0.0, %v1611
        %v1613 = vpop.f32.mrf.mxu0
        %1614 = vmatprep.mubr.bf16.mxu0 0
        %1615 = vmatmul.mubr.bf16.gmra.mxu0 %v1500
        %v1616 = vpop.f32.mrf.mxu0
        %v1617 = vadd.f32 0.0, %v1616
        %v1618 = vpop.f32.mrf.mxu0
        %v1619 = vpop.f32.mrf.mxu0
        %v1620 = vadd.f32 0.0, %v1619
        %v1621 = vpop.f32.mrf.mxu0
        %1622 = vmatprep.mubr.bf16.mxu0 0
        %1623 = vmatmul.mubr.bf16.gmra.mxu0 %v1501
        %v1624 = vpop.f32.mrf.mxu0
        %v1625 = vadd.f32 0.0, %v1624
        %v1626 = vpop.f32.mrf.mxu0
        %v1627 = vpop.f32.mrf.mxu0
        %v1628 = vadd.f32 0.0, %v1627
        %v1629 = vpop.f32.mrf.mxu0
        %1630 = vmatprep.mubr.bf16.mxu0 0
        %1631 = vmatmul.mubr.bf16.gmra.mxu0 %v1502
        %v1632 = vpop.f32.mrf.mxu0
        %v1633 = vadd.f32 0.0, %v1632
        %v1634 = vpop.f32.mrf.mxu0
        %v1635 = vpop.f32.mrf.mxu0
        %v1636 = vadd.f32 0.0, %v1635
        %v1637 = vpop.f32.mrf.mxu0
        %1638 = vmatprep.mubr.bf16.mxu0 0
        %1639 = vmatmul.mubr.bf16.gmra.mxu0 %v1503
        %v1640 = vpop.f32.mrf.mxu0
        %v1641 = vadd.f32 0.0, %v1640
        %v1642 = vpop.f32.mrf.mxu0
        %v1643 = vpop.f32.mrf.mxu0
        %v1644 = vadd.f32 0.0, %v1643
        %v1645 = vpop.f32.mrf.mxu0
        %1646 = vmatprep.mubr.bf16.mxu0 0
        %1647 = vmatmul.mubr.bf16.gmra.mxu0 %v1504
        %v1648 = vpop.f32.mrf.mxu0
        %v1649 = vadd.f32 0.0, %v1648
        %v1650 = vpop.f32.mrf.mxu0
        %v1651 = vpop.f32.mrf.mxu0
        %v1652 = vadd.f32 0.0, %v1651
        %v1653 = vpop.f32.mrf.mxu0
        %1654 = vmatprep.mubr.bf16.mxu0 0
        %1655 = vmatmul.mubr.bf16.gmra.mxu0 %v1505
        %v1656 = vpop.f32.mrf.mxu0
        %v1657 = vadd.f32 0.0, %v1656
        %v1658 = vpop.f32.mrf.mxu0
        %v1659 = vpop.f32.mrf.mxu0
        %v1660 = vadd.f32 0.0, %v1659
        %v1661 = vpop.f32.mrf.mxu0
        %1662 = vmatprep.mubr.bf16.mxu0 0
        %1663 = vmatmul.mubr.bf16.gmra.mxu0 %v1506
        %v1664 = vpop.f32.mrf.mxu0
        %v1665 = vadd.f32 0.0, %v1664
        %v1666 = vpop.f32.mrf.mxu0
        %v1667 = vpop.f32.mrf.mxu0
        %v1668 = vadd.f32 0.0, %v1667
        %v1669 = vpop.f32.mrf.mxu0
        %1670 = vmatprep.mubr.bf16.mxu0 0
        %1671 = vmatmul.mubr.bf16.gmra.mxu0 %v1507
        %v1672 = vpop.f32.mrf.mxu0
        %v1673 = vadd.f32 0.0, %v1672
        %v1674 = vpop.f32.mrf.mxu0
        %v1675 = vpop.f32.mrf.mxu0
        %v1676 = vadd.f32 0.0, %v1675
        %v1677 = vpop.f32.mrf.mxu0
        %1678 = vdwg.mxu0
        %v1679 = vadd.f32 %v1397, %v1601
        %v1680 = vadd.f32 %v1398, %v1604
        %v1681 = vadd.f32 %v1399, %v1609
        %v1682 = vadd.f32 %v1400, %v1612
        %v1683 = vadd.f32 %v1401, %v1617
        %v1684 = vadd.f32 %v1402, %v1620
        %v1685 = vadd.f32 %v1403, %v1625
        %v1686 = vadd.f32 %v1404, %v1628
        %v1687 = vadd.f32 %v1405, %v1633
        %v1688 = vadd.f32 %v1406, %v1636
        %v1689 = vadd.f32 %v1407, %v1641
        %v1690 = vadd.f32 %v1408, %v1644
        %v1691 = vadd.f32 %v1409, %v1649
        %v1692 = vadd.f32 %v1410, %v1652
        %v1693 = vadd.f32 %v1411, %v1657
        %v1694 = vadd.f32 %v1412, %v1660
        %v1695 = vadd.f32 %v1413, %v1665
        %v1696 = vadd.f32 %v1414, %v1668
        %v1697 = vadd.f32 %v1415, %v1673
        %v1698 = vadd.f32 %v1416, %v1676
        %v1699 = vld [vmem:[%s1420] sm:$0xf]
        %v1700 = vld [vmem:[%s1420 + $0x4] sm:$0xf]
        %v1701 = vld [vmem:[%s1420 + $0x8] sm:$0x1]
        %v1702 = vld [vmem:[%s1420 + $0xc] sm:$0xf]
        %v1703 = vld [vmem:[%s1420 + $0x10] sm:$0xf]
        %v1704 = vld [vmem:[%s1420 + $0x14] sm:$0x1]
        %v1705 = vld [vmem:[%s1420 + $0x18] sm:$0xf]
        %v1706 = vld [vmem:[%s1420 + $0x1c] sm:$0xf]
        %v1707 = vld [vmem:[%s1420 + $0x20] sm:$0x1]
        %v1708 = vld [vmem:[%s1420 + $0x24] sm:$0xf]
        %v1709 = vld [vmem:[%s1420 + $0x28] sm:$0xf]
        %v1710 = vld [vmem:[%s1420 + $0x2c] sm:$0x1]
        %v1711 = vld [vmem:[%s1420 + $0x30] sm:$0xf]
        %v1712 = vld [vmem:[%s1420 + $0x34] sm:$0xf]
        %v1713 = vld [vmem:[%s1420 + $0x38] sm:$0x1]
        %v1714 = vld [vmem:[%s1420 + $0x3c] sm:$0xf]
        %v1715 = vld [vmem:[%s1420 + $0x40] sm:$0xf]
        %v1716 = vld [vmem:[%s1420 + $0x44] sm:$0x1]
        %v1717 = vld [vmem:[%s1420 + $0x48] sm:$0xf]
        %v1718 = vld [vmem:[%s1420 + $0x4c] sm:$0xf]
        %v1719 = vld [vmem:[%s1420 + $0x50] sm:$0x1]
        %v1720 = vld [vmem:[%s1420 + $0x54] sm:$0xf]
        %v1721 = vld [vmem:[%s1420 + $0x58] sm:$0xf]
        %v1722 = vld [vmem:[%s1420 + $0x5c] sm:$0x1]
        %v1723 = vld [vmem:[%s1420 + $0x60] sm:$0xf]
        %v1724 = vld [vmem:[%s1420 + $0x64] sm:$0xf]
        %v1725 = vld [vmem:[%s1420 + $0x68] sm:$0x1]
        %v1726 = vld [vmem:[%s1420 + $0x6c] sm:$0xf]
        %v1727 = vld [vmem:[%s1420 + $0x70] sm:$0xf]
        %v1728 = vld [vmem:[%s1420 + $0x74] sm:$0x1]
        %v1730 = vshrl.u32 %v1699, 16
        %v1732 = vrot.slane %v1730, 4
        %v1733 = vshll.u32 %v1699, 16
        %v1735 = vrot.slane %v1733, 5
        %v1736 = vor.u32 %v1732, %v1735
        %v1737 = vrot.slane %v1736, 4
        %v1739 = vshll.u32 %v1700, 16
        %v1741 = vrot.slane %v1739, 5
        %v1742 = vsel %vm396, %v1737, %v1741
        %v1743 = vshrl.u32 %v1700, 16
        %v1745 = vrot.slane %v1743, 4
        %v1746 = vor.u32 %v1745, %v1741
        %v1747 = vrot.slane %v1746, 4
        %v1749 = vshll.u32 %v1701, 16
        %v1751 = vrot.slane %v1749, 5
        %v1752 = vsel %vm396, %v1747, %v1751
        %v1754 = vshrl.u32 %v1702, 16
        %v1756 = vrot.slane %v1754, 4
        %v1757 = vshll.u32 %v1702, 16
        %v1759 = vrot.slane %v1757, 5
        %v1760 = vor.u32 %v1756, %v1759
        %v1761 = vrot.slane %v1760, 4
        %v1763 = vshll.u32 %v1703, 16
        %v1765 = vrot.slane %v1763, 5
        %v1766 = vsel %vm396, %v1761, %v1765
        %v1767 = vshrl.u32 %v1703, 16
        %v1769 = vrot.slane %v1767, 4
        %v1770 = vor.u32 %v1769, %v1765
        %v1771 = vrot.slane %v1770, 4
        %v1773 = vshll.u32 %v1704, 16
        %v1775 = vrot.slane %v1773, 5
        %v1776 = vsel %vm396, %v1771, %v1775
        %v1778 = vshrl.u32 %v1705, 16
        %v1780 = vrot.slane %v1778, 4
        %v1781 = vshll.u32 %v1705, 16
        %v1783 = vrot.slane %v1781, 5
        %v1784 = vor.u32 %v1780, %v1783
        %v1785 = vrot.slane %v1784, 4
        %v1787 = vshll.u32 %v1706, 16
        %v1789 = vrot.slane %v1787, 5
        %v1790 = vsel %vm396, %v1785, %v1789
        %v1791 = vshrl.u32 %v1706, 16
        %v1793 = vrot.slane %v1791, 4
        %v1794 = vor.u32 %v1793, %v1789
        %v1795 = vrot.slane %v1794, 4
        %v1797 = vshll.u32 %v1707, 16
        %v1799 = vrot.slane %v1797, 5
        %v1800 = vsel %vm396, %v1795, %v1799
        %v1802 = vshrl.u32 %v1708, 16
        %v1804 = vrot.slane %v1802, 4
        %v1805 = vshll.u32 %v1708, 16
        %v1807 = vrot.slane %v1805, 5
        %v1808 = vor.u32 %v1804, %v1807
        %v1809 = vrot.slane %v1808, 4
        %v1811 = vshll.u32 %v1709, 16
        %v1813 = vrot.slane %v1811, 5
        %v1814 = vsel %vm396, %v1809, %v1813
        %v1815 = vshrl.u32 %v1709, 16
        %v1817 = vrot.slane %v1815, 4
        %v1818 = vor.u32 %v1817, %v1813
        %v1819 = vrot.slane %v1818, 4
        %v1821 = vshll.u32 %v1710, 16
        %v1823 = vrot.slane %v1821, 5
        %v1824 = vsel %vm396, %v1819, %v1823
        %v1826 = vshrl.u32 %v1711, 16
        %v1828 = vrot.slane %v1826, 4
        %v1829 = vshll.u32 %v1711, 16
        %v1831 = vrot.slane %v1829, 5
        %v1832 = vor.u32 %v1828, %v1831
        %v1833 = vrot.slane %v1832, 4
        %v1835 = vshll.u32 %v1712, 16
        %v1837 = vrot.slane %v1835, 5
        %v1838 = vsel %vm396, %v1833, %v1837
        %v1839 = vshrl.u32 %v1712, 16
        %v1841 = vrot.slane %v1839, 4
        %v1842 = vor.u32 %v1841, %v1837
        %v1843 = vrot.slane %v1842, 4
        %v1845 = vshll.u32 %v1713, 16
        %v1847 = vrot.slane %v1845, 5
        %v1848 = vsel %vm396, %v1843, %v1847
        %v1850 = vshrl.u32 %v1714, 16
        %v1852 = vrot.slane %v1850, 4
        %v1853 = vshll.u32 %v1714, 16
        %v1855 = vrot.slane %v1853, 5
        %v1856 = vor.u32 %v1852, %v1855
        %v1857 = vrot.slane %v1856, 4
        %v1859 = vshll.u32 %v1715, 16
        %v1861 = vrot.slane %v1859, 5
        %v1862 = vsel %vm396, %v1857, %v1861
        %v1863 = vshrl.u32 %v1715, 16
        %v1865 = vrot.slane %v1863, 4
        %v1866 = vor.u32 %v1865, %v1861
        %v1867 = vrot.slane %v1866, 4
        %v1869 = vshll.u32 %v1716, 16
        %v1871 = vrot.slane %v1869, 5
        %v1872 = vsel %vm396, %v1867, %v1871
        %v1874 = vshrl.u32 %v1717, 16
        %v1876 = vrot.slane %v1874, 4
        %v1877 = vshll.u32 %v1717, 16
        %v1879 = vrot.slane %v1877, 5
        %v1880 = vor.u32 %v1876, %v1879
        %v1881 = vrot.slane %v1880, 4
        %v1883 = vshll.u32 %v1718, 16
        %v1885 = vrot.slane %v1883, 5
        %v1886 = vsel %vm396, %v1881, %v1885
        %v1887 = vshrl.u32 %v1718, 16
        %v1889 = vrot.slane %v1887, 4
        %v1890 = vor.u32 %v1889, %v1885
        %v1891 = vrot.slane %v1890, 4
        %v1893 = vshll.u32 %v1719, 16
        %v1895 = vrot.slane %v1893, 5
        %v1896 = vsel %vm396, %v1891, %v1895
        %v1898 = vshrl.u32 %v1720, 16
        %v1900 = vrot.slane %v1898, 4
        %v1901 = vshll.u32 %v1720, 16
        %v1903 = vrot.slane %v1901, 5
        %v1904 = vor.u32 %v1900, %v1903
        %v1905 = vrot.slane %v1904, 4
        %v1907 = vshll.u32 %v1721, 16
        %v1909 = vrot.slane %v1907, 5
        %v1910 = vsel %vm396, %v1905, %v1909
        %v1911 = vshrl.u32 %v1721, 16
        %v1913 = vrot.slane %v1911, 4
        %v1914 = vor.u32 %v1913, %v1909
        %v1915 = vrot.slane %v1914, 4
        %v1917 = vshll.u32 %v1722, 16
        %v1919 = vrot.slane %v1917, 5
        %v1920 = vsel %vm396, %v1915, %v1919
        %v1922 = vshrl.u32 %v1723, 16
        %v1924 = vrot.slane %v1922, 4
        %v1925 = vshll.u32 %v1723, 16
        %v1927 = vrot.slane %v1925, 5
        %v1928 = vor.u32 %v1924, %v1927
        %v1929 = vrot.slane %v1928, 4
        %v1931 = vshll.u32 %v1724, 16
        %v1933 = vrot.slane %v1931, 5
        %v1934 = vsel %vm396, %v1929, %v1933
        %v1935 = vshrl.u32 %v1724, 16
        %v1937 = vrot.slane %v1935, 4
        %v1938 = vor.u32 %v1937, %v1933
        %v1939 = vrot.slane %v1938, 4
        %v1941 = vshll.u32 %v1725, 16
        %v1943 = vrot.slane %v1941, 5
        %v1944 = vsel %vm396, %v1939, %v1943
        %v1946 = vshrl.u32 %v1726, 16
        %v1948 = vrot.slane %v1946, 4
        %v1949 = vshll.u32 %v1726, 16
        %v1951 = vrot.slane %v1949, 5
        %v1952 = vor.u32 %v1948, %v1951
        %v1953 = vrot.slane %v1952, 4
        %v1955 = vshll.u32 %v1727, 16
        %v1957 = vrot.slane %v1955, 5
        %v1958 = vsel %vm396, %v1953, %v1957
        %v1959 = vshrl.u32 %v1727, 16
        %v1961 = vrot.slane %v1959, 4
        %v1962 = vor.u32 %v1961, %v1957
        %v1963 = vrot.slane %v1962, 4
        %v1965 = vshll.u32 %v1728, 16
        %v1967 = vrot.slane %v1965, 5
        %v1968 = vsel %vm396, %v1963, %v1967
        %s1969 = scalar_lea.vmem [#allocation6], 256
        %v1970 = vld [vmem:[%s1969] sm:$0xf]
        %v1971 = vld [vmem:[%s1969 + $0x4] sm:$0xf]
        %v1972 = vld [vmem:[%s1969 + $0x8] sm:$0xf]
        %v1973 = vld [vmem:[%s1969 + $0xc] sm:$0xf]
        %v1974 = vld [vmem:[%s1969 + $0x10] sm:$0xf]
        %v1975 = vld [vmem:[%s1969 + $0x14] sm:$0xf]
        %v1976 = vld [vmem:[%s1969 + $0x18] sm:$0xf]
        %v1977 = vld [vmem:[%s1969 + $0x1c] sm:$0xf]
        %v1978 = vld [vmem:[%s1969 + $0x20] sm:$0xf]
        %v1979 = vld [vmem:[%s1969 + $0x24] sm:$0xf]
        %v1980 = vld [vmem:[%s1969 + $0x28] sm:$0xf]
        %v1981 = vld [vmem:[%s1969 + $0x2c] sm:$0xf]
        %v1982 = vld [vmem:[%s1969 + $0x30] sm:$0xf]
        %v1983 = vld [vmem:[%s1969 + $0x34] sm:$0xf]
        %v1984 = vld [vmem:[%s1969 + $0x38] sm:$0xf]
        %v1985 = vld [vmem:[%s1969 + $0x3c] sm:$0xf]
        %v1986 = vunpack.c.l.b16 %v1742
        %v1987 = vunpack.c.l.b16 %v1752
        %v1988 = vunpack.c.l.b16 %v1766
        %v1989 = vunpack.c.l.b16 %v1776
        %v1990 = vunpack.c.l.b16 %v1790
        %v1991 = vunpack.c.l.b16 %v1800
        %v1992 = vunpack.c.l.b16 %v1814
        %v1993 = vunpack.c.l.b16 %v1824
        %v1994 = vunpack.c.l.b16 %v1838
        %v1995 = vunpack.c.l.b16 %v1848
        %v1996 = vunpack.c.l.b16 %v1862
        %v1997 = vunpack.c.l.b16 %v1872
        %v1998 = vunpack.c.l.b16 %v1886
        %v1999 = vunpack.c.l.b16 %v1896
        %v2000 = vunpack.c.l.b16 %v1910
        %v2001 = vunpack.c.l.b16 %v1920
        %v2002 = vunpack.c.l.b16 %v1934
        %v2003 = vunpack.c.l.b16 %v1944
        %v2004 = vunpack.c.l.b16 %v1958
        %v2005 = vunpack.c.l.b16 %v1968
        %v2006 = vpack.c.b16 %v1987, %v1986
        %v2007 = vpack.c.b16 %v1989, %v1988
        %v2008 = vpack.c.b16 %v1991, %v1990
        %v2009 = vpack.c.b16 %v1993, %v1992
        %v2010 = vpack.c.b16 %v1995, %v1994
        %v2011 = vpack.c.b16 %v1997, %v1996
        %v2012 = vpack.c.b16 %v1999, %v1998
        %v2013 = vpack.c.b16 %v2001, %v2000
        %v2014 = vpack.c.b16 %v2003, %v2002
        %v2015 = vpack.c.b16 %v2005, %v2004
        %v2042 = vunpack.c.l.b16 %v1970
        %v2043 = vunpack.c.l.b16 %v1971
        %v2044 = vunpack.c.l.b16 %v1972
        %v2045 = vunpack.c.l.b16 %v1973
        %v2046 = vunpack.c.l.b16 %v1974
        %v2047 = vunpack.c.l.b16 %v1975
        %v2048 = vunpack.c.l.b16 %v1976
        %v2049 = vunpack.c.l.b16 %v1977
        %v2050 = vunpack.c.l.b16 %v1978
        %v2051 = vunpack.c.l.b16 %v1979
        %v2052 = vunpack.c.l.b16 %v1980
        %v2053 = vunpack.c.l.b16 %v1981
        %v2054 = vunpack.c.l.b16 %v1982
        %v2055 = vunpack.c.l.b16 %v1983
        %v2056 = vunpack.c.l.b16 %v1984
        %v2057 = vunpack.c.l.b16 %v1985
        %v2058 = vpack.c.b16 %v2043, %v2042
        %v2059 = vpack.c.b16 %v2045, %v2044
        %v2060 = vpack.c.b16 %v2047, %v2046
        %v2061 = vpack.c.b16 %v2049, %v2048
        %v2062 = vpack.c.b16 %v2051, %v2050
        %v2063 = vpack.c.b16 %v2053, %v2052
        %v2064 = vpack.c.b16 %v2055, %v2054
        %v2065 = vpack.c.b16 %v2057, %v2056
        %2074 = vmatprep.subr.bf16.mxu0 0
        %2075 = vmatpush1.bf16.msra.mxu0 %v2065
        %2076 = vmatprep.subr.bf16.mxu0 0
        %2077 = vmatpush1.bf16.msra.mxu0 %v2064
        %2078 = vmatprep.subr.bf16.mxu0 0
        %2079 = vmatpush1.bf16.msra.mxu0 %v2063
        %2080 = vmatprep.subr.bf16.mxu0 0
        %2081 = vmatpush1.bf16.msra.mxu0 %v2062
        %2082 = vmatprep.subr.bf16.mxu0 0
        %2083 = vmatpush1.bf16.msra.mxu0 %v2061
        %2084 = vmatprep.subr.bf16.mxu0 0
        %2085 = vmatpush1.bf16.msra.mxu0 %v2060
        %2086 = vmatprep.subr.bf16.mxu0 0
        %2087 = vmatpush1.bf16.msra.mxu0 %v2059
        %2088 = vmatprep.subr.bf16.mxu0 0
        %2089 = vmatpush1.bf16.msra.mxu0 %v2058
        %2090 = vmatprep.subr.bf16.mxu0 0
        %2091 = vmatpush2.bf16.msra.mxu0 0
        %2092 = vmatprep.subr.bf16.mxu0 0
        %2093 = vmatpush2.bf16.msra.mxu0 0
        %2094 = vmatprep.subr.bf16.mxu0 0
        %2095 = vmatpush2.bf16.msra.mxu0 0
        %2096 = vmatprep.subr.bf16.mxu0 0
        %2097 = vmatpush2.bf16.msra.mxu0 0
        %2098 = vmatprep.subr.bf16.mxu0 0
        %2099 = vmatpush2.bf16.msra.mxu0 0
        %2100 = vmatprep.subr.bf16.mxu0 0
        %2101 = vmatpush2.bf16.msra.mxu0 0
        %2102 = vmatprep.subr.bf16.mxu0 0
        %2103 = vmatpush2.bf16.msra.mxu0 0
        %2104 = vmatprep.subr.bf16.mxu0 0
        %2105 = vmatpush2.bf16.msra.mxu0 0
        %2106 = vmatprep.mubr.bf16.mxu0 0
        %2107 = vmatmul.mubr.bf16.gmra.mxu0 %v2006
        %v2108 = vpop.f32.mrf.mxu0
        %v2109 = vadd.f32 0.0, %v2108
        %v2110 = vpop.f32.mrf.mxu0
        %v2111 = vpop.f32.mrf.mxu0
        %v2112 = vadd.f32 0.0, %v2111
        %v2113 = vpop.f32.mrf.mxu0
        %2114 = vmatprep.mubr.bf16.mxu0 0
        %2115 = vmatmul.mubr.bf16.gmra.mxu0 %v2007
        %v2116 = vpop.f32.mrf.mxu0
        %v2117 = vadd.f32 0.0, %v2116
        %v2118 = vpop.f32.mrf.mxu0
        %v2119 = vpop.f32.mrf.mxu0
        %v2120 = vadd.f32 0.0, %v2119
        %v2121 = vpop.f32.mrf.mxu0
        %2122 = vmatprep.mubr.bf16.mxu0 0
        %2123 = vmatmul.mubr.bf16.gmra.mxu0 %v2008
        %v2124 = vpop.f32.mrf.mxu0
        %v2125 = vadd.f32 0.0, %v2124
        %v2126 = vpop.f32.mrf.mxu0
        %v2127 = vpop.f32.mrf.mxu0
        %v2128 = vadd.f32 0.0, %v2127
        %v2129 = vpop.f32.mrf.mxu0
        %2130 = vmatprep.mubr.bf16.mxu0 0
        %2131 = vmatmul.mubr.bf16.gmra.mxu0 %v2009
        %v2132 = vpop.f32.mrf.mxu0
        %v2133 = vadd.f32 0.0, %v2132
        %v2134 = vpop.f32.mrf.mxu0
        %v2135 = vpop.f32.mrf.mxu0
        %v2136 = vadd.f32 0.0, %v2135
        %v2137 = vpop.f32.mrf.mxu0
        %2138 = vmatprep.mubr.bf16.mxu0 0
        %2139 = vmatmul.mubr.bf16.gmra.mxu0 %v2010
        %v2140 = vpop.f32.mrf.mxu0
        %v2141 = vadd.f32 0.0, %v2140
        %v2142 = vpop.f32.mrf.mxu0
        %v2143 = vpop.f32.mrf.mxu0
        %v2144 = vadd.f32 0.0, %v2143
        %v2145 = vpop.f32.mrf.mxu0
        %2146 = vmatprep.mubr.bf16.mxu0 0
        %2147 = vmatmul.mubr.bf16.gmra.mxu0 %v2011
        %v2148 = vpop.f32.mrf.mxu0
        %v2149 = vadd.f32 0.0, %v2148
        %v2150 = vpop.f32.mrf.mxu0
        %v2151 = vpop.f32.mrf.mxu0
        %v2152 = vadd.f32 0.0, %v2151
        %v2153 = vpop.f32.mrf.mxu0
        %2154 = vmatprep.mubr.bf16.mxu0 0
        %2155 = vmatmul.mubr.bf16.gmra.mxu0 %v2012
        %v2156 = vpop.f32.mrf.mxu0
        %v2157 = vadd.f32 0.0, %v2156
        %v2158 = vpop.f32.mrf.mxu0
        %v2159 = vpop.f32.mrf.mxu0
        %v2160 = vadd.f32 0.0, %v2159
        %v2161 = vpop.f32.mrf.mxu0
        %2162 = vmatprep.mubr.bf16.mxu0 0
        %2163 = vmatmul.mubr.bf16.gmra.mxu0 %v2013
        %v2164 = vpop.f32.mrf.mxu0
        %v2165 = vadd.f32 0.0, %v2164
        %v2166 = vpop.f32.mrf.mxu0
        %v2167 = vpop.f32.mrf.mxu0
        %v2168 = vadd.f32 0.0, %v2167
        %v2169 = vpop.f32.mrf.mxu0
        %2170 = vmatprep.mubr.bf16.mxu0 0
        %2171 = vmatmul.mubr.bf16.gmra.mxu0 %v2014
        %v2172 = vpop.f32.mrf.mxu0
        %v2173 = vadd.f32 0.0, %v2172
        %v2174 = vpop.f32.mrf.mxu0
        %v2175 = vpop.f32.mrf.mxu0
        %v2176 = vadd.f32 0.0, %v2175
        %v2177 = vpop.f32.mrf.mxu0
        %2178 = vmatprep.mubr.bf16.mxu0 0
        %2179 = vmatmul.mubr.bf16.gmra.mxu0 %v2015
        %v2180 = vpop.f32.mrf.mxu0
        %v2181 = vadd.f32 0.0, %v2180
        %v2182 = vpop.f32.mrf.mxu0
        %v2183 = vpop.f32.mrf.mxu0
        %v2184 = vadd.f32 0.0, %v2183
        %v2185 = vpop.f32.mrf.mxu0
        %2186 = vdwg.mxu0
        %v2187 = vadd.f32 %v1679, %v2109
        %v2188 = vadd.f32 %v1680, %v2112
        %v2189 = vadd.f32 %v1681, %v2117
        %v2190 = vadd.f32 %v1682, %v2120
        %v2191 = vadd.f32 %v1683, %v2125
        %v2192 = vadd.f32 %v1684, %v2128
        %v2193 = vadd.f32 %v1685, %v2133
        %v2194 = vadd.f32 %v1686, %v2136
        %v2195 = vadd.f32 %v1687, %v2141
        %v2196 = vadd.f32 %v1688, %v2144
        %v2197 = vadd.f32 %v1689, %v2149
        %v2198 = vadd.f32 %v1690, %v2152
        %v2199 = vadd.f32 %v1691, %v2157
        %v2200 = vadd.f32 %v1692, %v2160
        %v2201 = vadd.f32 %v1693, %v2165
        %v2202 = vadd.f32 %v1694, %v2168
        %v2203 = vadd.f32 %v1695, %v2173
        %v2204 = vadd.f32 %v1696, %v2176
        %v2205 = vadd.f32 %v1697, %v2181
        %v2206 = vadd.f32 %v1698, %v2184
        %v2207 = vld [vmem:[%s1420] sm:$0xe]
        %v2208 = vld [vmem:[%s1420 + $0xc] sm:$0xe]
        %v2209 = vld [vmem:[%s1420 + $0x18] sm:$0xe]
        %v2210 = vld [vmem:[%s1420 + $0x24] sm:$0xe]
        %v2211 = vld [vmem:[%s1420 + $0x30] sm:$0xe]
        %v2212 = vld [vmem:[%s1420 + $0x3c] sm:$0xe]
        %v2213 = vld [vmem:[%s1420 + $0x48] sm:$0xe]
        %v2214 = vld [vmem:[%s1420 + $0x54] sm:$0xe]
        %v2215 = vld [vmem:[%s1420 + $0x60] sm:$0xe]
        %v2216 = vld [vmem:[%s1420 + $0x6c] sm:$0xe]
        %v2247 = vrot.slane %v2207, 5
        %v2248 = vrot.slane %v2247, 4
        %v2249 = vrot.slane %v1700, 5
        %v2250 = vsel %vm1108, %v2248, %v2249
        %v2251 = vrot.slane %v2249, 4
        %v2252 = vrot.slane %v1701, 5
        %v2253 = vsel %vm1108, %v2251, %v2252
        %v2254 = vrot.slane %v2208, 5
        %v2255 = vrot.slane %v2254, 4
        %v2256 = vrot.slane %v1703, 5
        %v2257 = vsel %vm1108, %v2255, %v2256
        %v2258 = vrot.slane %v2256, 4
        %v2259 = vrot.slane %v1704, 5
        %v2260 = vsel %vm1108, %v2258, %v2259
        %v2261 = vrot.slane %v2209, 5
        %v2262 = vrot.slane %v2261, 4
        %v2263 = vrot.slane %v1706, 5
        %v2264 = vsel %vm1108, %v2262, %v2263
        %v2265 = vrot.slane %v2263, 4
        %v2266 = vrot.slane %v1707, 5
        %v2267 = vsel %vm1108, %v2265, %v2266
        %v2268 = vrot.slane %v2210, 5
        %v2269 = vrot.slane %v2268, 4
        %v2270 = vrot.slane %v1709, 5
        %v2271 = vsel %vm1108, %v2269, %v2270
        %v2272 = vrot.slane %v2270, 4
        %v2273 = vrot.slane %v1710, 5
        %v2274 = vsel %vm1108, %v2272, %v2273
        %v2275 = vrot.slane %v2211, 5
        %v2276 = vrot.slane %v2275, 4
        %v2277 = vrot.slane %v1712, 5
        %v2278 = vsel %vm1108, %v2276, %v2277
        %v2279 = vrot.slane %v2277, 4
        %v2280 = vrot.slane %v1713, 5
        %v2281 = vsel %vm1108, %v2279, %v2280
        %v2282 = vrot.slane %v2212, 5
        %v2283 = vrot.slane %v2282, 4
        %v2284 = vrot.slane %v1715, 5
        %v2285 = vsel %vm1108, %v2283, %v2284
        %v2286 = vrot.slane %v2284, 4
        %v2287 = vrot.slane %v1716, 5
        %v2288 = vsel %vm1108, %v2286, %v2287
        %v2289 = vrot.slane %v2213, 5
        %v2290 = vrot.slane %v2289, 4
        %v2291 = vrot.slane %v1718, 5
        %v2292 = vsel %vm1108, %v2290, %v2291
        %v2293 = vrot.slane %v2291, 4
        %v2294 = vrot.slane %v1719, 5
        %v2295 = vsel %vm1108, %v2293, %v2294
        %v2296 = vrot.slane %v2214, 5
        %v2297 = vrot.slane %v2296, 4
        %v2298 = vrot.slane %v1721, 5
        %v2299 = vsel %vm1108, %v2297, %v2298
        %v2300 = vrot.slane %v2298, 4
        %v2301 = vrot.slane %v1722, 5
        %v2302 = vsel %vm1108, %v2300, %v2301
        %v2303 = vrot.slane %v2215, 5
        %v2304 = vrot.slane %v2303, 4
        %v2305 = vrot.slane %v1724, 5
        %v2306 = vsel %vm1108, %v2304, %v2305
        %v2307 = vrot.slane %v2305, 4
        %v2308 = vrot.slane %v1725, 5
        %v2309 = vsel %vm1108, %v2307, %v2308
        %v2310 = vrot.slane %v2216, 5
        %v2311 = vrot.slane %v2310, 4
        %v2312 = vrot.slane %v1727, 5
        %v2313 = vsel %vm1108, %v2311, %v2312
        %v2314 = vrot.slane %v2312, 4
        %v2315 = vrot.slane %v1728, 5
        %v2316 = vsel %vm1108, %v2314, %v2315
        %s2317 = scalar_lea.vmem [#allocation6], 320
        %v2318 = vld [vmem:[%s2317] sm:$0xf]
        %v2319 = vld [vmem:[%s2317 + $0x4] sm:$0xf]
        %v2320 = vld [vmem:[%s2317 + $0x8] sm:$0xf]
        %v2321 = vld [vmem:[%s2317 + $0xc] sm:$0xf]
        %v2322 = vld [vmem:[%s2317 + $0x10] sm:$0xf]
        %v2323 = vld [vmem:[%s2317 + $0x14] sm:$0xf]
        %v2324 = vld [vmem:[%s2317 + $0x18] sm:$0xf]
        %v2325 = vld [vmem:[%s2317 + $0x1c] sm:$0xf]
        %v2326 = vld [vmem:[%s2317 + $0x20] sm:$0xf]
        %v2327 = vld [vmem:[%s2317 + $0x24] sm:$0xf]
        %v2328 = vld [vmem:[%s2317 + $0x28] sm:$0xf]
        %v2329 = vld [vmem:[%s2317 + $0x2c] sm:$0xf]
        %v2330 = vld [vmem:[%s2317 + $0x30] sm:$0xf]
        %v2331 = vld [vmem:[%s2317 + $0x34] sm:$0xf]
        %v2332 = vld [vmem:[%s2317 + $0x38] sm:$0xf]
        %v2333 = vld [vmem:[%s2317 + $0x3c] sm:$0xf]
        %v2334 = vunpack.c.l.b16 %v2250
        %v2335 = vunpack.c.l.b16 %v2253
        %v2336 = vunpack.c.l.b16 %v2257
        %v2337 = vunpack.c.l.b16 %v2260
        %v2338 = vunpack.c.l.b16 %v2264
        %v2339 = vunpack.c.l.b16 %v2267
        %v2340 = vunpack.c.l.b16 %v2271
        %v2341 = vunpack.c.l.b16 %v2274
        %v2342 = vunpack.c.l.b16 %v2278
        %v2343 = vunpack.c.l.b16 %v2281
        %v2344 = vunpack.c.l.b16 %v2285
        %v2345 = vunpack.c.l.b16 %v2288
        %v2346 = vunpack.c.l.b16 %v2292
        %v2347 = vunpack.c.l.b16 %v2295
        %v2348 = vunpack.c.l.b16 %v2299
        %v2349 = vunpack.c.l.b16 %v2302
        %v2350 = vunpack.c.l.b16 %v2306
        %v2351 = vunpack.c.l.b16 %v2309
        %v2352 = vunpack.c.l.b16 %v2313
        %v2353 = vunpack.c.l.b16 %v2316
        %v2354 = vpack.c.b16 %v2335, %v2334
        %v2355 = vpack.c.b16 %v2337, %v2336
        %v2356 = vpack.c.b16 %v2339, %v2338
        %v2357 = vpack.c.b16 %v2341, %v2340
        %v2358 = vpack.c.b16 %v2343, %v2342
        %v2359 = vpack.c.b16 %v2345, %v2344
        %v2360 = vpack.c.b16 %v2347, %v2346
        %v2361 = vpack.c.b16 %v2349, %v2348
        %v2362 = vpack.c.b16 %v2351, %v2350
        %v2363 = vpack.c.b16 %v2353, %v2352
        %v2390 = vunpack.c.l.b16 %v2318
        %v2391 = vunpack.c.l.b16 %v2319
        %v2392 = vunpack.c.l.b16 %v2320
        %v2393 = vunpack.c.l.b16 %v2321
        %v2394 = vunpack.c.l.b16 %v2322
        %v2395 = vunpack.c.l.b16 %v2323
        %v2396 = vunpack.c.l.b16 %v2324
        %v2397 = vunpack.c.l.b16 %v2325
        %v2398 = vunpack.c.l.b16 %v2326
        %v2399 = vunpack.c.l.b16 %v2327
        %v2400 = vunpack.c.l.b16 %v2328
        %v2401 = vunpack.c.l.b16 %v2329
        %v2402 = vunpack.c.l.b16 %v2330
        %v2403 = vunpack.c.l.b16 %v2331
        %v2404 = vunpack.c.l.b16 %v2332
        %v2405 = vunpack.c.l.b16 %v2333
        %v2406 = vpack.c.b16 %v2391, %v2390
        %v2407 = vpack.c.b16 %v2393, %v2392
        %v2408 = vpack.c.b16 %v2395, %v2394
        %v2409 = vpack.c.b16 %v2397, %v2396
        %v2410 = vpack.c.b16 %v2399, %v2398
        %v2411 = vpack.c.b16 %v2401, %v2400
        %v2412 = vpack.c.b16 %v2403, %v2402
        %v2413 = vpack.c.b16 %v2405, %v2404
        %2422 = vmatprep.subr.bf16.mxu0 0
        %2423 = vmatpush1.bf16.msra.mxu0 %v2413
        %2424 = vmatprep.subr.bf16.mxu0 0
        %2425 = vmatpush1.bf16.msra.mxu0 %v2412
        %2426 = vmatprep.subr.bf16.mxu0 0
        %2427 = vmatpush1.bf16.msra.mxu0 %v2411
        %2428 = vmatprep.subr.bf16.mxu0 0
        %2429 = vmatpush1.bf16.msra.mxu0 %v2410
        %2430 = vmatprep.subr.bf16.mxu0 0
        %2431 = vmatpush1.bf16.msra.mxu0 %v2409
        %2432 = vmatprep.subr.bf16.mxu0 0
        %2433 = vmatpush1.bf16.msra.mxu0 %v2408
        %2434 = vmatprep.subr.bf16.mxu0 0
        %2435 = vmatpush1.bf16.msra.mxu0 %v2407
        %2436 = vmatprep.subr.bf16.mxu0 0
        %2437 = vmatpush1.bf16.msra.mxu0 %v2406
        %2438 = vmatprep.subr.bf16.mxu0 0
        %2439 = vmatpush2.bf16.msra.mxu0 0
        %2440 = vmatprep.subr.bf16.mxu0 0
        %2441 = vmatpush2.bf16.msra.mxu0 0
        %2442 = vmatprep.subr.bf16.mxu0 0
        %2443 = vmatpush2.bf16.msra.mxu0 0
        %2444 = vmatprep.subr.bf16.mxu0 0
        %2445 = vmatpush2.bf16.msra.mxu0 0
        %2446 = vmatprep.subr.bf16.mxu0 0
        %2447 = vmatpush2.bf16.msra.mxu0 0
        %2448 = vmatprep.subr.bf16.mxu0 0
        %2449 = vmatpush2.bf16.msra.mxu0 0
        %2450 = vmatprep.subr.bf16.mxu0 0
        %2451 = vmatpush2.bf16.msra.mxu0 0
        %2452 = vmatprep.subr.bf16.mxu0 0
        %2453 = vmatpush2.bf16.msra.mxu0 0
        %2454 = vmatprep.mubr.bf16.mxu0 0
        %2455 = vmatmul.mubr.bf16.gmra.mxu0 %v2354
        %v2456 = vpop.f32.mrf.mxu0
        %v2457 = vadd.f32 0.0, %v2456
        %v2458 = vpop.f32.mrf.mxu0
        %v2459 = vpop.f32.mrf.mxu0
        %v2460 = vadd.f32 0.0, %v2459
        %v2461 = vpop.f32.mrf.mxu0
        %2462 = vmatprep.mubr.bf16.mxu0 0
        %2463 = vmatmul.mubr.bf16.gmra.mxu0 %v2355
        %v2464 = vpop.f32.mrf.mxu0
        %v2465 = vadd.f32 0.0, %v2464
        %v2466 = vpop.f32.mrf.mxu0
        %v2467 = vpop.f32.mrf.mxu0
        %v2468 = vadd.f32 0.0, %v2467
        %v2469 = vpop.f32.mrf.mxu0
        %2470 = vmatprep.mubr.bf16.mxu0 0
        %2471 = vmatmul.mubr.bf16.gmra.mxu0 %v2356
        %v2472 = vpop.f32.mrf.mxu0
        %v2473 = vadd.f32 0.0, %v2472
        %v2474 = vpop.f32.mrf.mxu0
        %v2475 = vpop.f32.mrf.mxu0
        %v2476 = vadd.f32 0.0, %v2475
        %v2477 = vpop.f32.mrf.mxu0
        %2478 = vmatprep.mubr.bf16.mxu0 0
        %2479 = vmatmul.mubr.bf16.gmra.mxu0 %v2357
        %v2480 = vpop.f32.mrf.mxu0
        %v2481 = vadd.f32 0.0, %v2480
        %v2482 = vpop.f32.mrf.mxu0
        %v2483 = vpop.f32.mrf.mxu0
        %v2484 = vadd.f32 0.0, %v2483
        %v2485 = vpop.f32.mrf.mxu0
        %2486 = vmatprep.mubr.bf16.mxu0 0
        %2487 = vmatmul.mubr.bf16.gmra.mxu0 %v2358
        %v2488 = vpop.f32.mrf.mxu0
        %v2489 = vadd.f32 0.0, %v2488
        %v2490 = vpop.f32.mrf.mxu0
        %v2491 = vpop.f32.mrf.mxu0
        %v2492 = vadd.f32 0.0, %v2491
        %v2493 = vpop.f32.mrf.mxu0
        %2494 = vmatprep.mubr.bf16.mxu0 0
        %2495 = vmatmul.mubr.bf16.gmra.mxu0 %v2359
        %v2496 = vpop.f32.mrf.mxu0
        %v2497 = vadd.f32 0.0, %v2496
        %v2498 = vpop.f32.mrf.mxu0
        %v2499 = vpop.f32.mrf.mxu0
        %v2500 = vadd.f32 0.0, %v2499
        %v2501 = vpop.f32.mrf.mxu0
        %2502 = vmatprep.mubr.bf16.mxu0 0
        %2503 = vmatmul.mubr.bf16.gmra.mxu0 %v2360
        %v2504 = vpop.f32.mrf.mxu0
        %v2505 = vadd.f32 0.0, %v2504
        %v2506 = vpop.f32.mrf.mxu0
        %v2507 = vpop.f32.mrf.mxu0
        %v2508 = vadd.f32 0.0, %v2507
        %v2509 = vpop.f32.mrf.mxu0
        %2510 = vmatprep.mubr.bf16.mxu0 0
        %2511 = vmatmul.mubr.bf16.gmra.mxu0 %v2361
        %v2512 = vpop.f32.mrf.mxu0
        %v2513 = vadd.f32 0.0, %v2512
        %v2514 = vpop.f32.mrf.mxu0
        %v2515 = vpop.f32.mrf.mxu0
        %v2516 = vadd.f32 0.0, %v2515
        %v2517 = vpop.f32.mrf.mxu0
        %2518 = vmatprep.mubr.bf16.mxu0 0
        %2519 = vmatmul.mubr.bf16.gmra.mxu0 %v2362
        %v2520 = vpop.f32.mrf.mxu0
        %v2521 = vadd.f32 0.0, %v2520
        %v2522 = vpop.f32.mrf.mxu0
        %v2523 = vpop.f32.mrf.mxu0
        %v2524 = vadd.f32 0.0, %v2523
        %v2525 = vpop.f32.mrf.mxu0
        %2526 = vmatprep.mubr.bf16.mxu0 0
        %2527 = vmatmul.mubr.bf16.gmra.mxu0 %v2363
        %v2528 = vpop.f32.mrf.mxu0
        %v2529 = vadd.f32 0.0, %v2528
        %v2530 = vpop.f32.mrf.mxu0
        %v2531 = vpop.f32.mrf.mxu0
        %v2532 = vadd.f32 0.0, %v2531
        %v2533 = vpop.f32.mrf.mxu0
        %2534 = vdwg.mxu0
        %v2535 = vadd.f32 %v2187, %v2457
        %v2536 = vadd.f32 %v2188, %v2460
        %v2537 = vadd.f32 %v2189, %v2465
        %v2538 = vadd.f32 %v2190, %v2468
        %v2539 = vadd.f32 %v2191, %v2473
        %v2540 = vadd.f32 %v2192, %v2476
        %v2541 = vadd.f32 %v2193, %v2481
        %v2542 = vadd.f32 %v2194, %v2484
        %v2543 = vadd.f32 %v2195, %v2489
        %v2544 = vadd.f32 %v2196, %v2492
        %v2545 = vadd.f32 %v2197, %v2497
        %v2546 = vadd.f32 %v2198, %v2500
        %v2547 = vadd.f32 %v2199, %v2505
        %v2548 = vadd.f32 %v2200, %v2508
        %v2549 = vadd.f32 %v2201, %v2513
        %v2550 = vadd.f32 %v2202, %v2516
        %v2551 = vadd.f32 %v2203, %v2521
        %v2552 = vadd.f32 %v2204, %v2524
        %v2553 = vadd.f32 %v2205, %v2529
        %v2554 = vadd.f32 %v2206, %v2532
        %s2555 = sadd.s32 %s342, 2
        %s2556 = smul.u32 %s2555, 3
        %s2557 = smul.addr %s2556, 4
        %s2558 = scalar_lea.vmem %s301, %s2557 [#allocation3]
        %v2559 = vld [vmem:[%s2558] sm:$0xf]
        %v2560 = vld [vmem:[%s2558 + $0x4] sm:$0xf]
        %v2561 = vld [vmem:[%s2558 + $0xc] sm:$0xf]
        %v2562 = vld [vmem:[%s2558 + $0x10] sm:$0xf]
        %v2563 = vld [vmem:[%s2558 + $0x18] sm:$0xf]
        %v2564 = vld [vmem:[%s2558 + $0x1c] sm:$0xf]
        %v2565 = vld [vmem:[%s2558 + $0x24] sm:$0xf]
        %v2566 = vld [vmem:[%s2558 + $0x28] sm:$0xf]
        %v2567 = vld [vmem:[%s2558 + $0x30] sm:$0xf]
        %v2568 = vld [vmem:[%s2558 + $0x34] sm:$0xf]
        %v2569 = vld [vmem:[%s2558 + $0x3c] sm:$0xf]
        %v2570 = vld [vmem:[%s2558 + $0x40] sm:$0xf]
        %v2571 = vld [vmem:[%s2558 + $0x48] sm:$0xf]
        %v2572 = vld [vmem:[%s2558 + $0x4c] sm:$0xf]
        %v2573 = vld [vmem:[%s2558 + $0x54] sm:$0xf]
        %v2574 = vld [vmem:[%s2558 + $0x58] sm:$0xf]
        %v2575 = vld [vmem:[%s2558 + $0x60] sm:$0xf]
        %v2576 = vld [vmem:[%s2558 + $0x64] sm:$0xf]
        %v2577 = vld [vmem:[%s2558 + $0x6c] sm:$0xf]
        %v2578 = vld [vmem:[%s2558 + $0x70] sm:$0xf]
        %s2579 = scalar_lea.vmem [#allocation6], 384
        %v2580 = vld [vmem:[%s2579] sm:$0xf]
        %v2581 = vld [vmem:[%s2579 + $0x4] sm:$0xf]
        %v2582 = vld [vmem:[%s2579 + $0x8] sm:$0xf]
        %v2583 = vld [vmem:[%s2579 + $0xc] sm:$0xf]
        %v2584 = vld [vmem:[%s2579 + $0x10] sm:$0xf]
        %v2585 = vld [vmem:[%s2579 + $0x14] sm:$0xf]
        %v2586 = vld [vmem:[%s2579 + $0x18] sm:$0xf]
        %v2587 = vld [vmem:[%s2579 + $0x1c] sm:$0xf]
        %v2588 = vld [vmem:[%s2579 + $0x20] sm:$0xf]
        %v2589 = vld [vmem:[%s2579 + $0x24] sm:$0xf]
        %v2590 = vld [vmem:[%s2579 + $0x28] sm:$0xf]
        %v2591 = vld [vmem:[%s2579 + $0x2c] sm:$0xf]
        %v2592 = vld [vmem:[%s2579 + $0x30] sm:$0xf]
        %v2593 = vld [vmem:[%s2579 + $0x34] sm:$0xf]
        %v2594 = vld [vmem:[%s2579 + $0x38] sm:$0xf]
        %v2595 = vld [vmem:[%s2579 + $0x3c] sm:$0xf]
        %v2616 = vunpack.c.l.b16 %v2559
        %v2617 = vunpack.c.l.b16 %v2560
        %v2618 = vunpack.c.l.b16 %v2561
        %v2619 = vunpack.c.l.b16 %v2562
        %v2620 = vunpack.c.l.b16 %v2563
        %v2621 = vunpack.c.l.b16 %v2564
        %v2622 = vunpack.c.l.b16 %v2565
        %v2623 = vunpack.c.l.b16 %v2566
        %v2624 = vunpack.c.l.b16 %v2567
        %v2625 = vunpack.c.l.b16 %v2568
        %v2626 = vunpack.c.l.b16 %v2569
        %v2627 = vunpack.c.l.b16 %v2570
        %v2628 = vunpack.c.l.b16 %v2571
        %v2629 = vunpack.c.l.b16 %v2572
        %v2630 = vunpack.c.l.b16 %v2573
        %v2631 = vunpack.c.l.b16 %v2574
        %v2632 = vunpack.c.l.b16 %v2575
        %v2633 = vunpack.c.l.b16 %v2576
        %v2634 = vunpack.c.l.b16 %v2577
        %v2635 = vunpack.c.l.b16 %v2578
        %v2636 = vpack.c.b16 %v2617, %v2616
        %v2637 = vpack.c.b16 %v2619, %v2618
        %v2638 = vpack.c.b16 %v2621, %v2620
        %v2639 = vpack.c.b16 %v2623, %v2622
        %v2640 = vpack.c.b16 %v2625, %v2624
        %v2641 = vpack.c.b16 %v2627, %v2626
        %v2642 = vpack.c.b16 %v2629, %v2628
        %v2643 = vpack.c.b16 %v2631, %v2630
        %v2644 = vpack.c.b16 %v2633, %v2632
        %v2645 = vpack.c.b16 %v2635, %v2634
        %v2672 = vunpack.c.l.b16 %v2580
        %v2673 = vunpack.c.l.b16 %v2581
        %v2674 = vunpack.c.l.b16 %v2582
        %v2675 = vunpack.c.l.b16 %v2583
        %v2676 = vunpack.c.l.b16 %v2584
        %v2677 = vunpack.c.l.b16 %v2585
        %v2678 = vunpack.c.l.b16 %v2586
        %v2679 = vunpack.c.l.b16 %v2587
        %v2680 = vunpack.c.l.b16 %v2588
        %v2681 = vunpack.c.l.b16 %v2589
        %v2682 = vunpack.c.l.b16 %v2590
        %v2683 = vunpack.c.l.b16 %v2591
        %v2684 = vunpack.c.l.b16 %v2592
        %v2685 = vunpack.c.l.b16 %v2593
        %v2686 = vunpack.c.l.b16 %v2594
        %v2687 = vunpack.c.l.b16 %v2595
        %v2688 = vpack.c.b16 %v2673, %v2672
        %v2689 = vpack.c.b16 %v2675, %v2674
        %v2690 = vpack.c.b16 %v2677, %v2676
        %v2691 = vpack.c.b16 %v2679, %v2678
        %v2692 = vpack.c.b16 %v2681, %v2680
        %v2693 = vpack.c.b16 %v2683, %v2682
        %v2694 = vpack.c.b16 %v2685, %v2684
        %v2695 = vpack.c.b16 %v2687, %v2686
        %2704 = vmatprep.subr.bf16.mxu0 0
        %2705 = vmatpush1.bf16.msra.mxu0 %v2695
        %2706 = vmatprep.subr.bf16.mxu0 0
        %2707 = vmatpush1.bf16.msra.mxu0 %v2694
        %2708 = vmatprep.subr.bf16.mxu0 0
        %2709 = vmatpush1.bf16.msra.mxu0 %v2693
        %2710 = vmatprep.subr.bf16.mxu0 0
        %2711 = vmatpush1.bf16.msra.mxu0 %v2692
        %2712 = vmatprep.subr.bf16.mxu0 0
        %2713 = vmatpush1.bf16.msra.mxu0 %v2691
        %2714 = vmatprep.subr.bf16.mxu0 0
        %2715 = vmatpush1.bf16.msra.mxu0 %v2690
        %2716 = vmatprep.subr.bf16.mxu0 0
        %2717 = vmatpush1.bf16.msra.mxu0 %v2689
        %2718 = vmatprep.subr.bf16.mxu0 0
        %2719 = vmatpush1.bf16.msra.mxu0 %v2688
        %2720 = vmatprep.subr.bf16.mxu0 0
        %2721 = vmatpush2.bf16.msra.mxu0 0
        %2722 = vmatprep.subr.bf16.mxu0 0
        %2723 = vmatpush2.bf16.msra.mxu0 0
        %2724 = vmatprep.subr.bf16.mxu0 0
        %2725 = vmatpush2.bf16.msra.mxu0 0
        %2726 = vmatprep.subr.bf16.mxu0 0
        %2727 = vmatpush2.bf16.msra.mxu0 0
        %2728 = vmatprep.subr.bf16.mxu0 0
        %2729 = vmatpush2.bf16.msra.mxu0 0
        %2730 = vmatprep.subr.bf16.mxu0 0
        %2731 = vmatpush2.bf16.msra.mxu0 0
        %2732 = vmatprep.subr.bf16.mxu0 0
        %2733 = vmatpush2.bf16.msra.mxu0 0
        %2734 = vmatprep.subr.bf16.mxu0 0
        %2735 = vmatpush2.bf16.msra.mxu0 0
        %2736 = vmatprep.mubr.bf16.mxu0 0
        %2737 = vmatmul.mubr.bf16.gmra.mxu0 %v2636
        %v2738 = vpop.f32.mrf.mxu0
        %v2739 = vadd.f32 0.0, %v2738
        %v2740 = vpop.f32.mrf.mxu0
        %v2741 = vpop.f32.mrf.mxu0
        %v2742 = vadd.f32 0.0, %v2741
        %v2743 = vpop.f32.mrf.mxu0
        %2744 = vmatprep.mubr.bf16.mxu0 0
        %2745 = vmatmul.mubr.bf16.gmra.mxu0 %v2637
        %v2746 = vpop.f32.mrf.mxu0
        %v2747 = vadd.f32 0.0, %v2746
        %v2748 = vpop.f32.mrf.mxu0
        %v2749 = vpop.f32.mrf.mxu0
        %v2750 = vadd.f32 0.0, %v2749
        %v2751 = vpop.f32.mrf.mxu0
        %2752 = vmatprep.mubr.bf16.mxu0 0
        %2753 = vmatmul.mubr.bf16.gmra.mxu0 %v2638
        %v2754 = vpop.f32.mrf.mxu0
        %v2755 = vadd.f32 0.0, %v2754
        %v2756 = vpop.f32.mrf.mxu0
        %v2757 = vpop.f32.mrf.mxu0
        %v2758 = vadd.f32 0.0, %v2757
        %v2759 = vpop.f32.mrf.mxu0
        %2760 = vmatprep.mubr.bf16.mxu0 0
        %2761 = vmatmul.mubr.bf16.gmra.mxu0 %v2639
        %v2762 = vpop.f32.mrf.mxu0
        %v2763 = vadd.f32 0.0, %v2762
        %v2764 = vpop.f32.mrf.mxu0
        %v2765 = vpop.f32.mrf.mxu0
        %v2766 = vadd.f32 0.0, %v2765
        %v2767 = vpop.f32.mrf.mxu0
        %2768 = vmatprep.mubr.bf16.mxu0 0
        %2769 = vmatmul.mubr.bf16.gmra.mxu0 %v2640
        %v2770 = vpop.f32.mrf.mxu0
        %v2771 = vadd.f32 0.0, %v2770
        %v2772 = vpop.f32.mrf.mxu0
        %v2773 = vpop.f32.mrf.mxu0
        %v2774 = vadd.f32 0.0, %v2773
        %v2775 = vpop.f32.mrf.mxu0
        %2776 = vmatprep.mubr.bf16.mxu0 0
        %2777 = vmatmul.mubr.bf16.gmra.mxu0 %v2641
        %v2778 = vpop.f32.mrf.mxu0
        %v2779 = vadd.f32 0.0, %v2778
        %v2780 = vpop.f32.mrf.mxu0
        %v2781 = vpop.f32.mrf.mxu0
        %v2782 = vadd.f32 0.0, %v2781
        %v2783 = vpop.f32.mrf.mxu0
        %2784 = vmatprep.mubr.bf16.mxu0 0
        %2785 = vmatmul.mubr.bf16.gmra.mxu0 %v2642
        %v2786 = vpop.f32.mrf.mxu0
        %v2787 = vadd.f32 0.0, %v2786
        %v2788 = vpop.f32.mrf.mxu0
        %v2789 = vpop.f32.mrf.mxu0
        %v2790 = vadd.f32 0.0, %v2789
        %v2791 = vpop.f32.mrf.mxu0
        %2792 = vmatprep.mubr.bf16.mxu0 0
        %2793 = vmatmul.mubr.bf16.gmra.mxu0 %v2643
        %v2794 = vpop.f32.mrf.mxu0
        %v2795 = vadd.f32 0.0, %v2794
        %v2796 = vpop.f32.mrf.mxu0
        %v2797 = vpop.f32.mrf.mxu0
        %v2798 = vadd.f32 0.0, %v2797
        %v2799 = vpop.f32.mrf.mxu0
        %2800 = vmatprep.mubr.bf16.mxu0 0
        %2801 = vmatmul.mubr.bf16.gmra.mxu0 %v2644
        %v2802 = vpop.f32.mrf.mxu0
        %v2803 = vadd.f32 0.0, %v2802
        %v2804 = vpop.f32.mrf.mxu0
        %v2805 = vpop.f32.mrf.mxu0
        %v2806 = vadd.f32 0.0, %v2805
        %v2807 = vpop.f32.mrf.mxu0
        %2808 = vmatprep.mubr.bf16.mxu0 0
        %2809 = vmatmul.mubr.bf16.gmra.mxu0 %v2645
        %v2810 = vpop.f32.mrf.mxu0
        %v2811 = vadd.f32 0.0, %v2810
        %v2812 = vpop.f32.mrf.mxu0
        %v2813 = vpop.f32.mrf.mxu0
        %v2814 = vadd.f32 0.0, %v2813
        %v2815 = vpop.f32.mrf.mxu0
        %2816 = vdwg.mxu0
        %v2817 = vadd.f32 %v2535, %v2739
        %v2818 = vadd.f32 %v2536, %v2742
        %v2819 = vadd.f32 %v2537, %v2747
        %v2820 = vadd.f32 %v2538, %v2750
        %v2821 = vadd.f32 %v2539, %v2755
        %v2822 = vadd.f32 %v2540, %v2758
        %v2823 = vadd.f32 %v2541, %v2763
        %v2824 = vadd.f32 %v2542, %v2766
        %v2825 = vadd.f32 %v2543, %v2771
        %v2826 = vadd.f32 %v2544, %v2774
        %v2827 = vadd.f32 %v2545, %v2779
        %v2828 = vadd.f32 %v2546, %v2782
        %v2829 = vadd.f32 %v2547, %v2787
        %v2830 = vadd.f32 %v2548, %v2790
        %v2831 = vadd.f32 %v2549, %v2795
        %v2832 = vadd.f32 %v2550, %v2798
        %v2833 = vadd.f32 %v2551, %v2803
        %v2834 = vadd.f32 %v2552, %v2806
        %v2835 = vadd.f32 %v2553, %v2811
        %v2836 = vadd.f32 %v2554, %v2814
        %v2837 = vld [vmem:[%s2558] sm:$0xf]
        %v2838 = vld [vmem:[%s2558 + $0x4] sm:$0xf]
        %v2839 = vld [vmem:[%s2558 + $0x8] sm:$0x1]
        %v2840 = vld [vmem:[%s2558 + $0xc] sm:$0xf]
        %v2841 = vld [vmem:[%s2558 + $0x10] sm:$0xf]
        %v2842 = vld [vmem:[%s2558 + $0x14] sm:$0x1]
        %v2843 = vld [vmem:[%s2558 + $0x18] sm:$0xf]
        %v2844 = vld [vmem:[%s2558 + $0x1c] sm:$0xf]
        %v2845 = vld [vmem:[%s2558 + $0x20] sm:$0x1]
        %v2846 = vld [vmem:[%s2558 + $0x24] sm:$0xf]
        %v2847 = vld [vmem:[%s2558 + $0x28] sm:$0xf]
        %v2848 = vld [vmem:[%s2558 + $0x2c] sm:$0x1]
        %v2849 = vld [vmem:[%s2558 + $0x30] sm:$0xf]
        %v2850 = vld [vmem:[%s2558 + $0x34] sm:$0xf]
        %v2851 = vld [vmem:[%s2558 + $0x38] sm:$0x1]
        %v2852 = vld [vmem:[%s2558 + $0x3c] sm:$0xf]
        %v2853 = vld [vmem:[%s2558 + $0x40] sm:$0xf]
        %v2854 = vld [vmem:[%s2558 + $0x44] sm:$0x1]
        %v2855 = vld [vmem:[%s2558 + $0x48] sm:$0xf]
        %v2856 = vld [vmem:[%s2558 + $0x4c] sm:$0xf]
        %v2857 = vld [vmem:[%s2558 + $0x50] sm:$0x1]
        %v2858 = vld [vmem:[%s2558 + $0x54] sm:$0xf]
        %v2859 = vld [vmem:[%s2558 + $0x58] sm:$0xf]
        %v2860 = vld [vmem:[%s2558 + $0x5c] sm:$0x1]
        %v2861 = vld [vmem:[%s2558 + $0x60] sm:$0xf]
        %v2862 = vld [vmem:[%s2558 + $0x64] sm:$0xf]
        %v2863 = vld [vmem:[%s2558 + $0x68] sm:$0x1]
        %v2864 = vld [vmem:[%s2558 + $0x6c] sm:$0xf]
        %v2865 = vld [vmem:[%s2558 + $0x70] sm:$0xf]
        %v2866 = vld [vmem:[%s2558 + $0x74] sm:$0x1]
        %v2868 = vshrl.u32 %v2837, 16
        %v2870 = vrot.slane %v2868, 4
        %v2871 = vshll.u32 %v2837, 16
        %v2873 = vrot.slane %v2871, 5
        %v2874 = vor.u32 %v2870, %v2873
        %v2875 = vrot.slane %v2874, 4
        %v2877 = vshll.u32 %v2838, 16
        %v2879 = vrot.slane %v2877, 5
        %v2880 = vsel %vm396, %v2875, %v2879
        %v2881 = vshrl.u32 %v2838, 16
        %v2883 = vrot.slane %v2881, 4
        %v2884 = vor.u32 %v2883, %v2879
        %v2885 = vrot.slane %v2884, 4
        %v2887 = vshll.u32 %v2839, 16
        %v2889 = vrot.slane %v2887, 5
        %v2890 = vsel %vm396, %v2885, %v2889
        %v2892 = vshrl.u32 %v2840, 16
        %v2894 = vrot.slane %v2892, 4
        %v2895 = vshll.u32 %v2840, 16
        %v2897 = vrot.slane %v2895, 5
        %v2898 = vor.u32 %v2894, %v2897
        %v2899 = vrot.slane %v2898, 4
        %v2901 = vshll.u32 %v2841, 16
        %v2903 = vrot.slane %v2901, 5
        %v2904 = vsel %vm396, %v2899, %v2903
        %v2905 = vshrl.u32 %v2841, 16
        %v2907 = vrot.slane %v2905, 4
        %v2908 = vor.u32 %v2907, %v2903
        %v2909 = vrot.slane %v2908, 4
        %v2911 = vshll.u32 %v2842, 16
        %v2913 = vrot.slane %v2911, 5
        %v2914 = vsel %vm396, %v2909, %v2913
        %v2916 = vshrl.u32 %v2843, 16
        %v2918 = vrot.slane %v2916, 4
        %v2919 = vshll.u32 %v2843, 16
        %v2921 = vrot.slane %v2919, 5
        %v2922 = vor.u32 %v2918, %v2921
        %v2923 = vrot.slane %v2922, 4
        %v2925 = vshll.u32 %v2844, 16
        %v2927 = vrot.slane %v2925, 5
        %v2928 = vsel %vm396, %v2923, %v2927
        %v2929 = vshrl.u32 %v2844, 16
        %v2931 = vrot.slane %v2929, 4
        %v2932 = vor.u32 %v2931, %v2927
        %v2933 = vrot.slane %v2932, 4
        %v2935 = vshll.u32 %v2845, 16
        %v2937 = vrot.slane %v2935, 5
        %v2938 = vsel %vm396, %v2933, %v2937
        %v2940 = vshrl.u32 %v2846, 16
        %v2942 = vrot.slane %v2940, 4
        %v2943 = vshll.u32 %v2846, 16
        %v2945 = vrot.slane %v2943, 5
        %v2946 = vor.u32 %v2942, %v2945
        %v2947 = vrot.slane %v2946, 4
        %v2949 = vshll.u32 %v2847, 16
        %v2951 = vrot.slane %v2949, 5
        %v2952 = vsel %vm396, %v2947, %v2951
        %v2953 = vshrl.u32 %v2847, 16
        %v2955 = vrot.slane %v2953, 4
        %v2956 = vor.u32 %v2955, %v2951
        %v2957 = vrot.slane %v2956, 4
        %v2959 = vshll.u32 %v2848, 16
        %v2961 = vrot.slane %v2959, 5
        %v2962 = vsel %vm396, %v2957, %v2961
        %v2964 = vshrl.u32 %v2849, 16
        %v2966 = vrot.slane %v2964, 4
        %v2967 = vshll.u32 %v2849, 16
        %v2969 = vrot.slane %v2967, 5
        %v2970 = vor.u32 %v2966, %v2969
        %v2971 = vrot.slane %v2970, 4
        %v2973 = vshll.u32 %v2850, 16
        %v2975 = vrot.slane %v2973, 5
        %v2976 = vsel %vm396, %v2971, %v2975
        %v2977 = vshrl.u32 %v2850, 16
        %v2979 = vrot.slane %v2977, 4
        %v2980 = vor.u32 %v2979, %v2975
        %v2981 = vrot.slane %v2980, 4
        %v2983 = vshll.u32 %v2851, 16
        %v2985 = vrot.slane %v2983, 5
        %v2986 = vsel %vm396, %v2981, %v2985
        %v2988 = vshrl.u32 %v2852, 16
        %v2990 = vrot.slane %v2988, 4
        %v2991 = vshll.u32 %v2852, 16
        %v2993 = vrot.slane %v2991, 5
        %v2994 = vor.u32 %v2990, %v2993
        %v2995 = vrot.slane %v2994, 4
        %v2997 = vshll.u32 %v2853, 16
        %v2999 = vrot.slane %v2997, 5
        %v3000 = vsel %vm396, %v2995, %v2999
        %v3001 = vshrl.u32 %v2853, 16
        %v3003 = vrot.slane %v3001, 4
        %v3004 = vor.u32 %v3003, %v2999
        %v3005 = vrot.slane %v3004, 4
        %v3007 = vshll.u32 %v2854, 16
        %v3009 = vrot.slane %v3007, 5
        %v3010 = vsel %vm396, %v3005, %v3009
        %v3012 = vshrl.u32 %v2855, 16
        %v3014 = vrot.slane %v3012, 4
        %v3015 = vshll.u32 %v2855, 16
        %v3017 = vrot.slane %v3015, 5
        %v3018 = vor.u32 %v3014, %v3017
        %v3019 = vrot.slane %v3018, 4
        %v3021 = vshll.u32 %v2856, 16
        %v3023 = vrot.slane %v3021, 5
        %v3024 = vsel %vm396, %v3019, %v3023
        %v3025 = vshrl.u32 %v2856, 16
        %v3027 = vrot.slane %v3025, 4
        %v3028 = vor.u32 %v3027, %v3023
        %v3029 = vrot.slane %v3028, 4
        %v3031 = vshll.u32 %v2857, 16
        %v3033 = vrot.slane %v3031, 5
        %v3034 = vsel %vm396, %v3029, %v3033
        %v3036 = vshrl.u32 %v2858, 16
        %v3038 = vrot.slane %v3036, 4
        %v3039 = vshll.u32 %v2858, 16
        %v3041 = vrot.slane %v3039, 5
        %v3042 = vor.u32 %v3038, %v3041
        %v3043 = vrot.slane %v3042, 4
        %v3045 = vshll.u32 %v2859, 16
        %v3047 = vrot.slane %v3045, 5
        %v3048 = vsel %vm396, %v3043, %v3047
        %v3049 = vshrl.u32 %v2859, 16
        %v3051 = vrot.slane %v3049, 4
        %v3052 = vor.u32 %v3051, %v3047
        %v3053 = vrot.slane %v3052, 4
        %v3055 = vshll.u32 %v2860, 16
        %v3057 = vrot.slane %v3055, 5
        %v3058 = vsel %vm396, %v3053, %v3057
        %v3060 = vshrl.u32 %v2861, 16
        %v3062 = vrot.slane %v3060, 4
        %v3063 = vshll.u32 %v2861, 16
        %v3065 = vrot.slane %v3063, 5
        %v3066 = vor.u32 %v3062, %v3065
        %v3067 = vrot.slane %v3066, 4
        %v3069 = vshll.u32 %v2862, 16
        %v3071 = vrot.slane %v3069, 5
        %v3072 = vsel %vm396, %v3067, %v3071
        %v3073 = vshrl.u32 %v2862, 16
        %v3075 = vrot.slane %v3073, 4
        %v3076 = vor.u32 %v3075, %v3071
        %v3077 = vrot.slane %v3076, 4
        %v3079 = vshll.u32 %v2863, 16
        %v3081 = vrot.slane %v3079, 5
        %v3082 = vsel %vm396, %v3077, %v3081
        %v3084 = vshrl.u32 %v2864, 16
        %v3086 = vrot.slane %v3084, 4
        %v3087 = vshll.u32 %v2864, 16
        %v3089 = vrot.slane %v3087, 5
        %v3090 = vor.u32 %v3086, %v3089
        %v3091 = vrot.slane %v3090, 4
        %v3093 = vshll.u32 %v2865, 16
        %v3095 = vrot.slane %v3093, 5
        %v3096 = vsel %vm396, %v3091, %v3095
        %v3097 = vshrl.u32 %v2865, 16
        %v3099 = vrot.slane %v3097, 4
        %v3100 = vor.u32 %v3099, %v3095
        %v3101 = vrot.slane %v3100, 4
        %v3103 = vshll.u32 %v2866, 16
        %v3105 = vrot.slane %v3103, 5
        %v3106 = vsel %vm396, %v3101, %v3105
        %s3107 = scalar_lea.vmem [#allocation6], 448
        %v3108 = vld [vmem:[%s3107] sm:$0xf]
        %v3109 = vld [vmem:[%s3107 + $0x4] sm:$0xf]
        %v3110 = vld [vmem:[%s3107 + $0x8] sm:$0xf]
        %v3111 = vld [vmem:[%s3107 + $0xc] sm:$0xf]
        %v3112 = vld [vmem:[%s3107 + $0x10] sm:$0xf]
        %v3113 = vld [vmem:[%s3107 + $0x14] sm:$0xf]
        %v3114 = vld [vmem:[%s3107 + $0x18] sm:$0xf]
        %v3115 = vld [vmem:[%s3107 + $0x1c] sm:$0xf]
        %v3116 = vld [vmem:[%s3107 + $0x20] sm:$0xf]
        %v3117 = vld [vmem:[%s3107 + $0x24] sm:$0xf]
        %v3118 = vld [vmem:[%s3107 + $0x28] sm:$0xf]
        %v3119 = vld [vmem:[%s3107 + $0x2c] sm:$0xf]
        %v3120 = vld [vmem:[%s3107 + $0x30] sm:$0xf]
        %v3121 = vld [vmem:[%s3107 + $0x34] sm:$0xf]
        %v3122 = vld [vmem:[%s3107 + $0x38] sm:$0xf]
        %v3123 = vld [vmem:[%s3107 + $0x3c] sm:$0xf]
        %v3124 = vunpack.c.l.b16 %v2880
        %v3125 = vunpack.c.l.b16 %v2890
        %v3126 = vunpack.c.l.b16 %v2904
        %v3127 = vunpack.c.l.b16 %v2914
        %v3128 = vunpack.c.l.b16 %v2928
        %v3129 = vunpack.c.l.b16 %v2938
        %v3130 = vunpack.c.l.b16 %v2952
        %v3131 = vunpack.c.l.b16 %v2962
        %v3132 = vunpack.c.l.b16 %v2976
        %v3133 = vunpack.c.l.b16 %v2986
        %v3134 = vunpack.c.l.b16 %v3000
        %v3135 = vunpack.c.l.b16 %v3010
        %v3136 = vunpack.c.l.b16 %v3024
        %v3137 = vunpack.c.l.b16 %v3034
        %v3138 = vunpack.c.l.b16 %v3048
        %v3139 = vunpack.c.l.b16 %v3058
        %v3140 = vunpack.c.l.b16 %v3072
        %v3141 = vunpack.c.l.b16 %v3082
        %v3142 = vunpack.c.l.b16 %v3096
        %v3143 = vunpack.c.l.b16 %v3106
        %v3144 = vpack.c.b16 %v3125, %v3124
        %v3145 = vpack.c.b16 %v3127, %v3126
        %v3146 = vpack.c.b16 %v3129, %v3128
        %v3147 = vpack.c.b16 %v3131, %v3130
        %v3148 = vpack.c.b16 %v3133, %v3132
        %v3149 = vpack.c.b16 %v3135, %v3134
        %v3150 = vpack.c.b16 %v3137, %v3136
        %v3151 = vpack.c.b16 %v3139, %v3138
        %v3152 = vpack.c.b16 %v3141, %v3140
        %v3153 = vpack.c.b16 %v3143, %v3142
        %v3180 = vunpack.c.l.b16 %v3108
        %v3181 = vunpack.c.l.b16 %v3109
        %v3182 = vunpack.c.l.b16 %v3110
        %v3183 = vunpack.c.l.b16 %v3111
        %v3184 = vunpack.c.l.b16 %v3112
        %v3185 = vunpack.c.l.b16 %v3113
        %v3186 = vunpack.c.l.b16 %v3114
        %v3187 = vunpack.c.l.b16 %v3115
        %v3188 = vunpack.c.l.b16 %v3116
        %v3189 = vunpack.c.l.b16 %v3117
        %v3190 = vunpack.c.l.b16 %v3118
        %v3191 = vunpack.c.l.b16 %v3119
        %v3192 = vunpack.c.l.b16 %v3120
        %v3193 = vunpack.c.l.b16 %v3121
        %v3194 = vunpack.c.l.b16 %v3122
        %v3195 = vunpack.c.l.b16 %v3123
        %v3196 = vpack.c.b16 %v3181, %v3180
        %v3197 = vpack.c.b16 %v3183, %v3182
        %v3198 = vpack.c.b16 %v3185, %v3184
        %v3199 = vpack.c.b16 %v3187, %v3186
        %v3200 = vpack.c.b16 %v3189, %v3188
        %v3201 = vpack.c.b16 %v3191, %v3190
        %v3202 = vpack.c.b16 %v3193, %v3192
        %v3203 = vpack.c.b16 %v3195, %v3194
        %3212 = vmatprep.subr.bf16.mxu0 0
        %3213 = vmatpush1.bf16.msra.mxu0 %v3203
        %3214 = vmatprep.subr.bf16.mxu0 0
        %3215 = vmatpush1.bf16.msra.mxu0 %v3202
        %3216 = vmatprep.subr.bf16.mxu0 0
        %3217 = vmatpush1.bf16.msra.mxu0 %v3201
        %3218 = vmatprep.subr.bf16.mxu0 0
        %3219 = vmatpush1.bf16.msra.mxu0 %v3200
        %3220 = vmatprep.subr.bf16.mxu0 0
        %3221 = vmatpush1.bf16.msra.mxu0 %v3199
        %3222 = vmatprep.subr.bf16.mxu0 0
        %3223 = vmatpush1.bf16.msra.mxu0 %v3198
        %3224 = vmatprep.subr.bf16.mxu0 0
        %3225 = vmatpush1.bf16.msra.mxu0 %v3197
        %3226 = vmatprep.subr.bf16.mxu0 0
        %3227 = vmatpush1.bf16.msra.mxu0 %v3196
        %3228 = vmatprep.subr.bf16.mxu0 0
        %3229 = vmatpush2.bf16.msra.mxu0 0
        %3230 = vmatprep.subr.bf16.mxu0 0
        %3231 = vmatpush2.bf16.msra.mxu0 0
        %3232 = vmatprep.subr.bf16.mxu0 0
        %3233 = vmatpush2.bf16.msra.mxu0 0
        %3234 = vmatprep.subr.bf16.mxu0 0
        %3235 = vmatpush2.bf16.msra.mxu0 0
        %3236 = vmatprep.subr.bf16.mxu0 0
        %3237 = vmatpush2.bf16.msra.mxu0 0
        %3238 = vmatprep.subr.bf16.mxu0 0
        %3239 = vmatpush2.bf16.msra.mxu0 0
        %3240 = vmatprep.subr.bf16.mxu0 0
        %3241 = vmatpush2.bf16.msra.mxu0 0
        %3242 = vmatprep.subr.bf16.mxu0 0
        %3243 = vmatpush2.bf16.msra.mxu0 0
        %3244 = vmatprep.mubr.bf16.mxu0 0
        %3245 = vmatmul.mubr.bf16.gmra.mxu0 %v3144
        %v3246 = vpop.f32.mrf.mxu0
        %v3247 = vadd.f32 0.0, %v3246
        %v3248 = vpop.f32.mrf.mxu0
        %v3249 = vpop.f32.mrf.mxu0
        %v3250 = vadd.f32 0.0, %v3249
        %v3251 = vpop.f32.mrf.mxu0
        %3252 = vmatprep.mubr.bf16.mxu0 0
        %3253 = vmatmul.mubr.bf16.gmra.mxu0 %v3145
        %v3254 = vpop.f32.mrf.mxu0
        %v3255 = vadd.f32 0.0, %v3254
        %v3256 = vpop.f32.mrf.mxu0
        %v3257 = vpop.f32.mrf.mxu0
        %v3258 = vadd.f32 0.0, %v3257
        %v3259 = vpop.f32.mrf.mxu0
        %3260 = vmatprep.mubr.bf16.mxu0 0
        %3261 = vmatmul.mubr.bf16.gmra.mxu0 %v3146
        %v3262 = vpop.f32.mrf.mxu0
        %v3263 = vadd.f32 0.0, %v3262
        %v3264 = vpop.f32.mrf.mxu0
        %v3265 = vpop.f32.mrf.mxu0
        %v3266 = vadd.f32 0.0, %v3265
        %v3267 = vpop.f32.mrf.mxu0
        %3268 = vmatprep.mubr.bf16.mxu0 0
        %3269 = vmatmul.mubr.bf16.gmra.mxu0 %v3147
        %v3270 = vpop.f32.mrf.mxu0
        %v3271 = vadd.f32 0.0, %v3270
        %v3272 = vpop.f32.mrf.mxu0
        %v3273 = vpop.f32.mrf.mxu0
        %v3274 = vadd.f32 0.0, %v3273
        %v3275 = vpop.f32.mrf.mxu0
        %3276 = vmatprep.mubr.bf16.mxu0 0
        %3277 = vmatmul.mubr.bf16.gmra.mxu0 %v3148
        %v3278 = vpop.f32.mrf.mxu0
        %v3279 = vadd.f32 0.0, %v3278
        %v3280 = vpop.f32.mrf.mxu0
        %v3281 = vpop.f32.mrf.mxu0
        %v3282 = vadd.f32 0.0, %v3281
        %v3283 = vpop.f32.mrf.mxu0
        %3284 = vmatprep.mubr.bf16.mxu0 0
        %3285 = vmatmul.mubr.bf16.gmra.mxu0 %v3149
        %v3286 = vpop.f32.mrf.mxu0
        %v3287 = vadd.f32 0.0, %v3286
        %v3288 = vpop.f32.mrf.mxu0
        %v3289 = vpop.f32.mrf.mxu0
        %v3290 = vadd.f32 0.0, %v3289
        %v3291 = vpop.f32.mrf.mxu0
        %3292 = vmatprep.mubr.bf16.mxu0 0
        %3293 = vmatmul.mubr.bf16.gmra.mxu0 %v3150
        %v3294 = vpop.f32.mrf.mxu0
        %v3295 = vadd.f32 0.0, %v3294
        %v3296 = vpop.f32.mrf.mxu0
        %v3297 = vpop.f32.mrf.mxu0
        %v3298 = vadd.f32 0.0, %v3297
        %v3299 = vpop.f32.mrf.mxu0
        %3300 = vmatprep.mubr.bf16.mxu0 0
        %3301 = vmatmul.mubr.bf16.gmra.mxu0 %v3151
        %v3302 = vpop.f32.mrf.mxu0
        %v3303 = vadd.f32 0.0, %v3302
        %v3304 = vpop.f32.mrf.mxu0
        %v3305 = vpop.f32.mrf.mxu0
        %v3306 = vadd.f32 0.0, %v3305
        %v3307 = vpop.f32.mrf.mxu0
        %3308 = vmatprep.mubr.bf16.mxu0 0
        %3309 = vmatmul.mubr.bf16.gmra.mxu0 %v3152
        %v3310 = vpop.f32.mrf.mxu0
        %v3311 = vadd.f32 0.0, %v3310
        %v3312 = vpop.f32.mrf.mxu0
        %v3313 = vpop.f32.mrf.mxu0
        %v3314 = vadd.f32 0.0, %v3313
        %v3315 = vpop.f32.mrf.mxu0
        %3316 = vmatprep.mubr.bf16.mxu0 0
        %3317 = vmatmul.mubr.bf16.gmra.mxu0 %v3153
        %v3318 = vpop.f32.mrf.mxu0
        %v3319 = vadd.f32 0.0, %v3318
        %v3320 = vpop.f32.mrf.mxu0
        %v3321 = vpop.f32.mrf.mxu0
        %v3322 = vadd.f32 0.0, %v3321
        %v3323 = vpop.f32.mrf.mxu0
        %3324 = vdwg.mxu0
        %v3325 = vadd.f32 %v2817, %v3247
        %v3326 = vadd.f32 %v2818, %v3250
        %v3327 = vadd.f32 %v2819, %v3255
        %v3328 = vadd.f32 %v2820, %v3258
        %v3329 = vadd.f32 %v2821, %v3263
        %v3330 = vadd.f32 %v2822, %v3266
        %v3331 = vadd.f32 %v2823, %v3271
        %v3332 = vadd.f32 %v2824, %v3274
        %v3333 = vadd.f32 %v2825, %v3279
        %v3334 = vadd.f32 %v2826, %v3282
        %v3335 = vadd.f32 %v2827, %v3287
        %v3336 = vadd.f32 %v2828, %v3290
        %v3337 = vadd.f32 %v2829, %v3295
        %v3338 = vadd.f32 %v2830, %v3298
        %v3339 = vadd.f32 %v2831, %v3303
        %v3340 = vadd.f32 %v2832, %v3306
        %v3341 = vadd.f32 %v2833, %v3311
        %v3342 = vadd.f32 %v2834, %v3314
        %v3343 = vadd.f32 %v2835, %v3319
        %v3344 = vadd.f32 %v2836, %v3322
        %v3345 = vld [vmem:[%s2558] sm:$0xe]
        %v3346 = vld [vmem:[%s2558 + $0xc] sm:$0xe]
        %v3347 = vld [vmem:[%s2558 + $0x18] sm:$0xe]
        %v3348 = vld [vmem:[%s2558 + $0x24] sm:$0xe]
        %v3349 = vld [vmem:[%s2558 + $0x30] sm:$0xe]
        %v3350 = vld [vmem:[%s2558 + $0x3c] sm:$0xe]
        %v3351 = vld [vmem:[%s2558 + $0x48] sm:$0xe]
        %v3352 = vld [vmem:[%s2558 + $0x54] sm:$0xe]
        %v3353 = vld [vmem:[%s2558 + $0x60] sm:$0xe]
        %v3354 = vld [vmem:[%s2558 + $0x6c] sm:$0xe]
        %v3385 = vrot.slane %v3345, 5
        %v3386 = vrot.slane %v3385, 4
        %v3387 = vrot.slane %v2838, 5
        %v3388 = vsel %vm1108, %v3386, %v3387
        %v3389 = vrot.slane %v3387, 4
        %v3390 = vrot.slane %v2839, 5
        %v3391 = vsel %vm1108, %v3389, %v3390
        %v3392 = vrot.slane %v3346, 5
        %v3393 = vrot.slane %v3392, 4
        %v3394 = vrot.slane %v2841, 5
        %v3395 = vsel %vm1108, %v3393, %v3394
        %v3396 = vrot.slane %v3394, 4
        %v3397 = vrot.slane %v2842, 5
        %v3398 = vsel %vm1108, %v3396, %v3397
        %v3399 = vrot.slane %v3347, 5
        %v3400 = vrot.slane %v3399, 4
        %v3401 = vrot.slane %v2844, 5
        %v3402 = vsel %vm1108, %v3400, %v3401
        %v3403 = vrot.slane %v3401, 4
        %v3404 = vrot.slane %v2845, 5
        %v3405 = vsel %vm1108, %v3403, %v3404
        %v3406 = vrot.slane %v3348, 5
        %v3407 = vrot.slane %v3406, 4
        %v3408 = vrot.slane %v2847, 5
        %v3409 = vsel %vm1108, %v3407, %v3408
        %v3410 = vrot.slane %v3408, 4
        %v3411 = vrot.slane %v2848, 5
        %v3412 = vsel %vm1108, %v3410, %v3411
        %v3413 = vrot.slane %v3349, 5
        %v3414 = vrot.slane %v3413, 4
        %v3415 = vrot.slane %v2850, 5
        %v3416 = vsel %vm1108, %v3414, %v3415
        %v3417 = vrot.slane %v3415, 4
        %v3418 = vrot.slane %v2851, 5
        %v3419 = vsel %vm1108, %v3417, %v3418
        %v3420 = vrot.slane %v3350, 5
        %v3421 = vrot.slane %v3420, 4
        %v3422 = vrot.slane %v2853, 5
        %v3423 = vsel %vm1108, %v3421, %v3422
        %v3424 = vrot.slane %v3422, 4
        %v3425 = vrot.slane %v2854, 5
        %v3426 = vsel %vm1108, %v3424, %v3425
        %v3427 = vrot.slane %v3351, 5
        %v3428 = vrot.slane %v3427, 4
        %v3429 = vrot.slane %v2856, 5
        %v3430 = vsel %vm1108, %v3428, %v3429
        %v3431 = vrot.slane %v3429, 4
        %v3432 = vrot.slane %v2857, 5
        %v3433 = vsel %vm1108, %v3431, %v3432
        %v3434 = vrot.slane %v3352, 5
        %v3435 = vrot.slane %v3434, 4
        %v3436 = vrot.slane %v2859, 5
        %v3437 = vsel %vm1108, %v3435, %v3436
        %v3438 = vrot.slane %v3436, 4
        %v3439 = vrot.slane %v2860, 5
        %v3440 = vsel %vm1108, %v3438, %v3439
        %v3441 = vrot.slane %v3353, 5
        %v3442 = vrot.slane %v3441, 4
        %v3443 = vrot.slane %v2862, 5
        %v3444 = vsel %vm1108, %v3442, %v3443
        %v3445 = vrot.slane %v3443, 4
        %v3446 = vrot.slane %v2863, 5
        %v3447 = vsel %vm1108, %v3445, %v3446
        %v3448 = vrot.slane %v3354, 5
        %v3449 = vrot.slane %v3448, 4
        %v3450 = vrot.slane %v2865, 5
        %v3451 = vsel %vm1108, %v3449, %v3450
        %v3452 = vrot.slane %v3450, 4
        %v3453 = vrot.slane %v2866, 5
        %v3454 = vsel %vm1108, %v3452, %v3453
        %s3455 = scalar_lea.vmem [#allocation6], 512
        %v3456 = vld [vmem:[%s3455] sm:$0xf]
        %v3457 = vld [vmem:[%s3455 + $0x4] sm:$0xf]
        %v3458 = vld [vmem:[%s3455 + $0x8] sm:$0xf]
        %v3459 = vld [vmem:[%s3455 + $0xc] sm:$0xf]
        %v3460 = vld [vmem:[%s3455 + $0x10] sm:$0xf]
        %v3461 = vld [vmem:[%s3455 + $0x14] sm:$0xf]
        %v3462 = vld [vmem:[%s3455 + $0x18] sm:$0xf]
        %v3463 = vld [vmem:[%s3455 + $0x1c] sm:$0xf]
        %v3464 = vld [vmem:[%s3455 + $0x20] sm:$0xf]
        %v3465 = vld [vmem:[%s3455 + $0x24] sm:$0xf]
        %v3466 = vld [vmem:[%s3455 + $0x28] sm:$0xf]
        %v3467 = vld [vmem:[%s3455 + $0x2c] sm:$0xf]
        %v3468 = vld [vmem:[%s3455 + $0x30] sm:$0xf]
        %v3469 = vld [vmem:[%s3455 + $0x34] sm:$0xf]
        %v3470 = vld [vmem:[%s3455 + $0x38] sm:$0xf]
        %v3471 = vld [vmem:[%s3455 + $0x3c] sm:$0xf]
        %v3472 = vunpack.c.l.b16 %v3388
        %v3473 = vunpack.c.l.b16 %v3391
        %v3474 = vunpack.c.l.b16 %v3395
        %v3475 = vunpack.c.l.b16 %v3398
        %v3476 = vunpack.c.l.b16 %v3402
        %v3477 = vunpack.c.l.b16 %v3405
        %v3478 = vunpack.c.l.b16 %v3409
        %v3479 = vunpack.c.l.b16 %v3412
        %v3480 = vunpack.c.l.b16 %v3416
        %v3481 = vunpack.c.l.b16 %v3419
        %v3482 = vunpack.c.l.b16 %v3423
        %v3483 = vunpack.c.l.b16 %v3426
        %v3484 = vunpack.c.l.b16 %v3430
        %v3485 = vunpack.c.l.b16 %v3433
        %v3486 = vunpack.c.l.b16 %v3437
        %v3487 = vunpack.c.l.b16 %v3440
        %v3488 = vunpack.c.l.b16 %v3444
        %v3489 = vunpack.c.l.b16 %v3447
        %v3490 = vunpack.c.l.b16 %v3451
        %v3491 = vunpack.c.l.b16 %v3454
        %v3492 = vpack.c.b16 %v3473, %v3472
        %v3493 = vpack.c.b16 %v3475, %v3474
        %v3494 = vpack.c.b16 %v3477, %v3476
        %v3495 = vpack.c.b16 %v3479, %v3478
        %v3496 = vpack.c.b16 %v3481, %v3480
        %v3497 = vpack.c.b16 %v3483, %v3482
        %v3498 = vpack.c.b16 %v3485, %v3484
        %v3499 = vpack.c.b16 %v3487, %v3486
        %v3500 = vpack.c.b16 %v3489, %v3488
        %v3501 = vpack.c.b16 %v3491, %v3490
        %v3528 = vunpack.c.l.b16 %v3456
        %v3529 = vunpack.c.l.b16 %v3457
        %v3530 = vunpack.c.l.b16 %v3458
        %v3531 = vunpack.c.l.b16 %v3459
        %v3532 = vunpack.c.l.b16 %v3460
        %v3533 = vunpack.c.l.b16 %v3461
        %v3534 = vunpack.c.l.b16 %v3462
        %v3535 = vunpack.c.l.b16 %v3463
        %v3536 = vunpack.c.l.b16 %v3464
        %v3537 = vunpack.c.l.b16 %v3465
        %v3538 = vunpack.c.l.b16 %v3466
        %v3539 = vunpack.c.l.b16 %v3467
        %v3540 = vunpack.c.l.b16 %v3468
        %v3541 = vunpack.c.l.b16 %v3469
        %v3542 = vunpack.c.l.b16 %v3470
        %v3543 = vunpack.c.l.b16 %v3471
        %v3544 = vpack.c.b16 %v3529, %v3528
        %v3545 = vpack.c.b16 %v3531, %v3530
        %v3546 = vpack.c.b16 %v3533, %v3532
        %v3547 = vpack.c.b16 %v3535, %v3534
        %v3548 = vpack.c.b16 %v3537, %v3536
        %v3549 = vpack.c.b16 %v3539, %v3538
        %v3550 = vpack.c.b16 %v3541, %v3540
        %v3551 = vpack.c.b16 %v3543, %v3542
        %3560 = vmatprep.subr.bf16.mxu0 0
        %3561 = vmatpush1.bf16.msra.mxu0 %v3551
        %3562 = vmatprep.subr.bf16.mxu0 0
        %3563 = vmatpush1.bf16.msra.mxu0 %v3550
        %3564 = vmatprep.subr.bf16.mxu0 0
        %3565 = vmatpush1.bf16.msra.mxu0 %v3549
        %3566 = vmatprep.subr.bf16.mxu0 0
        %3567 = vmatpush1.bf16.msra.mxu0 %v3548
        %3568 = vmatprep.subr.bf16.mxu0 0
        %3569 = vmatpush1.bf16.msra.mxu0 %v3547
        %3570 = vmatprep.subr.bf16.mxu0 0
        %3571 = vmatpush1.bf16.msra.mxu0 %v3546
        %3572 = vmatprep.subr.bf16.mxu0 0
        %3573 = vmatpush1.bf16.msra.mxu0 %v3545
        %3574 = vmatprep.subr.bf16.mxu0 0
        %3575 = vmatpush1.bf16.msra.mxu0 %v3544
        %3576 = vmatprep.subr.bf16.mxu0 0
        %3577 = vmatpush2.bf16.msra.mxu0 0
        %3578 = vmatprep.subr.bf16.mxu0 0
        %3579 = vmatpush2.bf16.msra.mxu0 0
        %3580 = vmatprep.subr.bf16.mxu0 0
        %3581 = vmatpush2.bf16.msra.mxu0 0
        %3582 = vmatprep.subr.bf16.mxu0 0
        %3583 = vmatpush2.bf16.msra.mxu0 0
        %3584 = vmatprep.subr.bf16.mxu0 0
        %3585 = vmatpush2.bf16.msra.mxu0 0
        %3586 = vmatprep.subr.bf16.mxu0 0
        %3587 = vmatpush2.bf16.msra.mxu0 0
        %3588 = vmatprep.subr.bf16.mxu0 0
        %3589 = vmatpush2.bf16.msra.mxu0 0
        %3590 = vmatprep.subr.bf16.mxu0 0
        %3591 = vmatpush2.bf16.msra.mxu0 0
        %3592 = vmatprep.mubr.bf16.mxu0 0
        %3593 = vmatmul.mubr.bf16.gmra.mxu0 %v3492
        %v3594 = vpop.f32.mrf.mxu0
        %v3595 = vadd.f32 0.0, %v3594
        %v3596 = vpop.f32.mrf.mxu0
        %v3597 = vpop.f32.mrf.mxu0
        %v3598 = vadd.f32 0.0, %v3597
        %v3599 = vpop.f32.mrf.mxu0
        %3600 = vmatprep.mubr.bf16.mxu0 0
        %3601 = vmatmul.mubr.bf16.gmra.mxu0 %v3493
        %v3602 = vpop.f32.mrf.mxu0
        %v3603 = vadd.f32 0.0, %v3602
        %v3604 = vpop.f32.mrf.mxu0
        %v3605 = vpop.f32.mrf.mxu0
        %v3606 = vadd.f32 0.0, %v3605
        %v3607 = vpop.f32.mrf.mxu0
        %3608 = vmatprep.mubr.bf16.mxu0 0
        %3609 = vmatmul.mubr.bf16.gmra.mxu0 %v3494
        %v3610 = vpop.f32.mrf.mxu0
        %v3611 = vadd.f32 0.0, %v3610
        %v3612 = vpop.f32.mrf.mxu0
        %v3613 = vpop.f32.mrf.mxu0
        %v3614 = vadd.f32 0.0, %v3613
        %v3615 = vpop.f32.mrf.mxu0
        %3616 = vmatprep.mubr.bf16.mxu0 0
        %3617 = vmatmul.mubr.bf16.gmra.mxu0 %v3495
        %v3618 = vpop.f32.mrf.mxu0
        %v3619 = vadd.f32 0.0, %v3618
        %v3620 = vpop.f32.mrf.mxu0
        %v3621 = vpop.f32.mrf.mxu0
        %v3622 = vadd.f32 0.0, %v3621
        %v3623 = vpop.f32.mrf.mxu0
        %3624 = vmatprep.mubr.bf16.mxu0 0
        %3625 = vmatmul.mubr.bf16.gmra.mxu0 %v3496
        %v3626 = vpop.f32.mrf.mxu0
        %v3627 = vadd.f32 0.0, %v3626
        %v3628 = vpop.f32.mrf.mxu0
        %v3629 = vpop.f32.mrf.mxu0
        %v3630 = vadd.f32 0.0, %v3629
        %v3631 = vpop.f32.mrf.mxu0
        %3632 = vmatprep.mubr.bf16.mxu0 0
        %3633 = vmatmul.mubr.bf16.gmra.mxu0 %v3497
        %v3634 = vpop.f32.mrf.mxu0
        %v3635 = vadd.f32 0.0, %v3634
        %v3636 = vpop.f32.mrf.mxu0
        %v3637 = vpop.f32.mrf.mxu0
        %v3638 = vadd.f32 0.0, %v3637
        %v3639 = vpop.f32.mrf.mxu0
        %3640 = vmatprep.mubr.bf16.mxu0 0
        %3641 = vmatmul.mubr.bf16.gmra.mxu0 %v3498
        %v3642 = vpop.f32.mrf.mxu0
        %v3643 = vadd.f32 0.0, %v3642
        %v3644 = vpop.f32.mrf.mxu0
        %v3645 = vpop.f32.mrf.mxu0
        %v3646 = vadd.f32 0.0, %v3645
        %v3647 = vpop.f32.mrf.mxu0
        %3648 = vmatprep.mubr.bf16.mxu0 0
        %3649 = vmatmul.mubr.bf16.gmra.mxu0 %v3499
        %v3650 = vpop.f32.mrf.mxu0
        %v3651 = vadd.f32 0.0, %v3650
        %v3652 = vpop.f32.mrf.mxu0
        %v3653 = vpop.f32.mrf.mxu0
        %v3654 = vadd.f32 0.0, %v3653
        %v3655 = vpop.f32.mrf.mxu0
        %3656 = vmatprep.mubr.bf16.mxu0 0
        %3657 = vmatmul.mubr.bf16.gmra.mxu0 %v3500
        %v3658 = vpop.f32.mrf.mxu0
        %v3659 = vadd.f32 0.0, %v3658
        %v3660 = vpop.f32.mrf.mxu0
        %v3661 = vpop.f32.mrf.mxu0
        %v3662 = vadd.f32 0.0, %v3661
        %v3663 = vpop.f32.mrf.mxu0
        %3664 = vmatprep.mubr.bf16.mxu0 0
        %3665 = vmatmul.mubr.bf16.gmra.mxu0 %v3501
        %v3666 = vpop.f32.mrf.mxu0
        %v3667 = vadd.f32 0.0, %v3666
        %v3668 = vpop.f32.mrf.mxu0
        %v3669 = vpop.f32.mrf.mxu0
        %v3670 = vadd.f32 0.0, %v3669
        %v3671 = vpop.f32.mrf.mxu0
        %3672 = vdwg.mxu0
        %v3673 = vadd.f32 %v3325, %v3595
        %v3674 = vadd.f32 %v3326, %v3598
        %v3675 = vadd.f32 %v3327, %v3603
        %v3676 = vadd.f32 %v3328, %v3606
        %v3677 = vadd.f32 %v3329, %v3611
        %v3678 = vadd.f32 %v3330, %v3614
        %v3679 = vadd.f32 %v3331, %v3619
        %v3680 = vadd.f32 %v3332, %v3622
        %v3681 = vadd.f32 %v3333, %v3627
        %v3682 = vadd.f32 %v3334, %v3630
        %v3683 = vadd.f32 %v3335, %v3635
        %v3684 = vadd.f32 %v3336, %v3638
        %v3685 = vadd.f32 %v3337, %v3643
        %v3686 = vadd.f32 %v3338, %v3646
        %v3687 = vadd.f32 %v3339, %v3651
        %v3688 = vadd.f32 %v3340, %v3654
        %v3689 = vadd.f32 %v3341, %v3659
        %v3690 = vadd.f32 %v3342, %v3662
        %v3691 = vadd.f32 %v3343, %v3667
        %v3692 = vadd.f32 %v3344, %v3670
        %v3694 = vlaneseq
        %v3695 = vshrl.u32 %v3694, 7
        %v3696 = vsub.s32 0, %v3695
        %v3697 = vrot.slane %v343, %v3696
        %v3699 = vmul.f32 %v3673, %v3697
        %v3700 = vmul.f32 %v3674, %v3697
        %v3701 = vmul.f32 %v3675, %v3697
        %v3702 = vmul.f32 %v3676, %v3697
        %v3703 = vmul.f32 %v3677, %v3697
        %v3704 = vmul.f32 %v3678, %v3697
        %v3705 = vmul.f32 %v3679, %v3697
        %v3706 = vmul.f32 %v3680, %v3697
        %v3707 = vmul.f32 %v3681, %v3697
        %v3708 = vmul.f32 %v3682, %v3697
        %v3709 = vmul.f32 %v3683, %v3697
        %v3710 = vmul.f32 %v3684, %v3697
        %v3711 = vmul.f32 %v3685, %v3697
        %v3712 = vmul.f32 %v3686, %v3697
        %v3713 = vmul.f32 %v3687, %v3697
        %v3714 = vmul.f32 %v3688, %v3697
        %v3715 = vmul.f32 %v3689, %v3697
        %v3716 = vmul.f32 %v3690, %v3697
        %v3717 = vmul.f32 %v3691, %v3697
        %v3718 = vmul.f32 %v3692, %v3697
        %v3720 = vlaneseq
        %v3721 = vshrl.u32 %v3720, 7
        %v3722 = vsub.s32 0, %v3721
        %v3723 = vrot.slane %v344, %v3722
        %v3725 = vadd.f32 %v3699, %v3723
        %v3726 = vadd.f32 %v3700, %v3723
        %v3727 = vadd.f32 %v3701, %v3723
        %v3728 = vadd.f32 %v3702, %v3723
        %v3729 = vadd.f32 %v3703, %v3723
        %v3730 = vadd.f32 %v3704, %v3723
        %v3731 = vadd.f32 %v3705, %v3723
        %v3732 = vadd.f32 %v3706, %v3723
        %v3733 = vadd.f32 %v3707, %v3723
        %v3734 = vadd.f32 %v3708, %v3723
        %v3735 = vadd.f32 %v3709, %v3723
        %v3736 = vadd.f32 %v3710, %v3723
        %v3737 = vadd.f32 %v3711, %v3723
        %v3738 = vadd.f32 %v3712, %v3723
        %v3739 = vadd.f32 %v3713, %v3723
        %v3740 = vadd.f32 %v3714, %v3723
        %v3741 = vadd.f32 %v3715, %v3723
        %v3742 = vadd.f32 %v3716, %v3723
        %v3743 = vadd.f32 %v3717, %v3723
        %v3744 = vadd.f32 %v3718, %v3723
        %v3745 = vmax.f32 %v3725, 0.0
        %v3746 = vmax.f32 %v3726, 0.0
        %v3747 = vmax.f32 %v3727, 0.0
        %v3748 = vmax.f32 %v3728, 0.0
        %v3749 = vmax.f32 %v3729, 0.0
        %v3750 = vmax.f32 %v3730, 0.0
        %v3751 = vmax.f32 %v3731, 0.0
        %v3752 = vmax.f32 %v3732, 0.0
        %v3753 = vmax.f32 %v3733, 0.0
        %v3754 = vmax.f32 %v3734, 0.0
        %v3755 = vmax.f32 %v3735, 0.0
        %v3756 = vmax.f32 %v3736, 0.0
        %v3757 = vmax.f32 %v3737, 0.0
        %v3758 = vmax.f32 %v3738, 0.0
        %v3759 = vmax.f32 %v3739, 0.0
        %v3760 = vmax.f32 %v3740, 0.0
        %v3761 = vmax.f32 %v3741, 0.0
        %v3762 = vmax.f32 %v3742, 0.0
        %v3763 = vmax.f32 %v3743, 0.0
        %v3764 = vmax.f32 %v3744, 0.0
        %v3765 = vpack.c.bf16 %v3746, %v3745
        %v3766 = vpack.c.bf16 %v3748, %v3747
        %v3767 = vpack.c.bf16 %v3750, %v3749
        %v3768 = vpack.c.bf16 %v3752, %v3751
        %v3769 = vpack.c.bf16 %v3754, %v3753
        %v3770 = vpack.c.bf16 %v3756, %v3755
        %v3771 = vpack.c.bf16 %v3758, %v3757
        %v3772 = vpack.c.bf16 %v3760, %v3759
        %v3773 = vpack.c.bf16 %v3762, %v3761
        %v3774 = vpack.c.bf16 %v3764, %v3763
        %v3785 = vunpack.c.l.b16 %v3765
        %v3786 = vunpack.c.h.b16 %v3765
        %v3787 = vunpack.c.l.b16 %v3766
        %v3788 = vunpack.c.h.b16 %v3766
        %v3789 = vunpack.c.l.b16 %v3767
        %v3790 = vunpack.c.h.b16 %v3767
        %v3791 = vunpack.c.l.b16 %v3768
        %v3792 = vunpack.c.h.b16 %v3768
        %v3793 = vunpack.c.l.b16 %v3769
        %v3794 = vunpack.c.h.b16 %v3769
        %v3795 = vunpack.c.l.b16 %v3770
        %v3796 = vunpack.c.h.b16 %v3770
        %v3797 = vunpack.c.l.b16 %v3771
        %v3798 = vunpack.c.h.b16 %v3771
        %v3799 = vunpack.c.l.b16 %v3772
        %v3800 = vunpack.c.h.b16 %v3772
        %v3801 = vunpack.c.l.b16 %v3773
        %v3802 = vunpack.c.h.b16 %v3773
        %v3803 = vunpack.c.l.b16 %v3774
        %v3804 = vunpack.c.h.b16 %v3774
        %v3805 = vpack.c.b16 %v3785, %v3785
        %v3806 = vpack.c.b16 %v3786, %v3786
        %v3807 = vpack.c.b16 %v3787, %v3787
        %v3808 = vpack.c.b16 %v3788, %v3788
        %v3809 = vpack.c.b16 %v3789, %v3789
        %v3810 = vpack.c.b16 %v3790, %v3790
        %v3811 = vpack.c.b16 %v3791, %v3791
        %v3812 = vpack.c.b16 %v3792, %v3792
        %v3813 = vpack.c.b16 %v3793, %v3793
        %v3814 = vpack.c.b16 %v3794, %v3794
        %v3815 = vpack.c.b16 %v3795, %v3795
        %v3816 = vpack.c.b16 %v3796, %v3796
        %v3817 = vpack.c.b16 %v3797, %v3797
        %v3818 = vpack.c.b16 %v3798, %v3798
        %v3819 = vpack.c.b16 %v3799, %v3799
        %v3820 = vpack.c.b16 %v3800, %v3800
        %v3821 = vpack.c.b16 %v3801, %v3801
        %v3822 = vpack.c.b16 %v3802, %v3802
        %v3823 = vpack.c.b16 %v3803, %v3803
        %v3824 = vpack.c.b16 %v3804, %v3804
        %vm3825 = vsmask.f32 256
        %vm3826 = vsmask.f32 4368
        %vm3827 = vmor %vm3825, %vm3826
        %v3829 = vshrl.u32 %v3805, 16
        %v3831 = vrot.slane %v3829, 7
        %v3832 = vshll.u32 %v3805, 16
        %v3834 = vor.u32 %v3831, %v3832
        %v3835 = vrot.slane %v3831, 4
        %v3837 = vshrl.u32 %v3806, 16
        %v3839 = vrot.slane %v3837, 7
        %v3840 = vshll.u32 %v3806, 16
        %v3842 = vor.u32 %v3839, %v3840
        %v3843 = vsel %vm3827, %v3835, %v3842
        %v3844 = vrot.slane %v3839, 4
        %v3846 = vshrl.u32 %v3807, 16
        %v3848 = vrot.slane %v3846, 7
        %v3849 = vshll.u32 %v3807, 16
        %v3851 = vor.u32 %v3848, %v3849
        %v3852 = vrot.slane %v3848, 4
        %v3854 = vshrl.u32 %v3808, 16
        %v3856 = vrot.slane %v3854, 7
        %v3857 = vshll.u32 %v3808, 16
        %v3859 = vor.u32 %v3856, %v3857
        %v3860 = vsel %vm3827, %v3852, %v3859
        %v3861 = vrot.slane %v3856, 4
        %v3863 = vshrl.u32 %v3809, 16
        %v3865 = vrot.slane %v3863, 7
        %v3866 = vshll.u32 %v3809, 16
        %v3868 = vor.u32 %v3865, %v3866
        %v3869 = vrot.slane %v3865, 4
        %v3871 = vshrl.u32 %v3810, 16
        %v3873 = vrot.slane %v3871, 7
        %v3874 = vshll.u32 %v3810, 16
        %v3876 = vor.u32 %v3873, %v3874
        %v3877 = vsel %vm3827, %v3869, %v3876
        %v3878 = vrot.slane %v3873, 4
        %v3880 = vshrl.u32 %v3811, 16
        %v3882 = vrot.slane %v3880, 7
        %v3883 = vshll.u32 %v3811, 16
        %v3885 = vor.u32 %v3882, %v3883
        %v3886 = vrot.slane %v3882, 4
        %v3888 = vshrl.u32 %v3812, 16
        %v3890 = vrot.slane %v3888, 7
        %v3891 = vshll.u32 %v3812, 16
        %v3893 = vor.u32 %v3890, %v3891
        %v3894 = vsel %vm3827, %v3886, %v3893
        %v3895 = vrot.slane %v3890, 4
        %v3897 = vshrl.u32 %v3813, 16
        %v3899 = vrot.slane %v3897, 7
        %v3900 = vshll.u32 %v3813, 16
        %v3902 = vor.u32 %v3899, %v3900
        %v3903 = vrot.slane %v3899, 4
        %v3905 = vshrl.u32 %v3814, 16
        %v3907 = vrot.slane %v3905, 7
        %v3908 = vshll.u32 %v3814, 16
        %v3910 = vor.u32 %v3907, %v3908
        %v3911 = vsel %vm3827, %v3903, %v3910
        %v3912 = vrot.slane %v3907, 4
        %v3914 = vshrl.u32 %v3815, 16
        %v3916 = vrot.slane %v3914, 7
        %v3917 = vshll.u32 %v3815, 16
        %v3919 = vor.u32 %v3916, %v3917
        %v3920 = vrot.slane %v3916, 4
        %v3922 = vshrl.u32 %v3816, 16
        %v3924 = vrot.slane %v3922, 7
        %v3925 = vshll.u32 %v3816, 16
        %v3927 = vor.u32 %v3924, %v3925
        %v3928 = vsel %vm3827, %v3920, %v3927
        %v3929 = vrot.slane %v3924, 4
        %v3931 = vshrl.u32 %v3817, 16
        %v3933 = vrot.slane %v3931, 7
        %v3934 = vshll.u32 %v3817, 16
        %v3936 = vor.u32 %v3933, %v3934
        %v3937 = vrot.slane %v3933, 4
        %v3939 = vshrl.u32 %v3818, 16
        %v3941 = vrot.slane %v3939, 7
        %v3942 = vshll.u32 %v3818, 16
        %v3944 = vor.u32 %v3941, %v3942
        %v3945 = vsel %vm3827, %v3937, %v3944
        %v3946 = vrot.slane %v3941, 4
        %v3948 = vshrl.u32 %v3819, 16
        %v3950 = vrot.slane %v3948, 7
        %v3951 = vshll.u32 %v3819, 16
        %v3953 = vor.u32 %v3950, %v3951
        %v3954 = vrot.slane %v3950, 4
        %v3956 = vshrl.u32 %v3820, 16
        %v3958 = vrot.slane %v3956, 7
        %v3959 = vshll.u32 %v3820, 16
        %v3961 = vor.u32 %v3958, %v3959
        %v3962 = vsel %vm3827, %v3954, %v3961
        %v3963 = vrot.slane %v3958, 4
        %v3965 = vshrl.u32 %v3821, 16
        %v3967 = vrot.slane %v3965, 7
        %v3968 = vshll.u32 %v3821, 16
        %v3970 = vor.u32 %v3967, %v3968
        %v3971 = vrot.slane %v3967, 4
        %v3973 = vshrl.u32 %v3822, 16
        %v3975 = vrot.slane %v3973, 7
        %v3976 = vshll.u32 %v3822, 16
        %v3978 = vor.u32 %v3975, %v3976
        %v3979 = vsel %vm3827, %v3971, %v3978
        %v3980 = vrot.slane %v3975, 4
        %v3982 = vshrl.u32 %v3823, 16
        %v3984 = vrot.slane %v3982, 7
        %v3985 = vshll.u32 %v3823, 16
        %v3987 = vor.u32 %v3984, %v3985
        %v3988 = vrot.slane %v3984, 4
        %v3990 = vshrl.u32 %v3824, 16
        %v3992 = vrot.slane %v3990, 7
        %v3993 = vshll.u32 %v3824, 16
        %v3995 = vor.u32 %v3992, %v3993
        %v3996 = vsel %vm3827, %v3988, %v3995
        %v3997 = vrot.slane %v3992, 4
        %vm4028 = vcmask 1043456
        %vm4029 = vsmask.f32 7938
        %vm4030 = vmand %vm4028, %vm4029
        %v4031 = vld [vmem:[#allocation2] sm:$0xf]
        %v4032 = vsel %vm4030, %v3834, %v4031
        %4033 = vst [vmem:[#allocation2] sm:$0xf] %v4032
        %4034 = vst [vmem:[#allocation2 + $0x4] sm:$0xf] %v3843
        %vm4035 = vcmask 1040384
        %vm4036 = vmand %vm4035, %vm3825
        %v4037 = vld [vmem:[#allocation2 + $0x8] sm:$0x1]
        %v4038 = vsel %vm4036, %v3844, %v4037
        %4039 = vst [vmem:[#allocation2 + $0x8] sm:$0x1] %v4038
        %v4040 = vld [vmem:[#allocation2 + $0xc] sm:$0xf]
        %v4041 = vsel %vm4030, %v3851, %v4040
        %4042 = vst [vmem:[#allocation2 + $0xc] sm:$0xf] %v4041
        %4043 = vst [vmem:[#allocation2 + $0x10] sm:$0xf] %v3860
        %v4044 = vld [vmem:[#allocation2 + $0x14] sm:$0x1]
        %v4045 = vsel %vm4036, %v3861, %v4044
        %4046 = vst [vmem:[#allocation2 + $0x14] sm:$0x1] %v4045
        %v4047 = vld [vmem:[#allocation2 + $0x18] sm:$0xf]
        %v4048 = vsel %vm4030, %v3868, %v4047
        %4049 = vst [vmem:[#allocation2 + $0x18] sm:$0xf] %v4048
        %4050 = vst [vmem:[#allocation2 + $0x1c] sm:$0xf] %v3877
        %v4051 = vld [vmem:[#allocation2 + $0x20] sm:$0x1]
        %v4052 = vsel %vm4036, %v3878, %v4051
        %4053 = vst [vmem:[#allocation2 + $0x20] sm:$0x1] %v4052
        %v4054 = vld [vmem:[#allocation2 + $0x24] sm:$0xf]
        %v4055 = vsel %vm4030, %v3885, %v4054
        %4056 = vst [vmem:[#allocation2 + $0x24] sm:$0xf] %v4055
        %4057 = vst [vmem:[#allocation2 + $0x28] sm:$0xf] %v3894
        %v4058 = vld [vmem:[#allocation2 + $0x2c] sm:$0x1]
        %v4059 = vsel %vm4036, %v3895, %v4058
        %4060 = vst [vmem:[#allocation2 + $0x2c] sm:$0x1] %v4059
        %v4061 = vld [vmem:[#allocation2 + $0x30] sm:$0xf]
        %v4062 = vsel %vm4030, %v3902, %v4061
        %4063 = vst [vmem:[#allocation2 + $0x30] sm:$0xf] %v4062
        %4064 = vst [vmem:[#allocation2 + $0x34] sm:$0xf] %v3911
        %v4065 = vld [vmem:[#allocation2 + $0x38] sm:$0x1]
        %v4066 = vsel %vm4036, %v3912, %v4065
        %4067 = vst [vmem:[#allocation2 + $0x38] sm:$0x1] %v4066
        %v4068 = vld [vmem:[#allocation2 + $0x3c] sm:$0xf]
        %v4069 = vsel %vm4030, %v3919, %v4068
        %4070 = vst [vmem:[#allocation2 + $0x3c] sm:$0xf] %v4069
        %4071 = vst [vmem:[#allocation2 + $0x40] sm:$0xf] %v3928
        %v4072 = vld [vmem:[#allocation2 + $0x44] sm:$0x1]
        %v4073 = vsel %vm4036, %v3929, %v4072
        %4074 = vst [vmem:[#allocation2 + $0x44] sm:$0x1] %v4073
        %v4075 = vld [vmem:[#allocation2 + $0x48] sm:$0xf]
        %v4076 = vsel %vm4030, %v3936, %v4075
        %4077 = vst [vmem:[#allocation2 + $0x48] sm:$0xf] %v4076
        %4078 = vst [vmem:[#allocation2 + $0x4c] sm:$0xf] %v3945
        %v4079 = vld [vmem:[#allocation2 + $0x50] sm:$0x1]
        %v4080 = vsel %vm4036, %v3946, %v4079
        %4081 = vst [vmem:[#allocation2 + $0x50] sm:$0x1] %v4080
        %v4082 = vld [vmem:[#allocation2 + $0x54] sm:$0xf]
        %v4083 = vsel %vm4030, %v3953, %v4082
        %4084 = vst [vmem:[#allocation2 + $0x54] sm:$0xf] %v4083
        %4085 = vst [vmem:[#allocation2 + $0x58] sm:$0xf] %v3962
        %v4086 = vld [vmem:[#allocation2 + $0x5c] sm:$0x1]
        %v4087 = vsel %vm4036, %v3963, %v4086
        %4088 = vst [vmem:[#allocation2 + $0x5c] sm:$0x1] %v4087
        %v4089 = vld [vmem:[#allocation2 + $0x60] sm:$0xf]
        %v4090 = vsel %vm4030, %v3970, %v4089
        %4091 = vst [vmem:[#allocation2 + $0x60] sm:$0xf] %v4090
        %4092 = vst [vmem:[#allocation2 + $0x64] sm:$0xf] %v3979
        %v4093 = vld [vmem:[#allocation2 + $0x68] sm:$0x1]
        %v4094 = vsel %vm4036, %v3980, %v4093
        %4095 = vst [vmem:[#allocation2 + $0x68] sm:$0x1] %v4094
        %v4096 = vld [vmem:[#allocation2 + $0x6c] sm:$0xf]
        %v4097 = vsel %vm4030, %v3987, %v4096
        %4098 = vst [vmem:[#allocation2 + $0x6c] sm:$0xf] %v4097
        %4099 = vst [vmem:[#allocation2 + $0x70] sm:$0xf] %v3996
        %v4100 = vld [vmem:[#allocation2 + $0x74] sm:$0x1]
        %v4101 = vsel %vm4036, %v3997, %v4100
        %4102 = vst [vmem:[#allocation2 + $0x74] sm:$0x1] %v4101
        %v4103 = vld [vmem:[#allocation2] sm:$0x1]
        %v4104 = vsel %vm4036, 0, %v4103
        %4105 = vst [vmem:[#allocation2] sm:$0x1] %v4104
        %v4106 = vld [vmem:[#allocation2 + $0xc] sm:$0x1]
        %v4107 = vsel %vm4036, 0, %v4106
        %4108 = vst [vmem:[#allocation2 + $0xc] sm:$0x1] %v4107
        %v4109 = vld [vmem:[#allocation2 + $0x18] sm:$0x1]
        %v4110 = vsel %vm4036, 0, %v4109
        %4111 = vst [vmem:[#allocation2 + $0x18] sm:$0x1] %v4110
        %v4112 = vld [vmem:[#allocation2 + $0x24] sm:$0x1]
        %v4113 = vsel %vm4036, 0, %v4112
        %4114 = vst [vmem:[#allocation2 + $0x24] sm:$0x1] %v4113
        %v4115 = vld [vmem:[#allocation2 + $0x30] sm:$0x1]
        %v4116 = vsel %vm4036, 0, %v4115
        %4117 = vst [vmem:[#allocation2 + $0x30] sm:$0x1] %v4116
        %v4118 = vld [vmem:[#allocation2 + $0x3c] sm:$0x1]
        %v4119 = vsel %vm4036, 0, %v4118
        %4120 = vst [vmem:[#allocation2 + $0x3c] sm:$0x1] %v4119
        %v4121 = vld [vmem:[#allocation2 + $0x48] sm:$0x1]
        %v4122 = vsel %vm4036, 0, %v4121
        %4123 = vst [vmem:[#allocation2 + $0x48] sm:$0x1] %v4122
        %v4124 = vld [vmem:[#allocation2 + $0x54] sm:$0x1]
        %v4125 = vsel %vm4036, 0, %v4124
        %4126 = vst [vmem:[#allocation2 + $0x54] sm:$0x1] %v4125
        %v4127 = vld [vmem:[#allocation2 + $0x60] sm:$0x1]
        %v4128 = vsel %vm4036, 0, %v4127
        %4129 = vst [vmem:[#allocation2 + $0x60] sm:$0x1] %v4128
        %v4130 = vld [vmem:[#allocation2 + $0x6c] sm:$0x1]
        %v4131 = vsel %vm4036, 0, %v4130
        %4132 = vst [vmem:[#allocation2 + $0x6c] sm:$0x1] %v4131
        %vm4133 = vmand %vm4035, %vm4029
        %v4134 = vld [vmem:[#allocation2 + $0x8] sm:$0x1]
        %v4135 = vsel %vm4133, 0, %v4134
        %4136 = vst [vmem:[#allocation2 + $0x8] sm:$0x1] %v4135
        %v4137 = vld [vmem:[#allocation2 + $0x14] sm:$0x1]
        %v4138 = vsel %vm4133, 0, %v4137
        %4139 = vst [vmem:[#allocation2 + $0x14] sm:$0x1] %v4138
        %v4140 = vld [vmem:[#allocation2 + $0x20] sm:$0x1]
        %v4141 = vsel %vm4133, 0, %v4140
        %4142 = vst [vmem:[#allocation2 + $0x20] sm:$0x1] %v4141
        %v4143 = vld [vmem:[#allocation2 + $0x2c] sm:$0x1]
        %v4144 = vsel %vm4133, 0, %v4143
        %4145 = vst [vmem:[#allocation2 + $0x2c] sm:$0x1] %v4144
        %v4146 = vld [vmem:[#allocation2 + $0x38] sm:$0x1]
        %v4147 = vsel %vm4133, 0, %v4146
        %4148 = vst [vmem:[#allocation2 + $0x38] sm:$0x1] %v4147
        %v4149 = vld [vmem:[#allocation2 + $0x44] sm:$0x1]
        %v4150 = vsel %vm4133, 0, %v4149
        %4151 = vst [vmem:[#allocation2 + $0x44] sm:$0x1] %v4150
        %v4152 = vld [vmem:[#allocation2 + $0x50] sm:$0x1]
        %v4153 = vsel %vm4133, 0, %v4152
        %4154 = vst [vmem:[#allocation2 + $0x50] sm:$0x1] %v4153
        %v4155 = vld [vmem:[#allocation2 + $0x5c] sm:$0x1]
        %v4156 = vsel %vm4133, 0, %v4155
        %4157 = vst [vmem:[#allocation2 + $0x5c] sm:$0x1] %v4156
        %v4158 = vld [vmem:[#allocation2 + $0x68] sm:$0x1]
        %v4159 = vsel %vm4133, 0, %v4158
        %4160 = vst [vmem:[#allocation2 + $0x68] sm:$0x1] %v4159
        %v4161 = vld [vmem:[#allocation2 + $0x74] sm:$0x1]
        %v4162 = vsel %vm4133, 0, %v4161
        %4163 = vst [vmem:[#allocation2 + $0x74] sm:$0x1] %v4162
        %p4164 = scmp.eq.s32.totalorder %s30, 0
        // Predicated region
        $region61: #{tpu_custom_call.1} parent=47 // pred_check
          %p4165 = pneg %p4164
        $region62: #{tpu_custom_call.1} parent=47 // pred_check_branch
          %4167 = sbr.rel (%p4165) target = $region64
        $region63: #{tpu_custom_call.1} parent=47 // pred_region
          %4168 = vst [vmem:[#allocation2] sm:$0xf] 0
          %4169 = vst [vmem:[#allocation2 + $0x4] sm:$0xf] 0
          %4170 = vst [vmem:[#allocation2 + $0x8] sm:$0xf] 0
        $region64: #{tpu_custom_call.1} parent=47 // pred_fallthru
          _
        %p4171 = scmp.eq.s32.totalorder %s30, 1
        // Predicated region
        $region65: #{tpu_custom_call.1} parent=47 // pred_check
          %p4172 = pneg %p4171
        $region66: #{tpu_custom_call.1} parent=47 // pred_check_branch
          %4174 = sbr.rel (%p4172) target = $region68
        $region67: #{tpu_custom_call.1} parent=47 // pred_region
          %s4175 = scalar_lea.vmem [#allocation2], 108
          %4176 = vst [vmem:[%s4175] sm:$0xf] 0
          %4177 = vst [vmem:[%s4175 + $0x4] sm:$0xf] 0
          %4178 = vst [vmem:[%s4175 + $0x8] sm:$0xf] 0
        $region68: #{tpu_custom_call.1} parent=47 // pred_fallthru
          _
        %v4179 = vld [vmem:[%s5] sm:$0x1]
        %v4180 = vld [vmem:[%s6] sm:$0x1]
        %v4181 = vld [vmem:[#allocation2] sm:$0xf]
        %v4182 = vld [vmem:[#allocation2 + $0x4] sm:$0xf]
        %v4183 = vld [vmem:[#allocation2 + $0xc] sm:$0xf]
        %v4184 = vld [vmem:[#allocation2 + $0x10] sm:$0xf]
        %v4185 = vld [vmem:[#allocation2 + $0x18] sm:$0xf]
        %v4186 = vld [vmem:[#allocation2 + $0x1c] sm:$0xf]
        %v4187 = vld [vmem:[#allocation2 + $0x24] sm:$0xf]
        %v4188 = vld [vmem:[#allocation2 + $0x28] sm:$0xf]
        %v4189 = vld [vmem:[#allocation2 + $0x30] sm:$0xf]
        %v4190 = vld [vmem:[#allocation2 + $0x34] sm:$0xf]
        %v4191 = vld [vmem:[#allocation2 + $0x3c] sm:$0xf]
        %v4192 = vld [vmem:[#allocation2 + $0x40] sm:$0xf]
        %v4193 = vld [vmem:[#allocation2 + $0x48] sm:$0xf]
        %v4194 = vld [vmem:[#allocation2 + $0x4c] sm:$0xf]
        %v4195 = vld [vmem:[#allocation2 + $0x54] sm:$0xf]
        %v4196 = vld [vmem:[#allocation2 + $0x58] sm:$0xf]
        %v4197 = vld [vmem:[#allocation8] sm:$0xf]
        %v4198 = vld [vmem:[#allocation8 + $0x4] sm:$0xf]
        %v4199 = vld [vmem:[#allocation8 + $0x8] sm:$0xf]
        %v4200 = vld [vmem:[#allocation8 + $0xc] sm:$0xf]
        %v4201 = vld [vmem:[#allocation8 + $0x10] sm:$0xf]
        %v4202 = vld [vmem:[#allocation8 + $0x14] sm:$0xf]
        %v4203 = vld [vmem:[#allocation8 + $0x18] sm:$0xf]
        %v4204 = vld [vmem:[#allocation8 + $0x1c] sm:$0xf]
        %v4205 = vld [vmem:[#allocation8 + $0x20] sm:$0xf]
        %v4206 = vld [vmem:[#allocation8 + $0x24] sm:$0xf]
        %v4207 = vld [vmem:[#allocation8 + $0x28] sm:$0xf]
        %v4208 = vld [vmem:[#allocation8 + $0x2c] sm:$0xf]
        %v4209 = vld [vmem:[#allocation8 + $0x30] sm:$0xf]
        %v4210 = vld [vmem:[#allocation8 + $0x34] sm:$0xf]
        %v4211 = vld [vmem:[#allocation8 + $0x38] sm:$0xf]
        %v4212 = vld [vmem:[#allocation8 + $0x3c] sm:$0xf]
        %v4213 = vld [vmem:[#allocation2 + $0x8] sm:$0x1]
        %v4214 = vld [vmem:[#allocation2 + $0x14] sm:$0x1]
        %v4215 = vld [vmem:[#allocation2 + $0x20] sm:$0x1]
        %v4216 = vld [vmem:[#allocation2 + $0x2c] sm:$0x1]
        %v4217 = vld [vmem:[#allocation2 + $0x38] sm:$0x1]
        %v4218 = vld [vmem:[#allocation2 + $0x44] sm:$0x1]
        %v4219 = vld [vmem:[#allocation2 + $0x50] sm:$0x1]
        %v4220 = vld [vmem:[#allocation2 + $0x5c] sm:$0x1]
        %v4222 = vshrl.u32 %v4181, 16
        %v4224 = vrot.slane %v4222, 4
        %v4225 = vshll.u32 %v4181, 16
        %v4227 = vrot.slane %v4225, 5
        %v4228 = vor.u32 %v4224, %v4227
        %v4229 = vrot.slane %v4228, 4
        %v4231 = vshll.u32 %v4182, 16
        %v4233 = vrot.slane %v4231, 5
        %v4234 = vsel %vm396, %v4229, %v4233
        %v4235 = vshrl.u32 %v4182, 16
        %v4237 = vrot.slane %v4235, 4
        %v4238 = vor.u32 %v4237, %v4233
        %v4239 = vrot.slane %v4238, 4
        %v4241 = vshll.u32 %v4213, 16
        %v4243 = vrot.slane %v4241, 5
        %v4244 = vsel %vm396, %v4239, %v4243
        %v4246 = vshrl.u32 %v4183, 16
        %v4248 = vrot.slane %v4246, 4
        %v4249 = vshll.u32 %v4183, 16
        %v4251 = vrot.slane %v4249, 5
        %v4252 = vor.u32 %v4248, %v4251
        %v4253 = vrot.slane %v4252, 4
        %v4255 = vshll.u32 %v4184, 16
        %v4257 = vrot.slane %v4255, 5
        %v4258 = vsel %vm396, %v4253, %v4257
        %v4259 = vshrl.u32 %v4184, 16
        %v4261 = vrot.slane %v4259, 4
        %v4262 = vor.u32 %v4261, %v4257
        %v4263 = vrot.slane %v4262, 4
        %v4265 = vshll.u32 %v4214, 16
        %v4267 = vrot.slane %v4265, 5
        %v4268 = vsel %vm396, %v4263, %v4267
        %v4270 = vshrl.u32 %v4185, 16
        %v4272 = vrot.slane %v4270, 4
        %v4273 = vshll.u32 %v4185, 16
        %v4275 = vrot.slane %v4273, 5
        %v4276 = vor.u32 %v4272, %v4275
        %v4277 = vrot.slane %v4276, 4
        %v4279 = vshll.u32 %v4186, 16
        %v4281 = vrot.slane %v4279, 5
        %v4282 = vsel %vm396, %v4277, %v4281
        %v4283 = vshrl.u32 %v4186, 16
        %v4285 = vrot.slane %v4283, 4
        %v4286 = vor.u32 %v4285, %v4281
        %v4287 = vrot.slane %v4286, 4
        %v4289 = vshll.u32 %v4215, 16
        %v4291 = vrot.slane %v4289, 5
        %v4292 = vsel %vm396, %v4287, %v4291
        %v4294 = vshrl.u32 %v4187, 16
        %v4296 = vrot.slane %v4294, 4
        %v4297 = vshll.u32 %v4187, 16
        %v4299 = vrot.slane %v4297, 5
        %v4300 = vor.u32 %v4296, %v4299
        %v4301 = vrot.slane %v4300, 4
        %v4303 = vshll.u32 %v4188, 16
        %v4305 = vrot.slane %v4303, 5
        %v4306 = vsel %vm396, %v4301, %v4305
        %v4307 = vshrl.u32 %v4188, 16
        %v4309 = vrot.slane %v4307, 4
        %v4310 = vor.u32 %v4309, %v4305
        %v4311 = vrot.slane %v4310, 4
        %v4313 = vshll.u32 %v4216, 16
        %v4315 = vrot.slane %v4313, 5
        %v4316 = vsel %vm396, %v4311, %v4315
        %v4318 = vshrl.u32 %v4189, 16
        %v4320 = vrot.slane %v4318, 4
        %v4321 = vshll.u32 %v4189, 16
        %v4323 = vrot.slane %v4321, 5
        %v4324 = vor.u32 %v4320, %v4323
        %v4325 = vrot.slane %v4324, 4
        %v4327 = vshll.u32 %v4190, 16
        %v4329 = vrot.slane %v4327, 5
        %v4330 = vsel %vm396, %v4325, %v4329
        %v4331 = vshrl.u32 %v4190, 16
        %v4333 = vrot.slane %v4331, 4
        %v4334 = vor.u32 %v4333, %v4329
        %v4335 = vrot.slane %v4334, 4
        %v4337 = vshll.u32 %v4217, 16
        %v4339 = vrot.slane %v4337, 5
        %v4340 = vsel %vm396, %v4335, %v4339
        %v4342 = vshrl.u32 %v4191, 16
        %v4344 = vrot.slane %v4342, 4
        %v4345 = vshll.u32 %v4191, 16
        %v4347 = vrot.slane %v4345, 5
        %v4348 = vor.u32 %v4344, %v4347
        %v4349 = vrot.slane %v4348, 4
        %v4351 = vshll.u32 %v4192, 16
        %v4353 = vrot.slane %v4351, 5
        %v4354 = vsel %vm396, %v4349, %v4353
        %v4355 = vshrl.u32 %v4192, 16
        %v4357 = vrot.slane %v4355, 4
        %v4358 = vor.u32 %v4357, %v4353
        %v4359 = vrot.slane %v4358, 4
        %v4361 = vshll.u32 %v4218, 16
        %v4363 = vrot.slane %v4361, 5
        %v4364 = vsel %vm396, %v4359, %v4363
        %v4366 = vshrl.u32 %v4193, 16
        %v4368 = vrot.slane %v4366, 4
        %v4369 = vshll.u32 %v4193, 16
        %v4371 = vrot.slane %v4369, 5
        %v4372 = vor.u32 %v4368, %v4371
        %v4373 = vrot.slane %v4372, 4
        %v4375 = vshll.u32 %v4194, 16
        %v4377 = vrot.slane %v4375, 5
        %v4378 = vsel %vm396, %v4373, %v4377
        %v4379 = vshrl.u32 %v4194, 16
        %v4381 = vrot.slane %v4379, 4
        %v4382 = vor.u32 %v4381, %v4377
        %v4383 = vrot.slane %v4382, 4
        %v4385 = vshll.u32 %v4219, 16
        %v4387 = vrot.slane %v4385, 5
        %v4388 = vsel %vm396, %v4383, %v4387
        %v4390 = vshrl.u32 %v4195, 16
        %v4392 = vrot.slane %v4390, 4
        %v4393 = vshll.u32 %v4195, 16
        %v4395 = vrot.slane %v4393, 5
        %v4396 = vor.u32 %v4392, %v4395
        %v4397 = vrot.slane %v4396, 4
        %v4399 = vshll.u32 %v4196, 16
        %v4401 = vrot.slane %v4399, 5
        %v4402 = vsel %vm396, %v4397, %v4401
        %v4403 = vshrl.u32 %v4196, 16
        %v4405 = vrot.slane %v4403, 4
        %v4406 = vor.u32 %v4405, %v4401
        %v4407 = vrot.slane %v4406, 4
        %v4409 = vshll.u32 %v4220, 16
        %v4411 = vrot.slane %v4409, 5
        %v4412 = vsel %vm396, %v4407, %v4411
        %s4413 = scalar_lea.vmem [#allocation8], 64
        %v4414 = vld [vmem:[%s4413] sm:$0xf]
        %v4415 = vld [vmem:[%s4413 + $0x4] sm:$0xf]
        %v4416 = vld [vmem:[%s4413 + $0x8] sm:$0xf]
        %v4417 = vld [vmem:[%s4413 + $0xc] sm:$0xf]
        %v4418 = vld [vmem:[%s4413 + $0x10] sm:$0xf]
        %v4419 = vld [vmem:[%s4413 + $0x14] sm:$0xf]
        %v4420 = vld [vmem:[%s4413 + $0x18] sm:$0xf]
        %v4421 = vld [vmem:[%s4413 + $0x1c] sm:$0xf]
        %v4422 = vld [vmem:[%s4413 + $0x20] sm:$0xf]
        %v4423 = vld [vmem:[%s4413 + $0x24] sm:$0xf]
        %v4424 = vld [vmem:[%s4413 + $0x28] sm:$0xf]
        %v4425 = vld [vmem:[%s4413 + $0x2c] sm:$0xf]
        %v4426 = vld [vmem:[%s4413 + $0x30] sm:$0xf]
        %v4427 = vld [vmem:[%s4413 + $0x34] sm:$0xf]
        %v4428 = vld [vmem:[%s4413 + $0x38] sm:$0xf]
        %v4429 = vld [vmem:[%s4413 + $0x3c] sm:$0xf]
        %v4430 = vunpack.c.l.b16 %v4234
        %v4431 = vunpack.c.l.b16 %v4244
        %v4432 = vunpack.c.l.b16 %v4258
        %v4433 = vunpack.c.l.b16 %v4268
        %v4434 = vunpack.c.l.b16 %v4282
        %v4435 = vunpack.c.l.b16 %v4292
        %v4436 = vunpack.c.l.b16 %v4306
        %v4437 = vunpack.c.l.b16 %v4316
        %v4438 = vunpack.c.l.b16 %v4330
        %v4439 = vunpack.c.l.b16 %v4340
        %v4440 = vunpack.c.l.b16 %v4354
        %v4441 = vunpack.c.l.b16 %v4364
        %v4442 = vunpack.c.l.b16 %v4378
        %v4443 = vunpack.c.l.b16 %v4388
        %v4444 = vunpack.c.l.b16 %v4402
        %v4445 = vunpack.c.l.b16 %v4412
        %v4446 = vpack.c.b16 %v4431, %v4430
        %v4447 = vpack.c.b16 %v4433, %v4432
        %v4448 = vpack.c.b16 %v4435, %v4434
        %v4449 = vpack.c.b16 %v4437, %v4436
        %v4450 = vpack.c.b16 %v4439, %v4438
        %v4451 = vpack.c.b16 %v4441, %v4440
        %v4452 = vpack.c.b16 %v4443, %v4442
        %v4453 = vpack.c.b16 %v4445, %v4444
        %v4478 = vunpack.c.l.b16 %v4414
        %v4479 = vunpack.c.l.b16 %v4415
        %v4480 = vunpack.c.l.b16 %v4416
        %v4481 = vunpack.c.l.b16 %v4417
        %v4482 = vunpack.c.l.b16 %v4418
        %v4483 = vunpack.c.l.b16 %v4419
        %v4484 = vunpack.c.l.b16 %v4420
        %v4485 = vunpack.c.l.b16 %v4421
        %v4486 = vunpack.c.l.b16 %v4422
        %v4487 = vunpack.c.l.b16 %v4423
        %v4488 = vunpack.c.l.b16 %v4424
        %v4489 = vunpack.c.l.b16 %v4425
        %v4490 = vunpack.c.l.b16 %v4426
        %v4491 = vunpack.c.l.b16 %v4427
        %v4492 = vunpack.c.l.b16 %v4428
        %v4493 = vunpack.c.l.b16 %v4429
        %v4494 = vpack.c.b16 %v4479, %v4478
        %v4495 = vpack.c.b16 %v4481, %v4480
        %v4496 = vpack.c.b16 %v4483, %v4482
        %v4497 = vpack.c.b16 %v4485, %v4484
        %v4498 = vpack.c.b16 %v4487, %v4486
        %v4499 = vpack.c.b16 %v4489, %v4488
        %v4500 = vpack.c.b16 %v4491, %v4490
        %v4501 = vpack.c.b16 %v4493, %v4492
        %4510 = vmatprep.subr.bf16.mxu0 0
        %4511 = vmatpush1.bf16.msra.mxu0 %v4501
        %4512 = vmatprep.subr.bf16.mxu0 0
        %4513 = vmatpush1.bf16.msra.mxu0 %v4500
        %4514 = vmatprep.subr.bf16.mxu0 0
        %4515 = vmatpush1.bf16.msra.mxu0 %v4499
        %4516 = vmatprep.subr.bf16.mxu0 0
        %4517 = vmatpush1.bf16.msra.mxu0 %v4498
        %4518 = vmatprep.subr.bf16.mxu0 0
        %4519 = vmatpush1.bf16.msra.mxu0 %v4497
        %4520 = vmatprep.subr.bf16.mxu0 0
        %4521 = vmatpush1.bf16.msra.mxu0 %v4496
        %4522 = vmatprep.subr.bf16.mxu0 0
        %4523 = vmatpush1.bf16.msra.mxu0 %v4495
        %4524 = vmatprep.subr.bf16.mxu0 0
        %4525 = vmatpush1.bf16.msra.mxu0 %v4494
        %4526 = vmatprep.subr.bf16.mxu0 0
        %4527 = vmatpush2.bf16.msra.mxu0 0
        %4528 = vmatprep.subr.bf16.mxu0 0
        %4529 = vmatpush2.bf16.msra.mxu0 0
        %4530 = vmatprep.subr.bf16.mxu0 0
        %4531 = vmatpush2.bf16.msra.mxu0 0
        %4532 = vmatprep.subr.bf16.mxu0 0
        %4533 = vmatpush2.bf16.msra.mxu0 0
        %4534 = vmatprep.subr.bf16.mxu0 0
        %4535 = vmatpush2.bf16.msra.mxu0 0
        %4536 = vmatprep.subr.bf16.mxu0 0
        %4537 = vmatpush2.bf16.msra.mxu0 0
        %4538 = vmatprep.subr.bf16.mxu0 0
        %4539 = vmatpush2.bf16.msra.mxu0 0
        %4540 = vmatprep.subr.bf16.mxu0 0
        %4541 = vmatpush2.bf16.msra.mxu0 0
        %4542 = vmatprep.mubr.bf16.mxu0 0
        %4543 = vmatmul.mubr.bf16.gmra.mxu0 %v4446
        %v4544 = vpop.f32.mrf.mxu0
        %v4545 = vadd.f32 0.0, %v4544
        %v4546 = vpop.f32.mrf.mxu0
        %v4547 = vpop.f32.mrf.mxu0
        %v4548 = vadd.f32 0.0, %v4547
        %v4549 = vpop.f32.mrf.mxu0
        %4550 = vmatprep.mubr.bf16.mxu0 0
        %4551 = vmatmul.mubr.bf16.gmra.mxu0 %v4447
        %v4552 = vpop.f32.mrf.mxu0
        %v4553 = vadd.f32 0.0, %v4552
        %v4554 = vpop.f32.mrf.mxu0
        %v4555 = vpop.f32.mrf.mxu0
        %v4556 = vadd.f32 0.0, %v4555
        %v4557 = vpop.f32.mrf.mxu0
        %4558 = vmatprep.mubr.bf16.mxu0 0
        %4559 = vmatmul.mubr.bf16.gmra.mxu0 %v4448
        %v4560 = vpop.f32.mrf.mxu0
        %v4561 = vadd.f32 0.0, %v4560
        %v4562 = vpop.f32.mrf.mxu0
        %v4563 = vpop.f32.mrf.mxu0
        %v4564 = vadd.f32 0.0, %v4563
        %v4565 = vpop.f32.mrf.mxu0
        %4566 = vmatprep.mubr.bf16.mxu0 0
        %4567 = vmatmul.mubr.bf16.gmra.mxu0 %v4449
        %v4568 = vpop.f32.mrf.mxu0
        %v4569 = vadd.f32 0.0, %v4568
        %v4570 = vpop.f32.mrf.mxu0
        %v4571 = vpop.f32.mrf.mxu0
        %v4572 = vadd.f32 0.0, %v4571
        %v4573 = vpop.f32.mrf.mxu0
        %4574 = vmatprep.mubr.bf16.mxu0 0
        %4575 = vmatmul.mubr.bf16.gmra.mxu0 %v4450
        %v4576 = vpop.f32.mrf.mxu0
        %v4577 = vadd.f32 0.0, %v4576
        %v4578 = vpop.f32.mrf.mxu0
        %v4579 = vpop.f32.mrf.mxu0
        %v4580 = vadd.f32 0.0, %v4579
        %v4581 = vpop.f32.mrf.mxu0
        %4582 = vmatprep.mubr.bf16.mxu0 0
        %4583 = vmatmul.mubr.bf16.gmra.mxu0 %v4451
        %v4584 = vpop.f32.mrf.mxu0
        %v4585 = vadd.f32 0.0, %v4584
        %v4586 = vpop.f32.mrf.mxu0
        %v4587 = vpop.f32.mrf.mxu0
        %v4588 = vadd.f32 0.0, %v4587
        %v4589 = vpop.f32.mrf.mxu0
        %4590 = vmatprep.mubr.bf16.mxu0 0
        %4591 = vmatmul.mubr.bf16.gmra.mxu0 %v4452
        %v4592 = vpop.f32.mrf.mxu0
        %v4593 = vadd.f32 0.0, %v4592
        %v4594 = vpop.f32.mrf.mxu0
        %v4595 = vpop.f32.mrf.mxu0
        %v4596 = vadd.f32 0.0, %v4595
        %v4597 = vpop.f32.mrf.mxu0
        %4598 = vmatprep.mubr.bf16.mxu0 0
        %4599 = vmatmul.mubr.bf16.gmra.mxu0 %v4453
        %v4600 = vpop.f32.mrf.mxu0
        %v4601 = vadd.f32 0.0, %v4600
        %v4602 = vpop.f32.mrf.mxu0
        %v4603 = vpop.f32.mrf.mxu0
        %v4604 = vadd.f32 0.0, %v4603
        %v4605 = vpop.f32.mrf.mxu0
        %4606 = vdwg.mxu0
        %v4623 = vunpack.c.l.b16 %v4181
        %v4624 = vunpack.c.l.b16 %v4182
        %v4625 = vunpack.c.l.b16 %v4183
        %v4626 = vunpack.c.l.b16 %v4184
        %v4627 = vunpack.c.l.b16 %v4185
        %v4628 = vunpack.c.l.b16 %v4186
        %v4629 = vunpack.c.l.b16 %v4187
        %v4630 = vunpack.c.l.b16 %v4188
        %v4631 = vunpack.c.l.b16 %v4189
        %v4632 = vunpack.c.l.b16 %v4190
        %v4633 = vunpack.c.l.b16 %v4191
        %v4634 = vunpack.c.l.b16 %v4192
        %v4635 = vunpack.c.l.b16 %v4193
        %v4636 = vunpack.c.l.b16 %v4194
        %v4637 = vunpack.c.l.b16 %v4195
        %v4638 = vunpack.c.l.b16 %v4196
        %v4639 = vpack.c.b16 %v4624, %v4623
        %v4640 = vpack.c.b16 %v4626, %v4625
        %v4641 = vpack.c.b16 %v4628, %v4627
        %v4642 = vpack.c.b16 %v4630, %v4629
        %v4643 = vpack.c.b16 %v4632, %v4631
        %v4644 = vpack.c.b16 %v4634, %v4633
        %v4645 = vpack.c.b16 %v4636, %v4635
        %v4646 = vpack.c.b16 %v4638, %v4637
        %v4671 = vunpack.c.l.b16 %v4197
        %v4672 = vunpack.c.l.b16 %v4198
        %v4673 = vunpack.c.l.b16 %v4199
        %v4674 = vunpack.c.l.b16 %v4200
        %v4675 = vunpack.c.l.b16 %v4201
        %v4676 = vunpack.c.l.b16 %v4202
        %v4677 = vunpack.c.l.b16 %v4203
        %v4678 = vunpack.c.l.b16 %v4204
        %v4679 = vunpack.c.l.b16 %v4205
        %v4680 = vunpack.c.l.b16 %v4206
        %v4681 = vunpack.c.l.b16 %v4207
        %v4682 = vunpack.c.l.b16 %v4208
        %v4683 = vunpack.c.l.b16 %v4209
        %v4684 = vunpack.c.l.b16 %v4210
        %v4685 = vunpack.c.l.b16 %v4211
        %v4686 = vunpack.c.l.b16 %v4212
        %v4687 = vpack.c.b16 %v4672, %v4671
        %v4688 = vpack.c.b16 %v4674, %v4673
        %v4689 = vpack.c.b16 %v4676, %v4675
        %v4690 = vpack.c.b16 %v4678, %v4677
        %v4691 = vpack.c.b16 %v4680, %v4679
        %v4692 = vpack.c.b16 %v4682, %v4681
        %v4693 = vpack.c.b16 %v4684, %v4683
        %v4694 = vpack.c.b16 %v4686, %v4685
        %4703 = vmatprep.subr.bf16.mxu0 0
        %4704 = vmatpush1.bf16.msra.mxu0 %v4694
        %4705 = vmatprep.subr.bf16.mxu0 0
        %4706 = vmatpush1.bf16.msra.mxu0 %v4693
        %4707 = vmatprep.subr.bf16.mxu0 0
        %4708 = vmatpush1.bf16.msra.mxu0 %v4692
        %4709 = vmatprep.subr.bf16.mxu0 0
        %4710 = vmatpush1.bf16.msra.mxu0 %v4691
        %4711 = vmatprep.subr.bf16.mxu0 0
        %4712 = vmatpush1.bf16.msra.mxu0 %v4690
        %4713 = vmatprep.subr.bf16.mxu0 0
        %4714 = vmatpush1.bf16.msra.mxu0 %v4689
        %4715 = vmatprep.subr.bf16.mxu0 0
        %4716 = vmatpush1.bf16.msra.mxu0 %v4688
        %4717 = vmatprep.subr.bf16.mxu0 0
        %4718 = vmatpush1.bf16.msra.mxu0 %v4687
        %4719 = vmatprep.subr.bf16.mxu0 0
        %4720 = vmatpush2.bf16.msra.mxu0 0
        %4721 = vmatprep.subr.bf16.mxu0 0
        %4722 = vmatpush2.bf16.msra.mxu0 0
        %4723 = vmatprep.subr.bf16.mxu0 0
        %4724 = vmatpush2.bf16.msra.mxu0 0
        %4725 = vmatprep.subr.bf16.mxu0 0
        %4726 = vmatpush2.bf16.msra.mxu0 0
        %4727 = vmatprep.subr.bf16.mxu0 0
        %4728 = vmatpush2.bf16.msra.mxu0 0
        %4729 = vmatprep.subr.bf16.mxu0 0
        %4730 = vmatpush2.bf16.msra.mxu0 0
        %4731 = vmatprep.subr.bf16.mxu0 0
        %4732 = vmatpush2.bf16.msra.mxu0 0
        %4733 = vmatprep.subr.bf16.mxu0 0
        %4734 = vmatpush2.bf16.msra.mxu0 0
        %4735 = vmatprep.mubr.bf16.mxu0 0
        %4736 = vmatmul.mubr.bf16.gmra.mxu0 %v4639
        %v4737 = vpop.f32.mrf.mxu0
        %v4738 = vadd.f32 %v4545, %v4737
        %v4739 = vpop.f32.mrf.mxu0
        %v4740 = vpop.f32.mrf.mxu0
        %v4741 = vadd.f32 %v4548, %v4740
        %v4742 = vpop.f32.mrf.mxu0
        %4743 = vmatprep.mubr.bf16.mxu0 0
        %4744 = vmatmul.mubr.bf16.gmra.mxu0 %v4640
        %v4745 = vpop.f32.mrf.mxu0
        %v4746 = vadd.f32 %v4553, %v4745
        %v4747 = vpop.f32.mrf.mxu0
        %v4748 = vpop.f32.mrf.mxu0
        %v4749 = vadd.f32 %v4556, %v4748
        %v4750 = vpop.f32.mrf.mxu0
        %4751 = vmatprep.mubr.bf16.mxu0 0
        %4752 = vmatmul.mubr.bf16.gmra.mxu0 %v4641
        %v4753 = vpop.f32.mrf.mxu0
        %v4754 = vadd.f32 %v4561, %v4753
        %v4755 = vpop.f32.mrf.mxu0
        %v4756 = vpop.f32.mrf.mxu0
        %v4757 = vadd.f32 %v4564, %v4756
        %v4758 = vpop.f32.mrf.mxu0
        %4759 = vmatprep.mubr.bf16.mxu0 0
        %4760 = vmatmul.mubr.bf16.gmra.mxu0 %v4642
        %v4761 = vpop.f32.mrf.mxu0
        %v4762 = vadd.f32 %v4569, %v4761
        %v4763 = vpop.f32.mrf.mxu0
        %v4764 = vpop.f32.mrf.mxu0
        %v4765 = vadd.f32 %v4572, %v4764
        %v4766 = vpop.f32.mrf.mxu0
        %4767 = vmatprep.mubr.bf16.mxu0 0
        %4768 = vmatmul.mubr.bf16.gmra.mxu0 %v4643
        %v4769 = vpop.f32.mrf.mxu0
        %v4770 = vadd.f32 %v4577, %v4769
        %v4771 = vpop.f32.mrf.mxu0
        %v4772 = vpop.f32.mrf.mxu0
        %v4773 = vadd.f32 %v4580, %v4772
        %v4774 = vpop.f32.mrf.mxu0
        %4775 = vmatprep.mubr.bf16.mxu0 0
        %4776 = vmatmul.mubr.bf16.gmra.mxu0 %v4644
        %v4777 = vpop.f32.mrf.mxu0
        %v4778 = vadd.f32 %v4585, %v4777
        %v4779 = vpop.f32.mrf.mxu0
        %v4780 = vpop.f32.mrf.mxu0
        %v4781 = vadd.f32 %v4588, %v4780
        %v4782 = vpop.f32.mrf.mxu0
        %4783 = vmatprep.mubr.bf16.mxu0 0
        %4784 = vmatmul.mubr.bf16.gmra.mxu0 %v4645
        %v4785 = vpop.f32.mrf.mxu0
        %v4786 = vadd.f32 %v4593, %v4785
        %v4787 = vpop.f32.mrf.mxu0
        %v4788 = vpop.f32.mrf.mxu0
        %v4789 = vadd.f32 %v4596, %v4788
        %v4790 = vpop.f32.mrf.mxu0
        %4791 = vmatprep.mubr.bf16.mxu0 0
        %4792 = vmatmul.mubr.bf16.gmra.mxu0 %v4646
        %v4793 = vpop.f32.mrf.mxu0
        %v4794 = vadd.f32 %v4601, %v4793
        %v4795 = vpop.f32.mrf.mxu0
        %v4796 = vpop.f32.mrf.mxu0
        %v4797 = vadd.f32 %v4604, %v4796
        %v4798 = vpop.f32.mrf.mxu0
        %4799 = vdwg.mxu0
        %v4800 = vld [vmem:[#allocation2] sm:$0xe]
        %v4801 = vld [vmem:[#allocation2 + $0xc] sm:$0xe]
        %v4802 = vld [vmem:[#allocation2 + $0x18] sm:$0xe]
        %v4803 = vld [vmem:[#allocation2 + $0x24] sm:$0xe]
        %v4804 = vld [vmem:[#allocation2 + $0x30] sm:$0xe]
        %v4805 = vld [vmem:[#allocation2 + $0x3c] sm:$0xe]
        %v4806 = vld [vmem:[#allocation2 + $0x48] sm:$0xe]
        %v4807 = vld [vmem:[#allocation2 + $0x54] sm:$0xe]
        %v4824 = vrot.slane %v4800, 5
        %v4825 = vrot.slane %v4824, 4
        %v4826 = vrot.slane %v4182, 5
        %v4827 = vsel %vm1108, %v4825, %v4826
        %v4828 = vrot.slane %v4826, 4
        %v4829 = vrot.slane %v4213, 5
        %v4830 = vsel %vm1108, %v4828, %v4829
        %v4831 = vrot.slane %v4801, 5
        %v4832 = vrot.slane %v4831, 4
        %v4833 = vrot.slane %v4184, 5
        %v4834 = vsel %vm1108, %v4832, %v4833
        %v4835 = vrot.slane %v4833, 4
        %v4836 = vrot.slane %v4214, 5
        %v4837 = vsel %vm1108, %v4835, %v4836
        %v4838 = vrot.slane %v4802, 5
        %v4839 = vrot.slane %v4838, 4
        %v4840 = vrot.slane %v4186, 5
        %v4841 = vsel %vm1108, %v4839, %v4840
        %v4842 = vrot.slane %v4840, 4
        %v4843 = vrot.slane %v4215, 5
        %v4844 = vsel %vm1108, %v4842, %v4843
        %v4845 = vrot.slane %v4803, 5
        %v4846 = vrot.slane %v4845, 4
        %v4847 = vrot.slane %v4188, 5
        %v4848 = vsel %vm1108, %v4846, %v4847
        %v4849 = vrot.slane %v4847, 4
        %v4850 = vrot.slane %v4216, 5
        %v4851 = vsel %vm1108, %v4849, %v4850
        %v4852 = vrot.slane %v4804, 5
        %v4853 = vrot.slane %v4852, 4
        %v4854 = vrot.slane %v4190, 5
        %v4855 = vsel %vm1108, %v4853, %v4854
        %v4856 = vrot.slane %v4854, 4
        %v4857 = vrot.slane %v4217, 5
        %v4858 = vsel %vm1108, %v4856, %v4857
        %v4859 = vrot.slane %v4805, 5
        %v4860 = vrot.slane %v4859, 4
        %v4861 = vrot.slane %v4192, 5
        %v4862 = vsel %vm1108, %v4860, %v4861
        %v4863 = vrot.slane %v4861, 4
        %v4864 = vrot.slane %v4218, 5
        %v4865 = vsel %vm1108, %v4863, %v4864
        %v4866 = vrot.slane %v4806, 5
        %v4867 = vrot.slane %v4866, 4
        %v4868 = vrot.slane %v4194, 5
        %v4869 = vsel %vm1108, %v4867, %v4868
        %v4870 = vrot.slane %v4868, 4
        %v4871 = vrot.slane %v4219, 5
        %v4872 = vsel %vm1108, %v4870, %v4871
        %v4873 = vrot.slane %v4807, 5
        %v4874 = vrot.slane %v4873, 4
        %v4875 = vrot.slane %v4196, 5
        %v4876 = vsel %vm1108, %v4874, %v4875
        %v4877 = vrot.slane %v4875, 4
        %v4878 = vrot.slane %v4220, 5
        %v4879 = vsel %vm1108, %v4877, %v4878
        %s4880 = scalar_lea.vmem [#allocation8], 128
        %v4881 = vld [vmem:[%s4880] sm:$0xf]
        %v4882 = vld [vmem:[%s4880 + $0x4] sm:$0xf]
        %v4883 = vld [vmem:[%s4880 + $0x8] sm:$0xf]
        %v4884 = vld [vmem:[%s4880 + $0xc] sm:$0xf]
        %v4885 = vld [vmem:[%s4880 + $0x10] sm:$0xf]
        %v4886 = vld [vmem:[%s4880 + $0x14] sm:$0xf]
        %v4887 = vld [vmem:[%s4880 + $0x18] sm:$0xf]
        %v4888 = vld [vmem:[%s4880 + $0x1c] sm:$0xf]
        %v4889 = vld [vmem:[%s4880 + $0x20] sm:$0xf]
        %v4890 = vld [vmem:[%s4880 + $0x24] sm:$0xf]
        %v4891 = vld [vmem:[%s4880 + $0x28] sm:$0xf]
        %v4892 = vld [vmem:[%s4880 + $0x2c] sm:$0xf]
        %v4893 = vld [vmem:[%s4880 + $0x30] sm:$0xf]
        %v4894 = vld [vmem:[%s4880 + $0x34] sm:$0xf]
        %v4895 = vld [vmem:[%s4880 + $0x38] sm:$0xf]
        %v4896 = vld [vmem:[%s4880 + $0x3c] sm:$0xf]
        %v4897 = vunpack.c.l.b16 %v4827
        %v4898 = vunpack.c.l.b16 %v4830
        %v4899 = vunpack.c.l.b16 %v4834
        %v4900 = vunpack.c.l.b16 %v4837
        %v4901 = vunpack.c.l.b16 %v4841
        %v4902 = vunpack.c.l.b16 %v4844
        %v4903 = vunpack.c.l.b16 %v4848
        %v4904 = vunpack.c.l.b16 %v4851
        %v4905 = vunpack.c.l.b16 %v4855
        %v4906 = vunpack.c.l.b16 %v4858
        %v4907 = vunpack.c.l.b16 %v4862
        %v4908 = vunpack.c.l.b16 %v4865
        %v4909 = vunpack.c.l.b16 %v4869
        %v4910 = vunpack.c.l.b16 %v4872
        %v4911 = vunpack.c.l.b16 %v4876
        %v4912 = vunpack.c.l.b16 %v4879
        %v4913 = vpack.c.b16 %v4898, %v4897
        %v4914 = vpack.c.b16 %v4900, %v4899
        %v4915 = vpack.c.b16 %v4902, %v4901
        %v4916 = vpack.c.b16 %v4904, %v4903
        %v4917 = vpack.c.b16 %v4906, %v4905
        %v4918 = vpack.c.b16 %v4908, %v4907
        %v4919 = vpack.c.b16 %v4910, %v4909
        %v4920 = vpack.c.b16 %v4912, %v4911
        %v4945 = vunpack.c.l.b16 %v4881
        %v4946 = vunpack.c.l.b16 %v4882
        %v4947 = vunpack.c.l.b16 %v4883
        %v4948 = vunpack.c.l.b16 %v4884
        %v4949 = vunpack.c.l.b16 %v4885
        %v4950 = vunpack.c.l.b16 %v4886
        %v4951 = vunpack.c.l.b16 %v4887
        %v4952 = vunpack.c.l.b16 %v4888
        %v4953 = vunpack.c.l.b16 %v4889
        %v4954 = vunpack.c.l.b16 %v4890
        %v4955 = vunpack.c.l.b16 %v4891
        %v4956 = vunpack.c.l.b16 %v4892
        %v4957 = vunpack.c.l.b16 %v4893
        %v4958 = vunpack.c.l.b16 %v4894
        %v4959 = vunpack.c.l.b16 %v4895
        %v4960 = vunpack.c.l.b16 %v4896
        %v4961 = vpack.c.b16 %v4946, %v4945
        %v4962 = vpack.c.b16 %v4948, %v4947
        %v4963 = vpack.c.b16 %v4950, %v4949
        %v4964 = vpack.c.b16 %v4952, %v4951
        %v4965 = vpack.c.b16 %v4954, %v4953
        %v4966 = vpack.c.b16 %v4956, %v4955
        %v4967 = vpack.c.b16 %v4958, %v4957
        %v4968 = vpack.c.b16 %v4960, %v4959
        %4977 = vmatprep.subr.bf16.mxu0 0
        %4978 = vmatpush1.bf16.msra.mxu0 %v4968
        %4979 = vmatprep.subr.bf16.mxu0 0
        %4980 = vmatpush1.bf16.msra.mxu0 %v4967
        %4981 = vmatprep.subr.bf16.mxu0 0
        %4982 = vmatpush1.bf16.msra.mxu0 %v4966
        %4983 = vmatprep.subr.bf16.mxu0 0
        %4984 = vmatpush1.bf16.msra.mxu0 %v4965
        %4985 = vmatprep.subr.bf16.mxu0 0
        %4986 = vmatpush1.bf16.msra.mxu0 %v4964
        %4987 = vmatprep.subr.bf16.mxu0 0
        %4988 = vmatpush1.bf16.msra.mxu0 %v4963
        %4989 = vmatprep.subr.bf16.mxu0 0
        %4990 = vmatpush1.bf16.msra.mxu0 %v4962
        %4991 = vmatprep.subr.bf16.mxu0 0
        %4992 = vmatpush1.bf16.msra.mxu0 %v4961
        %4993 = vmatprep.subr.bf16.mxu0 0
        %4994 = vmatpush2.bf16.msra.mxu0 0
        %4995 = vmatprep.subr.bf16.mxu0 0
        %4996 = vmatpush2.bf16.msra.mxu0 0
        %4997 = vmatprep.subr.bf16.mxu0 0
        %4998 = vmatpush2.bf16.msra.mxu0 0
        %4999 = vmatprep.subr.bf16.mxu0 0
        %5000 = vmatpush2.bf16.msra.mxu0 0
        %5001 = vmatprep.subr.bf16.mxu0 0
        %5002 = vmatpush2.bf16.msra.mxu0 0
        %5003 = vmatprep.subr.bf16.mxu0 0
        %5004 = vmatpush2.bf16.msra.mxu0 0
        %5005 = vmatprep.subr.bf16.mxu0 0
        %5006 = vmatpush2.bf16.msra.mxu0 0
        %5007 = vmatprep.subr.bf16.mxu0 0
        %5008 = vmatpush2.bf16.msra.mxu0 0
        %5009 = vmatprep.mubr.bf16.mxu0 0
        %5010 = vmatmul.mubr.bf16.gmra.mxu0 %v4913
        %v5011 = vpop.f32.mrf.mxu0
        %v5012 = vadd.f32 0.0, %v5011
        %v5013 = vpop.f32.mrf.mxu0
        %v5014 = vpop.f32.mrf.mxu0
        %v5015 = vadd.f32 0.0, %v5014
        %v5016 = vpop.f32.mrf.mxu0
        %5017 = vmatprep.mubr.bf16.mxu0 0
        %5018 = vmatmul.mubr.bf16.gmra.mxu0 %v4914
        %v5019 = vpop.f32.mrf.mxu0
        %v5020 = vadd.f32 0.0, %v5019
        %v5021 = vpop.f32.mrf.mxu0
        %v5022 = vpop.f32.mrf.mxu0
        %v5023 = vadd.f32 0.0, %v5022
        %v5024 = vpop.f32.mrf.mxu0
        %5025 = vmatprep.mubr.bf16.mxu0 0
        %5026 = vmatmul.mubr.bf16.gmra.mxu0 %v4915
        %v5027 = vpop.f32.mrf.mxu0
        %v5028 = vadd.f32 0.0, %v5027
        %v5029 = vpop.f32.mrf.mxu0
        %v5030 = vpop.f32.mrf.mxu0
        %v5031 = vadd.f32 0.0, %v5030
        %v5032 = vpop.f32.mrf.mxu0
        %5033 = vmatprep.mubr.bf16.mxu0 0
        %5034 = vmatmul.mubr.bf16.gmra.mxu0 %v4916
        %v5035 = vpop.f32.mrf.mxu0
        %v5036 = vadd.f32 0.0, %v5035
        %v5037 = vpop.f32.mrf.mxu0
        %v5038 = vpop.f32.mrf.mxu0
        %v5039 = vadd.f32 0.0, %v5038
        %v5040 = vpop.f32.mrf.mxu0
        %5041 = vmatprep.mubr.bf16.mxu0 0
        %5042 = vmatmul.mubr.bf16.gmra.mxu0 %v4917
        %v5043 = vpop.f32.mrf.mxu0
        %v5044 = vadd.f32 0.0, %v5043
        %v5045 = vpop.f32.mrf.mxu0
        %v5046 = vpop.f32.mrf.mxu0
        %v5047 = vadd.f32 0.0, %v5046
        %v5048 = vpop.f32.mrf.mxu0
        %5049 = vmatprep.mubr.bf16.mxu0 0
        %5050 = vmatmul.mubr.bf16.gmra.mxu0 %v4918
        %v5051 = vpop.f32.mrf.mxu0
        %v5052 = vadd.f32 0.0, %v5051
        %v5053 = vpop.f32.mrf.mxu0
        %v5054 = vpop.f32.mrf.mxu0
        %v5055 = vadd.f32 0.0, %v5054
        %v5056 = vpop.f32.mrf.mxu0
        %5057 = vmatprep.mubr.bf16.mxu0 0
        %5058 = vmatmul.mubr.bf16.gmra.mxu0 %v4919
        %v5059 = vpop.f32.mrf.mxu0
        %v5060 = vadd.f32 0.0, %v5059
        %v5061 = vpop.f32.mrf.mxu0
        %v5062 = vpop.f32.mrf.mxu0
        %v5063 = vadd.f32 0.0, %v5062
        %v5064 = vpop.f32.mrf.mxu0
        %5065 = vmatprep.mubr.bf16.mxu0 0
        %5066 = vmatmul.mubr.bf16.gmra.mxu0 %v4920
        %v5067 = vpop.f32.mrf.mxu0
        %v5068 = vadd.f32 0.0, %v5067
        %v5069 = vpop.f32.mrf.mxu0
        %v5070 = vpop.f32.mrf.mxu0
        %v5071 = vadd.f32 0.0, %v5070
        %v5072 = vpop.f32.mrf.mxu0
        %5073 = vdwg.mxu0
        %v5074 = vadd.f32 %v4738, %v5012
        %v5075 = vadd.f32 %v4741, %v5015
        %v5076 = vadd.f32 %v4746, %v5020
        %v5077 = vadd.f32 %v4749, %v5023
        %v5078 = vadd.f32 %v4754, %v5028
        %v5079 = vadd.f32 %v4757, %v5031
        %v5080 = vadd.f32 %v4762, %v5036
        %v5081 = vadd.f32 %v4765, %v5039
        %v5082 = vadd.f32 %v4770, %v5044
        %v5083 = vadd.f32 %v4773, %v5047
        %v5084 = vadd.f32 %v4778, %v5052
        %v5085 = vadd.f32 %v4781, %v5055
        %v5086 = vadd.f32 %v4786, %v5060
        %v5087 = vadd.f32 %v4789, %v5063
        %v5088 = vadd.f32 %v4794, %v5068
        %v5089 = vadd.f32 %v4797, %v5071
        %s5090 = scalar_lea.vmem [#allocation2], 12
        %v5091 = vld [vmem:[%s5090] sm:$0xf]
        %v5092 = vld [vmem:[%s5090 + $0x4] sm:$0xf]
        %v5093 = vld [vmem:[%s5090 + $0xc] sm:$0xf]
        %v5094 = vld [vmem:[%s5090 + $0x10] sm:$0xf]
        %v5095 = vld [vmem:[%s5090 + $0x18] sm:$0xf]
        %v5096 = vld [vmem:[%s5090 + $0x1c] sm:$0xf]
        %v5097 = vld [vmem:[%s5090 + $0x24] sm:$0xf]
        %v5098 = vld [vmem:[%s5090 + $0x28] sm:$0xf]
        %v5099 = vld [vmem:[%s5090 + $0x30] sm:$0xf]
        %v5100 = vld [vmem:[%s5090 + $0x34] sm:$0xf]
        %v5101 = vld [vmem:[%s5090 + $0x3c] sm:$0xf]
        %v5102 = vld [vmem:[%s5090 + $0x40] sm:$0xf]
        %v5103 = vld [vmem:[%s5090 + $0x48] sm:$0xf]
        %v5104 = vld [vmem:[%s5090 + $0x4c] sm:$0xf]
        %v5105 = vld [vmem:[%s5090 + $0x54] sm:$0xf]
        %v5106 = vld [vmem:[%s5090 + $0x58] sm:$0xf]
        %s5107 = scalar_lea.vmem [#allocation8], 192
        %v5108 = vld [vmem:[%s5107] sm:$0xf]
        %v5109 = vld [vmem:[%s5107 + $0x4] sm:$0xf]
        %v5110 = vld [vmem:[%s5107 + $0x8] sm:$0xf]
        %v5111 = vld [vmem:[%s5107 + $0xc] sm:$0xf]
        %v5112 = vld [vmem:[%s5107 + $0x10] sm:$0xf]
        %v5113 = vld [vmem:[%s5107 + $0x14] sm:$0xf]
        %v5114 = vld [vmem:[%s5107 + $0x18] sm:$0xf]
        %v5115 = vld [vmem:[%s5107 + $0x1c] sm:$0xf]
        %v5116 = vld [vmem:[%s5107 + $0x20] sm:$0xf]
        %v5117 = vld [vmem:[%s5107 + $0x24] sm:$0xf]
        %v5118 = vld [vmem:[%s5107 + $0x28] sm:$0xf]
        %v5119 = vld [vmem:[%s5107 + $0x2c] sm:$0xf]
        %v5120 = vld [vmem:[%s5107 + $0x30] sm:$0xf]
        %v5121 = vld [vmem:[%s5107 + $0x34] sm:$0xf]
        %v5122 = vld [vmem:[%s5107 + $0x38] sm:$0xf]
        %v5123 = vld [vmem:[%s5107 + $0x3c] sm:$0xf]
        %v5140 = vunpack.c.l.b16 %v5091
        %v5141 = vunpack.c.l.b16 %v5092
        %v5142 = vunpack.c.l.b16 %v5093
        %v5143 = vunpack.c.l.b16 %v5094
        %v5144 = vunpack.c.l.b16 %v5095
        %v5145 = vunpack.c.l.b16 %v5096
        %v5146 = vunpack.c.l.b16 %v5097
        %v5147 = vunpack.c.l.b16 %v5098
        %v5148 = vunpack.c.l.b16 %v5099
        %v5149 = vunpack.c.l.b16 %v5100
        %v5150 = vunpack.c.l.b16 %v5101
        %v5151 = vunpack.c.l.b16 %v5102
        %v5152 = vunpack.c.l.b16 %v5103
        %v5153 = vunpack.c.l.b16 %v5104
        %v5154 = vunpack.c.l.b16 %v5105
        %v5155 = vunpack.c.l.b16 %v5106
        %v5156 = vpack.c.b16 %v5141, %v5140
        %v5157 = vpack.c.b16 %v5143, %v5142
        %v5158 = vpack.c.b16 %v5145, %v5144
        %v5159 = vpack.c.b16 %v5147, %v5146
        %v5160 = vpack.c.b16 %v5149, %v5148
        %v5161 = vpack.c.b16 %v5151, %v5150
        %v5162 = vpack.c.b16 %v5153, %v5152
        %v5163 = vpack.c.b16 %v5155, %v5154
        %v5188 = vunpack.c.l.b16 %v5108
        %v5189 = vunpack.c.l.b16 %v5109
        %v5190 = vunpack.c.l.b16 %v5110
        %v5191 = vunpack.c.l.b16 %v5111
        %v5192 = vunpack.c.l.b16 %v5112
        %v5193 = vunpack.c.l.b16 %v5113
        %v5194 = vunpack.c.l.b16 %v5114
        %v5195 = vunpack.c.l.b16 %v5115
        %v5196 = vunpack.c.l.b16 %v5116
        %v5197 = vunpack.c.l.b16 %v5117
        %v5198 = vunpack.c.l.b16 %v5118
        %v5199 = vunpack.c.l.b16 %v5119
        %v5200 = vunpack.c.l.b16 %v5120
        %v5201 = vunpack.c.l.b16 %v5121
        %v5202 = vunpack.c.l.b16 %v5122
        %v5203 = vunpack.c.l.b16 %v5123
        %v5204 = vpack.c.b16 %v5189, %v5188
        %v5205 = vpack.c.b16 %v5191, %v5190
        %v5206 = vpack.c.b16 %v5193, %v5192
        %v5207 = vpack.c.b16 %v5195, %v5194
        %v5208 = vpack.c.b16 %v5197, %v5196
        %v5209 = vpack.c.b16 %v5199, %v5198
        %v5210 = vpack.c.b16 %v5201, %v5200
        %v5211 = vpack.c.b16 %v5203, %v5202
        %5220 = vmatprep.subr.bf16.mxu0 0
        %5221 = vmatpush1.bf16.msra.mxu0 %v5211
        %5222 = vmatprep.subr.bf16.mxu0 0
        %5223 = vmatpush1.bf16.msra.mxu0 %v5210
        %5224 = vmatprep.subr.bf16.mxu0 0
        %5225 = vmatpush1.bf16.msra.mxu0 %v5209
        %5226 = vmatprep.subr.bf16.mxu0 0
        %5227 = vmatpush1.bf16.msra.mxu0 %v5208
        %5228 = vmatprep.subr.bf16.mxu0 0
        %5229 = vmatpush1.bf16.msra.mxu0 %v5207
        %5230 = vmatprep.subr.bf16.mxu0 0
        %5231 = vmatpush1.bf16.msra.mxu0 %v5206
        %5232 = vmatprep.subr.bf16.mxu0 0
        %5233 = vmatpush1.bf16.msra.mxu0 %v5205
        %5234 = vmatprep.subr.bf16.mxu0 0
        %5235 = vmatpush1.bf16.msra.mxu0 %v5204
        %5236 = vmatprep.subr.bf16.mxu0 0
        %5237 = vmatpush2.bf16.msra.mxu0 0
        %5238 = vmatprep.subr.bf16.mxu0 0
        %5239 = vmatpush2.bf16.msra.mxu0 0
        %5240 = vmatprep.subr.bf16.mxu0 0
        %5241 = vmatpush2.bf16.msra.mxu0 0
        %5242 = vmatprep.subr.bf16.mxu0 0
        %5243 = vmatpush2.bf16.msra.mxu0 0
        %5244 = vmatprep.subr.bf16.mxu0 0
        %5245 = vmatpush2.bf16.msra.mxu0 0
        %5246 = vmatprep.subr.bf16.mxu0 0
        %5247 = vmatpush2.bf16.msra.mxu0 0
        %5248 = vmatprep.subr.bf16.mxu0 0
        %5249 = vmatpush2.bf16.msra.mxu0 0
        %5250 = vmatprep.subr.bf16.mxu0 0
        %5251 = vmatpush2.bf16.msra.mxu0 0
        %5252 = vmatprep.mubr.bf16.mxu0 0
        %5253 = vmatmul.mubr.bf16.gmra.mxu0 %v5156
        %v5254 = vpop.f32.mrf.mxu0
        %v5255 = vadd.f32 0.0, %v5254
        %v5256 = vpop.f32.mrf.mxu0
        %v5257 = vpop.f32.mrf.mxu0
        %v5258 = vadd.f32 0.0, %v5257
        %v5259 = vpop.f32.mrf.mxu0
        %5260 = vmatprep.mubr.bf16.mxu0 0
        %5261 = vmatmul.mubr.bf16.gmra.mxu0 %v5157
        %v5262 = vpop.f32.mrf.mxu0
        %v5263 = vadd.f32 0.0, %v5262
        %v5264 = vpop.f32.mrf.mxu0
        %v5265 = vpop.f32.mrf.mxu0
        %v5266 = vadd.f32 0.0, %v5265
        %v5267 = vpop.f32.mrf.mxu0
        %5268 = vmatprep.mubr.bf16.mxu0 0
        %5269 = vmatmul.mubr.bf16.gmra.mxu0 %v5158
        %v5270 = vpop.f32.mrf.mxu0
        %v5271 = vadd.f32 0.0, %v5270
        %v5272 = vpop.f32.mrf.mxu0
        %v5273 = vpop.f32.mrf.mxu0
        %v5274 = vadd.f32 0.0, %v5273
        %v5275 = vpop.f32.mrf.mxu0
        %5276 = vmatprep.mubr.bf16.mxu0 0
        %5277 = vmatmul.mubr.bf16.gmra.mxu0 %v5159
        %v5278 = vpop.f32.mrf.mxu0
        %v5279 = vadd.f32 0.0, %v5278
        %v5280 = vpop.f32.mrf.mxu0
        %v5281 = vpop.f32.mrf.mxu0
        %v5282 = vadd.f32 0.0, %v5281
        %v5283 = vpop.f32.mrf.mxu0
        %5284 = vmatprep.mubr.bf16.mxu0 0
        %5285 = vmatmul.mubr.bf16.gmra.mxu0 %v5160
        %v5286 = vpop.f32.mrf.mxu0
        %v5287 = vadd.f32 0.0, %v5286
        %v5288 = vpop.f32.mrf.mxu0
        %v5289 = vpop.f32.mrf.mxu0
        %v5290 = vadd.f32 0.0, %v5289
        %v5291 = vpop.f32.mrf.mxu0
        %5292 = vmatprep.mubr.bf16.mxu0 0
        %5293 = vmatmul.mubr.bf16.gmra.mxu0 %v5161
        %v5294 = vpop.f32.mrf.mxu0
        %v5295 = vadd.f32 0.0, %v5294
        %v5296 = vpop.f32.mrf.mxu0
        %v5297 = vpop.f32.mrf.mxu0
        %v5298 = vadd.f32 0.0, %v5297
        %v5299 = vpop.f32.mrf.mxu0
        %5300 = vmatprep.mubr.bf16.mxu0 0
        %5301 = vmatmul.mubr.bf16.gmra.mxu0 %v5162
        %v5302 = vpop.f32.mrf.mxu0
        %v5303 = vadd.f32 0.0, %v5302
        %v5304 = vpop.f32.mrf.mxu0
        %v5305 = vpop.f32.mrf.mxu0
        %v5306 = vadd.f32 0.0, %v5305
        %v5307 = vpop.f32.mrf.mxu0
        %5308 = vmatprep.mubr.bf16.mxu0 0
        %5309 = vmatmul.mubr.bf16.gmra.mxu0 %v5163
        %v5310 = vpop.f32.mrf.mxu0
        %v5311 = vadd.f32 0.0, %v5310
        %v5312 = vpop.f32.mrf.mxu0
        %v5313 = vpop.f32.mrf.mxu0
        %v5314 = vadd.f32 0.0, %v5313
        %v5315 = vpop.f32.mrf.mxu0
        %5316 = vdwg.mxu0
        %v5317 = vadd.f32 %v5074, %v5255
        %v5318 = vadd.f32 %v5075, %v5258
        %v5319 = vadd.f32 %v5076, %v5263
        %v5320 = vadd.f32 %v5077, %v5266
        %v5321 = vadd.f32 %v5078, %v5271
        %v5322 = vadd.f32 %v5079, %v5274
        %v5323 = vadd.f32 %v5080, %v5279
        %v5324 = vadd.f32 %v5081, %v5282
        %v5325 = vadd.f32 %v5082, %v5287
        %v5326 = vadd.f32 %v5083, %v5290
        %v5327 = vadd.f32 %v5084, %v5295
        %v5328 = vadd.f32 %v5085, %v5298
        %v5329 = vadd.f32 %v5086, %v5303
        %v5330 = vadd.f32 %v5087, %v5306
        %v5331 = vadd.f32 %v5088, %v5311
        %v5332 = vadd.f32 %v5089, %v5314
        %v5333 = vld [vmem:[%s5090] sm:$0xf]
        %v5334 = vld [vmem:[%s5090 + $0x4] sm:$0xf]
        %v5335 = vld [vmem:[%s5090 + $0x8] sm:$0x1]
        %v5336 = vld [vmem:[%s5090 + $0xc] sm:$0xf]
        %v5337 = vld [vmem:[%s5090 + $0x10] sm:$0xf]
        %v5338 = vld [vmem:[%s5090 + $0x14] sm:$0x1]
        %v5339 = vld [vmem:[%s5090 + $0x18] sm:$0xf]
        %v5340 = vld [vmem:[%s5090 + $0x1c] sm:$0xf]
        %v5341 = vld [vmem:[%s5090 + $0x20] sm:$0x1]
        %v5342 = vld [vmem:[%s5090 + $0x24] sm:$0xf]
        %v5343 = vld [vmem:[%s5090 + $0x28] sm:$0xf]
        %v5344 = vld [vmem:[%s5090 + $0x2c] sm:$0x1]
        %v5345 = vld [vmem:[%s5090 + $0x30] sm:$0xf]
        %v5346 = vld [vmem:[%s5090 + $0x34] sm:$0xf]
        %v5347 = vld [vmem:[%s5090 + $0x38] sm:$0x1]
        %v5348 = vld [vmem:[%s5090 + $0x3c] sm:$0xf]
        %v5349 = vld [vmem:[%s5090 + $0x40] sm:$0xf]
        %v5350 = vld [vmem:[%s5090 + $0x44] sm:$0x1]
        %v5351 = vld [vmem:[%s5090 + $0x48] sm:$0xf]
        %v5352 = vld [vmem:[%s5090 + $0x4c] sm:$0xf]
        %v5353 = vld [vmem:[%s5090 + $0x50] sm:$0x1]
        %v5354 = vld [vmem:[%s5090 + $0x54] sm:$0xf]
        %v5355 = vld [vmem:[%s5090 + $0x58] sm:$0xf]
        %v5356 = vld [vmem:[%s5090 + $0x5c] sm:$0x1]
        %v5358 = vshrl.u32 %v5333, 16
        %v5360 = vrot.slane %v5358, 4
        %v5361 = vshll.u32 %v5333, 16
        %v5363 = vrot.slane %v5361, 5
        %v5364 = vor.u32 %v5360, %v5363
        %v5365 = vrot.slane %v5364, 4
        %v5367 = vshll.u32 %v5334, 16
        %v5369 = vrot.slane %v5367, 5
        %v5370 = vsel %vm396, %v5365, %v5369
        %v5371 = vshrl.u32 %v5334, 16
        %v5373 = vrot.slane %v5371, 4
        %v5374 = vor.u32 %v5373, %v5369
        %v5375 = vrot.slane %v5374, 4
        %v5377 = vshll.u32 %v5335, 16
        %v5379 = vrot.slane %v5377, 5
        %v5380 = vsel %vm396, %v5375, %v5379
        %v5382 = vshrl.u32 %v5336, 16
        %v5384 = vrot.slane %v5382, 4
        %v5385 = vshll.u32 %v5336, 16
        %v5387 = vrot.slane %v5385, 5
        %v5388 = vor.u32 %v5384, %v5387
        %v5389 = vrot.slane %v5388, 4
        %v5391 = vshll.u32 %v5337, 16
        %v5393 = vrot.slane %v5391, 5
        %v5394 = vsel %vm396, %v5389, %v5393
        %v5395 = vshrl.u32 %v5337, 16
        %v5397 = vrot.slane %v5395, 4
        %v5398 = vor.u32 %v5397, %v5393
        %v5399 = vrot.slane %v5398, 4
        %v5401 = vshll.u32 %v5338, 16
        %v5403 = vrot.slane %v5401, 5
        %v5404 = vsel %vm396, %v5399, %v5403
        %v5406 = vshrl.u32 %v5339, 16
        %v5408 = vrot.slane %v5406, 4
        %v5409 = vshll.u32 %v5339, 16
        %v5411 = vrot.slane %v5409, 5
        %v5412 = vor.u32 %v5408, %v5411
        %v5413 = vrot.slane %v5412, 4
        %v5415 = vshll.u32 %v5340, 16
        %v5417 = vrot.slane %v5415, 5
        %v5418 = vsel %vm396, %v5413, %v5417
        %v5419 = vshrl.u32 %v5340, 16
        %v5421 = vrot.slane %v5419, 4
        %v5422 = vor.u32 %v5421, %v5417
        %v5423 = vrot.slane %v5422, 4
        %v5425 = vshll.u32 %v5341, 16
        %v5427 = vrot.slane %v5425, 5
        %v5428 = vsel %vm396, %v5423, %v5427
        %v5430 = vshrl.u32 %v5342, 16
        %v5432 = vrot.slane %v5430, 4
        %v5433 = vshll.u32 %v5342, 16
        %v5435 = vrot.slane %v5433, 5
        %v5436 = vor.u32 %v5432, %v5435
        %v5437 = vrot.slane %v5436, 4
        %v5439 = vshll.u32 %v5343, 16
        %v5441 = vrot.slane %v5439, 5
        %v5442 = vsel %vm396, %v5437, %v5441
        %v5443 = vshrl.u32 %v5343, 16
        %v5445 = vrot.slane %v5443, 4
        %v5446 = vor.u32 %v5445, %v5441
        %v5447 = vrot.slane %v5446, 4
        %v5449 = vshll.u32 %v5344, 16
        %v5451 = vrot.slane %v5449, 5
        %v5452 = vsel %vm396, %v5447, %v5451
        %v5454 = vshrl.u32 %v5345, 16
        %v5456 = vrot.slane %v5454, 4
        %v5457 = vshll.u32 %v5345, 16
        %v5459 = vrot.slane %v5457, 5
        %v5460 = vor.u32 %v5456, %v5459
        %v5461 = vrot.slane %v5460, 4
        %v5463 = vshll.u32 %v5346, 16
        %v5465 = vrot.slane %v5463, 5
        %v5466 = vsel %vm396, %v5461, %v5465
        %v5467 = vshrl.u32 %v5346, 16
        %v5469 = vrot.slane %v5467, 4
        %v5470 = vor.u32 %v5469, %v5465
        %v5471 = vrot.slane %v5470, 4
        %v5473 = vshll.u32 %v5347, 16
        %v5475 = vrot.slane %v5473, 5
        %v5476 = vsel %vm396, %v5471, %v5475
        %v5478 = vshrl.u32 %v5348, 16
        %v5480 = vrot.slane %v5478, 4
        %v5481 = vshll.u32 %v5348, 16
        %v5483 = vrot.slane %v5481, 5
        %v5484 = vor.u32 %v5480, %v5483
        %v5485 = vrot.slane %v5484, 4
        %v5487 = vshll.u32 %v5349, 16
        %v5489 = vrot.slane %v5487, 5
        %v5490 = vsel %vm396, %v5485, %v5489
        %v5491 = vshrl.u32 %v5349, 16
        %v5493 = vrot.slane %v5491, 4
        %v5494 = vor.u32 %v5493, %v5489
        %v5495 = vrot.slane %v5494, 4
        %v5497 = vshll.u32 %v5350, 16
        %v5499 = vrot.slane %v5497, 5
        %v5500 = vsel %vm396, %v5495, %v5499
        %v5502 = vshrl.u32 %v5351, 16
        %v5504 = vrot.slane %v5502, 4
        %v5505 = vshll.u32 %v5351, 16
        %v5507 = vrot.slane %v5505, 5
        %v5508 = vor.u32 %v5504, %v5507
        %v5509 = vrot.slane %v5508, 4
        %v5511 = vshll.u32 %v5352, 16
        %v5513 = vrot.slane %v5511, 5
        %v5514 = vsel %vm396, %v5509, %v5513
        %v5515 = vshrl.u32 %v5352, 16
        %v5517 = vrot.slane %v5515, 4
        %v5518 = vor.u32 %v5517, %v5513
        %v5519 = vrot.slane %v5518, 4
        %v5521 = vshll.u32 %v5353, 16
        %v5523 = vrot.slane %v5521, 5
        %v5524 = vsel %vm396, %v5519, %v5523
        %v5526 = vshrl.u32 %v5354, 16
        %v5528 = vrot.slane %v5526, 4
        %v5529 = vshll.u32 %v5354, 16
        %v5531 = vrot.slane %v5529, 5
        %v5532 = vor.u32 %v5528, %v5531
        %v5533 = vrot.slane %v5532, 4
        %v5535 = vshll.u32 %v5355, 16
        %v5537 = vrot.slane %v5535, 5
        %v5538 = vsel %vm396, %v5533, %v5537
        %v5539 = vshrl.u32 %v5355, 16
        %v5541 = vrot.slane %v5539, 4
        %v5542 = vor.u32 %v5541, %v5537
        %v5543 = vrot.slane %v5542, 4
        %v5545 = vshll.u32 %v5356, 16
        %v5547 = vrot.slane %v5545, 5
        %v5548 = vsel %vm396, %v5543, %v5547
        %s5549 = scalar_lea.vmem [#allocation8], 256
        %v5550 = vld [vmem:[%s5549] sm:$0xf]
        %v5551 = vld [vmem:[%s5549 + $0x4] sm:$0xf]
        %v5552 = vld [vmem:[%s5549 + $0x8] sm:$0xf]
        %v5553 = vld [vmem:[%s5549 + $0xc] sm:$0xf]
        %v5554 = vld [vmem:[%s5549 + $0x10] sm:$0xf]
        %v5555 = vld [vmem:[%s5549 + $0x14] sm:$0xf]
        %v5556 = vld [vmem:[%s5549 + $0x18] sm:$0xf]
        %v5557 = vld [vmem:[%s5549 + $0x1c] sm:$0xf]
        %v5558 = vld [vmem:[%s5549 + $0x20] sm:$0xf]
        %v5559 = vld [vmem:[%s5549 + $0x24] sm:$0xf]
        %v5560 = vld [vmem:[%s5549 + $0x28] sm:$0xf]
        %v5561 = vld [vmem:[%s5549 + $0x2c] sm:$0xf]
        %v5562 = vld [vmem:[%s5549 + $0x30] sm:$0xf]
        %v5563 = vld [vmem:[%s5549 + $0x34] sm:$0xf]
        %v5564 = vld [vmem:[%s5549 + $0x38] sm:$0xf]
        %v5565 = vld [vmem:[%s5549 + $0x3c] sm:$0xf]
        %v5566 = vunpack.c.l.b16 %v5370
        %v5567 = vunpack.c.l.b16 %v5380
        %v5568 = vunpack.c.l.b16 %v5394
        %v5569 = vunpack.c.l.b16 %v5404
        %v5570 = vunpack.c.l.b16 %v5418
        %v5571 = vunpack.c.l.b16 %v5428
        %v5572 = vunpack.c.l.b16 %v5442
        %v5573 = vunpack.c.l.b16 %v5452
        %v5574 = vunpack.c.l.b16 %v5466
        %v5575 = vunpack.c.l.b16 %v5476
        %v5576 = vunpack.c.l.b16 %v5490
        %v5577 = vunpack.c.l.b16 %v5500
        %v5578 = vunpack.c.l.b16 %v5514
        %v5579 = vunpack.c.l.b16 %v5524
        %v5580 = vunpack.c.l.b16 %v5538
        %v5581 = vunpack.c.l.b16 %v5548
        %v5582 = vpack.c.b16 %v5567, %v5566
        %v5583 = vpack.c.b16 %v5569, %v5568
        %v5584 = vpack.c.b16 %v5571, %v5570
        %v5585 = vpack.c.b16 %v5573, %v5572
        %v5586 = vpack.c.b16 %v5575, %v5574
        %v5587 = vpack.c.b16 %v5577, %v5576
        %v5588 = vpack.c.b16 %v5579, %v5578
        %v5589 = vpack.c.b16 %v5581, %v5580
        %v5614 = vunpack.c.l.b16 %v5550
        %v5615 = vunpack.c.l.b16 %v5551
        %v5616 = vunpack.c.l.b16 %v5552
        %v5617 = vunpack.c.l.b16 %v5553
        %v5618 = vunpack.c.l.b16 %v5554
        %v5619 = vunpack.c.l.b16 %v5555
        %v5620 = vunpack.c.l.b16 %v5556
        %v5621 = vunpack.c.l.b16 %v5557
        %v5622 = vunpack.c.l.b16 %v5558
        %v5623 = vunpack.c.l.b16 %v5559
        %v5624 = vunpack.c.l.b16 %v5560
        %v5625 = vunpack.c.l.b16 %v5561
        %v5626 = vunpack.c.l.b16 %v5562
        %v5627 = vunpack.c.l.b16 %v5563
        %v5628 = vunpack.c.l.b16 %v5564
        %v5629 = vunpack.c.l.b16 %v5565
        %v5630 = vpack.c.b16 %v5615, %v5614
        %v5631 = vpack.c.b16 %v5617, %v5616
        %v5632 = vpack.c.b16 %v5619, %v5618
        %v5633 = vpack.c.b16 %v5621, %v5620
        %v5634 = vpack.c.b16 %v5623, %v5622
        %v5635 = vpack.c.b16 %v5625, %v5624
        %v5636 = vpack.c.b16 %v5627, %v5626
        %v5637 = vpack.c.b16 %v5629, %v5628
        %5646 = vmatprep.subr.bf16.mxu0 0
        %5647 = vmatpush1.bf16.msra.mxu0 %v5637
        %5648 = vmatprep.subr.bf16.mxu0 0
        %5649 = vmatpush1.bf16.msra.mxu0 %v5636
        %5650 = vmatprep.subr.bf16.mxu0 0
        %5651 = vmatpush1.bf16.msra.mxu0 %v5635
        %5652 = vmatprep.subr.bf16.mxu0 0
        %5653 = vmatpush1.bf16.msra.mxu0 %v5634
        %5654 = vmatprep.subr.bf16.mxu0 0
        %5655 = vmatpush1.bf16.msra.mxu0 %v5633
        %5656 = vmatprep.subr.bf16.mxu0 0
        %5657 = vmatpush1.bf16.msra.mxu0 %v5632
        %5658 = vmatprep.subr.bf16.mxu0 0
        %5659 = vmatpush1.bf16.msra.mxu0 %v5631
        %5660 = vmatprep.subr.bf16.mxu0 0
        %5661 = vmatpush1.bf16.msra.mxu0 %v5630
        %5662 = vmatprep.subr.bf16.mxu0 0
        %5663 = vmatpush2.bf16.msra.mxu0 0
        %5664 = vmatprep.subr.bf16.mxu0 0
        %5665 = vmatpush2.bf16.msra.mxu0 0
        %5666 = vmatprep.subr.bf16.mxu0 0
        %5667 = vmatpush2.bf16.msra.mxu0 0
        %5668 = vmatprep.subr.bf16.mxu0 0
        %5669 = vmatpush2.bf16.msra.mxu0 0
        %5670 = vmatprep.subr.bf16.mxu0 0
        %5671 = vmatpush2.bf16.msra.mxu0 0
        %5672 = vmatprep.subr.bf16.mxu0 0
        %5673 = vmatpush2.bf16.msra.mxu0 0
        %5674 = vmatprep.subr.bf16.mxu0 0
        %5675 = vmatpush2.bf16.msra.mxu0 0
        %5676 = vmatprep.subr.bf16.mxu0 0
        %5677 = vmatpush2.bf16.msra.mxu0 0
        %5678 = vmatprep.mubr.bf16.mxu0 0
        %5679 = vmatmul.mubr.bf16.gmra.mxu0 %v5582
        %v5680 = vpop.f32.mrf.mxu0
        %v5681 = vadd.f32 0.0, %v5680
        %v5682 = vpop.f32.mrf.mxu0
        %v5683 = vpop.f32.mrf.mxu0
        %v5684 = vadd.f32 0.0, %v5683
        %v5685 = vpop.f32.mrf.mxu0
        %5686 = vmatprep.mubr.bf16.mxu0 0
        %5687 = vmatmul.mubr.bf16.gmra.mxu0 %v5583
        %v5688 = vpop.f32.mrf.mxu0
        %v5689 = vadd.f32 0.0, %v5688
        %v5690 = vpop.f32.mrf.mxu0
        %v5691 = vpop.f32.mrf.mxu0
        %v5692 = vadd.f32 0.0, %v5691
        %v5693 = vpop.f32.mrf.mxu0
        %5694 = vmatprep.mubr.bf16.mxu0 0
        %5695 = vmatmul.mubr.bf16.gmra.mxu0 %v5584
        %v5696 = vpop.f32.mrf.mxu0
        %v5697 = vadd.f32 0.0, %v5696
        %v5698 = vpop.f32.mrf.mxu0
        %v5699 = vpop.f32.mrf.mxu0
        %v5700 = vadd.f32 0.0, %v5699
        %v5701 = vpop.f32.mrf.mxu0
        %5702 = vmatprep.mubr.bf16.mxu0 0
        %5703 = vmatmul.mubr.bf16.gmra.mxu0 %v5585
        %v5704 = vpop.f32.mrf.mxu0
        %v5705 = vadd.f32 0.0, %v5704
        %v5706 = vpop.f32.mrf.mxu0
        %v5707 = vpop.f32.mrf.mxu0
        %v5708 = vadd.f32 0.0, %v5707
        %v5709 = vpop.f32.mrf.mxu0
        %5710 = vmatprep.mubr.bf16.mxu0 0
        %5711 = vmatmul.mubr.bf16.gmra.mxu0 %v5586
        %v5712 = vpop.f32.mrf.mxu0
        %v5713 = vadd.f32 0.0, %v5712
        %v5714 = vpop.f32.mrf.mxu0
        %v5715 = vpop.f32.mrf.mxu0
        %v5716 = vadd.f32 0.0, %v5715
        %v5717 = vpop.f32.mrf.mxu0
        %5718 = vmatprep.mubr.bf16.mxu0 0
        %5719 = vmatmul.mubr.bf16.gmra.mxu0 %v5587
        %v5720 = vpop.f32.mrf.mxu0
        %v5721 = vadd.f32 0.0, %v5720
        %v5722 = vpop.f32.mrf.mxu0
        %v5723 = vpop.f32.mrf.mxu0
        %v5724 = vadd.f32 0.0, %v5723
        %v5725 = vpop.f32.mrf.mxu0
        %5726 = vmatprep.mubr.bf16.mxu0 0
        %5727 = vmatmul.mubr.bf16.gmra.mxu0 %v5588
        %v5728 = vpop.f32.mrf.mxu0
        %v5729 = vadd.f32 0.0, %v5728
        %v5730 = vpop.f32.mrf.mxu0
        %v5731 = vpop.f32.mrf.mxu0
        %v5732 = vadd.f32 0.0, %v5731
        %v5733 = vpop.f32.mrf.mxu0
        %5734 = vmatprep.mubr.bf16.mxu0 0
        %5735 = vmatmul.mubr.bf16.gmra.mxu0 %v5589
        %v5736 = vpop.f32.mrf.mxu0
        %v5737 = vadd.f32 0.0, %v5736
        %v5738 = vpop.f32.mrf.mxu0
        %v5739 = vpop.f32.mrf.mxu0
        %v5740 = vadd.f32 0.0, %v5739
        %v5741 = vpop.f32.mrf.mxu0
        %5742 = vdwg.mxu0
        %v5743 = vadd.f32 %v5317, %v5681
        %v5744 = vadd.f32 %v5318, %v5684
        %v5745 = vadd.f32 %v5319, %v5689
        %v5746 = vadd.f32 %v5320, %v5692
        %v5747 = vadd.f32 %v5321, %v5697
        %v5748 = vadd.f32 %v5322, %v5700
        %v5749 = vadd.f32 %v5323, %v5705
        %v5750 = vadd.f32 %v5324, %v5708
        %v5751 = vadd.f32 %v5325, %v5713
        %v5752 = vadd.f32 %v5326, %v5716
        %v5753 = vadd.f32 %v5327, %v5721
        %v5754 = vadd.f32 %v5328, %v5724
        %v5755 = vadd.f32 %v5329, %v5729
        %v5756 = vadd.f32 %v5330, %v5732
        %v5757 = vadd.f32 %v5331, %v5737
        %v5758 = vadd.f32 %v5332, %v5740
        %v5759 = vld [vmem:[%s5090] sm:$0xe]
        %v5760 = vld [vmem:[%s5090 + $0xc] sm:$0xe]
        %v5761 = vld [vmem:[%s5090 + $0x18] sm:$0xe]
        %v5762 = vld [vmem:[%s5090 + $0x24] sm:$0xe]
        %v5763 = vld [vmem:[%s5090 + $0x30] sm:$0xe]
        %v5764 = vld [vmem:[%s5090 + $0x3c] sm:$0xe]
        %v5765 = vld [vmem:[%s5090 + $0x48] sm:$0xe]
        %v5766 = vld [vmem:[%s5090 + $0x54] sm:$0xe]
        %v5791 = vrot.slane %v5759, 5
        %v5792 = vrot.slane %v5791, 4
        %v5793 = vrot.slane %v5334, 5
        %v5794 = vsel %vm1108, %v5792, %v5793
        %v5795 = vrot.slane %v5793, 4
        %v5796 = vrot.slane %v5335, 5
        %v5797 = vsel %vm1108, %v5795, %v5796
        %v5798 = vrot.slane %v5760, 5
        %v5799 = vrot.slane %v5798, 4
        %v5800 = vrot.slane %v5337, 5
        %v5801 = vsel %vm1108, %v5799, %v5800
        %v5802 = vrot.slane %v5800, 4
        %v5803 = vrot.slane %v5338, 5
        %v5804 = vsel %vm1108, %v5802, %v5803
        %v5805 = vrot.slane %v5761, 5
        %v5806 = vrot.slane %v5805, 4
        %v5807 = vrot.slane %v5340, 5
        %v5808 = vsel %vm1108, %v5806, %v5807
        %v5809 = vrot.slane %v5807, 4
        %v5810 = vrot.slane %v5341, 5
        %v5811 = vsel %vm1108, %v5809, %v5810
        %v5812 = vrot.slane %v5762, 5
        %v5813 = vrot.slane %v5812, 4
        %v5814 = vrot.slane %v5343, 5
        %v5815 = vsel %vm1108, %v5813, %v5814
        %v5816 = vrot.slane %v5814, 4
        %v5817 = vrot.slane %v5344, 5
        %v5818 = vsel %vm1108, %v5816, %v5817
        %v5819 = vrot.slane %v5763, 5
        %v5820 = vrot.slane %v5819, 4
        %v5821 = vrot.slane %v5346, 5
        %v5822 = vsel %vm1108, %v5820, %v5821
        %v5823 = vrot.slane %v5821, 4
        %v5824 = vrot.slane %v5347, 5
        %v5825 = vsel %vm1108, %v5823, %v5824
        %v5826 = vrot.slane %v5764, 5
        %v5827 = vrot.slane %v5826, 4
        %v5828 = vrot.slane %v5349, 5
        %v5829 = vsel %vm1108, %v5827, %v5828
        %v5830 = vrot.slane %v5828, 4
        %v5831 = vrot.slane %v5350, 5
        %v5832 = vsel %vm1108, %v5830, %v5831
        %v5833 = vrot.slane %v5765, 5
        %v5834 = vrot.slane %v5833, 4
        %v5835 = vrot.slane %v5352, 5
        %v5836 = vsel %vm1108, %v5834, %v5835
        %v5837 = vrot.slane %v5835, 4
        %v5838 = vrot.slane %v5353, 5
        %v5839 = vsel %vm1108, %v5837, %v5838
        %v5840 = vrot.slane %v5766, 5
        %v5841 = vrot.slane %v5840, 4
        %v5842 = vrot.slane %v5355, 5
        %v5843 = vsel %vm1108, %v5841, %v5842
        %v5844 = vrot.slane %v5842, 4
        %v5845 = vrot.slane %v5356, 5
        %v5846 = vsel %vm1108, %v5844, %v5845
        %s5847 = scalar_lea.vmem [#allocation8], 320
        %v5848 = vld [vmem:[%s5847] sm:$0xf]
        %v5849 = vld [vmem:[%s5847 + $0x4] sm:$0xf]
        %v5850 = vld [vmem:[%s5847 + $0x8] sm:$0xf]
        %v5851 = vld [vmem:[%s5847 + $0xc] sm:$0xf]
        %v5852 = vld [vmem:[%s5847 + $0x10] sm:$0xf]
        %v5853 = vld [vmem:[%s5847 + $0x14] sm:$0xf]
        %v5854 = vld [vmem:[%s5847 + $0x18] sm:$0xf]
        %v5855 = vld [vmem:[%s5847 + $0x1c] sm:$0xf]
        %v5856 = vld [vmem:[%s5847 + $0x20] sm:$0xf]
        %v5857 = vld [vmem:[%s5847 + $0x24] sm:$0xf]
        %v5858 = vld [vmem:[%s5847 + $0x28] sm:$0xf]
        %v5859 = vld [vmem:[%s5847 + $0x2c] sm:$0xf]
        %v5860 = vld [vmem:[%s5847 + $0x30] sm:$0xf]
        %v5861 = vld [vmem:[%s5847 + $0x34] sm:$0xf]
        %v5862 = vld [vmem:[%s5847 + $0x38] sm:$0xf]
        %v5863 = vld [vmem:[%s5847 + $0x3c] sm:$0xf]
        %v5864 = vunpack.c.l.b16 %v5794
        %v5865 = vunpack.c.l.b16 %v5797
        %v5866 = vunpack.c.l.b16 %v5801
        %v5867 = vunpack.c.l.b16 %v5804
        %v5868 = vunpack.c.l.b16 %v5808
        %v5869 = vunpack.c.l.b16 %v5811
        %v5870 = vunpack.c.l.b16 %v5815
        %v5871 = vunpack.c.l.b16 %v5818
        %v5872 = vunpack.c.l.b16 %v5822
        %v5873 = vunpack.c.l.b16 %v5825
        %v5874 = vunpack.c.l.b16 %v5829
        %v5875 = vunpack.c.l.b16 %v5832
        %v5876 = vunpack.c.l.b16 %v5836
        %v5877 = vunpack.c.l.b16 %v5839
        %v5878 = vunpack.c.l.b16 %v5843
        %v5879 = vunpack.c.l.b16 %v5846
        %v5880 = vpack.c.b16 %v5865, %v5864
        %v5881 = vpack.c.b16 %v5867, %v5866
        %v5882 = vpack.c.b16 %v5869, %v5868
        %v5883 = vpack.c.b16 %v5871, %v5870
        %v5884 = vpack.c.b16 %v5873, %v5872
        %v5885 = vpack.c.b16 %v5875, %v5874
        %v5886 = vpack.c.b16 %v5877, %v5876
        %v5887 = vpack.c.b16 %v5879, %v5878
        %v5912 = vunpack.c.l.b16 %v5848
        %v5913 = vunpack.c.l.b16 %v5849
        %v5914 = vunpack.c.l.b16 %v5850
        %v5915 = vunpack.c.l.b16 %v5851
        %v5916 = vunpack.c.l.b16 %v5852
        %v5917 = vunpack.c.l.b16 %v5853
        %v5918 = vunpack.c.l.b16 %v5854
        %v5919 = vunpack.c.l.b16 %v5855
        %v5920 = vunpack.c.l.b16 %v5856
        %v5921 = vunpack.c.l.b16 %v5857
        %v5922 = vunpack.c.l.b16 %v5858
        %v5923 = vunpack.c.l.b16 %v5859
        %v5924 = vunpack.c.l.b16 %v5860
        %v5925 = vunpack.c.l.b16 %v5861
        %v5926 = vunpack.c.l.b16 %v5862
        %v5927 = vunpack.c.l.b16 %v5863
        %v5928 = vpack.c.b16 %v5913, %v5912
        %v5929 = vpack.c.b16 %v5915, %v5914
        %v5930 = vpack.c.b16 %v5917, %v5916
        %v5931 = vpack.c.b16 %v5919, %v5918
        %v5932 = vpack.c.b16 %v5921, %v5920
        %v5933 = vpack.c.b16 %v5923, %v5922
        %v5934 = vpack.c.b16 %v5925, %v5924
        %v5935 = vpack.c.b16 %v5927, %v5926
        %5944 = vmatprep.subr.bf16.mxu0 0
        %5945 = vmatpush1.bf16.msra.mxu0 %v5935
        %5946 = vmatprep.subr.bf16.mxu0 0
        %5947 = vmatpush1.bf16.msra.mxu0 %v5934
        %5948 = vmatprep.subr.bf16.mxu0 0
        %5949 = vmatpush1.bf16.msra.mxu0 %v5933
        %5950 = vmatprep.subr.bf16.mxu0 0
        %5951 = vmatpush1.bf16.msra.mxu0 %v5932
        %5952 = vmatprep.subr.bf16.mxu0 0
        %5953 = vmatpush1.bf16.msra.mxu0 %v5931
        %5954 = vmatprep.subr.bf16.mxu0 0
        %5955 = vmatpush1.bf16.msra.mxu0 %v5930
        %5956 = vmatprep.subr.bf16.mxu0 0
        %5957 = vmatpush1.bf16.msra.mxu0 %v5929
        %5958 = vmatprep.subr.bf16.mxu0 0
        %5959 = vmatpush1.bf16.msra.mxu0 %v5928
        %5960 = vmatprep.subr.bf16.mxu0 0
        %5961 = vmatpush2.bf16.msra.mxu0 0
        %5962 = vmatprep.subr.bf16.mxu0 0
        %5963 = vmatpush2.bf16.msra.mxu0 0
        %5964 = vmatprep.subr.bf16.mxu0 0
        %5965 = vmatpush2.bf16.msra.mxu0 0
        %5966 = vmatprep.subr.bf16.mxu0 0
        %5967 = vmatpush2.bf16.msra.mxu0 0
        %5968 = vmatprep.subr.bf16.mxu0 0
        %5969 = vmatpush2.bf16.msra.mxu0 0
        %5970 = vmatprep.subr.bf16.mxu0 0
        %5971 = vmatpush2.bf16.msra.mxu0 0
        %5972 = vmatprep.subr.bf16.mxu0 0
        %5973 = vmatpush2.bf16.msra.mxu0 0
        %5974 = vmatprep.subr.bf16.mxu0 0
        %5975 = vmatpush2.bf16.msra.mxu0 0
        %5976 = vmatprep.mubr.bf16.mxu0 0
        %5977 = vmatmul.mubr.bf16.gmra.mxu0 %v5880
        %v5978 = vpop.f32.mrf.mxu0
        %v5979 = vadd.f32 0.0, %v5978
        %v5980 = vpop.f32.mrf.mxu0
        %v5981 = vpop.f32.mrf.mxu0
        %v5982 = vadd.f32 0.0, %v5981
        %v5983 = vpop.f32.mrf.mxu0
        %5984 = vmatprep.mubr.bf16.mxu0 0
        %5985 = vmatmul.mubr.bf16.gmra.mxu0 %v5881
        %v5986 = vpop.f32.mrf.mxu0
        %v5987 = vadd.f32 0.0, %v5986
        %v5988 = vpop.f32.mrf.mxu0
        %v5989 = vpop.f32.mrf.mxu0
        %v5990 = vadd.f32 0.0, %v5989
        %v5991 = vpop.f32.mrf.mxu0
        %5992 = vmatprep.mubr.bf16.mxu0 0
        %5993 = vmatmul.mubr.bf16.gmra.mxu0 %v5882
        %v5994 = vpop.f32.mrf.mxu0
        %v5995 = vadd.f32 0.0, %v5994
        %v5996 = vpop.f32.mrf.mxu0
        %v5997 = vpop.f32.mrf.mxu0
        %v5998 = vadd.f32 0.0, %v5997
        %v5999 = vpop.f32.mrf.mxu0
        %6000 = vmatprep.mubr.bf16.mxu0 0
        %6001 = vmatmul.mubr.bf16.gmra.mxu0 %v5883
        %v6002 = vpop.f32.mrf.mxu0
        %v6003 = vadd.f32 0.0, %v6002
        %v6004 = vpop.f32.mrf.mxu0
        %v6005 = vpop.f32.mrf.mxu0
        %v6006 = vadd.f32 0.0, %v6005
        %v6007 = vpop.f32.mrf.mxu0
        %6008 = vmatprep.mubr.bf16.mxu0 0
        %6009 = vmatmul.mubr.bf16.gmra.mxu0 %v5884
        %v6010 = vpop.f32.mrf.mxu0
        %v6011 = vadd.f32 0.0, %v6010
        %v6012 = vpop.f32.mrf.mxu0
        %v6013 = vpop.f32.mrf.mxu0
        %v6014 = vadd.f32 0.0, %v6013
        %v6015 = vpop.f32.mrf.mxu0
        %6016 = vmatprep.mubr.bf16.mxu0 0
        %6017 = vmatmul.mubr.bf16.gmra.mxu0 %v5885
        %v6018 = vpop.f32.mrf.mxu0
        %v6019 = vadd.f32 0.0, %v6018
        %v6020 = vpop.f32.mrf.mxu0
        %v6021 = vpop.f32.mrf.mxu0
        %v6022 = vadd.f32 0.0, %v6021
        %v6023 = vpop.f32.mrf.mxu0
        %6024 = vmatprep.mubr.bf16.mxu0 0
        %6025 = vmatmul.mubr.bf16.gmra.mxu0 %v5886
        %v6026 = vpop.f32.mrf.mxu0
        %v6027 = vadd.f32 0.0, %v6026
        %v6028 = vpop.f32.mrf.mxu0
        %v6029 = vpop.f32.mrf.mxu0
        %v6030 = vadd.f32 0.0, %v6029
        %v6031 = vpop.f32.mrf.mxu0
        %6032 = vmatprep.mubr.bf16.mxu0 0
        %6033 = vmatmul.mubr.bf16.gmra.mxu0 %v5887
        %v6034 = vpop.f32.mrf.mxu0
        %v6035 = vadd.f32 0.0, %v6034
        %v6036 = vpop.f32.mrf.mxu0
        %v6037 = vpop.f32.mrf.mxu0
        %v6038 = vadd.f32 0.0, %v6037
        %v6039 = vpop.f32.mrf.mxu0
        %6040 = vdwg.mxu0
        %v6041 = vadd.f32 %v5743, %v5979
        %v6042 = vadd.f32 %v5744, %v5982
        %v6043 = vadd.f32 %v5745, %v5987
        %v6044 = vadd.f32 %v5746, %v5990
        %v6045 = vadd.f32 %v5747, %v5995
        %v6046 = vadd.f32 %v5748, %v5998
        %v6047 = vadd.f32 %v5749, %v6003
        %v6048 = vadd.f32 %v5750, %v6006
        %v6049 = vadd.f32 %v5751, %v6011
        %v6050 = vadd.f32 %v5752, %v6014
        %v6051 = vadd.f32 %v5753, %v6019
        %v6052 = vadd.f32 %v5754, %v6022
        %v6053 = vadd.f32 %v5755, %v6027
        %v6054 = vadd.f32 %v5756, %v6030
        %v6055 = vadd.f32 %v5757, %v6035
        %v6056 = vadd.f32 %v5758, %v6038
        %s6057 = scalar_lea.vmem [#allocation2], 24
        %v6058 = vld [vmem:[%s6057] sm:$0xf]
        %v6059 = vld [vmem:[%s6057 + $0x4] sm:$0xf]
        %v6060 = vld [vmem:[%s6057 + $0xc] sm:$0xf]
        %v6061 = vld [vmem:[%s6057 + $0x10] sm:$0xf]
        %v6062 = vld [vmem:[%s6057 + $0x18] sm:$0xf]
        %v6063 = vld [vmem:[%s6057 + $0x1c] sm:$0xf]
        %v6064 = vld [vmem:[%s6057 + $0x24] sm:$0xf]
        %v6065 = vld [vmem:[%s6057 + $0x28] sm:$0xf]
        %v6066 = vld [vmem:[%s6057 + $0x30] sm:$0xf]
        %v6067 = vld [vmem:[%s6057 + $0x34] sm:$0xf]
        %v6068 = vld [vmem:[%s6057 + $0x3c] sm:$0xf]
        %v6069 = vld [vmem:[%s6057 + $0x40] sm:$0xf]
        %v6070 = vld [vmem:[%s6057 + $0x48] sm:$0xf]
        %v6071 = vld [vmem:[%s6057 + $0x4c] sm:$0xf]
        %v6072 = vld [vmem:[%s6057 + $0x54] sm:$0xf]
        %v6073 = vld [vmem:[%s6057 + $0x58] sm:$0xf]
        %s6074 = scalar_lea.vmem [#allocation8], 384
        %v6075 = vld [vmem:[%s6074] sm:$0xf]
        %v6076 = vld [vmem:[%s6074 + $0x4] sm:$0xf]
        %v6077 = vld [vmem:[%s6074 + $0x8] sm:$0xf]
        %v6078 = vld [vmem:[%s6074 + $0xc] sm:$0xf]
        %v6079 = vld [vmem:[%s6074 + $0x10] sm:$0xf]
        %v6080 = vld [vmem:[%s6074 + $0x14] sm:$0xf]
        %v6081 = vld [vmem:[%s6074 + $0x18] sm:$0xf]
        %v6082 = vld [vmem:[%s6074 + $0x1c] sm:$0xf]
        %v6083 = vld [vmem:[%s6074 + $0x20] sm:$0xf]
        %v6084 = vld [vmem:[%s6074 + $0x24] sm:$0xf]
        %v6085 = vld [vmem:[%s6074 + $0x28] sm:$0xf]
        %v6086 = vld [vmem:[%s6074 + $0x2c] sm:$0xf]
        %v6087 = vld [vmem:[%s6074 + $0x30] sm:$0xf]
        %v6088 = vld [vmem:[%s6074 + $0x34] sm:$0xf]
        %v6089 = vld [vmem:[%s6074 + $0x38] sm:$0xf]
        %v6090 = vld [vmem:[%s6074 + $0x3c] sm:$0xf]
        %v6107 = vunpack.c.l.b16 %v6058
        %v6108 = vunpack.c.l.b16 %v6059
        %v6109 = vunpack.c.l.b16 %v6060
        %v6110 = vunpack.c.l.b16 %v6061
        %v6111 = vunpack.c.l.b16 %v6062
        %v6112 = vunpack.c.l.b16 %v6063
        %v6113 = vunpack.c.l.b16 %v6064
        %v6114 = vunpack.c.l.b16 %v6065
        %v6115 = vunpack.c.l.b16 %v6066
        %v6116 = vunpack.c.l.b16 %v6067
        %v6117 = vunpack.c.l.b16 %v6068
        %v6118 = vunpack.c.l.b16 %v6069
        %v6119 = vunpack.c.l.b16 %v6070
        %v6120 = vunpack.c.l.b16 %v6071
        %v6121 = vunpack.c.l.b16 %v6072
        %v6122 = vunpack.c.l.b16 %v6073
        %v6123 = vpack.c.b16 %v6108, %v6107
        %v6124 = vpack.c.b16 %v6110, %v6109
        %v6125 = vpack.c.b16 %v6112, %v6111
        %v6126 = vpack.c.b16 %v6114, %v6113
        %v6127 = vpack.c.b16 %v6116, %v6115
        %v6128 = vpack.c.b16 %v6118, %v6117
        %v6129 = vpack.c.b16 %v6120, %v6119
        %v6130 = vpack.c.b16 %v6122, %v6121
        %v6155 = vunpack.c.l.b16 %v6075
        %v6156 = vunpack.c.l.b16 %v6076
        %v6157 = vunpack.c.l.b16 %v6077
        %v6158 = vunpack.c.l.b16 %v6078
        %v6159 = vunpack.c.l.b16 %v6079
        %v6160 = vunpack.c.l.b16 %v6080
        %v6161 = vunpack.c.l.b16 %v6081
        %v6162 = vunpack.c.l.b16 %v6082
        %v6163 = vunpack.c.l.b16 %v6083
        %v6164 = vunpack.c.l.b16 %v6084
        %v6165 = vunpack.c.l.b16 %v6085
        %v6166 = vunpack.c.l.b16 %v6086
        %v6167 = vunpack.c.l.b16 %v6087
        %v6168 = vunpack.c.l.b16 %v6088
        %v6169 = vunpack.c.l.b16 %v6089
        %v6170 = vunpack.c.l.b16 %v6090
        %v6171 = vpack.c.b16 %v6156, %v6155
        %v6172 = vpack.c.b16 %v6158, %v6157
        %v6173 = vpack.c.b16 %v6160, %v6159
        %v6174 = vpack.c.b16 %v6162, %v6161
        %v6175 = vpack.c.b16 %v6164, %v6163
        %v6176 = vpack.c.b16 %v6166, %v6165
        %v6177 = vpack.c.b16 %v6168, %v6167
        %v6178 = vpack.c.b16 %v6170, %v6169
        %6187 = vmatprep.subr.bf16.mxu0 0
        %6188 = vmatpush1.bf16.msra.mxu0 %v6178
        %6189 = vmatprep.subr.bf16.mxu0 0
        %6190 = vmatpush1.bf16.msra.mxu0 %v6177
        %6191 = vmatprep.subr.bf16.mxu0 0
        %6192 = vmatpush1.bf16.msra.mxu0 %v6176
        %6193 = vmatprep.subr.bf16.mxu0 0
        %6194 = vmatpush1.bf16.msra.mxu0 %v6175
        %6195 = vmatprep.subr.bf16.mxu0 0
        %6196 = vmatpush1.bf16.msra.mxu0 %v6174
        %6197 = vmatprep.subr.bf16.mxu0 0
        %6198 = vmatpush1.bf16.msra.mxu0 %v6173
        %6199 = vmatprep.subr.bf16.mxu0 0
        %6200 = vmatpush1.bf16.msra.mxu0 %v6172
        %6201 = vmatprep.subr.bf16.mxu0 0
        %6202 = vmatpush1.bf16.msra.mxu0 %v6171
        %6203 = vmatprep.subr.bf16.mxu0 0
        %6204 = vmatpush2.bf16.msra.mxu0 0
        %6205 = vmatprep.subr.bf16.mxu0 0
        %6206 = vmatpush2.bf16.msra.mxu0 0
        %6207 = vmatprep.subr.bf16.mxu0 0
        %6208 = vmatpush2.bf16.msra.mxu0 0
        %6209 = vmatprep.subr.bf16.mxu0 0
        %6210 = vmatpush2.bf16.msra.mxu0 0
        %6211 = vmatprep.subr.bf16.mxu0 0
        %6212 = vmatpush2.bf16.msra.mxu0 0
        %6213 = vmatprep.subr.bf16.mxu0 0
        %6214 = vmatpush2.bf16.msra.mxu0 0
        %6215 = vmatprep.subr.bf16.mxu0 0
        %6216 = vmatpush2.bf16.msra.mxu0 0
        %6217 = vmatprep.subr.bf16.mxu0 0
        %6218 = vmatpush2.bf16.msra.mxu0 0
        %6219 = vmatprep.mubr.bf16.mxu0 0
        %6220 = vmatmul.mubr.bf16.gmra.mxu0 %v6123
        %v6221 = vpop.f32.mrf.mxu0
        %v6222 = vadd.f32 0.0, %v6221
        %v6223 = vpop.f32.mrf.mxu0
        %v6224 = vpop.f32.mrf.mxu0
        %v6225 = vadd.f32 0.0, %v6224
        %v6226 = vpop.f32.mrf.mxu0
        %6227 = vmatprep.mubr.bf16.mxu0 0
        %6228 = vmatmul.mubr.bf16.gmra.mxu0 %v6124
        %v6229 = vpop.f32.mrf.mxu0
        %v6230 = vadd.f32 0.0, %v6229
        %v6231 = vpop.f32.mrf.mxu0
        %v6232 = vpop.f32.mrf.mxu0
        %v6233 = vadd.f32 0.0, %v6232
        %v6234 = vpop.f32.mrf.mxu0
        %6235 = vmatprep.mubr.bf16.mxu0 0
        %6236 = vmatmul.mubr.bf16.gmra.mxu0 %v6125
        %v6237 = vpop.f32.mrf.mxu0
        %v6238 = vadd.f32 0.0, %v6237
        %v6239 = vpop.f32.mrf.mxu0
        %v6240 = vpop.f32.mrf.mxu0
        %v6241 = vadd.f32 0.0, %v6240
        %v6242 = vpop.f32.mrf.mxu0
        %6243 = vmatprep.mubr.bf16.mxu0 0
        %6244 = vmatmul.mubr.bf16.gmra.mxu0 %v6126
        %v6245 = vpop.f32.mrf.mxu0
        %v6246 = vadd.f32 0.0, %v6245
        %v6247 = vpop.f32.mrf.mxu0
        %v6248 = vpop.f32.mrf.mxu0
        %v6249 = vadd.f32 0.0, %v6248
        %v6250 = vpop.f32.mrf.mxu0
        %6251 = vmatprep.mubr.bf16.mxu0 0
        %6252 = vmatmul.mubr.bf16.gmra.mxu0 %v6127
        %v6253 = vpop.f32.mrf.mxu0
        %v6254 = vadd.f32 0.0, %v6253
        %v6255 = vpop.f32.mrf.mxu0
        %v6256 = vpop.f32.mrf.mxu0
        %v6257 = vadd.f32 0.0, %v6256
        %v6258 = vpop.f32.mrf.mxu0
        %6259 = vmatprep.mubr.bf16.mxu0 0
        %6260 = vmatmul.mubr.bf16.gmra.mxu0 %v6128
        %v6261 = vpop.f32.mrf.mxu0
        %v6262 = vadd.f32 0.0, %v6261
        %v6263 = vpop.f32.mrf.mxu0
        %v6264 = vpop.f32.mrf.mxu0
        %v6265 = vadd.f32 0.0, %v6264
        %v6266 = vpop.f32.mrf.mxu0
        %6267 = vmatprep.mubr.bf16.mxu0 0
        %6268 = vmatmul.mubr.bf16.gmra.mxu0 %v6129
        %v6269 = vpop.f32.mrf.mxu0
        %v6270 = vadd.f32 0.0, %v6269
        %v6271 = vpop.f32.mrf.mxu0
        %v6272 = vpop.f32.mrf.mxu0
        %v6273 = vadd.f32 0.0, %v6272
        %v6274 = vpop.f32.mrf.mxu0
        %6275 = vmatprep.mubr.bf16.mxu0 0
        %6276 = vmatmul.mubr.bf16.gmra.mxu0 %v6130
        %v6277 = vpop.f32.mrf.mxu0
        %v6278 = vadd.f32 0.0, %v6277
        %v6279 = vpop.f32.mrf.mxu0
        %v6280 = vpop.f32.mrf.mxu0
        %v6281 = vadd.f32 0.0, %v6280
        %v6282 = vpop.f32.mrf.mxu0
        %6283 = vdwg.mxu0
        %v6284 = vadd.f32 %v6041, %v6222
        %v6285 = vadd.f32 %v6042, %v6225
        %v6286 = vadd.f32 %v6043, %v6230
        %v6287 = vadd.f32 %v6044, %v6233
        %v6288 = vadd.f32 %v6045, %v6238
        %v6289 = vadd.f32 %v6046, %v6241
        %v6290 = vadd.f32 %v6047, %v6246
        %v6291 = vadd.f32 %v6048, %v6249
        %v6292 = vadd.f32 %v6049, %v6254
        %v6293 = vadd.f32 %v6050, %v6257
        %v6294 = vadd.f32 %v6051, %v6262
        %v6295 = vadd.f32 %v6052, %v6265
        %v6296 = vadd.f32 %v6053, %v6270
        %v6297 = vadd.f32 %v6054, %v6273
        %v6298 = vadd.f32 %v6055, %v6278
        %v6299 = vadd.f32 %v6056, %v6281
        %v6300 = vld [vmem:[%s6057] sm:$0xf]
        %v6301 = vld [vmem:[%s6057 + $0x4] sm:$0xf]
        %v6302 = vld [vmem:[%s6057 + $0x8] sm:$0x1]
        %v6303 = vld [vmem:[%s6057 + $0xc] sm:$0xf]
        %v6304 = vld [vmem:[%s6057 + $0x10] sm:$0xf]
        %v6305 = vld [vmem:[%s6057 + $0x14] sm:$0x1]
        %v6306 = vld [vmem:[%s6057 + $0x18] sm:$0xf]
        %v6307 = vld [vmem:[%s6057 + $0x1c] sm:$0xf]
        %v6308 = vld [vmem:[%s6057 + $0x20] sm:$0x1]
        %v6309 = vld [vmem:[%s6057 + $0x24] sm:$0xf]
        %v6310 = vld [vmem:[%s6057 + $0x28] sm:$0xf]
        %v6311 = vld [vmem:[%s6057 + $0x2c] sm:$0x1]
        %v6312 = vld [vmem:[%s6057 + $0x30] sm:$0xf]
        %v6313 = vld [vmem:[%s6057 + $0x34] sm:$0xf]
        %v6314 = vld [vmem:[%s6057 + $0x38] sm:$0x1]
        %v6315 = vld [vmem:[%s6057 + $0x3c] sm:$0xf]
        %v6316 = vld [vmem:[%s6057 + $0x40] sm:$0xf]
        %v6317 = vld [vmem:[%s6057 + $0x44] sm:$0x1]
        %v6318 = vld [vmem:[%s6057 + $0x48] sm:$0xf]
        %v6319 = vld [vmem:[%s6057 + $0x4c] sm:$0xf]
        %v6320 = vld [vmem:[%s6057 + $0x50] sm:$0x1]
        %v6321 = vld [vmem:[%s6057 + $0x54] sm:$0xf]
        %v6322 = vld [vmem:[%s6057 + $0x58] sm:$0xf]
        %v6323 = vld [vmem:[%s6057 + $0x5c] sm:$0x1]
        %v6325 = vshrl.u32 %v6300, 16
        %v6327 = vrot.slane %v6325, 4
        %v6328 = vshll.u32 %v6300, 16
        %v6330 = vrot.slane %v6328, 5
        %v6331 = vor.u32 %v6327, %v6330
        %v6332 = vrot.slane %v6331, 4
        %v6334 = vshll.u32 %v6301, 16
        %v6336 = vrot.slane %v6334, 5
        %v6337 = vsel %vm396, %v6332, %v6336
        %v6338 = vshrl.u32 %v6301, 16
        %v6340 = vrot.slane %v6338, 4
        %v6341 = vor.u32 %v6340, %v6336
        %v6342 = vrot.slane %v6341, 4
        %v6344 = vshll.u32 %v6302, 16
        %v6346 = vrot.slane %v6344, 5
        %v6347 = vsel %vm396, %v6342, %v6346
        %v6349 = vshrl.u32 %v6303, 16
        %v6351 = vrot.slane %v6349, 4
        %v6352 = vshll.u32 %v6303, 16
        %v6354 = vrot.slane %v6352, 5
        %v6355 = vor.u32 %v6351, %v6354
        %v6356 = vrot.slane %v6355, 4
        %v6358 = vshll.u32 %v6304, 16
        %v6360 = vrot.slane %v6358, 5
        %v6361 = vsel %vm396, %v6356, %v6360
        %v6362 = vshrl.u32 %v6304, 16
        %v6364 = vrot.slane %v6362, 4
        %v6365 = vor.u32 %v6364, %v6360
        %v6366 = vrot.slane %v6365, 4
        %v6368 = vshll.u32 %v6305, 16
        %v6370 = vrot.slane %v6368, 5
        %v6371 = vsel %vm396, %v6366, %v6370
        %v6373 = vshrl.u32 %v6306, 16
        %v6375 = vrot.slane %v6373, 4
        %v6376 = vshll.u32 %v6306, 16
        %v6378 = vrot.slane %v6376, 5
        %v6379 = vor.u32 %v6375, %v6378
        %v6380 = vrot.slane %v6379, 4
        %v6382 = vshll.u32 %v6307, 16
        %v6384 = vrot.slane %v6382, 5
        %v6385 = vsel %vm396, %v6380, %v6384
        %v6386 = vshrl.u32 %v6307, 16
        %v6388 = vrot.slane %v6386, 4
        %v6389 = vor.u32 %v6388, %v6384
        %v6390 = vrot.slane %v6389, 4
        %v6392 = vshll.u32 %v6308, 16
        %v6394 = vrot.slane %v6392, 5
        %v6395 = vsel %vm396, %v6390, %v6394
        %v6397 = vshrl.u32 %v6309, 16
        %v6399 = vrot.slane %v6397, 4
        %v6400 = vshll.u32 %v6309, 16
        %v6402 = vrot.slane %v6400, 5
        %v6403 = vor.u32 %v6399, %v6402
        %v6404 = vrot.slane %v6403, 4
        %v6406 = vshll.u32 %v6310, 16
        %v6408 = vrot.slane %v6406, 5
        %v6409 = vsel %vm396, %v6404, %v6408
        %v6410 = vshrl.u32 %v6310, 16
        %v6412 = vrot.slane %v6410, 4
        %v6413 = vor.u32 %v6412, %v6408
        %v6414 = vrot.slane %v6413, 4
        %v6416 = vshll.u32 %v6311, 16
        %v6418 = vrot.slane %v6416, 5
        %v6419 = vsel %vm396, %v6414, %v6418
        %v6421 = vshrl.u32 %v6312, 16
        %v6423 = vrot.slane %v6421, 4
        %v6424 = vshll.u32 %v6312, 16
        %v6426 = vrot.slane %v6424, 5
        %v6427 = vor.u32 %v6423, %v6426
        %v6428 = vrot.slane %v6427, 4
        %v6430 = vshll.u32 %v6313, 16
        %v6432 = vrot.slane %v6430, 5
        %v6433 = vsel %vm396, %v6428, %v6432
        %v6434 = vshrl.u32 %v6313, 16
        %v6436 = vrot.slane %v6434, 4
        %v6437 = vor.u32 %v6436, %v6432
        %v6438 = vrot.slane %v6437, 4
        %v6440 = vshll.u32 %v6314, 16
        %v6442 = vrot.slane %v6440, 5
        %v6443 = vsel %vm396, %v6438, %v6442
        %v6445 = vshrl.u32 %v6315, 16
        %v6447 = vrot.slane %v6445, 4
        %v6448 = vshll.u32 %v6315, 16
        %v6450 = vrot.slane %v6448, 5
        %v6451 = vor.u32 %v6447, %v6450
        %v6452 = vrot.slane %v6451, 4
        %v6454 = vshll.u32 %v6316, 16
        %v6456 = vrot.slane %v6454, 5
        %v6457 = vsel %vm396, %v6452, %v6456
        %v6458 = vshrl.u32 %v6316, 16
        %v6460 = vrot.slane %v6458, 4
        %v6461 = vor.u32 %v6460, %v6456
        %v6462 = vrot.slane %v6461, 4
        %v6464 = vshll.u32 %v6317, 16
        %v6466 = vrot.slane %v6464, 5
        %v6467 = vsel %vm396, %v6462, %v6466
        %v6469 = vshrl.u32 %v6318, 16
        %v6471 = vrot.slane %v6469, 4
        %v6472 = vshll.u32 %v6318, 16
        %v6474 = vrot.slane %v6472, 5
        %v6475 = vor.u32 %v6471, %v6474
        %v6476 = vrot.slane %v6475, 4
        %v6478 = vshll.u32 %v6319, 16
        %v6480 = vrot.slane %v6478, 5
        %v6481 = vsel %vm396, %v6476, %v6480
        %v6482 = vshrl.u32 %v6319, 16
        %v6484 = vrot.slane %v6482, 4
        %v6485 = vor.u32 %v6484, %v6480
        %v6486 = vrot.slane %v6485, 4
        %v6488 = vshll.u32 %v6320, 16
        %v6490 = vrot.slane %v6488, 5
        %v6491 = vsel %vm396, %v6486, %v6490
        %v6493 = vshrl.u32 %v6321, 16
        %v6495 = vrot.slane %v6493, 4
        %v6496 = vshll.u32 %v6321, 16
        %v6498 = vrot.slane %v6496, 5
        %v6499 = vor.u32 %v6495, %v6498
        %v6500 = vrot.slane %v6499, 4
        %v6502 = vshll.u32 %v6322, 16
        %v6504 = vrot.slane %v6502, 5
        %v6505 = vsel %vm396, %v6500, %v6504
        %v6506 = vshrl.u32 %v6322, 16
        %v6508 = vrot.slane %v6506, 4
        %v6509 = vor.u32 %v6508, %v6504
        %v6510 = vrot.slane %v6509, 4
        %v6512 = vshll.u32 %v6323, 16
        %v6514 = vrot.slane %v6512, 5
        %v6515 = vsel %vm396, %v6510, %v6514
        %s6516 = scalar_lea.vmem [#allocation8], 448
        %v6517 = vld [vmem:[%s6516] sm:$0xf]
        %v6518 = vld [vmem:[%s6516 + $0x4] sm:$0xf]
        %v6519 = vld [vmem:[%s6516 + $0x8] sm:$0xf]
        %v6520 = vld [vmem:[%s6516 + $0xc] sm:$0xf]
        %v6521 = vld [vmem:[%s6516 + $0x10] sm:$0xf]
        %v6522 = vld [vmem:[%s6516 + $0x14] sm:$0xf]
        %v6523 = vld [vmem:[%s6516 + $0x18] sm:$0xf]
        %v6524 = vld [vmem:[%s6516 + $0x1c] sm:$0xf]
        %v6525 = vld [vmem:[%s6516 + $0x20] sm:$0xf]
        %v6526 = vld [vmem:[%s6516 + $0x24] sm:$0xf]
        %v6527 = vld [vmem:[%s6516 + $0x28] sm:$0xf]
        %v6528 = vld [vmem:[%s6516 + $0x2c] sm:$0xf]
        %v6529 = vld [vmem:[%s6516 + $0x30] sm:$0xf]
        %v6530 = vld [vmem:[%s6516 + $0x34] sm:$0xf]
        %v6531 = vld [vmem:[%s6516 + $0x38] sm:$0xf]
        %v6532 = vld [vmem:[%s6516 + $0x3c] sm:$0xf]
        %v6533 = vunpack.c.l.b16 %v6337
        %v6534 = vunpack.c.l.b16 %v6347
        %v6535 = vunpack.c.l.b16 %v6361
        %v6536 = vunpack.c.l.b16 %v6371
        %v6537 = vunpack.c.l.b16 %v6385
        %v6538 = vunpack.c.l.b16 %v6395
        %v6539 = vunpack.c.l.b16 %v6409
        %v6540 = vunpack.c.l.b16 %v6419
        %v6541 = vunpack.c.l.b16 %v6433
        %v6542 = vunpack.c.l.b16 %v6443
        %v6543 = vunpack.c.l.b16 %v6457
        %v6544 = vunpack.c.l.b16 %v6467
        %v6545 = vunpack.c.l.b16 %v6481
        %v6546 = vunpack.c.l.b16 %v6491
        %v6547 = vunpack.c.l.b16 %v6505
        %v6548 = vunpack.c.l.b16 %v6515
        %v6549 = vpack.c.b16 %v6534, %v6533
        %v6550 = vpack.c.b16 %v6536, %v6535
        %v6551 = vpack.c.b16 %v6538, %v6537
        %v6552 = vpack.c.b16 %v6540, %v6539
        %v6553 = vpack.c.b16 %v6542, %v6541
        %v6554 = vpack.c.b16 %v6544, %v6543
        %v6555 = vpack.c.b16 %v6546, %v6545
        %v6556 = vpack.c.b16 %v6548, %v6547
        %v6581 = vunpack.c.l.b16 %v6517
        %v6582 = vunpack.c.l.b16 %v6518
        %v6583 = vunpack.c.l.b16 %v6519
        %v6584 = vunpack.c.l.b16 %v6520
        %v6585 = vunpack.c.l.b16 %v6521
        %v6586 = vunpack.c.l.b16 %v6522
        %v6587 = vunpack.c.l.b16 %v6523
        %v6588 = vunpack.c.l.b16 %v6524
        %v6589 = vunpack.c.l.b16 %v6525
        %v6590 = vunpack.c.l.b16 %v6526
        %v6591 = vunpack.c.l.b16 %v6527
        %v6592 = vunpack.c.l.b16 %v6528
        %v6593 = vunpack.c.l.b16 %v6529
        %v6594 = vunpack.c.l.b16 %v6530
        %v6595 = vunpack.c.l.b16 %v6531
        %v6596 = vunpack.c.l.b16 %v6532
        %v6597 = vpack.c.b16 %v6582, %v6581
        %v6598 = vpack.c.b16 %v6584, %v6583
        %v6599 = vpack.c.b16 %v6586, %v6585
        %v6600 = vpack.c.b16 %v6588, %v6587
        %v6601 = vpack.c.b16 %v6590, %v6589
        %v6602 = vpack.c.b16 %v6592, %v6591
        %v6603 = vpack.c.b16 %v6594, %v6593
        %v6604 = vpack.c.b16 %v6596, %v6595
        %6613 = vmatprep.subr.bf16.mxu0 0
        %6614 = vmatpush1.bf16.msra.mxu0 %v6604
        %6615 = vmatprep.subr.bf16.mxu0 0
        %6616 = vmatpush1.bf16.msra.mxu0 %v6603
        %6617 = vmatprep.subr.bf16.mxu0 0
        %6618 = vmatpush1.bf16.msra.mxu0 %v6602
        %6619 = vmatprep.subr.bf16.mxu0 0
        %6620 = vmatpush1.bf16.msra.mxu0 %v6601
        %6621 = vmatprep.subr.bf16.mxu0 0
        %6622 = vmatpush1.bf16.msra.mxu0 %v6600
        %6623 = vmatprep.subr.bf16.mxu0 0
        %6624 = vmatpush1.bf16.msra.mxu0 %v6599
        %6625 = vmatprep.subr.bf16.mxu0 0
        %6626 = vmatpush1.bf16.msra.mxu0 %v6598
        %6627 = vmatprep.subr.bf16.mxu0 0
        %6628 = vmatpush1.bf16.msra.mxu0 %v6597
        %6629 = vmatprep.subr.bf16.mxu0 0
        %6630 = vmatpush2.bf16.msra.mxu0 0
        %6631 = vmatprep.subr.bf16.mxu0 0
        %6632 = vmatpush2.bf16.msra.mxu0 0
        %6633 = vmatprep.subr.bf16.mxu0 0
        %6634 = vmatpush2.bf16.msra.mxu0 0
        %6635 = vmatprep.subr.bf16.mxu0 0
        %6636 = vmatpush2.bf16.msra.mxu0 0
        %6637 = vmatprep.subr.bf16.mxu0 0
        %6638 = vmatpush2.bf16.msra.mxu0 0
        %6639 = vmatprep.subr.bf16.mxu0 0
        %6640 = vmatpush2.bf16.msra.mxu0 0
        %6641 = vmatprep.subr.bf16.mxu0 0
        %6642 = vmatpush2.bf16.msra.mxu0 0
        %6643 = vmatprep.subr.bf16.mxu0 0
        %6644 = vmatpush2.bf16.msra.mxu0 0
        %6645 = vmatprep.mubr.bf16.mxu0 0
        %6646 = vmatmul.mubr.bf16.gmra.mxu0 %v6549
        %v6647 = vpop.f32.mrf.mxu0
        %v6648 = vadd.f32 0.0, %v6647
        %v6649 = vpop.f32.mrf.mxu0
        %v6650 = vpop.f32.mrf.mxu0
        %v6651 = vadd.f32 0.0, %v6650
        %v6652 = vpop.f32.mrf.mxu0
        %6653 = vmatprep.mubr.bf16.mxu0 0
        %6654 = vmatmul.mubr.bf16.gmra.mxu0 %v6550
        %v6655 = vpop.f32.mrf.mxu0
        %v6656 = vadd.f32 0.0, %v6655
        %v6657 = vpop.f32.mrf.mxu0
        %v6658 = vpop.f32.mrf.mxu0
        %v6659 = vadd.f32 0.0, %v6658
        %v6660 = vpop.f32.mrf.mxu0
        %6661 = vmatprep.mubr.bf16.mxu0 0
        %6662 = vmatmul.mubr.bf16.gmra.mxu0 %v6551
        %v6663 = vpop.f32.mrf.mxu0
        %v6664 = vadd.f32 0.0, %v6663
        %v6665 = vpop.f32.mrf.mxu0
        %v6666 = vpop.f32.mrf.mxu0
        %v6667 = vadd.f32 0.0, %v6666
        %v6668 = vpop.f32.mrf.mxu0
        %6669 = vmatprep.mubr.bf16.mxu0 0
        %6670 = vmatmul.mubr.bf16.gmra.mxu0 %v6552
        %v6671 = vpop.f32.mrf.mxu0
        %v6672 = vadd.f32 0.0, %v6671
        %v6673 = vpop.f32.mrf.mxu0
        %v6674 = vpop.f32.mrf.mxu0
        %v6675 = vadd.f32 0.0, %v6674
        %v6676 = vpop.f32.mrf.mxu0
        %6677 = vmatprep.mubr.bf16.mxu0 0
        %6678 = vmatmul.mubr.bf16.gmra.mxu0 %v6553
        %v6679 = vpop.f32.mrf.mxu0
        %v6680 = vadd.f32 0.0, %v6679
        %v6681 = vpop.f32.mrf.mxu0
        %v6682 = vpop.f32.mrf.mxu0
        %v6683 = vadd.f32 0.0, %v6682
        %v6684 = vpop.f32.mrf.mxu0
        %6685 = vmatprep.mubr.bf16.mxu0 0
        %6686 = vmatmul.mubr.bf16.gmra.mxu0 %v6554
        %v6687 = vpop.f32.mrf.mxu0
        %v6688 = vadd.f32 0.0, %v6687
        %v6689 = vpop.f32.mrf.mxu0
        %v6690 = vpop.f32.mrf.mxu0
        %v6691 = vadd.f32 0.0, %v6690
        %v6692 = vpop.f32.mrf.mxu0
        %6693 = vmatprep.mubr.bf16.mxu0 0
        %6694 = vmatmul.mubr.bf16.gmra.mxu0 %v6555
        %v6695 = vpop.f32.mrf.mxu0
        %v6696 = vadd.f32 0.0, %v6695
        %v6697 = vpop.f32.mrf.mxu0
        %v6698 = vpop.f32.mrf.mxu0
        %v6699 = vadd.f32 0.0, %v6698
        %v6700 = vpop.f32.mrf.mxu0
        %6701 = vmatprep.mubr.bf16.mxu0 0
        %6702 = vmatmul.mubr.bf16.gmra.mxu0 %v6556
        %v6703 = vpop.f32.mrf.mxu0
        %v6704 = vadd.f32 0.0, %v6703
        %v6705 = vpop.f32.mrf.mxu0
        %v6706 = vpop.f32.mrf.mxu0
        %v6707 = vadd.f32 0.0, %v6706
        %v6708 = vpop.f32.mrf.mxu0
        %6709 = vdwg.mxu0
        %v6710 = vadd.f32 %v6284, %v6648
        %v6711 = vadd.f32 %v6285, %v6651
        %v6712 = vadd.f32 %v6286, %v6656
        %v6713 = vadd.f32 %v6287, %v6659
        %v6714 = vadd.f32 %v6288, %v6664
        %v6715 = vadd.f32 %v6289, %v6667
        %v6716 = vadd.f32 %v6290, %v6672
        %v6717 = vadd.f32 %v6291, %v6675
        %v6718 = vadd.f32 %v6292, %v6680
        %v6719 = vadd.f32 %v6293, %v6683
        %v6720 = vadd.f32 %v6294, %v6688
        %v6721 = vadd.f32 %v6295, %v6691
        %v6722 = vadd.f32 %v6296, %v6696
        %v6723 = vadd.f32 %v6297, %v6699
        %v6724 = vadd.f32 %v6298, %v6704
        %v6725 = vadd.f32 %v6299, %v6707
        %v6726 = vld [vmem:[%s6057] sm:$0xe]
        %v6727 = vld [vmem:[%s6057 + $0xc] sm:$0xe]
        %v6728 = vld [vmem:[%s6057 + $0x18] sm:$0xe]
        %v6729 = vld [vmem:[%s6057 + $0x24] sm:$0xe]
        %v6730 = vld [vmem:[%s6057 + $0x30] sm:$0xe]
        %v6731 = vld [vmem:[%s6057 + $0x3c] sm:$0xe]
        %v6732 = vld [vmem:[%s6057 + $0x48] sm:$0xe]
        %v6733 = vld [vmem:[%s6057 + $0x54] sm:$0xe]
        %v6758 = vrot.slane %v6726, 5
        %v6759 = vrot.slane %v6758, 4
        %v6760 = vrot.slane %v6301, 5
        %v6761 = vsel %vm1108, %v6759, %v6760
        %v6762 = vrot.slane %v6760, 4
        %v6763 = vrot.slane %v6302, 5
        %v6764 = vsel %vm1108, %v6762, %v6763
        %v6765 = vrot.slane %v6727, 5
        %v6766 = vrot.slane %v6765, 4
        %v6767 = vrot.slane %v6304, 5
        %v6768 = vsel %vm1108, %v6766, %v6767
        %v6769 = vrot.slane %v6767, 4
        %v6770 = vrot.slane %v6305, 5
        %v6771 = vsel %vm1108, %v6769, %v6770
        %v6772 = vrot.slane %v6728, 5
        %v6773 = vrot.slane %v6772, 4
        %v6774 = vrot.slane %v6307, 5
        %v6775 = vsel %vm1108, %v6773, %v6774
        %v6776 = vrot.slane %v6774, 4
        %v6777 = vrot.slane %v6308, 5
        %v6778 = vsel %vm1108, %v6776, %v6777
        %v6779 = vrot.slane %v6729, 5
        %v6780 = vrot.slane %v6779, 4
        %v6781 = vrot.slane %v6310, 5
        %v6782 = vsel %vm1108, %v6780, %v6781
        %v6783 = vrot.slane %v6781, 4
        %v6784 = vrot.slane %v6311, 5
        %v6785 = vsel %vm1108, %v6783, %v6784
        %v6786 = vrot.slane %v6730, 5
        %v6787 = vrot.slane %v6786, 4
        %v6788 = vrot.slane %v6313, 5
        %v6789 = vsel %vm1108, %v6787, %v6788
        %v6790 = vrot.slane %v6788, 4
        %v6791 = vrot.slane %v6314, 5
        %v6792 = vsel %vm1108, %v6790, %v6791
        %v6793 = vrot.slane %v6731, 5
        %v6794 = vrot.slane %v6793, 4
        %v6795 = vrot.slane %v6316, 5
        %v6796 = vsel %vm1108, %v6794, %v6795
        %v6797 = vrot.slane %v6795, 4
        %v6798 = vrot.slane %v6317, 5
        %v6799 = vsel %vm1108, %v6797, %v6798
        %v6800 = vrot.slane %v6732, 5
        %v6801 = vrot.slane %v6800, 4
        %v6802 = vrot.slane %v6319, 5
        %v6803 = vsel %vm1108, %v6801, %v6802
        %v6804 = vrot.slane %v6802, 4
        %v6805 = vrot.slane %v6320, 5
        %v6806 = vsel %vm1108, %v6804, %v6805
        %v6807 = vrot.slane %v6733, 5
        %v6808 = vrot.slane %v6807, 4
        %v6809 = vrot.slane %v6322, 5
        %v6810 = vsel %vm1108, %v6808, %v6809
        %v6811 = vrot.slane %v6809, 4
        %v6812 = vrot.slane %v6323, 5
        %v6813 = vsel %vm1108, %v6811, %v6812
        %s6814 = scalar_lea.vmem [#allocation8], 512
        %v6815 = vld [vmem:[%s6814] sm:$0xf]
        %v6816 = vld [vmem:[%s6814 + $0x4] sm:$0xf]
        %v6817 = vld [vmem:[%s6814 + $0x8] sm:$0xf]
        %v6818 = vld [vmem:[%s6814 + $0xc] sm:$0xf]
        %v6819 = vld [vmem:[%s6814 + $0x10] sm:$0xf]
        %v6820 = vld [vmem:[%s6814 + $0x14] sm:$0xf]
        %v6821 = vld [vmem:[%s6814 + $0x18] sm:$0xf]
        %v6822 = vld [vmem:[%s6814 + $0x1c] sm:$0xf]
        %v6823 = vld [vmem:[%s6814 + $0x20] sm:$0xf]
        %v6824 = vld [vmem:[%s6814 + $0x24] sm:$0xf]
        %v6825 = vld [vmem:[%s6814 + $0x28] sm:$0xf]
        %v6826 = vld [vmem:[%s6814 + $0x2c] sm:$0xf]
        %v6827 = vld [vmem:[%s6814 + $0x30] sm:$0xf]
        %v6828 = vld [vmem:[%s6814 + $0x34] sm:$0xf]
        %v6829 = vld [vmem:[%s6814 + $0x38] sm:$0xf]
        %v6830 = vld [vmem:[%s6814 + $0x3c] sm:$0xf]
        %v6831 = vunpack.c.l.b16 %v6761
        %v6832 = vunpack.c.l.b16 %v6764
        %v6833 = vunpack.c.l.b16 %v6768
        %v6834 = vunpack.c.l.b16 %v6771
        %v6835 = vunpack.c.l.b16 %v6775
        %v6836 = vunpack.c.l.b16 %v6778
        %v6837 = vunpack.c.l.b16 %v6782
        %v6838 = vunpack.c.l.b16 %v6785
        %v6839 = vunpack.c.l.b16 %v6789
        %v6840 = vunpack.c.l.b16 %v6792
        %v6841 = vunpack.c.l.b16 %v6796
        %v6842 = vunpack.c.l.b16 %v6799
        %v6843 = vunpack.c.l.b16 %v6803
        %v6844 = vunpack.c.l.b16 %v6806
        %v6845 = vunpack.c.l.b16 %v6810
        %v6846 = vunpack.c.l.b16 %v6813
        %v6847 = vpack.c.b16 %v6832, %v6831
        %v6848 = vpack.c.b16 %v6834, %v6833
        %v6849 = vpack.c.b16 %v6836, %v6835
        %v6850 = vpack.c.b16 %v6838, %v6837
        %v6851 = vpack.c.b16 %v6840, %v6839
        %v6852 = vpack.c.b16 %v6842, %v6841
        %v6853 = vpack.c.b16 %v6844, %v6843
        %v6854 = vpack.c.b16 %v6846, %v6845
        %v6879 = vunpack.c.l.b16 %v6815
        %v6880 = vunpack.c.l.b16 %v6816
        %v6881 = vunpack.c.l.b16 %v6817
        %v6882 = vunpack.c.l.b16 %v6818
        %v6883 = vunpack.c.l.b16 %v6819
        %v6884 = vunpack.c.l.b16 %v6820
        %v6885 = vunpack.c.l.b16 %v6821
        %v6886 = vunpack.c.l.b16 %v6822
        %v6887 = vunpack.c.l.b16 %v6823
        %v6888 = vunpack.c.l.b16 %v6824
        %v6889 = vunpack.c.l.b16 %v6825
        %v6890 = vunpack.c.l.b16 %v6826
        %v6891 = vunpack.c.l.b16 %v6827
        %v6892 = vunpack.c.l.b16 %v6828
        %v6893 = vunpack.c.l.b16 %v6829
        %v6894 = vunpack.c.l.b16 %v6830
        %v6895 = vpack.c.b16 %v6880, %v6879
        %v6896 = vpack.c.b16 %v6882, %v6881
        %v6897 = vpack.c.b16 %v6884, %v6883
        %v6898 = vpack.c.b16 %v6886, %v6885
        %v6899 = vpack.c.b16 %v6888, %v6887
        %v6900 = vpack.c.b16 %v6890, %v6889
        %v6901 = vpack.c.b16 %v6892, %v6891
        %v6902 = vpack.c.b16 %v6894, %v6893
        %6911 = vmatprep.subr.bf16.mxu0 0
        %6912 = vmatpush1.bf16.msra.mxu0 %v6902
        %6913 = vmatprep.subr.bf16.mxu0 0
        %6914 = vmatpush1.bf16.msra.mxu0 %v6901
        %6915 = vmatprep.subr.bf16.mxu0 0
        %6916 = vmatpush1.bf16.msra.mxu0 %v6900
        %6917 = vmatprep.subr.bf16.mxu0 0
        %6918 = vmatpush1.bf16.msra.mxu0 %v6899
        %6919 = vmatprep.subr.bf16.mxu0 0
        %6920 = vmatpush1.bf16.msra.mxu0 %v6898
        %6921 = vmatprep.subr.bf16.mxu0 0
        %6922 = vmatpush1.bf16.msra.mxu0 %v6897
        %6923 = vmatprep.subr.bf16.mxu0 0
        %6924 = vmatpush1.bf16.msra.mxu0 %v6896
        %6925 = vmatprep.subr.bf16.mxu0 0
        %6926 = vmatpush1.bf16.msra.mxu0 %v6895
        %6927 = vmatprep.subr.bf16.mxu0 0
        %6928 = vmatpush2.bf16.msra.mxu0 0
        %6929 = vmatprep.subr.bf16.mxu0 0
        %6930 = vmatpush2.bf16.msra.mxu0 0
        %6931 = vmatprep.subr.bf16.mxu0 0
        %6932 = vmatpush2.bf16.msra.mxu0 0
        %6933 = vmatprep.subr.bf16.mxu0 0
        %6934 = vmatpush2.bf16.msra.mxu0 0
        %6935 = vmatprep.subr.bf16.mxu0 0
        %6936 = vmatpush2.bf16.msra.mxu0 0
        %6937 = vmatprep.subr.bf16.mxu0 0
        %6938 = vmatpush2.bf16.msra.mxu0 0
        %6939 = vmatprep.subr.bf16.mxu0 0
        %6940 = vmatpush2.bf16.msra.mxu0 0
        %6941 = vmatprep.subr.bf16.mxu0 0
        %6942 = vmatpush2.bf16.msra.mxu0 0
        %6943 = vmatprep.mubr.bf16.mxu0 0
        %6944 = vmatmul.mubr.bf16.gmra.mxu0 %v6847
        %v6945 = vpop.f32.mrf.mxu0
        %v6946 = vadd.f32 0.0, %v6945
        %v6947 = vpop.f32.mrf.mxu0
        %v6948 = vpop.f32.mrf.mxu0
        %v6949 = vadd.f32 0.0, %v6948
        %v6950 = vpop.f32.mrf.mxu0
        %6951 = vmatprep.mubr.bf16.mxu0 0
        %6952 = vmatmul.mubr.bf16.gmra.mxu0 %v6848
        %v6953 = vpop.f32.mrf.mxu0
        %v6954 = vadd.f32 0.0, %v6953
        %v6955 = vpop.f32.mrf.mxu0
        %v6956 = vpop.f32.mrf.mxu0
        %v6957 = vadd.f32 0.0, %v6956
        %v6958 = vpop.f32.mrf.mxu0
        %6959 = vmatprep.mubr.bf16.mxu0 0
        %6960 = vmatmul.mubr.bf16.gmra.mxu0 %v6849
        %v6961 = vpop.f32.mrf.mxu0
        %v6962 = vadd.f32 0.0, %v6961
        %v6963 = vpop.f32.mrf.mxu0
        %v6964 = vpop.f32.mrf.mxu0
        %v6965 = vadd.f32 0.0, %v6964
        %v6966 = vpop.f32.mrf.mxu0
        %6967 = vmatprep.mubr.bf16.mxu0 0
        %6968 = vmatmul.mubr.bf16.gmra.mxu0 %v6850
        %v6969 = vpop.f32.mrf.mxu0
        %v6970 = vadd.f32 0.0, %v6969
        %v6971 = vpop.f32.mrf.mxu0
        %v6972 = vpop.f32.mrf.mxu0
        %v6973 = vadd.f32 0.0, %v6972
        %v6974 = vpop.f32.mrf.mxu0
        %6975 = vmatprep.mubr.bf16.mxu0 0
        %6976 = vmatmul.mubr.bf16.gmra.mxu0 %v6851
        %v6977 = vpop.f32.mrf.mxu0
        %v6978 = vadd.f32 0.0, %v6977
        %v6979 = vpop.f32.mrf.mxu0
        %v6980 = vpop.f32.mrf.mxu0
        %v6981 = vadd.f32 0.0, %v6980
        %v6982 = vpop.f32.mrf.mxu0
        %6983 = vmatprep.mubr.bf16.mxu0 0
        %6984 = vmatmul.mubr.bf16.gmra.mxu0 %v6852
        %v6985 = vpop.f32.mrf.mxu0
        %v6986 = vadd.f32 0.0, %v6985
        %v6987 = vpop.f32.mrf.mxu0
        %v6988 = vpop.f32.mrf.mxu0
        %v6989 = vadd.f32 0.0, %v6988
        %v6990 = vpop.f32.mrf.mxu0
        %6991 = vmatprep.mubr.bf16.mxu0 0
        %6992 = vmatmul.mubr.bf16.gmra.mxu0 %v6853
        %v6993 = vpop.f32.mrf.mxu0
        %v6994 = vadd.f32 0.0, %v6993
        %v6995 = vpop.f32.mrf.mxu0
        %v6996 = vpop.f32.mrf.mxu0
        %v6997 = vadd.f32 0.0, %v6996
        %v6998 = vpop.f32.mrf.mxu0
        %6999 = vmatprep.mubr.bf16.mxu0 0
        %7000 = vmatmul.mubr.bf16.gmra.mxu0 %v6854
        %v7001 = vpop.f32.mrf.mxu0
        %v7002 = vadd.f32 0.0, %v7001
        %v7003 = vpop.f32.mrf.mxu0
        %v7004 = vpop.f32.mrf.mxu0
        %v7005 = vadd.f32 0.0, %v7004
        %v7006 = vpop.f32.mrf.mxu0
        %7007 = vdwg.mxu0
        %v7008 = vadd.f32 %v6710, %v6946
        %v7009 = vadd.f32 %v6711, %v6949
        %v7010 = vadd.f32 %v6712, %v6954
        %v7011 = vadd.f32 %v6713, %v6957
        %v7012 = vadd.f32 %v6714, %v6962
        %v7013 = vadd.f32 %v6715, %v6965
        %v7014 = vadd.f32 %v6716, %v6970
        %v7015 = vadd.f32 %v6717, %v6973
        %v7016 = vadd.f32 %v6718, %v6978
        %v7017 = vadd.f32 %v6719, %v6981
        %v7018 = vadd.f32 %v6720, %v6986
        %v7019 = vadd.f32 %v6721, %v6989
        %v7020 = vadd.f32 %v6722, %v6994
        %v7021 = vadd.f32 %v6723, %v6997
        %v7022 = vadd.f32 %v6724, %v7002
        %v7023 = vadd.f32 %v6725, %v7005
        %v7025 = vlaneseq
        %v7026 = vshrl.u32 %v7025, 7
        %v7027 = vsub.s32 0, %v7026
        %v7028 = vrot.slane %v4179, %v7027
        %v7030 = vmul.f32 %v7008, %v7028
        %v7031 = vmul.f32 %v7009, %v7028
        %v7032 = vmul.f32 %v7010, %v7028
        %v7033 = vmul.f32 %v7011, %v7028
        %v7034 = vmul.f32 %v7012, %v7028
        %v7035 = vmul.f32 %v7013, %v7028
        %v7036 = vmul.f32 %v7014, %v7028
        %v7037 = vmul.f32 %v7015, %v7028
        %v7038 = vmul.f32 %v7016, %v7028
        %v7039 = vmul.f32 %v7017, %v7028
        %v7040 = vmul.f32 %v7018, %v7028
        %v7041 = vmul.f32 %v7019, %v7028
        %v7042 = vmul.f32 %v7020, %v7028
        %v7043 = vmul.f32 %v7021, %v7028
        %v7044 = vmul.f32 %v7022, %v7028
        %v7045 = vmul.f32 %v7023, %v7028
        %v7047 = vlaneseq
        %v7048 = vshrl.u32 %v7047, 7
        %v7049 = vsub.s32 0, %v7048
        %v7050 = vrot.slane %v4180, %v7049
        %v7052 = vadd.f32 %v7030, %v7050
        %v7053 = vadd.f32 %v7031, %v7050
        %v7054 = vadd.f32 %v7032, %v7050
        %v7055 = vadd.f32 %v7033, %v7050
        %v7056 = vadd.f32 %v7034, %v7050
        %v7057 = vadd.f32 %v7035, %v7050
        %v7058 = vadd.f32 %v7036, %v7050
        %v7059 = vadd.f32 %v7037, %v7050
        %v7060 = vadd.f32 %v7038, %v7050
        %v7061 = vadd.f32 %v7039, %v7050
        %v7062 = vadd.f32 %v7040, %v7050
        %v7063 = vadd.f32 %v7041, %v7050
        %v7064 = vadd.f32 %v7042, %v7050
        %v7065 = vadd.f32 %v7043, %v7050
        %v7066 = vadd.f32 %v7044, %v7050
        %v7067 = vadd.f32 %v7045, %v7050
        %v7068 = vmax.f32 %v7052, 0.0
        %v7069 = vmax.f32 %v7053, 0.0
        %v7070 = vmax.f32 %v7054, 0.0
        %v7071 = vmax.f32 %v7055, 0.0
        %v7072 = vmax.f32 %v7056, 0.0
        %v7073 = vmax.f32 %v7057, 0.0
        %v7074 = vmax.f32 %v7058, 0.0
        %v7075 = vmax.f32 %v7059, 0.0
        %v7076 = vmax.f32 %v7060, 0.0
        %v7077 = vmax.f32 %v7061, 0.0
        %v7078 = vmax.f32 %v7062, 0.0
        %v7079 = vmax.f32 %v7063, 0.0
        %v7080 = vmax.f32 %v7064, 0.0
        %v7081 = vmax.f32 %v7065, 0.0
        %v7082 = vmax.f32 %v7066, 0.0
        %v7083 = vmax.f32 %v7067, 0.0
        %v7084 = vpack.c.bf16 %v7069, %v7068
        %v7085 = vpack.c.bf16 %v7071, %v7070
        %v7086 = vpack.c.bf16 %v7073, %v7072
        %v7087 = vpack.c.bf16 %v7075, %v7074
        %v7088 = vpack.c.bf16 %v7077, %v7076
        %v7089 = vpack.c.bf16 %v7079, %v7078
        %v7090 = vpack.c.bf16 %v7081, %v7080
        %v7091 = vpack.c.bf16 %v7083, %v7082
        %v7100 = vunpack.c.l.b16 %v7084
        %v7101 = vunpack.c.h.b16 %v7084
        %v7102 = vunpack.c.l.b16 %v7085
        %v7103 = vunpack.c.h.b16 %v7085
        %v7104 = vunpack.c.l.b16 %v7086
        %v7105 = vunpack.c.h.b16 %v7086
        %v7106 = vunpack.c.l.b16 %v7087
        %v7107 = vunpack.c.h.b16 %v7087
        %v7108 = vunpack.c.l.b16 %v7088
        %v7109 = vunpack.c.h.b16 %v7088
        %v7110 = vunpack.c.l.b16 %v7089
        %v7111 = vunpack.c.h.b16 %v7089
        %v7112 = vunpack.c.l.b16 %v7090
        %v7113 = vunpack.c.h.b16 %v7090
        %v7114 = vunpack.c.l.b16 %v7091
        %v7115 = vunpack.c.h.b16 %v7091
        %v7116 = vpack.c.b16 %v7100, %v7100
        %v7117 = vpack.c.b16 %v7101, %v7101
        %v7118 = vpack.c.b16 %v7102, %v7102
        %v7119 = vpack.c.b16 %v7103, %v7103
        %v7120 = vpack.c.b16 %v7104, %v7104
        %v7121 = vpack.c.b16 %v7105, %v7105
        %v7122 = vpack.c.b16 %v7106, %v7106
        %v7123 = vpack.c.b16 %v7107, %v7107
        %v7124 = vpack.c.b16 %v7108, %v7108
        %v7125 = vpack.c.b16 %v7109, %v7109
        %v7126 = vpack.c.b16 %v7110, %v7110
        %v7127 = vpack.c.b16 %v7111, %v7111
        %v7128 = vpack.c.b16 %v7112, %v7112
        %v7129 = vpack.c.b16 %v7113, %v7113
        %v7130 = vpack.c.b16 %v7114, %v7114
        %v7131 = vpack.c.b16 %v7115, %v7115
        %7148 = vst [vmem:[%s339] sm:$0xf] %v7116
        %7149 = vst [vmem:[%s339 + $0x4] sm:$0xf] %v7117
        %7150 = vst [vmem:[%s339 + $0x8] sm:$0xf] %v7118
        %7151 = vst [vmem:[%s339 + $0xc] sm:$0xf] %v7119
        %7152 = vst [vmem:[%s339 + $0x10] sm:$0xf] %v7120
        %7153 = vst [vmem:[%s339 + $0x14] sm:$0xf] %v7121
        %7154 = vst [vmem:[%s339 + $0x18] sm:$0xf] %v7122
        %7155 = vst [vmem:[%s339 + $0x1c] sm:$0xf] %v7123
        %7156 = vst [vmem:[%s339 + $0x20] sm:$0xf] %v7124
        %7157 = vst [vmem:[%s339 + $0x24] sm:$0xf] %v7125
        %7158 = vst [vmem:[%s339 + $0x28] sm:$0xf] %v7126
        %7159 = vst [vmem:[%s339 + $0x2c] sm:$0xf] %v7127
        %7160 = vst [vmem:[%s339 + $0x30] sm:$0xf] %v7128
        %7161 = vst [vmem:[%s339 + $0x34] sm:$0xf] %v7129
        %7162 = vst [vmem:[%s339 + $0x38] sm:$0xf] %v7130
        %7163 = vst [vmem:[%s339 + $0x3c] sm:$0xf] %v7131
        %s7164 = sand.u32 %s199, 1
        %s7165 = scalar_lea.sflag [#allocation5], %s7164
        %s7166 = sand.u32 %s199, 1
        %s7167 = smul.addr %s7166, 64
        %s7168 = scalar_lea.vmem [#allocation9], %s7167
        // Predicated region
        $region69: #{tpu_custom_call.1} parent=47 // pred_check
          %p7169 = pneg %p209
        $region70: #{tpu_custom_call.1} parent=47 // pred_check_branch
          %7171 = sbr.rel (%p7169) target = $region72
        $region71: #{tpu_custom_call.1} parent=47 // pred_region
          %s7172 = smul.u32 8, %s30
          %s7174 = ssub.s32 1024, 1024
          %7175 = vsyncadd %s7165, %s7174
          %s7176 = smul.addr %s7172, 2
          %s7177 = smul.addr %s29, 32
          %s7178 = sadd.s32 %s7176, %s7177
          %s7179 = smul.addr %s7178, 64
          %s7180 = scalar_lea.hbm %s7, %s7179
          %s7181 = sshll.u32 %s7168, 4
          %s7182 = int_to_ptr.vmem [resolvable:$true] %s7181
          %7187 = dma.vmem_to_hbm [thread:$0]  %s7182, 1024, %s7180, %s7165, 64, 64, 4
        $region72: #{tpu_custom_call.1} parent=47 // pred_fallthru
          _
      $region48: #{tpu_custom_call.1} parent=5 // pred_fallthru
        _
      %p7188 = scmp.le.s32.totalorder 2, %s20
      // Predicated region
      $region73: #{tpu_custom_call.1} parent=5 // pred_check
        %p7189 = pneg %p7188
      $region74: #{tpu_custom_call.1} parent=5 // pred_check_branch
        %7191 = sbr.rel (%p7189) target = $region76
      $region75: #{tpu_custom_call.1} parent=5 // pred_region
        %s7192 = ssub.s32 %s20, 2
        // Predicated region
        $region77: #{tpu_custom_call.1} parent=75 // pred_check
          %p7193 = pneg %p215
        $region78: #{tpu_custom_call.1} parent=75 // pred_check_branch
          %7195 = sbr.rel (%p7193) target = $region80
        $region79: #{tpu_custom_call.1} parent=75 // pred_region
          %s7196 = sand.u32 %s200, 1
          %s7197 = scalar_lea.sflag [#allocation5], %s7196
          %s7198 = sand.u32 %s200, 1
          %s7199 = smul.addr %s7198, 64
          %s7200 = scalar_lea.vmem [#allocation9], %s7199
          %7201 = dma.done %s7197, 1024
        $region80: #{tpu_custom_call.1} parent=75 // pred_fallthru
          _
      $region76: #{tpu_custom_call.1} parent=5 // pred_fallthru
        _
    $region6: #{tpu_custom_call.1} parent=1 // loop_footer
      %s24 = sadd.s32 1, %s20
    $region7: #{tpu_custom_call.1} parent=1 // loop_footer_branch
      %19 = sbr.rel target = $region3
    $region8: #{tpu_custom_call.1} parent=1 // loop_exit
      _
    %7202 = vsyncpa [#allocation4], 1
    %s7203 = scalar_lea.sflag [#allocation4], 1
    %7204 = vsyncpa %s7203, 1
    %7205 = vsyncpa [#allocation7], 1
    %7206 = vsyncpa [#allocation5], 1
    %s7207 = scalar_lea.sflag [#allocation5], 1
    %7208 = vsyncpa %s7207, 1

</llo_original>
